<compile_context>
chip_gen: v5e
topology: v5e:2x2
jax: 0.10.0
libtpu: 0.0.40
codegen_flags: <defaults>
</compile_context>

<pallas_src>
from functools import partial

import jax
import jax.numpy as jnp
import numpy as np
from jax.experimental import pallas as pl
from jax.experimental.pallas import tpu as pltpu

EPS = 1e-5


def _round_up(v, m):
    return (v + m - 1) // m * m


# ----------------------------------------------------------------------------
# Fused kernel
# ----------------------------------------------------------------------------
def _basic_block_kernel(*refs, taps1, taps2, ident_off, down_off, L,
                        scr_off, scr_len, has_down):
    """conv1+bn1+relu -> conv2+bn2 -> (+identity/downsample) -> relu.

    All activations use the flat full-width layout (row index = h*Wp + w), so
    each conv tap is `ref[off:off+L, :]` - a contiguous leading-dim slice.
    """
    if has_down:
        (x_ref, mask_ref, w1_ref, s1_ref, b1_ref, w2_ref, s2_ref, b2_ref,
         wd_ref, sd_ref, bd_ref, o_ref, scr_ref) = refs
    else:
        (x_ref, mask_ref, w1_ref, s1_ref, b1_ref, w2_ref, s2_ref, b2_ref,
         o_ref, scr_ref) = refs

    # ---- conv1 (3x3, stride=s, pad=1): 9 shift-and-matmul taps, f32 acc -----
    acc1 = None
    for t, off in enumerate(taps1):
        y = jnp.dot(x_ref[off:off + L, :], w1_ref[t],
                    preferred_element_type=jnp.float32)
        acc1 = y if acc1 is None else acc1 + y

    # bn1 + relu (f32 epilogue); mask zeroes the two junk columns per row that
    # conv2 will interpret as its left/right zero padding.
    out1 = jnp.maximum(acc1 * s1_ref[...] + b1_ref[...], 0.0) * mask_ref[...]

    # Scratch = conv1 output with a small flat zero halo before/after the data.
    # Halo is re-zeroed every step (megacore-safe); interior is one aligned,
    # full-width, unmasked store (no duplicate zero-then-overwrite).
    cw = scr_ref.shape[1]
    scr_ref[0:scr_off, :] = jnp.zeros((scr_off, cw), scr_ref.dtype)
    scr_ref[scr_off + L:scr_len, :] = jnp.zeros((scr_len - scr_off - L, cw),
                                                scr_ref.dtype)
    scr_ref[scr_off:scr_off + L, :] = out1.astype(scr_ref.dtype)

    # ---- conv2 (3x3, stride=1, pad=1) + bn2 ---------------------------------
    # TODO(synk): K-group kw taps (K=3*C) / MRB accumulation on v6e/v7x.
    acc2 = None
    for t, off in enumerate(taps2):
        y = jnp.dot(scr_ref[off:off + L, :], w2_ref[t],
                    preferred_element_type=jnp.float32)
        acc2 = y if acc2 is None else acc2 + y
    acc2 = acc2 * s2_ref[...] + b2_ref[...]

    # ---- identity / downsample branch ---------------------------------------
    if has_down:
        # 1x1 stride-2 conv reads exactly stride-phase plane (1,1).
        ident = jnp.dot(x_ref[down_off:down_off + L, :], wd_ref[...],
                        preferred_element_type=jnp.float32)
        ident = ident * sd_ref[...] + bd_ref[...]
    else:
        ident = x_ref[ident_off:ident_off + L, :].astype(jnp.float32)

    # ---- residual add + relu; store in compute dtype ------------------------
    o_ref[...] = jnp.maximum(acc2 + ident, 0.0).astype(o_ref.dtype)


# ----------------------------------------------------------------------------
# Plain-JAX glue: padding, stride-phase re-layout, weight/BN folding
# ----------------------------------------------------------------------------
def _fold_bn(bn, cout_p):
    scale = bn["gamma"] / jnp.sqrt(bn["var"] + EPS)
    bias = bn["beta"] - bn["mean"] * scale
    pad = cout_p - scale.shape[0]
    return (jnp.pad(scale, (0, pad))[None, :].astype(jnp.float32),
            jnp.pad(bias, (0, pad))[None, :].astype(jnp.float32))


def _prep_weight(w_oihw, cin_p, cout_p, cdtype):
    """PyTorch (Cout, Cin, KH, KW) -> (KH*KW, Cin_p, Cout_p), tap-major order."""
    cout, cin, kh, kw = w_oihw.shape
    w = jnp.transpose(w_oihw, (2, 3, 1, 0))
    w = jnp.pad(w, ((0, 0), (0, 0), (0, cin_p - cin), (0, cout_p - cout)))
    return w.reshape(kh * kw, cin_p, cout_p).astype(cdtype)


@partial(jax.jit, static_argnames=("stride", "compute_dtype", "channel_pad"))
def basic_block_forward(params, x_nchw, stride=1, compute_dtype=jnp.bfloat16,
                        channel_pad=128):
    x = jnp.transpose(x_nchw, (0, 2, 3, 1)).astype(jnp.float32)   # NHWC
    N, H, W, cin = x.shape
    cout = params["conv1_w"].shape[0]
    has_down = "down_w" in params

    # The spec module hard-codes a stride-2 1x1 downsample whenever
    # ch_out != ch_in, so the only shape-consistent configs are
    # (stride=1, ch_in==ch_out) and (stride=2, ch_in!=ch_out).
    if has_down:
        if stride != 2:
            raise ValueError("downsample branch uses a fixed stride-2 1x1 conv; "
                             "stride must be 2")
    else:
        if stride != 1 or cin != cout:
            raise ValueError("identity skip requires stride == 1 and ch_in == ch_out")

    s = stride
    cin_p = _round_up(cin, channel_pad)
    cout_p = _round_up(cout, channel_pad)
    Ho = (H - 1) // s + 1
    Wo = (W - 1) // s + 1
    Hps = -(-(H + 2) // s)                      # stride-phase plane height
    Wp = _round_up(-(-(W + 2) // s), 8)         # plane width, sublane-aligned
    L = Ho * Wp                                 # full-width output rows

    # Channel-pad (lane-dense), conv pad=1 + alignment pad, stride-phase split,
    # then flatten each batch element to (rows, Cin_p) so every in-kernel conv
    # tap is a contiguous leading-dim slice (no im2col, no compaction copies).
    xp = jnp.pad(x, ((0, 0), (1, Hps * s - H - 1), (1, Wp * s - W - 1),
                     (0, cin_p - cin)))
    xph = xp.reshape(N, Hps, s, Wp, s, cin_p).transpose(0, 2, 4, 1, 3, 5)
    x_flat = xph.reshape(N, s * s * Hps * Wp, cin_p)
    x_flat = jnp.pad(x_flat, ((0, 0), (0, 8), (0, 0))).astype(compute_dtype)
    Lx = x_flat.shape[1]

    # Flat row offsets of the 9 conv taps (tap order = kh*3 + kw).
    taps1 = tuple(((kh % s) * s + (kw % s)) * Hps * Wp
                  + (kh // s) * Wp + (kw // s)
                  for kh in range(3) for kw in range(3))
    scr_off = Wp + 8                            # sublane-aligned data start
    scr_len = scr_off + (Ho + 1) * Wp + 8
    taps2 = tuple(scr_off + (kh - 1) * Wp + (kw - 1)
                  for kh in range(3) for kw in range(3))
    ident_off = Wp + 1                          # stride-1 identity (pad offset)
    down_off = 3 * Hps * Wp                     # stride-2 phase (1,1) plane

    # Mask (L,1): zero the junk columns conv2 reads as left/right zero padding.
    col = jnp.arange(L, dtype=jnp.int32) % Wp
    mask = jnp.where((col == Wo) | (col == Wp - 1), 0.0, 1.0)
    mask = mask.astype(jnp.float32)[:, None]

    w1 = _prep_weight(params["conv1_w"], cin_p, cout_p, compute_dtype)
    w2 = _prep_weight(params["conv2_w"], cout_p, cout_p, compute_dtype)
    s1, b1 = _fold_bn(params["bn1"], cout_p)
    s2, b2 = _fold_bn(params["bn2"], cout_p)

    args = [x_flat, mask, w1, s1, b1, w2, s2, b2]
    in_specs = [
        pl.BlockSpec((None, Lx, cin_p), lambda n: (n, 0, 0)),
        pl.BlockSpec((L, 1), lambda n: (0, 0)),
        pl.BlockSpec((9, cin_p, cout_p), lambda n: (0, 0, 0)),
        pl.BlockSpec((1, cout_p), lambda n: (0, 0)),
        pl.BlockSpec((1, cout_p), lambda n: (0, 0)),
        pl.BlockSpec((9, cout_p, cout_p), lambda n: (0, 0, 0)),
        pl.BlockSpec((1, cout_p), lambda n: (0, 0)),
        pl.BlockSpec((1, cout_p), lambda n: (0, 0)),
    ]
    if has_down:
        wd = _prep_weight(params["down_w"], cin_p, cout_p, compute_dtype)[0]
        sd, bd = _fold_bn(params["bn_d"], cout_p)
        args += [wd, sd, bd]
        in_specs += [
            pl.BlockSpec((cin_p, cout_p), lambda n: (0, 0)),
            pl.BlockSpec((1, cout_p), lambda n: (0, 0)),
            pl.BlockSpec((1, cout_p), lambda n: (0, 0)),
        ]

    # Explicit VMEM budget (review item): real footprint + headroom, clamped.
    cb = jnp.dtype(compute_dtype).itemsize
    est = (2 * Lx * cin_p * cb                                  # input  x2 buf
           + 2 * L * cout_p * cb                                # output x2 buf
           + scr_len * cout_p * cb                              # conv1 scratch
           + 2 * (9 * cin_p * cout_p + 9 * cout_p * cout_p
                  + cin_p * cout_p + 6 * cout_p) * cb           # weights / BN
           + 6 * L * cout_p * 4)                                # live f32 temps
    vmem_limit = int(min(56 * 2 ** 20, max(32 * 2 ** 20, 2 * est)))

    out = pl.pallas_call(
        partial(_basic_block_kernel, taps1=taps1, taps2=taps2,
                ident_off=ident_off, down_off=down_off, L=L,
                scr_off=scr_off, scr_len=scr_len, has_down=has_down),
        out_shape=jax.ShapeDtypeStruct((N, L, cout_p), compute_dtype),
        grid=(N,),
        in_specs=in_specs,
        out_specs=pl.BlockSpec((None, L, cout_p), lambda n: (n, 0, 0)),
        scratch_shapes=[pltpu.VMEM((scr_len, cout_p), compute_dtype)],
        compiler_params=pltpu.CompilerParams(
            dimension_semantics=("parallel",),
            vmem_limit_bytes=vmem_limit),
    )(*args)

    out = out.reshape(N, Ho, Wp, cout_p)[:, :, :Wo, :cout]
    return jnp.transpose(out, (0, 3, 1, 2)).astype(jnp.float32)   # NCHW


# ----------------------------------------------------------------------------
# Parameter init + pure-JAX reference (for correctness checking only)
# ----------------------------------------------------------------------------
def init_basic_block_params(key, ch_in, ch_out):
    ks = jax.random.split(key, 6)

    def bn_params(k, c):
        kg, kb, km, kv = jax.random.split(k, 4)
        return {
            "gamma": 1.0 + 0.1 * jax.random.normal(kg, (c,), jnp.float32),
            "beta": 0.1 * jax.random.normal(kb, (c,), jnp.float32),
            "mean": 0.1 * jax.random.normal(km, (c,), jnp.float32),
            "var": 1.0 + 0.1 * jax.random.uniform(kv, (c,), jnp.float32),
        }

    params = {
        "conv1_w": 0.1 * jax.random.normal(ks[0], (ch_out, ch_in, 3, 3), jnp.float32),
        "bn1": bn_params(ks[1], ch_out),
        "conv2_w": 0.1 * jax.random.normal(ks[2], (ch_out, ch_out, 3, 3), jnp.float32),
        "bn2": bn_params(ks[3], ch_out),
    }
    if ch_in != ch_out:
        params["down_w"] = 0.1 * jax.random.normal(ks[4], (ch_out, ch_in, 1, 1), jnp.float32)
        params["bn_d"] = bn_params(ks[5], ch_out)
    return params


def ref_basic_block(params, x_nchw, stride=1, compute_dtype=jnp.float32):
    """Reference; `compute_dtype` matches the kernel's matmul-input precision."""
    cd = compute_dtype

    def conv(x, w, st, pad):
        return jax.lax.conv_general_dilated(
            x.astype(cd), w.astype(cd), window_strides=(st, st),
            padding=((pad, pad), (pad, pad)),
            dimension_numbers=("NCHW", "OIHW", "NCHW"),
            preferred_element_type=jnp.float32)

    def bn(x, p):
        s = (p["gamma"] / jnp.sqrt(p["var"] + EPS))[None, :, None, None]
        b = (p["beta"] - p["mean"] * p["gamma"] / jnp.sqrt(p["var"] + EPS))[None, :, None, None]
        return x * s + b

    out = jnp.maximum(bn(conv(x_nchw, params["conv1_w"], stride, 1), params["bn1"]), 0.0)
    out = bn(conv(out, params["conv2_w"], 1, 1), params["bn2"])
    if "down_w" in params:
        identity = bn(conv(x_nchw, params["down_w"], 2, 0), params["bn_d"])
    else:
        identity = x_nchw.astype(cd).astype(jnp.float32)
    return jnp.maximum(out + identity, 0.0)


# ----------------------------------------------------------------------------
if __name__ == "__main__":
    key = jax.random.PRNGKey(0)
    kx, kp1, kp2 = jax.random.split(key, 3)

    # Case 1: ch_in == ch_out -> identity skip (downsample is None), stride=1.
    x1 = jax.random.normal(kx, (2, 8, 16, 16), jnp.float32)   # NCHW
    p1 = init_basic_block_params(kp1, ch_in=8, ch_out=8)

    y1 = jax.block_until_ready(
        basic_block_forward(p1, x1, stride=1, compute_dtype=jnp.float32))
    r1 = ref_basic_block(p1, x1, stride=1, compute_dtype=jnp.float32)
    np.testing.assert_allclose(np.asarray(y1), np.asarray(r1), atol=1e-4, rtol=1e-4)

    y1b = jax.block_until_ready(
        basic_block_forward(p1, x1, stride=1, compute_dtype=jnp.bfloat16))
    r1b = ref_basic_block(p1, x1, stride=1, compute_dtype=jnp.bfloat16)
    np.testing.assert_allclose(np.asarray(y1b), np.asarray(r1b), atol=2e-2, rtol=2e-2)

    # Case 2: ch_in != ch_out -> 1x1 stride-2 conv + BN downsample branch.
    x2 = jax.random.normal(kx, (2, 8, 16, 16), jnp.float32)
    p2 = init_basic_block_params(kp2, ch_in=8, ch_out=16)

    y2 = jax.block_until_ready(
        basic_block_forward(p2, x2, stride=2, compute_dtype=jnp.float32))
    r2 = ref_basic_block(p2, x2, stride=2, compute_dtype=jnp.float32)
    np.testing.assert_allclose(np.asarray(y2), np.asarray(r2), atol=1e-4, rtol=1e-4)

    y2b = jax.block_until_ready(
        basic_block_forward(p2, x2, stride=2, compute_dtype=jnp.bfloat16))
    r2b = ref_basic_block(p2, x2, stride=2, compute_dtype=jnp.bfloat16)
    np.testing.assert_allclose(np.asarray(y2b), np.asarray(r2b), atol=2e-2, rtol=2e-2)

    print("KERNEL_OK")
</pallas_src>

<mosaic_0001>
module attributes {stable_mosaic.version = 11 : i64} {
  func.func @_basic_block_kernel(%arg0: i32, %arg1: memref<1x440x128xf32, #tpu.memory_space<vmem>>, %arg2: memref<384x1xf32, #tpu.memory_space<vmem>>, %arg3: memref<9x128x128xf32, #tpu.memory_space<vmem>>, %arg4: memref<1x128xf32, #tpu.memory_space<vmem>>, %arg5: memref<1x128xf32, #tpu.memory_space<vmem>>, %arg6: memref<9x128x128xf32, #tpu.memory_space<vmem>>, %arg7: memref<1x128xf32, #tpu.memory_space<vmem>>, %arg8: memref<1x128xf32, #tpu.memory_space<vmem>>, %arg9: memref<1x384x128xf32, #tpu.memory_space<vmem>>, %arg10: memref<448x128xf32, #tpu.memory_space<vmem>>) attributes {dimension_semantics = [#tpu.dimension_semantics<parallel>], iteration_bounds = array<i64: 2>, scalar_prefetch = 0 : i64, scratch_operands = 1 : i64, tpu.core_type = #tpu.core_type<tc>, window_params = [{transform_indices = @transform_0, window_bounds = array<i64: 1, 440, 128>}, {pipeline_mode = #tpu.pipeline_mode<synchronous>, transform_indices = @transform_1, window_bounds = array<i64: 384, 1>}, {pipeline_mode = #tpu.pipeline_mode<synchronous>, transform_indices = @transform_2, window_bounds = array<i64: 9, 128, 128>}, {pipeline_mode = #tpu.pipeline_mode<synchronous>, transform_indices = @transform_3, window_bounds = array<i64: 1, 128>}, {pipeline_mode = #tpu.pipeline_mode<synchronous>, transform_indices = @transform_4, window_bounds = array<i64: 1, 128>}, {pipeline_mode = #tpu.pipeline_mode<synchronous>, transform_indices = @transform_5, window_bounds = array<i64: 9, 128, 128>}, {pipeline_mode = #tpu.pipeline_mode<synchronous>, transform_indices = @transform_6, window_bounds = array<i64: 1, 128>}, {pipeline_mode = #tpu.pipeline_mode<synchronous>, transform_indices = @transform_7, window_bounds = array<i64: 1, 128>}, {transform_indices = @transform_8, window_bounds = array<i64: 1, 384, 128>}]} {
    %c0 = arith.constant 0 : index
    %c0_0 = arith.constant 0 : index
    %c0_1 = arith.constant 0 : index
    %0 = vector.load %arg1[%c0, %c0_0, %c0_1] : memref<1x440x128xf32, #tpu.memory_space<vmem>>, vector<1x384x128xf32>
    %1 = vector.shape_cast %0 : vector<1x384x128xf32> to vector<384x128xf32>
    %c0_2 = arith.constant 0 : index
    %c0_3 = arith.constant 0 : index
    %c0_4 = arith.constant 0 : index
    %2 = vector.load %arg3[%c0_2, %c0_3, %c0_4] : memref<9x128x128xf32, #tpu.memory_space<vmem>>, vector<1x128x128xf32>
    %3 = vector.shape_cast %2 : vector<1x128x128xf32> to vector<128x128xf32>
    %cst = arith.constant dense<0.000000e+00> : vector<384x128xf32>
    %4 = tpu.matmul %1, %3, %cst {dimension_numbers = #tpu.dot_dimension_numbers<[1], [0], [0], [1], [0, 0, 1, 1], [], []>} : vector<384x128xf32>, vector<128x128xf32>, vector<384x128xf32> -> vector<384x128xf32>
    %c0_5 = arith.constant 0 : index
    %c1 = arith.constant 1 : index
    %c0_6 = arith.constant 0 : index
    %5 = vector.load %arg1[%c0_5, %c1, %c0_6] : memref<1x440x128xf32, #tpu.memory_space<vmem>>, vector<1x384x128xf32>
    %6 = vector.shape_cast %5 : vector<1x384x128xf32> to vector<384x128xf32>
    %c1_7 = arith.constant 1 : index
    %c0_8 = arith.constant 0 : index
    %c0_9 = arith.constant 0 : index
    %7 = vector.load %arg3[%c1_7, %c0_8, %c0_9] : memref<9x128x128xf32, #tpu.memory_space<vmem>>, vector<1x128x128xf32>
    %8 = vector.shape_cast %7 : vector<1x128x128xf32> to vector<128x128xf32>
    %cst_10 = arith.constant dense<0.000000e+00> : vector<384x128xf32>
    %9 = tpu.matmul %6, %8, %cst_10 {dimension_numbers = #tpu.dot_dimension_numbers<[1], [0], [0], [1], [0, 0, 1, 1], [], []>} : vector<384x128xf32>, vector<128x128xf32>, vector<384x128xf32> -> vector<384x128xf32>
    %10 = arith.addf %4, %9 : vector<384x128xf32>
    %c0_11 = arith.constant 0 : index
    %c2 = arith.constant 2 : index
    %c0_12 = arith.constant 0 : index
    %11 = vector.load %arg1[%c0_11, %c2, %c0_12] : memref<1x440x128xf32, #tpu.memory_space<vmem>>, vector<1x384x128xf32>
    %12 = vector.shape_cast %11 : vector<1x384x128xf32> to vector<384x128xf32>
    %c2_13 = arith.constant 2 : index
    %c0_14 = arith.constant 0 : index
    %c0_15 = arith.constant 0 : index
    %13 = vector.load %arg3[%c2_13, %c0_14, %c0_15] : memref<9x128x128xf32, #tpu.memory_space<vmem>>, vector<1x128x128xf32>
    %14 = vector.shape_cast %13 : vector<1x128x128xf32> to vector<128x128xf32>
    %cst_16 = arith.constant dense<0.000000e+00> : vector<384x128xf32>
    %15 = tpu.matmul %12, %14, %cst_16 {dimension_numbers = #tpu.dot_dimension_numbers<[1], [0], [0], [1], [0, 0, 1, 1], [], []>} : vector<384x128xf32>, vector<128x128xf32>, vector<384x128xf32> -> vector<384x128xf32>
    %16 = arith.addf %10, %15 : vector<384x128xf32>
    %c0_17 = arith.constant 0 : index
    %c24 = arith.constant 24 : index
    %c0_18 = arith.constant 0 : index
    %17 = vector.load %arg1[%c0_17, %c24, %c0_18] : memref<1x440x128xf32, #tpu.memory_space<vmem>>, vector<1x384x128xf32>
    %18 = vector.shape_cast %17 : vector<1x384x128xf32> to vector<384x128xf32>
    %c3 = arith.constant 3 : index
    %c0_19 = arith.constant 0 : index
    %c0_20 = arith.constant 0 : index
    %19 = vector.load %arg3[%c3, %c0_19, %c0_20] : memref<9x128x128xf32, #tpu.memory_space<vmem>>, vector<1x128x128xf32>
    %20 = vector.shape_cast %19 : vector<1x128x128xf32> to vector<128x128xf32>
    %cst_21 = arith.constant dense<0.000000e+00> : vector<384x128xf32>
    %21 = tpu.matmul %18, %20, %cst_21 {dimension_numbers = #tpu.dot_dimension_numbers<[1], [0], [0], [1], [0, 0, 1, 1], [], []>} : vector<384x128xf32>, vector<128x128xf32>, vector<384x128xf32> -> vector<384x128xf32>
    %22 = arith.addf %16, %21 : vector<384x128xf32>
    %c0_22 = arith.constant 0 : index
    %c25 = arith.constant 25 : index
    %c0_23 = arith.constant 0 : index
    %23 = vector.load %arg1[%c0_22, %c25, %c0_23] : memref<1x440x128xf32, #tpu.memory_space<vmem>>, vector<1x384x128xf32>
    %24 = vector.shape_cast %23 : vector<1x384x128xf32> to vector<384x128xf32>
    %c4 = arith.constant 4 : index
    %c0_24 = arith.constant 0 : index
    %c0_25 = arith.constant 0 : index
    %25 = vector.load %arg3[%c4, %c0_24, %c0_25] : memref<9x128x128xf32, #tpu.memory_space<vmem>>, vector<1x128x128xf32>
    %26 = vector.shape_cast %25 : vector<1x128x128xf32> to vector<128x128xf32>
    %cst_26 = arith.constant dense<0.000000e+00> : vector<384x128xf32>
    %27 = tpu.matmul %24, %26, %cst_26 {dimension_numbers = #tpu.dot_dimension_numbers<[1], [0], [0], [1], [0, 0, 1, 1], [], []>} : vector<384x128xf32>, vector<128x128xf32>, vector<384x128xf32> -> vector<384x128xf32>
    %28 = arith.addf %22, %27 : vector<384x128xf32>
    %c0_27 = arith.constant 0 : index
    %c26 = arith.constant 26 : index
    %c0_28 = arith.constant 0 : index
    %29 = vector.load %arg1[%c0_27, %c26, %c0_28] : memref<1x440x128xf32, #tpu.memory_space<vmem>>, vector<1x384x128xf32>
    %30 = vector.shape_cast %29 : vector<1x384x128xf32> to vector<384x128xf32>
    %c5 = arith.constant 5 : index
    %c0_29 = arith.constant 0 : index
    %c0_30 = arith.constant 0 : index
    %31 = vector.load %arg3[%c5, %c0_29, %c0_30] : memref<9x128x128xf32, #tpu.memory_space<vmem>>, vector<1x128x128xf32>
    %32 = vector.shape_cast %31 : vector<1x128x128xf32> to vector<128x128xf32>
    %cst_31 = arith.constant dense<0.000000e+00> : vector<384x128xf32>
    %33 = tpu.matmul %30, %32, %cst_31 {dimension_numbers = #tpu.dot_dimension_numbers<[1], [0], [0], [1], [0, 0, 1, 1], [], []>} : vector<384x128xf32>, vector<128x128xf32>, vector<384x128xf32> -> vector<384x128xf32>
    %34 = arith.addf %28, %33 : vector<384x128xf32>
    %c0_32 = arith.constant 0 : index
    %c48 = arith.constant 48 : index
    %c0_33 = arith.constant 0 : index
    %35 = vector.load %arg1[%c0_32, %c48, %c0_33] : memref<1x440x128xf32, #tpu.memory_space<vmem>>, vector<1x384x128xf32>
    %36 = vector.shape_cast %35 : vector<1x384x128xf32> to vector<384x128xf32>
    %c6 = arith.constant 6 : index
    %c0_34 = arith.constant 0 : index
    %c0_35 = arith.constant 0 : index
    %37 = vector.load %arg3[%c6, %c0_34, %c0_35] : memref<9x128x128xf32, #tpu.memory_space<vmem>>, vector<1x128x128xf32>
    %38 = vector.shape_cast %37 : vector<1x128x128xf32> to vector<128x128xf32>
    %cst_36 = arith.constant dense<0.000000e+00> : vector<384x128xf32>
    %39 = tpu.matmul %36, %38, %cst_36 {dimension_numbers = #tpu.dot_dimension_numbers<[1], [0], [0], [1], [0, 0, 1, 1], [], []>} : vector<384x128xf32>, vector<128x128xf32>, vector<384x128xf32> -> vector<384x128xf32>
    %40 = arith.addf %34, %39 : vector<384x128xf32>
    %c0_37 = arith.constant 0 : index
    %c49 = arith.constant 49 : index
    %c0_38 = arith.constant 0 : index
    %41 = vector.load %arg1[%c0_37, %c49, %c0_38] : memref<1x440x128xf32, #tpu.memory_space<vmem>>, vector<1x384x128xf32>
    %42 = vector.shape_cast %41 : vector<1x384x128xf32> to vector<384x128xf32>
    %c7 = arith.constant 7 : index
    %c0_39 = arith.constant 0 : index
    %c0_40 = arith.constant 0 : index
    %43 = vector.load %arg3[%c7, %c0_39, %c0_40] : memref<9x128x128xf32, #tpu.memory_space<vmem>>, vector<1x128x128xf32>
    %44 = vector.shape_cast %43 : vector<1x128x128xf32> to vector<128x128xf32>
    %cst_41 = arith.constant dense<0.000000e+00> : vector<384x128xf32>
    %45 = tpu.matmul %42, %44, %cst_41 {dimension_numbers = #tpu.dot_dimension_numbers<[1], [0], [0], [1], [0, 0, 1, 1], [], []>} : vector<384x128xf32>, vector<128x128xf32>, vector<384x128xf32> -> vector<384x128xf32>
    %46 = arith.addf %40, %45 : vector<384x128xf32>
    %c0_42 = arith.constant 0 : index
    %c50 = arith.constant 50 : index
    %c0_43 = arith.constant 0 : index
    %47 = vector.load %arg1[%c0_42, %c50, %c0_43] : memref<1x440x128xf32, #tpu.memory_space<vmem>>, vector<1x384x128xf32>
    %48 = vector.shape_cast %47 : vector<1x384x128xf32> to vector<384x128xf32>
    %c8 = arith.constant 8 : index
    %c0_44 = arith.constant 0 : index
    %c0_45 = arith.constant 0 : index
    %49 = vector.load %arg3[%c8, %c0_44, %c0_45] : memref<9x128x128xf32, #tpu.memory_space<vmem>>, vector<1x128x128xf32>
    %50 = vector.shape_cast %49 : vector<1x128x128xf32> to vector<128x128xf32>
    %cst_46 = arith.constant dense<0.000000e+00> : vector<384x128xf32>
    %51 = tpu.matmul %48, %50, %cst_46 {dimension_numbers = #tpu.dot_dimension_numbers<[1], [0], [0], [1], [0, 0, 1, 1], [], []>} : vector<384x128xf32>, vector<128x128xf32>, vector<384x128xf32> -> vector<384x128xf32>
    %52 = arith.addf %46, %51 : vector<384x128xf32>
    %c0_47 = arith.constant 0 : index
    %c0_48 = arith.constant 0 : index
    %53 = vector.load %arg4[%c0_47, %c0_48] : memref<1x128xf32, #tpu.memory_space<vmem>>, vector<1x128xf32>
    %54 = vector.broadcast %53 : vector<1x128xf32> to vector<384x128xf32>
    %55 = arith.mulf %52, %54 : vector<384x128xf32>
    %c0_49 = arith.constant 0 : index
    %c0_50 = arith.constant 0 : index
    %56 = vector.load %arg5[%c0_49, %c0_50] : memref<1x128xf32, #tpu.memory_space<vmem>>, vector<1x128xf32>
    %57 = vector.broadcast %56 : vector<1x128xf32> to vector<384x128xf32>
    %58 = arith.addf %55, %57 : vector<384x128xf32>
    %cst_51 = arith.constant 0.000000e+00 : f32
    %59 = vector.broadcast %cst_51 : f32 to vector<384x128xf32>
    %60 = arith.maximumf %58, %59 : vector<384x128xf32>
    %c0_52 = arith.constant 0 : index
    %c0_53 = arith.constant 0 : index
    %61 = vector.load %arg2[%c0_52, %c0_53] : memref<384x1xf32, #tpu.memory_space<vmem>>, vector<384x1xf32>
    %62 = vector.broadcast %61 : vector<384x1xf32> to vector<384x128xf32>
    %63 = arith.mulf %60, %62 : vector<384x128xf32>
    %cst_54 = arith.constant 0.000000e+00 : f32
    %64 = vector.broadcast %cst_54 : f32 to vector<32x128xf32>
    %c0_55 = arith.constant 0 : index
    %c0_56 = arith.constant 0 : index
    %65 = vector.load %arg10[%c0_55, %c0_56] : memref<448x128xf32, #tpu.memory_space<vmem>>, vector<32x128xf32>
    tpu.vector_store %arg10[%c0_55, %c0_56], %64 {strides = array<i32>} : memref<448x128xf32, #tpu.memory_space<vmem>>, vector<32x128xf32>,
    %cst_57 = arith.constant 0.000000e+00 : f32
    %66 = vector.broadcast %cst_57 : f32 to vector<32x128xf32>
    %c416 = arith.constant 416 : index
    %c0_58 = arith.constant 0 : index
    %67 = vector.load %arg10[%c416, %c0_58] : memref<448x128xf32, #tpu.memory_space<vmem>>, vector<32x128xf32>
    tpu.vector_store %arg10[%c416, %c0_58], %66 {strides = array<i32>} : memref<448x128xf32, #tpu.memory_space<vmem>>, vector<32x128xf32>,
    %c32 = arith.constant 32 : index
    %c0_59 = arith.constant 0 : index
    %68 = vector.load %arg10[%c32, %c0_59] : memref<448x128xf32, #tpu.memory_space<vmem>>, vector<384x128xf32>
    tpu.vector_store %arg10[%c32, %c0_59], %63 {strides = array<i32>} : memref<448x128xf32, #tpu.memory_space<vmem>>, vector<384x128xf32>,
    %c7_60 = arith.constant 7 : index
    %c0_61 = arith.constant 0 : index
    %69 = vector.load %arg10[%c7_60, %c0_61] : memref<448x128xf32, #tpu.memory_space<vmem>>, vector<384x128xf32>
    %c0_62 = arith.constant 0 : index
    %c0_63 = arith.constant 0 : index
    %c0_64 = arith.constant 0 : index
    %70 = vector.load %arg6[%c0_62, %c0_63, %c0_64] : memref<9x128x128xf32, #tpu.memory_space<vmem>>, vector<1x128x128xf32>
    %71 = vector.shape_cast %70 : vector<1x128x128xf32> to vector<128x128xf32>
    %cst_65 = arith.constant dense<0.000000e+00> : vector<384x128xf32>
    %72 = tpu.matmul %69, %71, %cst_65 {dimension_numbers = #tpu.dot_dimension_numbers<[1], [0], [0], [1], [0, 0, 1, 1], [], []>} : vector<384x128xf32>, vector<128x128xf32>, vector<384x128xf32> -> vector<384x128xf32>
    %c8_66 = arith.constant 8 : index
    %c0_67 = arith.constant 0 : index
    %73 = vector.load %arg10[%c8_66, %c0_67] : memref<448x128xf32, #tpu.memory_space<vmem>>, vector<384x128xf32>
    %c1_68 = arith.constant 1 : index
    %c0_69 = arith.constant 0 : index
    %c0_70 = arith.constant 0 : index
    %74 = vector.load %arg6[%c1_68, %c0_69, %c0_70] : memref<9x128x128xf32, #tpu.memory_space<vmem>>, vector<1x128x128xf32>
    %75 = vector.shape_cast %74 : vector<1x128x128xf32> to vector<128x128xf32>
    %cst_71 = arith.constant dense<0.000000e+00> : vector<384x128xf32>
    %76 = tpu.matmul %73, %75, %cst_71 {dimension_numbers = #tpu.dot_dimension_numbers<[1], [0], [0], [1], [0, 0, 1, 1], [], []>} : vector<384x128xf32>, vector<128x128xf32>, vector<384x128xf32> -> vector<384x128xf32>
    %77 = arith.addf %72, %76 : vector<384x128xf32>
    %c9 = arith.constant 9 : index
    %c0_72 = arith.constant 0 : index
    %78 = vector.load %arg10[%c9, %c0_72] : memref<448x128xf32, #tpu.memory_space<vmem>>, vector<384x128xf32>
    %c2_73 = arith.constant 2 : index
    %c0_74 = arith.constant 0 : index
    %c0_75 = arith.constant 0 : index
    %79 = vector.load %arg6[%c2_73, %c0_74, %c0_75] : memref<9x128x128xf32, #tpu.memory_space<vmem>>, vector<1x128x128xf32>
    %80 = vector.shape_cast %79 : vector<1x128x128xf32> to vector<128x128xf32>
    %cst_76 = arith.constant dense<0.000000e+00> : vector<384x128xf32>
    %81 = tpu.matmul %78, %80, %cst_76 {dimension_numbers = #tpu.dot_dimension_numbers<[1], [0], [0], [1], [0, 0, 1, 1], [], []>} : vector<384x128xf32>, vector<128x128xf32>, vector<384x128xf32> -> vector<384x128xf32>
    %82 = arith.addf %77, %81 : vector<384x128xf32>
    %c31 = arith.constant 31 : index
    %c0_77 = arith.constant 0 : index
    %83 = vector.load %arg10[%c31, %c0_77] : memref<448x128xf32, #tpu.memory_space<vmem>>, vector<384x128xf32>
    %c3_78 = arith.constant 3 : index
    %c0_79 = arith.constant 0 : index
    %c0_80 = arith.constant 0 : index
    %84 = vector.load %arg6[%c3_78, %c0_79, %c0_80] : memref<9x128x128xf32, #tpu.memory_space<vmem>>, vector<1x128x128xf32>
    %85 = vector.shape_cast %84 : vector<1x128x128xf32> to vector<128x128xf32>
    %cst_81 = arith.constant dense<0.000000e+00> : vector<384x128xf32>
    %86 = tpu.matmul %83, %85, %cst_81 {dimension_numbers = #tpu.dot_dimension_numbers<[1], [0], [0], [1], [0, 0, 1, 1], [], []>} : vector<384x128xf32>, vector<128x128xf32>, vector<384x128xf32> -> vector<384x128xf32>
    %87 = arith.addf %82, %86 : vector<384x128xf32>
    %c32_82 = arith.constant 32 : index
    %c0_83 = arith.constant 0 : index
    %88 = vector.load %arg10[%c32_82, %c0_83] : memref<448x128xf32, #tpu.memory_space<vmem>>, vector<384x128xf32>
    %c4_84 = arith.constant 4 : index
    %c0_85 = arith.constant 0 : index
    %c0_86 = arith.constant 0 : index
    %89 = vector.load %arg6[%c4_84, %c0_85, %c0_86] : memref<9x128x128xf32, #tpu.memory_space<vmem>>, vector<1x128x128xf32>
    %90 = vector.shape_cast %89 : vector<1x128x128xf32> to vector<128x128xf32>
    %cst_87 = arith.constant dense<0.000000e+00> : vector<384x128xf32>
    %91 = tpu.matmul %88, %90, %cst_87 {dimension_numbers = #tpu.dot_dimension_numbers<[1], [0], [0], [1], [0, 0, 1, 1], [], []>} : vector<384x128xf32>, vector<128x128xf32>, vector<384x128xf32> -> vector<384x128xf32>
    %92 = arith.addf %87, %91 : vector<384x128xf32>
    %c33 = arith.constant 33 : index
    %c0_88 = arith.constant 0 : index
    %93 = vector.load %arg10[%c33, %c0_88] : memref<448x128xf32, #tpu.memory_space<vmem>>, vector<384x128xf32>
    %c5_89 = arith.constant 5 : index
    %c0_90 = arith.constant 0 : index
    %c0_91 = arith.constant 0 : index
    %94 = vector.load %arg6[%c5_89, %c0_90, %c0_91] : memref<9x128x128xf32, #tpu.memory_space<vmem>>, vector<1x128x128xf32>
    %95 = vector.shape_cast %94 : vector<1x128x128xf32> to vector<128x128xf32>
    %cst_92 = arith.constant dense<0.000000e+00> : vector<384x128xf32>
    %96 = tpu.matmul %93, %95, %cst_92 {dimension_numbers = #tpu.dot_dimension_numbers<[1], [0], [0], [1], [0, 0, 1, 1], [], []>} : vector<384x128xf32>, vector<128x128xf32>, vector<384x128xf32> -> vector<384x128xf32>
    %97 = arith.addf %92, %96 : vector<384x128xf32>
    %c55 = arith.constant 55 : index
    %c0_93 = arith.constant 0 : index
    %98 = vector.load %arg10[%c55, %c0_93] : memref<448x128xf32, #tpu.memory_space<vmem>>, vector<384x128xf32>
    %c6_94 = arith.constant 6 : index
    %c0_95 = arith.constant 0 : index
    %c0_96 = arith.constant 0 : index
    %99 = vector.load %arg6[%c6_94, %c0_95, %c0_96] : memref<9x128x128xf32, #tpu.memory_space<vmem>>, vector<1x128x128xf32>
    %100 = vector.shape_cast %99 : vector<1x128x128xf32> to vector<128x128xf32>
    %cst_97 = arith.constant dense<0.000000e+00> : vector<384x128xf32>
    %101 = tpu.matmul %98, %100, %cst_97 {dimension_numbers = #tpu.dot_dimension_numbers<[1], [0], [0], [1], [0, 0, 1, 1], [], []>} : vector<384x128xf32>, vector<128x128xf32>, vector<384x128xf32> -> vector<384x128xf32>
    %102 = arith.addf %97, %101 : vector<384x128xf32>
    %c56 = arith.constant 56 : index
    %c0_98 = arith.constant 0 : index
    %103 = vector.load %arg10[%c56, %c0_98] : memref<448x128xf32, #tpu.memory_space<vmem>>, vector<384x128xf32>
    %c7_99 = arith.constant 7 : index
    %c0_100 = arith.constant 0 : index
    %c0_101 = arith.constant 0 : index
    %104 = vector.load %arg6[%c7_99, %c0_100, %c0_101] : memref<9x128x128xf32, #tpu.memory_space<vmem>>, vector<1x128x128xf32>
    %105 = vector.shape_cast %104 : vector<1x128x128xf32> to vector<128x128xf32>
    %cst_102 = arith.constant dense<0.000000e+00> : vector<384x128xf32>
    %106 = tpu.matmul %103, %105, %cst_102 {dimension_numbers = #tpu.dot_dimension_numbers<[1], [0], [0], [1], [0, 0, 1, 1], [], []>} : vector<384x128xf32>, vector<128x128xf32>, vector<384x128xf32> -> vector<384x128xf32>
    %107 = arith.addf %102, %106 : vector<384x128xf32>
    %c57 = arith.constant 57 : index
    %c0_103 = arith.constant 0 : index
    %108 = vector.load %arg10[%c57, %c0_103] : memref<448x128xf32, #tpu.memory_space<vmem>>, vector<384x128xf32>
    %c8_104 = arith.constant 8 : index
    %c0_105 = arith.constant 0 : index
    %c0_106 = arith.constant 0 : index
    %109 = vector.load %arg6[%c8_104, %c0_105, %c0_106] : memref<9x128x128xf32, #tpu.memory_space<vmem>>, vector<1x128x128xf32>
    %110 = vector.shape_cast %109 : vector<1x128x128xf32> to vector<128x128xf32>
    %cst_107 = arith.constant dense<0.000000e+00> : vector<384x128xf32>
    %111 = tpu.matmul %108, %110, %cst_107 {dimension_numbers = #tpu.dot_dimension_numbers<[1], [0], [0], [1], [0, 0, 1, 1], [], []>} : vector<384x128xf32>, vector<128x128xf32>, vector<384x128xf32> -> vector<384x128xf32>
    %112 = arith.addf %107, %111 : vector<384x128xf32>
    %c0_108 = arith.constant 0 : index
    %c0_109 = arith.constant 0 : index
    %113 = vector.load %arg7[%c0_108, %c0_109] : memref<1x128xf32, #tpu.memory_space<vmem>>, vector<1x128xf32>
    %114 = vector.broadcast %113 : vector<1x128xf32> to vector<384x128xf32>
    %115 = arith.mulf %112, %114 : vector<384x128xf32>
    %c0_110 = arith.constant 0 : index
    %c0_111 = arith.constant 0 : index
    %116 = vector.load %arg8[%c0_110, %c0_111] : memref<1x128xf32, #tpu.memory_space<vmem>>, vector<1x128xf32>
    %117 = vector.broadcast %116 : vector<1x128xf32> to vector<384x128xf32>
    %118 = arith.addf %115, %117 : vector<384x128xf32>
    %c0_112 = arith.constant 0 : index
    %c25_113 = arith.constant 25 : index
    %c0_114 = arith.constant 0 : index
    %119 = vector.load %arg1[%c0_112, %c25_113, %c0_114] : memref<1x440x128xf32, #tpu.memory_space<vmem>>, vector<1x384x128xf32>
    %120 = vector.shape_cast %119 : vector<1x384x128xf32> to vector<384x128xf32>
    %121 = arith.addf %118, %120 : vector<384x128xf32>
    %cst_115 = arith.constant 0.000000e+00 : f32
    %122 = vector.broadcast %cst_115 : f32 to vector<384x128xf32>
    %123 = arith.maximumf %121, %122 : vector<384x128xf32>
    %c0_116 = arith.constant 0 : index
    %c0_117 = arith.constant 0 : index
    %c0_118 = arith.constant 0 : index
    %124 = vector.load %arg9[%c0_116, %c0_117, %c0_118] : memref<1x384x128xf32, #tpu.memory_space<vmem>>, vector<1x384x128xf32>
    %125 = vector.shape_cast %124 : vector<1x384x128xf32> to vector<384x128xf32>
    %126 = vector.shape_cast %123 : vector<384x128xf32> to vector<1x384x128xf32>
    tpu.vector_store %arg9[%c0_116, %c0_117, %c0_118], %126 {strides = array<i32>} : memref<1x384x128xf32, #tpu.memory_space<vmem>>, vector<1x384x128xf32>,
    return
  }
  func.func @transform_0(%arg0: i32) -> (i32, i32, i32) {
    %c0_i32 = arith.constant 0 : i32
    %c0_i32_0 = arith.constant 0 : i32
    %c0_i32_1 = arith.constant 0 : i32
    return %arg0, %c0_i32, %c0_i32_0 : i32, i32, i32
  }
  func.func @transform_1(%arg0: i32) -> (i32, i32) {
    %c0_i32 = arith.constant 0 : i32
    %c0_i32_0 = arith.constant 0 : i32
    %c0_i32_1 = arith.constant 0 : i32
    return %c0_i32, %c0_i32_0 : i32, i32
  }
  func.func @transform_2(%arg0: i32) -> (i32, i32, i32) {
    %c0_i32 = arith.constant 0 : i32
    %c0_i32_0 = arith.constant 0 : i32
    %c0_i32_1 = arith.constant 0 : i32
    %c0_i32_2 = arith.constant 0 : i32
    return %c0_i32, %c0_i32_0, %c0_i32_1 : i32, i32, i32
  }
  func.func @transform_3(%arg0: i32) -> (i32, i32) {
    %c0_i32 = arith.constant 0 : i32
    %c0_i32_0 = arith.constant 0 : i32
    %c0_i32_1 = arith.constant 0 : i32
    return %c0_i32, %c0_i32_0 : i32, i32
  }
  func.func @transform_4(%arg0: i32) -> (i32, i32) {
    %c0_i32 = arith.constant 0 : i32
    %c0_i32_0 = arith.constant 0 : i32
    %c0_i32_1 = arith.constant 0 : i32
    return %c0_i32, %c0_i32_0 : i32, i32
  }
  func.func @transform_5(%arg0: i32) -> (i32, i32, i32) {
    %c0_i32 = arith.constant 0 : i32
    %c0_i32_0 = arith.constant 0 : i32
    %c0_i32_1 = arith.constant 0 : i32
    %c0_i32_2 = arith.constant 0 : i32
    return %c0_i32, %c0_i32_0, %c0_i32_1 : i32, i32, i32
  }
  func.func @transform_6(%arg0: i32) -> (i32, i32) {
    %c0_i32 = arith.constant 0 : i32
    %c0_i32_0 = arith.constant 0 : i32
    %c0_i32_1 = arith.constant 0 : i32
    return %c0_i32, %c0_i32_0 : i32, i32
  }
  func.func @transform_7(%arg0: i32) -> (i32, i32) {
    %c0_i32 = arith.constant 0 : i32
    %c0_i32_0 = arith.constant 0 : i32
    %c0_i32_1 = arith.constant 0 : i32
    return %c0_i32, %c0_i32_0 : i32, i32
  }
  func.func @transform_8(%arg0: i32) -> (i32, i32, i32) {
    %c0_i32 = arith.constant 0 : i32
    %c0_i32_0 = arith.constant 0 : i32
    %c0_i32_1 = arith.constant 0 : i32
    return %arg0, %c0_i32, %c0_i32_0 : i32, i32, i32
  }
}

</mosaic_0001>

<llo_original>
// kernel: basic_block_forward.1
$region0: #{basic_block_forward.1}
  #allocation0 [shape = 'u32[]', space=smem, size = 0x4, offset = 0x4, fixed_abs, tag = 'smem constant byte address 0x4 - core index']
  #allocation1 [shape = 'u32[72,128]{1,0:T(1,128)}', space=vmem, size = 0x9000, scoped, tag = 'internal scratch']
  #allocation2 [shape = 'f32[448,128]{1,0:T(8,128)}', space=vmem, size = 0x38000, scoped, tag = 'scratch operand']
  %s0 = inlined_call_operand.vmem [shape: f32[2,440,128], index: 0, kind: input, shape index: {}]
  %s1 = inlined_call_operand.vmem [shape: f32[384,1], index: 1, kind: input, shape index: {}]
  %s2 = inlined_call_operand.vmem [shape: f32[9,128,128], index: 2, kind: input, shape index: {}]
  %s3 = inlined_call_operand.vmem [shape: f32[1,128], index: 3, kind: input, shape index: {}]
  %s4 = inlined_call_operand.vmem [shape: f32[1,128], index: 4, kind: input, shape index: {}]
  %s5 = inlined_call_operand.vmem [shape: f32[9,128,128], index: 5, kind: input, shape index: {}]
  %s6 = inlined_call_operand.vmem [shape: f32[1,128], index: 6, kind: input, shape index: {}]
  %s7 = inlined_call_operand.vmem [shape: f32[1,128], index: 7, kind: input, shape index: {}]
  %s8 = inlined_call_operand.vmem [shape: f32[2,384,128], index: 8, kind: output, shape index: {}]
  %s9 = sld [smem:[#allocation0]]
  $region65: #{basic_block_forward.1} parent=0
    _
  %s11 = ssub.s32 1, %s9
  %s12 = scalar_select 0, %s11, %s9
  loop: start=0, step=1, limit=4
  $region2: #{basic_block_forward.1} parent=0 // loop_pre_header
    _
  $region3: #{basic_block_forward.1} parent=0 // loop_header
    %s14 = sphi 0, %s18
    %p15 = scmp.ge.s32.totalorder %s14, 4
    %s24 = sphi 0, %s26
    %s27 = sphi 0, %s24
    %s28 = sphi 0, %s27
    %s44 = sphi 0, %s28
    %s48 = sphi 0, %s48
    %s50 = sphi 0, %s48
    %s51 = sphi 0, %s50
    %s65 = sphi 0, %s51
    %s69 = sphi 0, %s69
    %s71 = sphi 0, %s69
    %s72 = sphi 0, %s71
    %s86 = sphi 0, %s72
    %s90 = sphi 0, %s90
    %s92 = sphi 0, %s90
    %s93 = sphi 0, %s92
    %s107 = sphi 0, %s93
    %s111 = sphi 0, %s111
    %s113 = sphi 0, %s111
    %s114 = sphi 0, %s113
    %s128 = sphi 0, %s114
    %s132 = sphi 0, %s132
    %s134 = sphi 0, %s132
    %s135 = sphi 0, %s134
    %s149 = sphi 0, %s135
    %s153 = sphi 0, %s153
    %s155 = sphi 0, %s153
    %s156 = sphi 0, %s155
    %s170 = sphi 0, %s156
    %s174 = sphi 0, %s174
    %s176 = sphi 0, %s174
    %s177 = sphi 0, %s176
    %s191 = sphi 0, %s177
    %s197 = sphi 0, %s199
    %s200 = sphi 0, %s197
    %s201 = sphi 0, %s200
    %s217 = sphi 0, %s201
  $region4: #{basic_block_forward.1} parent=0 // loop_header_branch
    %17 = sbr.rel (%p15) target = $region8
  $region5: #{basic_block_forward.1} parent=0 // loop_body
    %s19 = ssub.s32 %s14, 1
    %s20 = ssub.s32 %s14, 2
    %s21 = sadd.s32 %s14, 1
    %s22 = ssub.s32 %s14, %s21
    %p23 = scmp.eq.s32.totalorder %s22, 0
    %s25 = sadd.s32 %s24, 1
    %s26 = scalar_select %p23, %s24, %s25
    %p29 = pneg %p23
    %p30 = scmp.eq.s32.totalorder %s14, 1
    %p31 = por %p29, %p30
    %p32 = scmp.ne.s32.totalorder %s24, %s27
    %p33 = scmp.eq.s32.totalorder %s14, 0
    %p34 = por %p32, %p33
    %p35 = scmp.ne.s32.totalorder %s24, %s27
    %p36 = scmp.eq.s32.totalorder %s19, 1
    %p37 = por %p35, %p36
    %p38 = scmp.ne.s32.totalorder %s27, %s28
    %p39 = scmp.eq.s32.totalorder %s19, 0
    %p40 = por %p38, %p39
    %p41 = scmp.ne.s32.totalorder %s27, %s28
    %p42 = scmp.eq.s32.totalorder %s20, 1
    %p43 = por %p41, %p42
    %p45 = scmp.ne.s32.totalorder %s28, %s44
    %p46 = scmp.eq.s32.totalorder %s20, 0
    %p47 = por %p45, %p46
    %s49 = sadd.s32 %s48, 1
    %p52 = scmp.eq.s32.totalorder %s14, 1
    %p53 = scmp.ne.s32.totalorder %s48, %s50
    %p54 = scmp.eq.s32.totalorder %s14, 0
    %p55 = por %p53, %p54
    %p56 = scmp.ne.s32.totalorder %s48, %s50
    %p57 = scmp.eq.s32.totalorder %s19, 1
    %p58 = por %p56, %p57
    %p59 = scmp.ne.s32.totalorder %s50, %s51
    %p60 = scmp.eq.s32.totalorder %s19, 0
    %p61 = por %p59, %p60
    %p62 = scmp.ne.s32.totalorder %s50, %s51
    %p63 = scmp.eq.s32.totalorder %s20, 1
    %p64 = por %p62, %p63
    %p66 = scmp.ne.s32.totalorder %s51, %s65
    %p67 = scmp.eq.s32.totalorder %s20, 0
    %p68 = por %p66, %p67
    %s70 = sadd.s32 %s69, 1
    %p73 = scmp.eq.s32.totalorder %s14, 1
    %p74 = scmp.ne.s32.totalorder %s69, %s71
    %p75 = scmp.eq.s32.totalorder %s14, 0
    %p76 = por %p74, %p75
    %p77 = scmp.ne.s32.totalorder %s69, %s71
    %p78 = scmp.eq.s32.totalorder %s19, 1
    %p79 = por %p77, %p78
    %p80 = scmp.ne.s32.totalorder %s71, %s72
    %p81 = scmp.eq.s32.totalorder %s19, 0
    %p82 = por %p80, %p81
    %p83 = scmp.ne.s32.totalorder %s71, %s72
    %p84 = scmp.eq.s32.totalorder %s20, 1
    %p85 = por %p83, %p84
    %p87 = scmp.ne.s32.totalorder %s72, %s86
    %p88 = scmp.eq.s32.totalorder %s20, 0
    %p89 = por %p87, %p88
    %s91 = sadd.s32 %s90, 1
    %p94 = scmp.eq.s32.totalorder %s14, 1
    %p95 = scmp.ne.s32.totalorder %s90, %s92
    %p96 = scmp.eq.s32.totalorder %s14, 0
    %p97 = por %p95, %p96
    %p98 = scmp.ne.s32.totalorder %s90, %s92
    %p99 = scmp.eq.s32.totalorder %s19, 1
    %p100 = por %p98, %p99
    %p101 = scmp.ne.s32.totalorder %s92, %s93
    %p102 = scmp.eq.s32.totalorder %s19, 0
    %p103 = por %p101, %p102
    %p104 = scmp.ne.s32.totalorder %s92, %s93
    %p105 = scmp.eq.s32.totalorder %s20, 1
    %p106 = por %p104, %p105
    %p108 = scmp.ne.s32.totalorder %s93, %s107
    %p109 = scmp.eq.s32.totalorder %s20, 0
    %p110 = por %p108, %p109
    %s112 = sadd.s32 %s111, 1
    %p115 = scmp.eq.s32.totalorder %s14, 1
    %p116 = scmp.ne.s32.totalorder %s111, %s113
    %p117 = scmp.eq.s32.totalorder %s14, 0
    %p118 = por %p116, %p117
    %p119 = scmp.ne.s32.totalorder %s111, %s113
    %p120 = scmp.eq.s32.totalorder %s19, 1
    %p121 = por %p119, %p120
    %p122 = scmp.ne.s32.totalorder %s113, %s114
    %p123 = scmp.eq.s32.totalorder %s19, 0
    %p124 = por %p122, %p123
    %p125 = scmp.ne.s32.totalorder %s113, %s114
    %p126 = scmp.eq.s32.totalorder %s20, 1
    %p127 = por %p125, %p126
    %p129 = scmp.ne.s32.totalorder %s114, %s128
    %p130 = scmp.eq.s32.totalorder %s20, 0
    %p131 = por %p129, %p130
    %s133 = sadd.s32 %s132, 1
    %p136 = scmp.eq.s32.totalorder %s14, 1
    %p137 = scmp.ne.s32.totalorder %s132, %s134
    %p138 = scmp.eq.s32.totalorder %s14, 0
    %p139 = por %p137, %p138
    %p140 = scmp.ne.s32.totalorder %s132, %s134
    %p141 = scmp.eq.s32.totalorder %s19, 1
    %p142 = por %p140, %p141
    %p143 = scmp.ne.s32.totalorder %s134, %s135
    %p144 = scmp.eq.s32.totalorder %s19, 0
    %p145 = por %p143, %p144
    %p146 = scmp.ne.s32.totalorder %s134, %s135
    %p147 = scmp.eq.s32.totalorder %s20, 1
    %p148 = por %p146, %p147
    %p150 = scmp.ne.s32.totalorder %s135, %s149
    %p151 = scmp.eq.s32.totalorder %s20, 0
    %p152 = por %p150, %p151
    %s154 = sadd.s32 %s153, 1
    %p157 = scmp.eq.s32.totalorder %s14, 1
    %p158 = scmp.ne.s32.totalorder %s153, %s155
    %p159 = scmp.eq.s32.totalorder %s14, 0
    %p160 = por %p158, %p159
    %p161 = scmp.ne.s32.totalorder %s153, %s155
    %p162 = scmp.eq.s32.totalorder %s19, 1
    %p163 = por %p161, %p162
    %p164 = scmp.ne.s32.totalorder %s155, %s156
    %p165 = scmp.eq.s32.totalorder %s19, 0
    %p166 = por %p164, %p165
    %p167 = scmp.ne.s32.totalorder %s155, %s156
    %p168 = scmp.eq.s32.totalorder %s20, 1
    %p169 = por %p167, %p168
    %p171 = scmp.ne.s32.totalorder %s156, %s170
    %p172 = scmp.eq.s32.totalorder %s20, 0
    %p173 = por %p171, %p172
    %s175 = sadd.s32 %s174, 1
    %p178 = scmp.eq.s32.totalorder %s14, 1
    %p179 = scmp.ne.s32.totalorder %s174, %s176
    %p180 = scmp.eq.s32.totalorder %s14, 0
    %p181 = por %p179, %p180
    %p182 = scmp.ne.s32.totalorder %s174, %s176
    %p183 = scmp.eq.s32.totalorder %s19, 1
    %p184 = por %p182, %p183
    %p185 = scmp.ne.s32.totalorder %s176, %s177
    %p186 = scmp.eq.s32.totalorder %s19, 0
    %p187 = por %p185, %p186
    %p188 = scmp.ne.s32.totalorder %s176, %s177
    %p189 = scmp.eq.s32.totalorder %s20, 1
    %p190 = por %p188, %p189
    %p192 = scmp.ne.s32.totalorder %s177, %s191
    %p193 = scmp.eq.s32.totalorder %s20, 0
    %p194 = por %p192, %p193
    %s195 = ssub.s32 %s14, %s21
    %p196 = scmp.eq.s32.totalorder %s195, 0
    %s198 = sadd.s32 %s197, 1
    %s199 = scalar_select %p196, %s197, %s198
    %p202 = pneg %p196
    %p203 = scmp.eq.s32.totalorder %s14, 1
    %p204 = por %p202, %p203
    %p205 = scmp.ne.s32.totalorder %s197, %s200
    %p206 = scmp.eq.s32.totalorder %s14, 0
    %p207 = por %p205, %p206
    %p208 = scmp.ne.s32.totalorder %s197, %s200
    %p209 = scmp.eq.s32.totalorder %s19, 1
    %p210 = por %p208, %p209
    %p211 = scmp.ne.s32.totalorder %s200, %s201
    %p212 = scmp.eq.s32.totalorder %s19, 0
    %p213 = por %p211, %p212
    %p214 = scmp.ne.s32.totalorder %s200, %s201
    %p215 = scmp.eq.s32.totalorder %s20, 1
    %p216 = por %p214, %p215
    %p218 = scmp.ne.s32.totalorder %s201, %s217
    %p219 = scmp.eq.s32.totalorder %s20, 0
    %p220 = por %p218, %p219
    %p221 = scmp.le.s32.totalorder 1, %s14
    %p222 = scmp.lt.s32.totalorder %s14, 3
    %p223 = pnand %p221, %p222
    %p224 = pneg %p223
    // Predicated region
    $region9: #{basic_block_forward.1} parent=5 // pred_check
      _
    $region10: #{basic_block_forward.1} parent=5 // pred_check_branch
      %226 = sbr.rel (%p223) target = $region12
    $region11: #{basic_block_forward.1} parent=5 // pred_region
      %s227 = ssub.s32 %s14, 1
      // Predicated region
      $region13: #{basic_block_forward.1} parent=11 // pred_check
        %p228 = pneg %p61
      $region14: #{basic_block_forward.1} parent=11 // pred_check_branch
        %230 = sbr.rel (%p228) target = $region16
      $region15: #{basic_block_forward.1} parent=11 // pred_region
        _
      $region16: #{basic_block_forward.1} parent=11 // pred_fallthru
        _
      // Predicated region
      $region17: #{basic_block_forward.1} parent=11 // pred_check
        %p231 = pneg %p82
      $region18: #{basic_block_forward.1} parent=11 // pred_check_branch
        %233 = sbr.rel (%p231) target = $region20
      $region19: #{basic_block_forward.1} parent=11 // pred_region
        _
      $region20: #{basic_block_forward.1} parent=11 // pred_fallthru
        _
      // Predicated region
      $region21: #{basic_block_forward.1} parent=11 // pred_check
        %p234 = pneg %p103
      $region22: #{basic_block_forward.1} parent=11 // pred_check_branch
        %236 = sbr.rel (%p234) target = $region24
      $region23: #{basic_block_forward.1} parent=11 // pred_region
        _
      $region24: #{basic_block_forward.1} parent=11 // pred_fallthru
        _
      // Predicated region
      $region25: #{basic_block_forward.1} parent=11 // pred_check
        %p237 = pneg %p124
      $region26: #{basic_block_forward.1} parent=11 // pred_check_branch
        %239 = sbr.rel (%p237) target = $region28
      $region27: #{basic_block_forward.1} parent=11 // pred_region
        _
      $region28: #{basic_block_forward.1} parent=11 // pred_fallthru
        _
      // Predicated region
      $region29: #{basic_block_forward.1} parent=11 // pred_check
        %p240 = pneg %p145
      $region30: #{basic_block_forward.1} parent=11 // pred_check_branch
        %242 = sbr.rel (%p240) target = $region32
      $region31: #{basic_block_forward.1} parent=11 // pred_region
        _
      $region32: #{basic_block_forward.1} parent=11 // pred_fallthru
        _
      // Predicated region
      $region33: #{basic_block_forward.1} parent=11 // pred_check
        %p243 = pneg %p166
      $region34: #{basic_block_forward.1} parent=11 // pred_check_branch
        %245 = sbr.rel (%p243) target = $region36
      $region35: #{basic_block_forward.1} parent=11 // pred_region
        _
      $region36: #{basic_block_forward.1} parent=11 // pred_fallthru
        _
      // Predicated region
      $region37: #{basic_block_forward.1} parent=11 // pred_check
        %p246 = pneg %p187
      $region38: #{basic_block_forward.1} parent=11 // pred_check_branch
        %248 = sbr.rel (%p246) target = $region40
      $region39: #{basic_block_forward.1} parent=11 // pred_region
        _
      $region40: #{basic_block_forward.1} parent=11 // pred_fallthru
        _
    $region12: #{basic_block_forward.1} parent=5 // pred_fallthru
      _
    %p249 = scmp.lt.s32.totalorder %s14, 2
    // Predicated region
    $region41: #{basic_block_forward.1} parent=5 // pred_check
      %p250 = pneg %p249
    $region42: #{basic_block_forward.1} parent=5 // pred_check_branch
      %252 = sbr.rel (%p250) target = $region44
    $region43: #{basic_block_forward.1} parent=5 // pred_region
      // Predicated region
      $region45: #{basic_block_forward.1} parent=43 // pred_check
        %p253 = pneg %p34
      $region46: #{basic_block_forward.1} parent=43 // pred_check_branch
        %255 = sbr.rel (%p253) target = $region48
      $region47: #{basic_block_forward.1} parent=43 // pred_region
        %p256 = scmp.lt.s32.totalorder %s14, 1
        %s257 = scalar_select %p256, %s14, 1
        %s258 = smul.addr %s257, 55
        %s259 = smul.addr %s258, 8
        %s260 = scalar_lea.vmem %s0, %s259
      $region48: #{basic_block_forward.1} parent=43 // pred_fallthru
        _
    $region44: #{basic_block_forward.1} parent=5 // pred_fallthru
      _
    %p261 = scmp.le.s32.totalorder 1, %s14
    %p262 = scmp.lt.s32.totalorder %s14, 3
    %p263 = pnand %p261, %p262
    %p264 = pneg %p263
    // Predicated region
    $region49: #{basic_block_forward.1} parent=5 // pred_check
      _
    $region50: #{basic_block_forward.1} parent=5 // pred_check_branch
      %266 = sbr.rel (%p263) target = $region52
    $region51: #{basic_block_forward.1} parent=5 // pred_region
      %s267 = ssub.s32 %s14, 1
      %p268 = scmp.lt.s32.totalorder %s19, 1
      %s269 = scalar_select %p268, %s19, 1
      %s270 = smul.addr %s269, 55
      %s271 = smul.addr %s270, 8
      %s272 = scalar_lea.vmem %s0, %s271
      %p273 = pneg %p40
      %p274 = pneg %p37
      %p275 = pneg %p61
      %p276 = pneg %p58
      %p277 = pneg %p82
      %p278 = pneg %p79
      %p279 = pneg %p103
      %p280 = pneg %p100
      %p281 = pneg %p124
      %p282 = pneg %p121
      %p283 = pneg %p145
      %p284 = pneg %p142
      %p285 = pneg %p166
      %p286 = pneg %p163
      %p287 = pneg %p187
      %p288 = pneg %p184
      %p289 = pneg %p213
      %p290 = pneg %p210
      %p291 = scmp.lt.s32.totalorder %s19, 1
      %s292 = scalar_select %p291, %s19, 1
      %s293 = smul.addr %s292, 48
      %s294 = smul.addr %s293, 8
      %s295 = scalar_lea.vmem %s8, %s294
      %p296 = scmp.lt.s32.totalorder %s19, 1
      %s297 = scalar_select %p296, %s19, 1
      %s298 = smul.addr %s297, 55
      %s299 = smul.addr %s298, 8
      %s300 = scalar_lea.vmem %s0, %s299
      %p301 = scmp.lt.s32.totalorder %s19, 1
      %s302 = scalar_select %p301, %s19, 1
      %s303 = smul.addr %s302, 48
      %s304 = smul.addr %s303, 8
      %s305 = scalar_lea.vmem %s8, %s304
      %v306 = vld [vmem:[%s300] sm:$0xff]
      %v307 = vld [vmem:[%s300 + $0x8] sm:$0xff]
      %v308 = vld [vmem:[%s300 + $0x10] sm:$0xff]
      %v309 = vld [vmem:[%s300 + $0x18] sm:$0xff]
      %v310 = vld [vmem:[%s300 + $0x20] sm:$0xff]
      %v311 = vld [vmem:[%s300 + $0x28] sm:$0xff]
      %v312 = vld [vmem:[%s300 + $0x30] sm:$0xff]
      %v313 = vld [vmem:[%s300 + $0x38] sm:$0xff]
      %v314 = vld [vmem:[%s300 + $0x40] sm:$0xff]
      %v315 = vld [vmem:[%s300 + $0x48] sm:$0xff]
      %v316 = vld [vmem:[%s300 + $0x50] sm:$0xff]
      %v317 = vld [vmem:[%s300 + $0x58] sm:$0xff]
      %v318 = vld [vmem:[%s300 + $0x60] sm:$0xff]
      %v319 = vld [vmem:[%s300 + $0x68] sm:$0xff]
      %v320 = vld [vmem:[%s300 + $0x70] sm:$0xff]
      %v321 = vld [vmem:[%s300 + $0x78] sm:$0xff]
      %v322 = vld [vmem:[%s300 + $0x80] sm:$0xff]
      %v323 = vld [vmem:[%s300 + $0x88] sm:$0xff]
      %v324 = vld [vmem:[%s300 + $0x90] sm:$0xff]
      %v325 = vld [vmem:[%s300 + $0x98] sm:$0xff]
      %v326 = vld [vmem:[%s300 + $0xa0] sm:$0xff]
      %v327 = vld [vmem:[%s300 + $0xa8] sm:$0xff]
      %v328 = vld [vmem:[%s300 + $0xb0] sm:$0xff]
      %v329 = vld [vmem:[%s300 + $0xb8] sm:$0xff]
      %v330 = vld [vmem:[%s300 + $0xc0] sm:$0xff]
      %v331 = vld [vmem:[%s300 + $0xc8] sm:$0xff]
      %v332 = vld [vmem:[%s300 + $0xd0] sm:$0xff]
      %v333 = vld [vmem:[%s300 + $0xd8] sm:$0xff]
      %v334 = vld [vmem:[%s300 + $0xe0] sm:$0xff]
      %v335 = vld [vmem:[%s300 + $0xe8] sm:$0xff]
      %v336 = vld [vmem:[%s300 + $0xf0] sm:$0xff]
      %v337 = vld [vmem:[%s300 + $0xf8] sm:$0xff]
      %v338 = vld [vmem:[%s300 + $0x100] sm:$0xff]
      %v339 = vld [vmem:[%s300 + $0x108] sm:$0xff]
      %v340 = vld [vmem:[%s300 + $0x110] sm:$0xff]
      %v341 = vld [vmem:[%s300 + $0x118] sm:$0xff]
      %v342 = vld [vmem:[%s300 + $0x120] sm:$0xff]
      %v343 = vld [vmem:[%s300 + $0x128] sm:$0xff]
      %v344 = vld [vmem:[%s300 + $0x130] sm:$0xff]
      %v345 = vld [vmem:[%s300 + $0x138] sm:$0xff]
      %v346 = vld [vmem:[%s300 + $0x140] sm:$0xff]
      %v347 = vld [vmem:[%s300 + $0x148] sm:$0xff]
      %v348 = vld [vmem:[%s300 + $0x150] sm:$0xff]
      %v349 = vld [vmem:[%s300 + $0x158] sm:$0xff]
      %v350 = vld [vmem:[%s300 + $0x160] sm:$0xff]
      %v351 = vld [vmem:[%s300 + $0x168] sm:$0xff]
      %v352 = vld [vmem:[%s300 + $0x170] sm:$0xff]
      %v353 = vld [vmem:[%s300 + $0x178] sm:$0xff]
      %v354 = vld [vmem:[%s2] sm:$0xff]
      %v355 = vld [vmem:[%s2 + $0x8] sm:$0xff]
      %v356 = vld [vmem:[%s2 + $0x10] sm:$0xff]
      %v357 = vld [vmem:[%s2 + $0x18] sm:$0xff]
      %v358 = vld [vmem:[%s2 + $0x20] sm:$0xff]
      %v359 = vld [vmem:[%s2 + $0x28] sm:$0xff]
      %v360 = vld [vmem:[%s2 + $0x30] sm:$0xff]
      %v361 = vld [vmem:[%s2 + $0x38] sm:$0xff]
      %v362 = vld [vmem:[%s2 + $0x40] sm:$0xff]
      %v363 = vld [vmem:[%s2 + $0x48] sm:$0xff]
      %v364 = vld [vmem:[%s2 + $0x50] sm:$0xff]
      %v365 = vld [vmem:[%s2 + $0x58] sm:$0xff]
      %v366 = vld [vmem:[%s2 + $0x60] sm:$0xff]
      %v367 = vld [vmem:[%s2 + $0x68] sm:$0xff]
      %v368 = vld [vmem:[%s2 + $0x70] sm:$0xff]
      %v369 = vld [vmem:[%s2 + $0x78] sm:$0xff]
      %v370 = vld [vmem:[%s300 + $0x1] sm:$0xff]
      %v371 = vld [vmem:[%s300 + $0x9] sm:$0xff]
      %v372 = vld [vmem:[%s300 + $0x11] sm:$0xff]
      %v373 = vld [vmem:[%s300 + $0x19] sm:$0xff]
      %v374 = vld [vmem:[%s300 + $0x21] sm:$0xff]
      %v375 = vld [vmem:[%s300 + $0x29] sm:$0xff]
      %v376 = vld [vmem:[%s300 + $0x31] sm:$0xff]
      %v377 = vld [vmem:[%s300 + $0x39] sm:$0xff]
      %v378 = vld [vmem:[%s300 + $0x41] sm:$0xff]
      %v379 = vld [vmem:[%s300 + $0x49] sm:$0xff]
      %v380 = vld [vmem:[%s300 + $0x51] sm:$0xff]
      %v381 = vld [vmem:[%s300 + $0x59] sm:$0xff]
      %v382 = vld [vmem:[%s300 + $0x61] sm:$0xff]
      %v383 = vld [vmem:[%s300 + $0x69] sm:$0xff]
      %v384 = vld [vmem:[%s300 + $0x71] sm:$0xff]
      %v385 = vld [vmem:[%s300 + $0x79] sm:$0xff]
      %v386 = vld [vmem:[%s300 + $0x81] sm:$0xff]
      %v387 = vld [vmem:[%s300 + $0x89] sm:$0xff]
      %v388 = vld [vmem:[%s300 + $0x91] sm:$0xff]
      %v389 = vld [vmem:[%s300 + $0x99] sm:$0xff]
      %v390 = vld [vmem:[%s300 + $0xa1] sm:$0xff]
      %v391 = vld [vmem:[%s300 + $0xa9] sm:$0xff]
      %v392 = vld [vmem:[%s300 + $0xb1] sm:$0xff]
      %v393 = vld [vmem:[%s300 + $0xb9] sm:$0xff]
      %v394 = vld [vmem:[%s300 + $0xc1] sm:$0xff]
      %v395 = vld [vmem:[%s300 + $0xc9] sm:$0xff]
      %v396 = vld [vmem:[%s300 + $0xd1] sm:$0xff]
      %v397 = vld [vmem:[%s300 + $0xd9] sm:$0xff]
      %v398 = vld [vmem:[%s300 + $0xe1] sm:$0xff]
      %v399 = vld [vmem:[%s300 + $0xe9] sm:$0xff]
      %v400 = vld [vmem:[%s300 + $0xf1] sm:$0xff]
      %v401 = vld [vmem:[%s300 + $0xf9] sm:$0xff]
      %v402 = vld [vmem:[%s300 + $0x101] sm:$0xff]
      %v403 = vld [vmem:[%s300 + $0x109] sm:$0xff]
      %v404 = vld [vmem:[%s300 + $0x111] sm:$0xff]
      %v405 = vld [vmem:[%s300 + $0x119] sm:$0xff]
      %v406 = vld [vmem:[%s300 + $0x121] sm:$0xff]
      %v407 = vld [vmem:[%s300 + $0x129] sm:$0xff]
      %v408 = vld [vmem:[%s300 + $0x131] sm:$0xff]
      %v409 = vld [vmem:[%s300 + $0x139] sm:$0xff]
      %v410 = vld [vmem:[%s300 + $0x141] sm:$0xff]
      %v411 = vld [vmem:[%s300 + $0x149] sm:$0xff]
      %v412 = vld [vmem:[%s300 + $0x151] sm:$0xff]
      %v413 = vld [vmem:[%s300 + $0x159] sm:$0xff]
      %v414 = vld [vmem:[%s300 + $0x161] sm:$0xff]
      %v415 = vld [vmem:[%s300 + $0x169] sm:$0xff]
      %v416 = vld [vmem:[%s300 + $0x171] sm:$0xff]
      %v417 = vld [vmem:[%s300 + $0x179] sm:$0xff]
      %s418 = scalar_lea.vmem %s2, 128
      %v419 = vld [vmem:[%s418] sm:$0xff]
      %v420 = vld [vmem:[%s418 + $0x8] sm:$0xff]
      %v421 = vld [vmem:[%s418 + $0x10] sm:$0xff]
      %v422 = vld [vmem:[%s418 + $0x18] sm:$0xff]
      %v423 = vld [vmem:[%s418 + $0x20] sm:$0xff]
      %v424 = vld [vmem:[%s418 + $0x28] sm:$0xff]
      %v425 = vld [vmem:[%s418 + $0x30] sm:$0xff]
      %v426 = vld [vmem:[%s418 + $0x38] sm:$0xff]
      %v427 = vld [vmem:[%s418 + $0x40] sm:$0xff]
      %v428 = vld [vmem:[%s418 + $0x48] sm:$0xff]
      %v429 = vld [vmem:[%s418 + $0x50] sm:$0xff]
      %v430 = vld [vmem:[%s418 + $0x58] sm:$0xff]
      %v431 = vld [vmem:[%s418 + $0x60] sm:$0xff]
      %v432 = vld [vmem:[%s418 + $0x68] sm:$0xff]
      %v433 = vld [vmem:[%s418 + $0x70] sm:$0xff]
      %v434 = vld [vmem:[%s418 + $0x78] sm:$0xff]
      %435 = vmatpush.msra.mxu0 %v434
      %436 = vmatpush.msra.mxu0 %v433
      %437 = vmatpush.msra.mxu0 %v432
      %438 = vmatpush.msra.mxu0 %v431
      %439 = vmatpush.msra.mxu0 %v430
      %440 = vmatpush.msra.mxu0 %v429
      %441 = vmatpush.msra.mxu0 %v428
      %442 = vmatpush.msra.mxu0 %v427
      %443 = vmatpush.msra.mxu0 %v426
      %444 = vmatpush.msra.mxu0 %v425
      %445 = vmatpush.msra.mxu0 %v424
      %446 = vmatpush.msra.mxu0 %v423
      %447 = vmatpush.msra.mxu0 %v422
      %448 = vmatpush.msra.mxu0 %v421
      %449 = vmatpush.msra.mxu0 %v420
      %450 = vmatpush.msra.mxu0 %v419
      %451 = vmatmul.f32.gmra.mxu0 %v370
      %v452 = vpop.f32.mrf.mxu0
      %v453 = vadd.f32 0.0, %v452
      %454 = vmatmul.f32.gmra.mxu0 %v371
      %v455 = vpop.f32.mrf.mxu0
      %v456 = vadd.f32 0.0, %v455
      %457 = vmatmul.f32.gmra.mxu0 %v372
      %v458 = vpop.f32.mrf.mxu0
      %v459 = vadd.f32 0.0, %v458
      %460 = vmatmul.f32.gmra.mxu0 %v373
      %v461 = vpop.f32.mrf.mxu0
      %v462 = vadd.f32 0.0, %v461
      %463 = vmatmul.f32.gmra.mxu0 %v374
      %v464 = vpop.f32.mrf.mxu0
      %v465 = vadd.f32 0.0, %v464
      %466 = vmatmul.f32.gmra.mxu0 %v375
      %v467 = vpop.f32.mrf.mxu0
      %v468 = vadd.f32 0.0, %v467
      %469 = vmatmul.f32.gmra.mxu0 %v376
      %v470 = vpop.f32.mrf.mxu0
      %v471 = vadd.f32 0.0, %v470
      %472 = vmatmul.f32.gmra.mxu0 %v377
      %v473 = vpop.f32.mrf.mxu0
      %v474 = vadd.f32 0.0, %v473
      %475 = vmatmul.f32.gmra.mxu0 %v378
      %v476 = vpop.f32.mrf.mxu0
      %v477 = vadd.f32 0.0, %v476
      %478 = vmatmul.f32.gmra.mxu0 %v379
      %v479 = vpop.f32.mrf.mxu0
      %v480 = vadd.f32 0.0, %v479
      %481 = vmatmul.f32.gmra.mxu0 %v380
      %v482 = vpop.f32.mrf.mxu0
      %v483 = vadd.f32 0.0, %v482
      %484 = vmatmul.f32.gmra.mxu0 %v381
      %v485 = vpop.f32.mrf.mxu0
      %v486 = vadd.f32 0.0, %v485
      %487 = vmatmul.f32.gmra.mxu0 %v382
      %v488 = vpop.f32.mrf.mxu0
      %v489 = vadd.f32 0.0, %v488
      %490 = vmatmul.f32.gmra.mxu0 %v383
      %v491 = vpop.f32.mrf.mxu0
      %v492 = vadd.f32 0.0, %v491
      %493 = vmatmul.f32.gmra.mxu0 %v384
      %v494 = vpop.f32.mrf.mxu0
      %v495 = vadd.f32 0.0, %v494
      %496 = vmatmul.f32.gmra.mxu0 %v385
      %v497 = vpop.f32.mrf.mxu0
      %v498 = vadd.f32 0.0, %v497
      %499 = vmatmul.f32.gmra.mxu0 %v386
      %v500 = vpop.f32.mrf.mxu0
      %v501 = vadd.f32 0.0, %v500
      %502 = vmatmul.f32.gmra.mxu0 %v387
      %v503 = vpop.f32.mrf.mxu0
      %v504 = vadd.f32 0.0, %v503
      %505 = vmatmul.f32.gmra.mxu0 %v388
      %v506 = vpop.f32.mrf.mxu0
      %v507 = vadd.f32 0.0, %v506
      %508 = vmatmul.f32.gmra.mxu0 %v389
      %v509 = vpop.f32.mrf.mxu0
      %v510 = vadd.f32 0.0, %v509
      %511 = vmatmul.f32.gmra.mxu0 %v390
      %v512 = vpop.f32.mrf.mxu0
      %v513 = vadd.f32 0.0, %v512
      %514 = vmatmul.f32.gmra.mxu0 %v391
      %v515 = vpop.f32.mrf.mxu0
      %v516 = vadd.f32 0.0, %v515
      %517 = vmatmul.f32.gmra.mxu0 %v392
      %v518 = vpop.f32.mrf.mxu0
      %v519 = vadd.f32 0.0, %v518
      %520 = vmatmul.f32.gmra.mxu0 %v393
      %v521 = vpop.f32.mrf.mxu0
      %v522 = vadd.f32 0.0, %v521
      %523 = vmatmul.f32.gmra.mxu0 %v394
      %v524 = vpop.f32.mrf.mxu0
      %v525 = vadd.f32 0.0, %v524
      %526 = vmatmul.f32.gmra.mxu0 %v395
      %v527 = vpop.f32.mrf.mxu0
      %v528 = vadd.f32 0.0, %v527
      %529 = vmatmul.f32.gmra.mxu0 %v396
      %v530 = vpop.f32.mrf.mxu0
      %v531 = vadd.f32 0.0, %v530
      %532 = vmatmul.f32.gmra.mxu0 %v397
      %v533 = vpop.f32.mrf.mxu0
      %v534 = vadd.f32 0.0, %v533
      %535 = vmatmul.f32.gmra.mxu0 %v398
      %v536 = vpop.f32.mrf.mxu0
      %v537 = vadd.f32 0.0, %v536
      %538 = vmatmul.f32.gmra.mxu0 %v399
      %v539 = vpop.f32.mrf.mxu0
      %v540 = vadd.f32 0.0, %v539
      %541 = vmatmul.f32.gmra.mxu0 %v400
      %v542 = vpop.f32.mrf.mxu0
      %v543 = vadd.f32 0.0, %v542
      %544 = vmatmul.f32.gmra.mxu0 %v401
      %v545 = vpop.f32.mrf.mxu0
      %v546 = vadd.f32 0.0, %v545
      %547 = vmatmul.f32.gmra.mxu0 %v402
      %v548 = vpop.f32.mrf.mxu0
      %v549 = vadd.f32 0.0, %v548
      %550 = vmatmul.f32.gmra.mxu0 %v403
      %v551 = vpop.f32.mrf.mxu0
      %v552 = vadd.f32 0.0, %v551
      %553 = vmatmul.f32.gmra.mxu0 %v404
      %v554 = vpop.f32.mrf.mxu0
      %v555 = vadd.f32 0.0, %v554
      %556 = vmatmul.f32.gmra.mxu0 %v405
      %v557 = vpop.f32.mrf.mxu0
      %v558 = vadd.f32 0.0, %v557
      %559 = vmatmul.f32.gmra.mxu0 %v406
      %v560 = vpop.f32.mrf.mxu0
      %v561 = vadd.f32 0.0, %v560
      %562 = vmatmul.f32.gmra.mxu0 %v407
      %v563 = vpop.f32.mrf.mxu0
      %v564 = vadd.f32 0.0, %v563
      %565 = vmatmul.f32.gmra.mxu0 %v408
      %v566 = vpop.f32.mrf.mxu0
      %v567 = vadd.f32 0.0, %v566
      %568 = vmatmul.f32.gmra.mxu0 %v409
      %v569 = vpop.f32.mrf.mxu0
      %v570 = vadd.f32 0.0, %v569
      %571 = vmatmul.f32.gmra.mxu0 %v410
      %v572 = vpop.f32.mrf.mxu0
      %v573 = vadd.f32 0.0, %v572
      %574 = vmatmul.f32.gmra.mxu0 %v411
      %v575 = vpop.f32.mrf.mxu0
      %v576 = vadd.f32 0.0, %v575
      %577 = vmatmul.f32.gmra.mxu0 %v412
      %v578 = vpop.f32.mrf.mxu0
      %v579 = vadd.f32 0.0, %v578
      %580 = vmatmul.f32.gmra.mxu0 %v413
      %v581 = vpop.f32.mrf.mxu0
      %v582 = vadd.f32 0.0, %v581
      %583 = vmatmul.f32.gmra.mxu0 %v414
      %v584 = vpop.f32.mrf.mxu0
      %v585 = vadd.f32 0.0, %v584
      %586 = vmatmul.f32.gmra.mxu0 %v415
      %v587 = vpop.f32.mrf.mxu0
      %v588 = vadd.f32 0.0, %v587
      %589 = vmatmul.f32.gmra.mxu0 %v416
      %v590 = vpop.f32.mrf.mxu0
      %v591 = vadd.f32 0.0, %v590
      %592 = vmatmul.f32.gmra.mxu0 %v417
      %v593 = vpop.f32.mrf.mxu0
      %v594 = vadd.f32 0.0, %v593
      %595 = vdwg.mxu0
      %596 = vmatpush.msra.mxu0 %v369
      %597 = vmatpush.msra.mxu0 %v368
      %598 = vmatpush.msra.mxu0 %v367
      %599 = vmatpush.msra.mxu0 %v366
      %600 = vmatpush.msra.mxu0 %v365
      %601 = vmatpush.msra.mxu0 %v364
      %602 = vmatpush.msra.mxu0 %v363
      %603 = vmatpush.msra.mxu0 %v362
      %604 = vmatpush.msra.mxu0 %v361
      %605 = vmatpush.msra.mxu0 %v360
      %606 = vmatpush.msra.mxu0 %v359
      %607 = vmatpush.msra.mxu0 %v358
      %608 = vmatpush.msra.mxu0 %v357
      %609 = vmatpush.msra.mxu0 %v356
      %610 = vmatpush.msra.mxu0 %v355
      %611 = vmatpush.msra.mxu0 %v354
      %612 = vmatmul.f32.gmra.mxu0 %v306
      %v613 = vpop.f32.mrf.mxu0
      %v614 = vadd.f32 %v453, %v613
      %615 = vmatmul.f32.gmra.mxu0 %v307
      %v616 = vpop.f32.mrf.mxu0
      %v617 = vadd.f32 %v456, %v616
      %618 = vmatmul.f32.gmra.mxu0 %v308
      %v619 = vpop.f32.mrf.mxu0
      %v620 = vadd.f32 %v459, %v619
      %621 = vmatmul.f32.gmra.mxu0 %v309
      %v622 = vpop.f32.mrf.mxu0
      %v623 = vadd.f32 %v462, %v622
      %624 = vmatmul.f32.gmra.mxu0 %v310
      %v625 = vpop.f32.mrf.mxu0
      %v626 = vadd.f32 %v465, %v625
      %627 = vmatmul.f32.gmra.mxu0 %v311
      %v628 = vpop.f32.mrf.mxu0
      %v629 = vadd.f32 %v468, %v628
      %630 = vmatmul.f32.gmra.mxu0 %v312
      %v631 = vpop.f32.mrf.mxu0
      %v632 = vadd.f32 %v471, %v631
      %633 = vmatmul.f32.gmra.mxu0 %v313
      %v634 = vpop.f32.mrf.mxu0
      %v635 = vadd.f32 %v474, %v634
      %636 = vmatmul.f32.gmra.mxu0 %v314
      %v637 = vpop.f32.mrf.mxu0
      %v638 = vadd.f32 %v477, %v637
      %639 = vmatmul.f32.gmra.mxu0 %v315
      %v640 = vpop.f32.mrf.mxu0
      %v641 = vadd.f32 %v480, %v640
      %642 = vmatmul.f32.gmra.mxu0 %v316
      %v643 = vpop.f32.mrf.mxu0
      %v644 = vadd.f32 %v483, %v643
      %645 = vmatmul.f32.gmra.mxu0 %v317
      %v646 = vpop.f32.mrf.mxu0
      %v647 = vadd.f32 %v486, %v646
      %648 = vmatmul.f32.gmra.mxu0 %v318
      %v649 = vpop.f32.mrf.mxu0
      %v650 = vadd.f32 %v489, %v649
      %651 = vmatmul.f32.gmra.mxu0 %v319
      %v652 = vpop.f32.mrf.mxu0
      %v653 = vadd.f32 %v492, %v652
      %654 = vmatmul.f32.gmra.mxu0 %v320
      %v655 = vpop.f32.mrf.mxu0
      %v656 = vadd.f32 %v495, %v655
      %657 = vmatmul.f32.gmra.mxu0 %v321
      %v658 = vpop.f32.mrf.mxu0
      %v659 = vadd.f32 %v498, %v658
      %660 = vmatmul.f32.gmra.mxu0 %v322
      %v661 = vpop.f32.mrf.mxu0
      %v662 = vadd.f32 %v501, %v661
      %663 = vmatmul.f32.gmra.mxu0 %v323
      %v664 = vpop.f32.mrf.mxu0
      %v665 = vadd.f32 %v504, %v664
      %666 = vmatmul.f32.gmra.mxu0 %v324
      %v667 = vpop.f32.mrf.mxu0
      %v668 = vadd.f32 %v507, %v667
      %669 = vmatmul.f32.gmra.mxu0 %v325
      %v670 = vpop.f32.mrf.mxu0
      %v671 = vadd.f32 %v510, %v670
      %672 = vmatmul.f32.gmra.mxu0 %v326
      %v673 = vpop.f32.mrf.mxu0
      %v674 = vadd.f32 %v513, %v673
      %675 = vmatmul.f32.gmra.mxu0 %v327
      %v676 = vpop.f32.mrf.mxu0
      %v677 = vadd.f32 %v516, %v676
      %678 = vmatmul.f32.gmra.mxu0 %v328
      %v679 = vpop.f32.mrf.mxu0
      %v680 = vadd.f32 %v519, %v679
      %681 = vmatmul.f32.gmra.mxu0 %v329
      %v682 = vpop.f32.mrf.mxu0
      %v683 = vadd.f32 %v522, %v682
      %684 = vmatmul.f32.gmra.mxu0 %v330
      %v685 = vpop.f32.mrf.mxu0
      %v686 = vadd.f32 %v525, %v685
      %687 = vmatmul.f32.gmra.mxu0 %v331
      %v688 = vpop.f32.mrf.mxu0
      %v689 = vadd.f32 %v528, %v688
      %690 = vmatmul.f32.gmra.mxu0 %v332
      %v691 = vpop.f32.mrf.mxu0
      %v692 = vadd.f32 %v531, %v691
      %693 = vmatmul.f32.gmra.mxu0 %v333
      %v694 = vpop.f32.mrf.mxu0
      %v695 = vadd.f32 %v534, %v694
      %696 = vmatmul.f32.gmra.mxu0 %v334
      %v697 = vpop.f32.mrf.mxu0
      %v698 = vadd.f32 %v537, %v697
      %699 = vmatmul.f32.gmra.mxu0 %v335
      %v700 = vpop.f32.mrf.mxu0
      %v701 = vadd.f32 %v540, %v700
      %702 = vmatmul.f32.gmra.mxu0 %v336
      %v703 = vpop.f32.mrf.mxu0
      %v704 = vadd.f32 %v543, %v703
      %705 = vmatmul.f32.gmra.mxu0 %v337
      %v706 = vpop.f32.mrf.mxu0
      %v707 = vadd.f32 %v546, %v706
      %708 = vmatmul.f32.gmra.mxu0 %v338
      %v709 = vpop.f32.mrf.mxu0
      %v710 = vadd.f32 %v549, %v709
      %711 = vmatmul.f32.gmra.mxu0 %v339
      %v712 = vpop.f32.mrf.mxu0
      %v713 = vadd.f32 %v552, %v712
      %714 = vmatmul.f32.gmra.mxu0 %v340
      %v715 = vpop.f32.mrf.mxu0
      %v716 = vadd.f32 %v555, %v715
      %717 = vmatmul.f32.gmra.mxu0 %v341
      %v718 = vpop.f32.mrf.mxu0
      %v719 = vadd.f32 %v558, %v718
      %720 = vmatmul.f32.gmra.mxu0 %v342
      %v721 = vpop.f32.mrf.mxu0
      %v722 = vadd.f32 %v561, %v721
      %723 = vmatmul.f32.gmra.mxu0 %v343
      %v724 = vpop.f32.mrf.mxu0
      %v725 = vadd.f32 %v564, %v724
      %726 = vmatmul.f32.gmra.mxu0 %v344
      %v727 = vpop.f32.mrf.mxu0
      %v728 = vadd.f32 %v567, %v727
      %729 = vmatmul.f32.gmra.mxu0 %v345
      %v730 = vpop.f32.mrf.mxu0
      %v731 = vadd.f32 %v570, %v730
      %732 = vmatmul.f32.gmra.mxu0 %v346
      %v733 = vpop.f32.mrf.mxu0
      %v734 = vadd.f32 %v573, %v733
      %735 = vmatmul.f32.gmra.mxu0 %v347
      %v736 = vpop.f32.mrf.mxu0
      %v737 = vadd.f32 %v576, %v736
      %738 = vmatmul.f32.gmra.mxu0 %v348
      %v739 = vpop.f32.mrf.mxu0
      %v740 = vadd.f32 %v579, %v739
      %741 = vmatmul.f32.gmra.mxu0 %v349
      %v742 = vpop.f32.mrf.mxu0
      %v743 = vadd.f32 %v582, %v742
      %744 = vmatmul.f32.gmra.mxu0 %v350
      %v745 = vpop.f32.mrf.mxu0
      %v746 = vadd.f32 %v585, %v745
      %747 = vmatmul.f32.gmra.mxu0 %v351
      %v748 = vpop.f32.mrf.mxu0
      %v749 = vadd.f32 %v588, %v748
      %750 = vmatmul.f32.gmra.mxu0 %v352
      %v751 = vpop.f32.mrf.mxu0
      %v752 = vadd.f32 %v591, %v751
      %753 = vmatmul.f32.gmra.mxu0 %v353
      %v754 = vpop.f32.mrf.mxu0
      %v755 = vadd.f32 %v594, %v754
      %756 = vdwg.mxu0
      %v757 = vld [vmem:[%s300 + $0x2] sm:$0xff]
      %v758 = vld [vmem:[%s300 + $0xa] sm:$0xff]
      %v759 = vld [vmem:[%s300 + $0x12] sm:$0xff]
      %v760 = vld [vmem:[%s300 + $0x1a] sm:$0xff]
      %v761 = vld [vmem:[%s300 + $0x22] sm:$0xff]
      %v762 = vld [vmem:[%s300 + $0x2a] sm:$0xff]
      %v763 = vld [vmem:[%s300 + $0x32] sm:$0xff]
      %v764 = vld [vmem:[%s300 + $0x3a] sm:$0xff]
      %v765 = vld [vmem:[%s300 + $0x42] sm:$0xff]
      %v766 = vld [vmem:[%s300 + $0x4a] sm:$0xff]
      %v767 = vld [vmem:[%s300 + $0x52] sm:$0xff]
      %v768 = vld [vmem:[%s300 + $0x5a] sm:$0xff]
      %v769 = vld [vmem:[%s300 + $0x62] sm:$0xff]
      %v770 = vld [vmem:[%s300 + $0x6a] sm:$0xff]
      %v771 = vld [vmem:[%s300 + $0x72] sm:$0xff]
      %v772 = vld [vmem:[%s300 + $0x7a] sm:$0xff]
      %v773 = vld [vmem:[%s300 + $0x82] sm:$0xff]
      %v774 = vld [vmem:[%s300 + $0x8a] sm:$0xff]
      %v775 = vld [vmem:[%s300 + $0x92] sm:$0xff]
      %v776 = vld [vmem:[%s300 + $0x9a] sm:$0xff]
      %v777 = vld [vmem:[%s300 + $0xa2] sm:$0xff]
      %v778 = vld [vmem:[%s300 + $0xaa] sm:$0xff]
      %v779 = vld [vmem:[%s300 + $0xb2] sm:$0xff]
      %v780 = vld [vmem:[%s300 + $0xba] sm:$0xff]
      %v781 = vld [vmem:[%s300 + $0xc2] sm:$0xff]
      %v782 = vld [vmem:[%s300 + $0xca] sm:$0xff]
      %v783 = vld [vmem:[%s300 + $0xd2] sm:$0xff]
      %v784 = vld [vmem:[%s300 + $0xda] sm:$0xff]
      %v785 = vld [vmem:[%s300 + $0xe2] sm:$0xff]
      %v786 = vld [vmem:[%s300 + $0xea] sm:$0xff]
      %v787 = vld [vmem:[%s300 + $0xf2] sm:$0xff]
      %v788 = vld [vmem:[%s300 + $0xfa] sm:$0xff]
      %v789 = vld [vmem:[%s300 + $0x102] sm:$0xff]
      %v790 = vld [vmem:[%s300 + $0x10a] sm:$0xff]
      %v791 = vld [vmem:[%s300 + $0x112] sm:$0xff]
      %v792 = vld [vmem:[%s300 + $0x11a] sm:$0xff]
      %v793 = vld [vmem:[%s300 + $0x122] sm:$0xff]
      %v794 = vld [vmem:[%s300 + $0x12a] sm:$0xff]
      %v795 = vld [vmem:[%s300 + $0x132] sm:$0xff]
      %v796 = vld [vmem:[%s300 + $0x13a] sm:$0xff]
      %v797 = vld [vmem:[%s300 + $0x142] sm:$0xff]
      %v798 = vld [vmem:[%s300 + $0x14a] sm:$0xff]
      %v799 = vld [vmem:[%s300 + $0x152] sm:$0xff]
      %v800 = vld [vmem:[%s300 + $0x15a] sm:$0xff]
      %v801 = vld [vmem:[%s300 + $0x162] sm:$0xff]
      %v802 = vld [vmem:[%s300 + $0x16a] sm:$0xff]
      %v803 = vld [vmem:[%s300 + $0x172] sm:$0xff]
      %v804 = vld [vmem:[%s300 + $0x17a] sm:$0xff]
      %s805 = scalar_lea.vmem %s2, 256
      %v806 = vld [vmem:[%s805] sm:$0xff]
      %v807 = vld [vmem:[%s805 + $0x8] sm:$0xff]
      %v808 = vld [vmem:[%s805 + $0x10] sm:$0xff]
      %v809 = vld [vmem:[%s805 + $0x18] sm:$0xff]
      %v810 = vld [vmem:[%s805 + $0x20] sm:$0xff]
      %v811 = vld [vmem:[%s805 + $0x28] sm:$0xff]
      %v812 = vld [vmem:[%s805 + $0x30] sm:$0xff]
      %v813 = vld [vmem:[%s805 + $0x38] sm:$0xff]
      %v814 = vld [vmem:[%s805 + $0x40] sm:$0xff]
      %v815 = vld [vmem:[%s805 + $0x48] sm:$0xff]
      %v816 = vld [vmem:[%s805 + $0x50] sm:$0xff]
      %v817 = vld [vmem:[%s805 + $0x58] sm:$0xff]
      %v818 = vld [vmem:[%s805 + $0x60] sm:$0xff]
      %v819 = vld [vmem:[%s805 + $0x68] sm:$0xff]
      %v820 = vld [vmem:[%s805 + $0x70] sm:$0xff]
      %v821 = vld [vmem:[%s805 + $0x78] sm:$0xff]
      %822 = vmatpush.msra.mxu0 %v821
      %823 = vmatpush.msra.mxu0 %v820
      %824 = vmatpush.msra.mxu0 %v819
      %825 = vmatpush.msra.mxu0 %v818
      %826 = vmatpush.msra.mxu0 %v817
      %827 = vmatpush.msra.mxu0 %v816
      %828 = vmatpush.msra.mxu0 %v815
      %829 = vmatpush.msra.mxu0 %v814
      %830 = vmatpush.msra.mxu0 %v813
      %831 = vmatpush.msra.mxu0 %v812
      %832 = vmatpush.msra.mxu0 %v811
      %833 = vmatpush.msra.mxu0 %v810
      %834 = vmatpush.msra.mxu0 %v809
      %835 = vmatpush.msra.mxu0 %v808
      %836 = vmatpush.msra.mxu0 %v807
      %837 = vmatpush.msra.mxu0 %v806
      %838 = vmatmul.f32.gmra.mxu0 %v757
      %v839 = vpop.f32.mrf.mxu0
      %v840 = vadd.f32 0.0, %v839
      %841 = vmatmul.f32.gmra.mxu0 %v758
      %v842 = vpop.f32.mrf.mxu0
      %v843 = vadd.f32 0.0, %v842
      %844 = vmatmul.f32.gmra.mxu0 %v759
      %v845 = vpop.f32.mrf.mxu0
      %v846 = vadd.f32 0.0, %v845
      %847 = vmatmul.f32.gmra.mxu0 %v760
      %v848 = vpop.f32.mrf.mxu0
      %v849 = vadd.f32 0.0, %v848
      %850 = vmatmul.f32.gmra.mxu0 %v761
      %v851 = vpop.f32.mrf.mxu0
      %v852 = vadd.f32 0.0, %v851
      %853 = vmatmul.f32.gmra.mxu0 %v762
      %v854 = vpop.f32.mrf.mxu0
      %v855 = vadd.f32 0.0, %v854
      %856 = vmatmul.f32.gmra.mxu0 %v763
      %v857 = vpop.f32.mrf.mxu0
      %v858 = vadd.f32 0.0, %v857
      %859 = vmatmul.f32.gmra.mxu0 %v764
      %v860 = vpop.f32.mrf.mxu0
      %v861 = vadd.f32 0.0, %v860
      %862 = vmatmul.f32.gmra.mxu0 %v765
      %v863 = vpop.f32.mrf.mxu0
      %v864 = vadd.f32 0.0, %v863
      %865 = vmatmul.f32.gmra.mxu0 %v766
      %v866 = vpop.f32.mrf.mxu0
      %v867 = vadd.f32 0.0, %v866
      %868 = vmatmul.f32.gmra.mxu0 %v767
      %v869 = vpop.f32.mrf.mxu0
      %v870 = vadd.f32 0.0, %v869
      %871 = vmatmul.f32.gmra.mxu0 %v768
      %v872 = vpop.f32.mrf.mxu0
      %v873 = vadd.f32 0.0, %v872
      %874 = vmatmul.f32.gmra.mxu0 %v769
      %v875 = vpop.f32.mrf.mxu0
      %v876 = vadd.f32 0.0, %v875
      %877 = vmatmul.f32.gmra.mxu0 %v770
      %v878 = vpop.f32.mrf.mxu0
      %v879 = vadd.f32 0.0, %v878
      %880 = vmatmul.f32.gmra.mxu0 %v771
      %v881 = vpop.f32.mrf.mxu0
      %v882 = vadd.f32 0.0, %v881
      %883 = vmatmul.f32.gmra.mxu0 %v772
      %v884 = vpop.f32.mrf.mxu0
      %v885 = vadd.f32 0.0, %v884
      %886 = vmatmul.f32.gmra.mxu0 %v773
      %v887 = vpop.f32.mrf.mxu0
      %v888 = vadd.f32 0.0, %v887
      %889 = vmatmul.f32.gmra.mxu0 %v774
      %v890 = vpop.f32.mrf.mxu0
      %v891 = vadd.f32 0.0, %v890
      %892 = vmatmul.f32.gmra.mxu0 %v775
      %v893 = vpop.f32.mrf.mxu0
      %v894 = vadd.f32 0.0, %v893
      %895 = vmatmul.f32.gmra.mxu0 %v776
      %v896 = vpop.f32.mrf.mxu0
      %v897 = vadd.f32 0.0, %v896
      %898 = vmatmul.f32.gmra.mxu0 %v777
      %v899 = vpop.f32.mrf.mxu0
      %v900 = vadd.f32 0.0, %v899
      %901 = vmatmul.f32.gmra.mxu0 %v778
      %v902 = vpop.f32.mrf.mxu0
      %v903 = vadd.f32 0.0, %v902
      %904 = vmatmul.f32.gmra.mxu0 %v779
      %v905 = vpop.f32.mrf.mxu0
      %v906 = vadd.f32 0.0, %v905
      %907 = vmatmul.f32.gmra.mxu0 %v780
      %v908 = vpop.f32.mrf.mxu0
      %v909 = vadd.f32 0.0, %v908
      %910 = vmatmul.f32.gmra.mxu0 %v781
      %v911 = vpop.f32.mrf.mxu0
      %v912 = vadd.f32 0.0, %v911
      %913 = vmatmul.f32.gmra.mxu0 %v782
      %v914 = vpop.f32.mrf.mxu0
      %v915 = vadd.f32 0.0, %v914
      %916 = vmatmul.f32.gmra.mxu0 %v783
      %v917 = vpop.f32.mrf.mxu0
      %v918 = vadd.f32 0.0, %v917
      %919 = vmatmul.f32.gmra.mxu0 %v784
      %v920 = vpop.f32.mrf.mxu0
      %v921 = vadd.f32 0.0, %v920
      %922 = vmatmul.f32.gmra.mxu0 %v785
      %v923 = vpop.f32.mrf.mxu0
      %v924 = vadd.f32 0.0, %v923
      %925 = vmatmul.f32.gmra.mxu0 %v786
      %v926 = vpop.f32.mrf.mxu0
      %v927 = vadd.f32 0.0, %v926
      %928 = vmatmul.f32.gmra.mxu0 %v787
      %v929 = vpop.f32.mrf.mxu0
      %v930 = vadd.f32 0.0, %v929
      %931 = vmatmul.f32.gmra.mxu0 %v788
      %v932 = vpop.f32.mrf.mxu0
      %v933 = vadd.f32 0.0, %v932
      %934 = vmatmul.f32.gmra.mxu0 %v789
      %v935 = vpop.f32.mrf.mxu0
      %v936 = vadd.f32 0.0, %v935
      %937 = vmatmul.f32.gmra.mxu0 %v790
      %v938 = vpop.f32.mrf.mxu0
      %v939 = vadd.f32 0.0, %v938
      %940 = vmatmul.f32.gmra.mxu0 %v791
      %v941 = vpop.f32.mrf.mxu0
      %v942 = vadd.f32 0.0, %v941
      %943 = vmatmul.f32.gmra.mxu0 %v792
      %v944 = vpop.f32.mrf.mxu0
      %v945 = vadd.f32 0.0, %v944
      %946 = vmatmul.f32.gmra.mxu0 %v793
      %v947 = vpop.f32.mrf.mxu0
      %v948 = vadd.f32 0.0, %v947
      %949 = vmatmul.f32.gmra.mxu0 %v794
      %v950 = vpop.f32.mrf.mxu0
      %v951 = vadd.f32 0.0, %v950
      %952 = vmatmul.f32.gmra.mxu0 %v795
      %v953 = vpop.f32.mrf.mxu0
      %v954 = vadd.f32 0.0, %v953
      %955 = vmatmul.f32.gmra.mxu0 %v796
      %v956 = vpop.f32.mrf.mxu0
      %v957 = vadd.f32 0.0, %v956
      %958 = vmatmul.f32.gmra.mxu0 %v797
      %v959 = vpop.f32.mrf.mxu0
      %v960 = vadd.f32 0.0, %v959
      %961 = vmatmul.f32.gmra.mxu0 %v798
      %v962 = vpop.f32.mrf.mxu0
      %v963 = vadd.f32 0.0, %v962
      %964 = vmatmul.f32.gmra.mxu0 %v799
      %v965 = vpop.f32.mrf.mxu0
      %v966 = vadd.f32 0.0, %v965
      %967 = vmatmul.f32.gmra.mxu0 %v800
      %v968 = vpop.f32.mrf.mxu0
      %v969 = vadd.f32 0.0, %v968
      %970 = vmatmul.f32.gmra.mxu0 %v801
      %v971 = vpop.f32.mrf.mxu0
      %v972 = vadd.f32 0.0, %v971
      %973 = vmatmul.f32.gmra.mxu0 %v802
      %v974 = vpop.f32.mrf.mxu0
      %v975 = vadd.f32 0.0, %v974
      %976 = vmatmul.f32.gmra.mxu0 %v803
      %v977 = vpop.f32.mrf.mxu0
      %v978 = vadd.f32 0.0, %v977
      %979 = vmatmul.f32.gmra.mxu0 %v804
      %v980 = vpop.f32.mrf.mxu0
      %v981 = vadd.f32 0.0, %v980
      %982 = vdwg.mxu0
      %v983 = vadd.f32 %v614, %v840
      %v984 = vadd.f32 %v617, %v843
      %v985 = vadd.f32 %v620, %v846
      %v986 = vadd.f32 %v623, %v849
      %v987 = vadd.f32 %v626, %v852
      %v988 = vadd.f32 %v629, %v855
      %v989 = vadd.f32 %v632, %v858
      %v990 = vadd.f32 %v635, %v861
      %v991 = vadd.f32 %v638, %v864
      %v992 = vadd.f32 %v641, %v867
      %v993 = vadd.f32 %v644, %v870
      %v994 = vadd.f32 %v647, %v873
      %v995 = vadd.f32 %v650, %v876
      %v996 = vadd.f32 %v653, %v879
      %v997 = vadd.f32 %v656, %v882
      %v998 = vadd.f32 %v659, %v885
      %v999 = vadd.f32 %v662, %v888
      %v1000 = vadd.f32 %v665, %v891
      %v1001 = vadd.f32 %v668, %v894
      %v1002 = vadd.f32 %v671, %v897
      %v1003 = vadd.f32 %v674, %v900
      %v1004 = vadd.f32 %v677, %v903
      %v1005 = vadd.f32 %v680, %v906
      %v1006 = vadd.f32 %v683, %v909
      %v1007 = vadd.f32 %v686, %v912
      %v1008 = vadd.f32 %v689, %v915
      %v1009 = vadd.f32 %v692, %v918
      %v1010 = vadd.f32 %v695, %v921
      %v1011 = vadd.f32 %v698, %v924
      %v1012 = vadd.f32 %v701, %v927
      %v1013 = vadd.f32 %v704, %v930
      %v1014 = vadd.f32 %v707, %v933
      %v1015 = vadd.f32 %v710, %v936
      %v1016 = vadd.f32 %v713, %v939
      %v1017 = vadd.f32 %v716, %v942
      %v1018 = vadd.f32 %v719, %v945
      %v1019 = vadd.f32 %v722, %v948
      %v1020 = vadd.f32 %v725, %v951
      %v1021 = vadd.f32 %v728, %v954
      %v1022 = vadd.f32 %v731, %v957
      %v1023 = vadd.f32 %v734, %v960
      %v1024 = vadd.f32 %v737, %v963
      %v1025 = vadd.f32 %v740, %v966
      %v1026 = vadd.f32 %v743, %v969
      %v1027 = vadd.f32 %v746, %v972
      %v1028 = vadd.f32 %v749, %v975
      %v1029 = vadd.f32 %v752, %v978
      %v1030 = vadd.f32 %v755, %v981
      %v1031 = vld [vmem:[%s300 + $0x18] sm:$0xff]
      %v1032 = vld [vmem:[%s300 + $0x20] sm:$0xff]
      %v1033 = vld [vmem:[%s300 + $0x28] sm:$0xff]
      %v1034 = vld [vmem:[%s300 + $0x30] sm:$0xff]
      %v1035 = vld [vmem:[%s300 + $0x38] sm:$0xff]
      %v1036 = vld [vmem:[%s300 + $0x40] sm:$0xff]
      %v1037 = vld [vmem:[%s300 + $0x48] sm:$0xff]
      %v1038 = vld [vmem:[%s300 + $0x50] sm:$0xff]
      %v1039 = vld [vmem:[%s300 + $0x58] sm:$0xff]
      %v1040 = vld [vmem:[%s300 + $0x60] sm:$0xff]
      %v1041 = vld [vmem:[%s300 + $0x68] sm:$0xff]
      %v1042 = vld [vmem:[%s300 + $0x70] sm:$0xff]
      %v1043 = vld [vmem:[%s300 + $0x78] sm:$0xff]
      %v1044 = vld [vmem:[%s300 + $0x80] sm:$0xff]
      %v1045 = vld [vmem:[%s300 + $0x88] sm:$0xff]
      %v1046 = vld [vmem:[%s300 + $0x90] sm:$0xff]
      %v1047 = vld [vmem:[%s300 + $0x98] sm:$0xff]
      %v1048 = vld [vmem:[%s300 + $0xa0] sm:$0xff]
      %v1049 = vld [vmem:[%s300 + $0xa8] sm:$0xff]
      %v1050 = vld [vmem:[%s300 + $0xb0] sm:$0xff]
      %v1051 = vld [vmem:[%s300 + $0xb8] sm:$0xff]
      %v1052 = vld [vmem:[%s300 + $0xc0] sm:$0xff]
      %v1053 = vld [vmem:[%s300 + $0xc8] sm:$0xff]
      %v1054 = vld [vmem:[%s300 + $0xd0] sm:$0xff]
      %v1055 = vld [vmem:[%s300 + $0xd8] sm:$0xff]
      %v1056 = vld [vmem:[%s300 + $0xe0] sm:$0xff]
      %v1057 = vld [vmem:[%s300 + $0xe8] sm:$0xff]
      %v1058 = vld [vmem:[%s300 + $0xf0] sm:$0xff]
      %v1059 = vld [vmem:[%s300 + $0xf8] sm:$0xff]
      %v1060 = vld [vmem:[%s300 + $0x100] sm:$0xff]
      %v1061 = vld [vmem:[%s300 + $0x108] sm:$0xff]
      %v1062 = vld [vmem:[%s300 + $0x110] sm:$0xff]
      %v1063 = vld [vmem:[%s300 + $0x118] sm:$0xff]
      %v1064 = vld [vmem:[%s300 + $0x120] sm:$0xff]
      %v1065 = vld [vmem:[%s300 + $0x128] sm:$0xff]
      %v1066 = vld [vmem:[%s300 + $0x130] sm:$0xff]
      %v1067 = vld [vmem:[%s300 + $0x138] sm:$0xff]
      %v1068 = vld [vmem:[%s300 + $0x140] sm:$0xff]
      %v1069 = vld [vmem:[%s300 + $0x148] sm:$0xff]
      %v1070 = vld [vmem:[%s300 + $0x150] sm:$0xff]
      %v1071 = vld [vmem:[%s300 + $0x158] sm:$0xff]
      %v1072 = vld [vmem:[%s300 + $0x160] sm:$0xff]
      %v1073 = vld [vmem:[%s300 + $0x168] sm:$0xff]
      %v1074 = vld [vmem:[%s300 + $0x170] sm:$0xff]
      %v1075 = vld [vmem:[%s300 + $0x178] sm:$0xff]
      %v1076 = vld [vmem:[%s300 + $0x180] sm:$0xff]
      %v1077 = vld [vmem:[%s300 + $0x188] sm:$0xff]
      %v1078 = vld [vmem:[%s300 + $0x190] sm:$0xff]
      %s1079 = scalar_lea.vmem %s2, 384
      %v1080 = vld [vmem:[%s1079] sm:$0xff]
      %v1081 = vld [vmem:[%s1079 + $0x8] sm:$0xff]
      %v1082 = vld [vmem:[%s1079 + $0x10] sm:$0xff]
      %v1083 = vld [vmem:[%s1079 + $0x18] sm:$0xff]
      %v1084 = vld [vmem:[%s1079 + $0x20] sm:$0xff]
      %v1085 = vld [vmem:[%s1079 + $0x28] sm:$0xff]
      %v1086 = vld [vmem:[%s1079 + $0x30] sm:$0xff]
      %v1087 = vld [vmem:[%s1079 + $0x38] sm:$0xff]
      %v1088 = vld [vmem:[%s1079 + $0x40] sm:$0xff]
      %v1089 = vld [vmem:[%s1079 + $0x48] sm:$0xff]
      %v1090 = vld [vmem:[%s1079 + $0x50] sm:$0xff]
      %v1091 = vld [vmem:[%s1079 + $0x58] sm:$0xff]
      %v1092 = vld [vmem:[%s1079 + $0x60] sm:$0xff]
      %v1093 = vld [vmem:[%s1079 + $0x68] sm:$0xff]
      %v1094 = vld [vmem:[%s1079 + $0x70] sm:$0xff]
      %v1095 = vld [vmem:[%s1079 + $0x78] sm:$0xff]
      %1096 = vmatpush.msra.mxu0 %v1095
      %1097 = vmatpush.msra.mxu0 %v1094
      %1098 = vmatpush.msra.mxu0 %v1093
      %1099 = vmatpush.msra.mxu0 %v1092
      %1100 = vmatpush.msra.mxu0 %v1091
      %1101 = vmatpush.msra.mxu0 %v1090
      %1102 = vmatpush.msra.mxu0 %v1089
      %1103 = vmatpush.msra.mxu0 %v1088
      %1104 = vmatpush.msra.mxu0 %v1087
      %1105 = vmatpush.msra.mxu0 %v1086
      %1106 = vmatpush.msra.mxu0 %v1085
      %1107 = vmatpush.msra.mxu0 %v1084
      %1108 = vmatpush.msra.mxu0 %v1083
      %1109 = vmatpush.msra.mxu0 %v1082
      %1110 = vmatpush.msra.mxu0 %v1081
      %1111 = vmatpush.msra.mxu0 %v1080
      %1112 = vmatmul.f32.gmra.mxu0 %v1031
      %v1113 = vpop.f32.mrf.mxu0
      %v1114 = vadd.f32 0.0, %v1113
      %1115 = vmatmul.f32.gmra.mxu0 %v1032
      %v1116 = vpop.f32.mrf.mxu0
      %v1117 = vadd.f32 0.0, %v1116
      %1118 = vmatmul.f32.gmra.mxu0 %v1033
      %v1119 = vpop.f32.mrf.mxu0
      %v1120 = vadd.f32 0.0, %v1119
      %1121 = vmatmul.f32.gmra.mxu0 %v1034
      %v1122 = vpop.f32.mrf.mxu0
      %v1123 = vadd.f32 0.0, %v1122
      %1124 = vmatmul.f32.gmra.mxu0 %v1035
      %v1125 = vpop.f32.mrf.mxu0
      %v1126 = vadd.f32 0.0, %v1125
      %1127 = vmatmul.f32.gmra.mxu0 %v1036
      %v1128 = vpop.f32.mrf.mxu0
      %v1129 = vadd.f32 0.0, %v1128
      %1130 = vmatmul.f32.gmra.mxu0 %v1037
      %v1131 = vpop.f32.mrf.mxu0
      %v1132 = vadd.f32 0.0, %v1131
      %1133 = vmatmul.f32.gmra.mxu0 %v1038
      %v1134 = vpop.f32.mrf.mxu0
      %v1135 = vadd.f32 0.0, %v1134
      %1136 = vmatmul.f32.gmra.mxu0 %v1039
      %v1137 = vpop.f32.mrf.mxu0
      %v1138 = vadd.f32 0.0, %v1137
      %1139 = vmatmul.f32.gmra.mxu0 %v1040
      %v1140 = vpop.f32.mrf.mxu0
      %v1141 = vadd.f32 0.0, %v1140
      %1142 = vmatmul.f32.gmra.mxu0 %v1041
      %v1143 = vpop.f32.mrf.mxu0
      %v1144 = vadd.f32 0.0, %v1143
      %1145 = vmatmul.f32.gmra.mxu0 %v1042
      %v1146 = vpop.f32.mrf.mxu0
      %v1147 = vadd.f32 0.0, %v1146
      %1148 = vmatmul.f32.gmra.mxu0 %v1043
      %v1149 = vpop.f32.mrf.mxu0
      %v1150 = vadd.f32 0.0, %v1149
      %1151 = vmatmul.f32.gmra.mxu0 %v1044
      %v1152 = vpop.f32.mrf.mxu0
      %v1153 = vadd.f32 0.0, %v1152
      %1154 = vmatmul.f32.gmra.mxu0 %v1045
      %v1155 = vpop.f32.mrf.mxu0
      %v1156 = vadd.f32 0.0, %v1155
      %1157 = vmatmul.f32.gmra.mxu0 %v1046
      %v1158 = vpop.f32.mrf.mxu0
      %v1159 = vadd.f32 0.0, %v1158
      %1160 = vmatmul.f32.gmra.mxu0 %v1047
      %v1161 = vpop.f32.mrf.mxu0
      %v1162 = vadd.f32 0.0, %v1161
      %1163 = vmatmul.f32.gmra.mxu0 %v1048
      %v1164 = vpop.f32.mrf.mxu0
      %v1165 = vadd.f32 0.0, %v1164
      %1166 = vmatmul.f32.gmra.mxu0 %v1049
      %v1167 = vpop.f32.mrf.mxu0
      %v1168 = vadd.f32 0.0, %v1167
      %1169 = vmatmul.f32.gmra.mxu0 %v1050
      %v1170 = vpop.f32.mrf.mxu0
      %v1171 = vadd.f32 0.0, %v1170
      %1172 = vmatmul.f32.gmra.mxu0 %v1051
      %v1173 = vpop.f32.mrf.mxu0
      %v1174 = vadd.f32 0.0, %v1173
      %1175 = vmatmul.f32.gmra.mxu0 %v1052
      %v1176 = vpop.f32.mrf.mxu0
      %v1177 = vadd.f32 0.0, %v1176
      %1178 = vmatmul.f32.gmra.mxu0 %v1053
      %v1179 = vpop.f32.mrf.mxu0
      %v1180 = vadd.f32 0.0, %v1179
      %1181 = vmatmul.f32.gmra.mxu0 %v1054
      %v1182 = vpop.f32.mrf.mxu0
      %v1183 = vadd.f32 0.0, %v1182
      %1184 = vmatmul.f32.gmra.mxu0 %v1055
      %v1185 = vpop.f32.mrf.mxu0
      %v1186 = vadd.f32 0.0, %v1185
      %1187 = vmatmul.f32.gmra.mxu0 %v1056
      %v1188 = vpop.f32.mrf.mxu0
      %v1189 = vadd.f32 0.0, %v1188
      %1190 = vmatmul.f32.gmra.mxu0 %v1057
      %v1191 = vpop.f32.mrf.mxu0
      %v1192 = vadd.f32 0.0, %v1191
      %1193 = vmatmul.f32.gmra.mxu0 %v1058
      %v1194 = vpop.f32.mrf.mxu0
      %v1195 = vadd.f32 0.0, %v1194
      %1196 = vmatmul.f32.gmra.mxu0 %v1059
      %v1197 = vpop.f32.mrf.mxu0
      %v1198 = vadd.f32 0.0, %v1197
      %1199 = vmatmul.f32.gmra.mxu0 %v1060
      %v1200 = vpop.f32.mrf.mxu0
      %v1201 = vadd.f32 0.0, %v1200
      %1202 = vmatmul.f32.gmra.mxu0 %v1061
      %v1203 = vpop.f32.mrf.mxu0
      %v1204 = vadd.f32 0.0, %v1203
      %1205 = vmatmul.f32.gmra.mxu0 %v1062
      %v1206 = vpop.f32.mrf.mxu0
      %v1207 = vadd.f32 0.0, %v1206
      %1208 = vmatmul.f32.gmra.mxu0 %v1063
      %v1209 = vpop.f32.mrf.mxu0
      %v1210 = vadd.f32 0.0, %v1209
      %1211 = vmatmul.f32.gmra.mxu0 %v1064
      %v1212 = vpop.f32.mrf.mxu0
      %v1213 = vadd.f32 0.0, %v1212
      %1214 = vmatmul.f32.gmra.mxu0 %v1065
      %v1215 = vpop.f32.mrf.mxu0
      %v1216 = vadd.f32 0.0, %v1215
      %1217 = vmatmul.f32.gmra.mxu0 %v1066
      %v1218 = vpop.f32.mrf.mxu0
      %v1219 = vadd.f32 0.0, %v1218
      %1220 = vmatmul.f32.gmra.mxu0 %v1067
      %v1221 = vpop.f32.mrf.mxu0
      %v1222 = vadd.f32 0.0, %v1221
      %1223 = vmatmul.f32.gmra.mxu0 %v1068
      %v1224 = vpop.f32.mrf.mxu0
      %v1225 = vadd.f32 0.0, %v1224
      %1226 = vmatmul.f32.gmra.mxu0 %v1069
      %v1227 = vpop.f32.mrf.mxu0
      %v1228 = vadd.f32 0.0, %v1227
      %1229 = vmatmul.f32.gmra.mxu0 %v1070
      %v1230 = vpop.f32.mrf.mxu0
      %v1231 = vadd.f32 0.0, %v1230
      %1232 = vmatmul.f32.gmra.mxu0 %v1071
      %v1233 = vpop.f32.mrf.mxu0
      %v1234 = vadd.f32 0.0, %v1233
      %1235 = vmatmul.f32.gmra.mxu0 %v1072
      %v1236 = vpop.f32.mrf.mxu0
      %v1237 = vadd.f32 0.0, %v1236
      %1238 = vmatmul.f32.gmra.mxu0 %v1073
      %v1239 = vpop.f32.mrf.mxu0
      %v1240 = vadd.f32 0.0, %v1239
      %1241 = vmatmul.f32.gmra.mxu0 %v1074
      %v1242 = vpop.f32.mrf.mxu0
      %v1243 = vadd.f32 0.0, %v1242
      %1244 = vmatmul.f32.gmra.mxu0 %v1075
      %v1245 = vpop.f32.mrf.mxu0
      %v1246 = vadd.f32 0.0, %v1245
      %1247 = vmatmul.f32.gmra.mxu0 %v1076
      %v1248 = vpop.f32.mrf.mxu0
      %v1249 = vadd.f32 0.0, %v1248
      %1250 = vmatmul.f32.gmra.mxu0 %v1077
      %v1251 = vpop.f32.mrf.mxu0
      %v1252 = vadd.f32 0.0, %v1251
      %1253 = vmatmul.f32.gmra.mxu0 %v1078
      %v1254 = vpop.f32.mrf.mxu0
      %v1255 = vadd.f32 0.0, %v1254
      %1256 = vdwg.mxu0
      %v1257 = vadd.f32 %v983, %v1114
      %v1258 = vadd.f32 %v984, %v1117
      %v1259 = vadd.f32 %v985, %v1120
      %v1260 = vadd.f32 %v986, %v1123
      %v1261 = vadd.f32 %v987, %v1126
      %v1262 = vadd.f32 %v988, %v1129
      %v1263 = vadd.f32 %v989, %v1132
      %v1264 = vadd.f32 %v990, %v1135
      %v1265 = vadd.f32 %v991, %v1138
      %v1266 = vadd.f32 %v992, %v1141
      %v1267 = vadd.f32 %v993, %v1144
      %v1268 = vadd.f32 %v994, %v1147
      %v1269 = vadd.f32 %v995, %v1150
      %v1270 = vadd.f32 %v996, %v1153
      %v1271 = vadd.f32 %v997, %v1156
      %v1272 = vadd.f32 %v998, %v1159
      %v1273 = vadd.f32 %v999, %v1162
      %v1274 = vadd.f32 %v1000, %v1165
      %v1275 = vadd.f32 %v1001, %v1168
      %v1276 = vadd.f32 %v1002, %v1171
      %v1277 = vadd.f32 %v1003, %v1174
      %v1278 = vadd.f32 %v1004, %v1177
      %v1279 = vadd.f32 %v1005, %v1180
      %v1280 = vadd.f32 %v1006, %v1183
      %v1281 = vadd.f32 %v1007, %v1186
      %v1282 = vadd.f32 %v1008, %v1189
      %v1283 = vadd.f32 %v1009, %v1192
      %v1284 = vadd.f32 %v1010, %v1195
      %v1285 = vadd.f32 %v1011, %v1198
      %v1286 = vadd.f32 %v1012, %v1201
      %v1287 = vadd.f32 %v1013, %v1204
      %v1288 = vadd.f32 %v1014, %v1207
      %v1289 = vadd.f32 %v1015, %v1210
      %v1290 = vadd.f32 %v1016, %v1213
      %v1291 = vadd.f32 %v1017, %v1216
      %v1292 = vadd.f32 %v1018, %v1219
      %v1293 = vadd.f32 %v1019, %v1222
      %v1294 = vadd.f32 %v1020, %v1225
      %v1295 = vadd.f32 %v1021, %v1228
      %v1296 = vadd.f32 %v1022, %v1231
      %v1297 = vadd.f32 %v1023, %v1234
      %v1298 = vadd.f32 %v1024, %v1237
      %v1299 = vadd.f32 %v1025, %v1240
      %v1300 = vadd.f32 %v1026, %v1243
      %v1301 = vadd.f32 %v1027, %v1246
      %v1302 = vadd.f32 %v1028, %v1249
      %v1303 = vadd.f32 %v1029, %v1252
      %v1304 = vadd.f32 %v1030, %v1255
      %v1305 = vld [vmem:[%s300 + $0x19] sm:$0xff]
      %v1306 = vld [vmem:[%s300 + $0x21] sm:$0xff]
      %v1307 = vld [vmem:[%s300 + $0x29] sm:$0xff]
      %v1308 = vld [vmem:[%s300 + $0x31] sm:$0xff]
      %v1309 = vld [vmem:[%s300 + $0x39] sm:$0xff]
      %v1310 = vld [vmem:[%s300 + $0x41] sm:$0xff]
      %v1311 = vld [vmem:[%s300 + $0x49] sm:$0xff]
      %v1312 = vld [vmem:[%s300 + $0x51] sm:$0xff]
      %v1313 = vld [vmem:[%s300 + $0x59] sm:$0xff]
      %v1314 = vld [vmem:[%s300 + $0x61] sm:$0xff]
      %v1315 = vld [vmem:[%s300 + $0x69] sm:$0xff]
      %v1316 = vld [vmem:[%s300 + $0x71] sm:$0xff]
      %v1317 = vld [vmem:[%s300 + $0x79] sm:$0xff]
      %v1318 = vld [vmem:[%s300 + $0x81] sm:$0xff]
      %v1319 = vld [vmem:[%s300 + $0x89] sm:$0xff]
      %v1320 = vld [vmem:[%s300 + $0x91] sm:$0xff]
      %v1321 = vld [vmem:[%s300 + $0x99] sm:$0xff]
      %v1322 = vld [vmem:[%s300 + $0xa1] sm:$0xff]
      %v1323 = vld [vmem:[%s300 + $0xa9] sm:$0xff]
      %v1324 = vld [vmem:[%s300 + $0xb1] sm:$0xff]
      %v1325 = vld [vmem:[%s300 + $0xb9] sm:$0xff]
      %v1326 = vld [vmem:[%s300 + $0xc1] sm:$0xff]
      %v1327 = vld [vmem:[%s300 + $0xc9] sm:$0xff]
      %v1328 = vld [vmem:[%s300 + $0xd1] sm:$0xff]
      %v1329 = vld [vmem:[%s300 + $0xd9] sm:$0xff]
      %v1330 = vld [vmem:[%s300 + $0xe1] sm:$0xff]
      %v1331 = vld [vmem:[%s300 + $0xe9] sm:$0xff]
      %v1332 = vld [vmem:[%s300 + $0xf1] sm:$0xff]
      %v1333 = vld [vmem:[%s300 + $0xf9] sm:$0xff]
      %v1334 = vld [vmem:[%s300 + $0x101] sm:$0xff]
      %v1335 = vld [vmem:[%s300 + $0x109] sm:$0xff]
      %v1336 = vld [vmem:[%s300 + $0x111] sm:$0xff]
      %v1337 = vld [vmem:[%s300 + $0x119] sm:$0xff]
      %v1338 = vld [vmem:[%s300 + $0x121] sm:$0xff]
      %v1339 = vld [vmem:[%s300 + $0x129] sm:$0xff]
      %v1340 = vld [vmem:[%s300 + $0x131] sm:$0xff]
      %v1341 = vld [vmem:[%s300 + $0x139] sm:$0xff]
      %v1342 = vld [vmem:[%s300 + $0x141] sm:$0xff]
      %v1343 = vld [vmem:[%s300 + $0x149] sm:$0xff]
      %v1344 = vld [vmem:[%s300 + $0x151] sm:$0xff]
      %v1345 = vld [vmem:[%s300 + $0x159] sm:$0xff]
      %v1346 = vld [vmem:[%s300 + $0x161] sm:$0xff]
      %v1347 = vld [vmem:[%s300 + $0x169] sm:$0xff]
      %v1348 = vld [vmem:[%s300 + $0x171] sm:$0xff]
      %v1349 = vld [vmem:[%s300 + $0x179] sm:$0xff]
      %v1350 = vld [vmem:[%s300 + $0x181] sm:$0xff]
      %v1351 = vld [vmem:[%s300 + $0x189] sm:$0xff]
      %v1352 = vld [vmem:[%s300 + $0x191] sm:$0xff]
      %s1353 = scalar_lea.vmem %s2, 512
      %v1354 = vld [vmem:[%s1353] sm:$0xff]
      %v1355 = vld [vmem:[%s1353 + $0x8] sm:$0xff]
      %v1356 = vld [vmem:[%s1353 + $0x10] sm:$0xff]
      %v1357 = vld [vmem:[%s1353 + $0x18] sm:$0xff]
      %v1358 = vld [vmem:[%s1353 + $0x20] sm:$0xff]
      %v1359 = vld [vmem:[%s1353 + $0x28] sm:$0xff]
      %v1360 = vld [vmem:[%s1353 + $0x30] sm:$0xff]
      %v1361 = vld [vmem:[%s1353 + $0x38] sm:$0xff]
      %v1362 = vld [vmem:[%s1353 + $0x40] sm:$0xff]
      %v1363 = vld [vmem:[%s1353 + $0x48] sm:$0xff]
      %v1364 = vld [vmem:[%s1353 + $0x50] sm:$0xff]
      %v1365 = vld [vmem:[%s1353 + $0x58] sm:$0xff]
      %v1366 = vld [vmem:[%s1353 + $0x60] sm:$0xff]
      %v1367 = vld [vmem:[%s1353 + $0x68] sm:$0xff]
      %v1368 = vld [vmem:[%s1353 + $0x70] sm:$0xff]
      %v1369 = vld [vmem:[%s1353 + $0x78] sm:$0xff]
      %1370 = vmatpush.msra.mxu0 %v1369
      %1371 = vmatpush.msra.mxu0 %v1368
      %1372 = vmatpush.msra.mxu0 %v1367
      %1373 = vmatpush.msra.mxu0 %v1366
      %1374 = vmatpush.msra.mxu0 %v1365
      %1375 = vmatpush.msra.mxu0 %v1364
      %1376 = vmatpush.msra.mxu0 %v1363
      %1377 = vmatpush.msra.mxu0 %v1362
      %1378 = vmatpush.msra.mxu0 %v1361
      %1379 = vmatpush.msra.mxu0 %v1360
      %1380 = vmatpush.msra.mxu0 %v1359
      %1381 = vmatpush.msra.mxu0 %v1358
      %1382 = vmatpush.msra.mxu0 %v1357
      %1383 = vmatpush.msra.mxu0 %v1356
      %1384 = vmatpush.msra.mxu0 %v1355
      %1385 = vmatpush.msra.mxu0 %v1354
      %1386 = vmatmul.f32.gmra.mxu0 %v1305
      %v1387 = vpop.f32.mrf.mxu0
      %v1388 = vadd.f32 0.0, %v1387
      %1389 = vmatmul.f32.gmra.mxu0 %v1306
      %v1390 = vpop.f32.mrf.mxu0
      %v1391 = vadd.f32 0.0, %v1390
      %1392 = vmatmul.f32.gmra.mxu0 %v1307
      %v1393 = vpop.f32.mrf.mxu0
      %v1394 = vadd.f32 0.0, %v1393
      %1395 = vmatmul.f32.gmra.mxu0 %v1308
      %v1396 = vpop.f32.mrf.mxu0
      %v1397 = vadd.f32 0.0, %v1396
      %1398 = vmatmul.f32.gmra.mxu0 %v1309
      %v1399 = vpop.f32.mrf.mxu0
      %v1400 = vadd.f32 0.0, %v1399
      %1401 = vmatmul.f32.gmra.mxu0 %v1310
      %v1402 = vpop.f32.mrf.mxu0
      %v1403 = vadd.f32 0.0, %v1402
      %1404 = vmatmul.f32.gmra.mxu0 %v1311
      %v1405 = vpop.f32.mrf.mxu0
      %v1406 = vadd.f32 0.0, %v1405
      %1407 = vmatmul.f32.gmra.mxu0 %v1312
      %v1408 = vpop.f32.mrf.mxu0
      %v1409 = vadd.f32 0.0, %v1408
      %1410 = vmatmul.f32.gmra.mxu0 %v1313
      %v1411 = vpop.f32.mrf.mxu0
      %v1412 = vadd.f32 0.0, %v1411
      %1413 = vmatmul.f32.gmra.mxu0 %v1314
      %v1414 = vpop.f32.mrf.mxu0
      %v1415 = vadd.f32 0.0, %v1414
      %1416 = vmatmul.f32.gmra.mxu0 %v1315
      %v1417 = vpop.f32.mrf.mxu0
      %v1418 = vadd.f32 0.0, %v1417
      %1419 = vmatmul.f32.gmra.mxu0 %v1316
      %v1420 = vpop.f32.mrf.mxu0
      %v1421 = vadd.f32 0.0, %v1420
      %1422 = vmatmul.f32.gmra.mxu0 %v1317
      %v1423 = vpop.f32.mrf.mxu0
      %v1424 = vadd.f32 0.0, %v1423
      %1425 = vmatmul.f32.gmra.mxu0 %v1318
      %v1426 = vpop.f32.mrf.mxu0
      %v1427 = vadd.f32 0.0, %v1426
      %1428 = vmatmul.f32.gmra.mxu0 %v1319
      %v1429 = vpop.f32.mrf.mxu0
      %v1430 = vadd.f32 0.0, %v1429
      %1431 = vmatmul.f32.gmra.mxu0 %v1320
      %v1432 = vpop.f32.mrf.mxu0
      %v1433 = vadd.f32 0.0, %v1432
      %1434 = vmatmul.f32.gmra.mxu0 %v1321
      %v1435 = vpop.f32.mrf.mxu0
      %v1436 = vadd.f32 0.0, %v1435
      %1437 = vmatmul.f32.gmra.mxu0 %v1322
      %v1438 = vpop.f32.mrf.mxu0
      %v1439 = vadd.f32 0.0, %v1438
      %1440 = vmatmul.f32.gmra.mxu0 %v1323
      %v1441 = vpop.f32.mrf.mxu0
      %v1442 = vadd.f32 0.0, %v1441
      %1443 = vmatmul.f32.gmra.mxu0 %v1324
      %v1444 = vpop.f32.mrf.mxu0
      %v1445 = vadd.f32 0.0, %v1444
      %1446 = vmatmul.f32.gmra.mxu0 %v1325
      %v1447 = vpop.f32.mrf.mxu0
      %v1448 = vadd.f32 0.0, %v1447
      %1449 = vmatmul.f32.gmra.mxu0 %v1326
      %v1450 = vpop.f32.mrf.mxu0
      %v1451 = vadd.f32 0.0, %v1450
      %1452 = vmatmul.f32.gmra.mxu0 %v1327
      %v1453 = vpop.f32.mrf.mxu0
      %v1454 = vadd.f32 0.0, %v1453
      %1455 = vmatmul.f32.gmra.mxu0 %v1328
      %v1456 = vpop.f32.mrf.mxu0
      %v1457 = vadd.f32 0.0, %v1456
      %1458 = vmatmul.f32.gmra.mxu0 %v1329
      %v1459 = vpop.f32.mrf.mxu0
      %v1460 = vadd.f32 0.0, %v1459
      %1461 = vmatmul.f32.gmra.mxu0 %v1330
      %v1462 = vpop.f32.mrf.mxu0
      %v1463 = vadd.f32 0.0, %v1462
      %1464 = vmatmul.f32.gmra.mxu0 %v1331
      %v1465 = vpop.f32.mrf.mxu0
      %v1466 = vadd.f32 0.0, %v1465
      %1467 = vmatmul.f32.gmra.mxu0 %v1332
      %v1468 = vpop.f32.mrf.mxu0
      %v1469 = vadd.f32 0.0, %v1468
      %1470 = vmatmul.f32.gmra.mxu0 %v1333
      %v1471 = vpop.f32.mrf.mxu0
      %v1472 = vadd.f32 0.0, %v1471
      %1473 = vmatmul.f32.gmra.mxu0 %v1334
      %v1474 = vpop.f32.mrf.mxu0
      %v1475 = vadd.f32 0.0, %v1474
      %1476 = vmatmul.f32.gmra.mxu0 %v1335
      %v1477 = vpop.f32.mrf.mxu0
      %v1478 = vadd.f32 0.0, %v1477
      %1479 = vmatmul.f32.gmra.mxu0 %v1336
      %v1480 = vpop.f32.mrf.mxu0
      %v1481 = vadd.f32 0.0, %v1480
      %1482 = vmatmul.f32.gmra.mxu0 %v1337
      %v1483 = vpop.f32.mrf.mxu0
      %v1484 = vadd.f32 0.0, %v1483
      %1485 = vmatmul.f32.gmra.mxu0 %v1338
      %v1486 = vpop.f32.mrf.mxu0
      %v1487 = vadd.f32 0.0, %v1486
      %1488 = vmatmul.f32.gmra.mxu0 %v1339
      %v1489 = vpop.f32.mrf.mxu0
      %v1490 = vadd.f32 0.0, %v1489
      %1491 = vmatmul.f32.gmra.mxu0 %v1340
      %v1492 = vpop.f32.mrf.mxu0
      %v1493 = vadd.f32 0.0, %v1492
      %1494 = vmatmul.f32.gmra.mxu0 %v1341
      %v1495 = vpop.f32.mrf.mxu0
      %v1496 = vadd.f32 0.0, %v1495
      %1497 = vmatmul.f32.gmra.mxu0 %v1342
      %v1498 = vpop.f32.mrf.mxu0
      %v1499 = vadd.f32 0.0, %v1498
      %1500 = vmatmul.f32.gmra.mxu0 %v1343
      %v1501 = vpop.f32.mrf.mxu0
      %v1502 = vadd.f32 0.0, %v1501
      %1503 = vmatmul.f32.gmra.mxu0 %v1344
      %v1504 = vpop.f32.mrf.mxu0
      %v1505 = vadd.f32 0.0, %v1504
      %1506 = vmatmul.f32.gmra.mxu0 %v1345
      %v1507 = vpop.f32.mrf.mxu0
      %v1508 = vadd.f32 0.0, %v1507
      %1509 = vmatmul.f32.gmra.mxu0 %v1346
      %v1510 = vpop.f32.mrf.mxu0
      %v1511 = vadd.f32 0.0, %v1510
      %1512 = vmatmul.f32.gmra.mxu0 %v1347
      %v1513 = vpop.f32.mrf.mxu0
      %v1514 = vadd.f32 0.0, %v1513
      %1515 = vmatmul.f32.gmra.mxu0 %v1348
      %v1516 = vpop.f32.mrf.mxu0
      %v1517 = vadd.f32 0.0, %v1516
      %1518 = vmatmul.f32.gmra.mxu0 %v1349
      %v1519 = vpop.f32.mrf.mxu0
      %v1520 = vadd.f32 0.0, %v1519
      %1521 = vmatmul.f32.gmra.mxu0 %v1350
      %v1522 = vpop.f32.mrf.mxu0
      %v1523 = vadd.f32 0.0, %v1522
      %1524 = vmatmul.f32.gmra.mxu0 %v1351
      %v1525 = vpop.f32.mrf.mxu0
      %v1526 = vadd.f32 0.0, %v1525
      %1527 = vmatmul.f32.gmra.mxu0 %v1352
      %v1528 = vpop.f32.mrf.mxu0
      %v1529 = vadd.f32 0.0, %v1528
      %1530 = vdwg.mxu0
      %v1531 = vadd.f32 %v1257, %v1388
      %v1532 = vadd.f32 %v1258, %v1391
      %v1533 = vadd.f32 %v1259, %v1394
      %v1534 = vadd.f32 %v1260, %v1397
      %v1535 = vadd.f32 %v1261, %v1400
      %v1536 = vadd.f32 %v1262, %v1403
      %v1537 = vadd.f32 %v1263, %v1406
      %v1538 = vadd.f32 %v1264, %v1409
      %v1539 = vadd.f32 %v1265, %v1412
      %v1540 = vadd.f32 %v1266, %v1415
      %v1541 = vadd.f32 %v1267, %v1418
      %v1542 = vadd.f32 %v1268, %v1421
      %v1543 = vadd.f32 %v1269, %v1424
      %v1544 = vadd.f32 %v1270, %v1427
      %v1545 = vadd.f32 %v1271, %v1430
      %v1546 = vadd.f32 %v1272, %v1433
      %v1547 = vadd.f32 %v1273, %v1436
      %v1548 = vadd.f32 %v1274, %v1439
      %v1549 = vadd.f32 %v1275, %v1442
      %v1550 = vadd.f32 %v1276, %v1445
      %v1551 = vadd.f32 %v1277, %v1448
      %v1552 = vadd.f32 %v1278, %v1451
      %v1553 = vadd.f32 %v1279, %v1454
      %v1554 = vadd.f32 %v1280, %v1457
      %v1555 = vadd.f32 %v1281, %v1460
      %v1556 = vadd.f32 %v1282, %v1463
      %v1557 = vadd.f32 %v1283, %v1466
      %v1558 = vadd.f32 %v1284, %v1469
      %v1559 = vadd.f32 %v1285, %v1472
      %v1560 = vadd.f32 %v1286, %v1475
      %v1561 = vadd.f32 %v1287, %v1478
      %v1562 = vadd.f32 %v1288, %v1481
      %v1563 = vadd.f32 %v1289, %v1484
      %v1564 = vadd.f32 %v1290, %v1487
      %v1565 = vadd.f32 %v1291, %v1490
      %v1566 = vadd.f32 %v1292, %v1493
      %v1567 = vadd.f32 %v1293, %v1496
      %v1568 = vadd.f32 %v1294, %v1499
      %v1569 = vadd.f32 %v1295, %v1502
      %v1570 = vadd.f32 %v1296, %v1505
      %v1571 = vadd.f32 %v1297, %v1508
      %v1572 = vadd.f32 %v1298, %v1511
      %v1573 = vadd.f32 %v1299, %v1514
      %v1574 = vadd.f32 %v1300, %v1517
      %v1575 = vadd.f32 %v1301, %v1520
      %v1576 = vadd.f32 %v1302, %v1523
      %v1577 = vadd.f32 %v1303, %v1526
      %v1578 = vadd.f32 %v1304, %v1529
      %v1579 = vld [vmem:[%s300 + $0x1a] sm:$0xff]
      %v1580 = vld [vmem:[%s300 + $0x22] sm:$0xff]
      %v1581 = vld [vmem:[%s300 + $0x2a] sm:$0xff]
      %v1582 = vld [vmem:[%s300 + $0x32] sm:$0xff]
      %v1583 = vld [vmem:[%s300 + $0x3a] sm:$0xff]
      %v1584 = vld [vmem:[%s300 + $0x42] sm:$0xff]
      %v1585 = vld [vmem:[%s300 + $0x4a] sm:$0xff]
      %v1586 = vld [vmem:[%s300 + $0x52] sm:$0xff]
      %v1587 = vld [vmem:[%s300 + $0x5a] sm:$0xff]
      %v1588 = vld [vmem:[%s300 + $0x62] sm:$0xff]
      %v1589 = vld [vmem:[%s300 + $0x6a] sm:$0xff]
      %v1590 = vld [vmem:[%s300 + $0x72] sm:$0xff]
      %v1591 = vld [vmem:[%s300 + $0x7a] sm:$0xff]
      %v1592 = vld [vmem:[%s300 + $0x82] sm:$0xff]
      %v1593 = vld [vmem:[%s300 + $0x8a] sm:$0xff]
      %v1594 = vld [vmem:[%s300 + $0x92] sm:$0xff]
      %v1595 = vld [vmem:[%s300 + $0x9a] sm:$0xff]
      %v1596 = vld [vmem:[%s300 + $0xa2] sm:$0xff]
      %v1597 = vld [vmem:[%s300 + $0xaa] sm:$0xff]
      %v1598 = vld [vmem:[%s300 + $0xb2] sm:$0xff]
      %v1599 = vld [vmem:[%s300 + $0xba] sm:$0xff]
      %v1600 = vld [vmem:[%s300 + $0xc2] sm:$0xff]
      %v1601 = vld [vmem:[%s300 + $0xca] sm:$0xff]
      %v1602 = vld [vmem:[%s300 + $0xd2] sm:$0xff]
      %v1603 = vld [vmem:[%s300 + $0xda] sm:$0xff]
      %v1604 = vld [vmem:[%s300 + $0xe2] sm:$0xff]
      %v1605 = vld [vmem:[%s300 + $0xea] sm:$0xff]
      %v1606 = vld [vmem:[%s300 + $0xf2] sm:$0xff]
      %v1607 = vld [vmem:[%s300 + $0xfa] sm:$0xff]
      %v1608 = vld [vmem:[%s300 + $0x102] sm:$0xff]
      %v1609 = vld [vmem:[%s300 + $0x10a] sm:$0xff]
      %v1610 = vld [vmem:[%s300 + $0x112] sm:$0xff]
      %v1611 = vld [vmem:[%s300 + $0x11a] sm:$0xff]
      %v1612 = vld [vmem:[%s300 + $0x122] sm:$0xff]
      %v1613 = vld [vmem:[%s300 + $0x12a] sm:$0xff]
      %v1614 = vld [vmem:[%s300 + $0x132] sm:$0xff]
      %v1615 = vld [vmem:[%s300 + $0x13a] sm:$0xff]
      %v1616 = vld [vmem:[%s300 + $0x142] sm:$0xff]
      %v1617 = vld [vmem:[%s300 + $0x14a] sm:$0xff]
      %v1618 = vld [vmem:[%s300 + $0x152] sm:$0xff]
      %v1619 = vld [vmem:[%s300 + $0x15a] sm:$0xff]
      %v1620 = vld [vmem:[%s300 + $0x162] sm:$0xff]
      %v1621 = vld [vmem:[%s300 + $0x16a] sm:$0xff]
      %v1622 = vld [vmem:[%s300 + $0x172] sm:$0xff]
      %v1623 = vld [vmem:[%s300 + $0x17a] sm:$0xff]
      %v1624 = vld [vmem:[%s300 + $0x182] sm:$0xff]
      %v1625 = vld [vmem:[%s300 + $0x18a] sm:$0xff]
      %v1626 = vld [vmem:[%s300 + $0x192] sm:$0xff]
      %s1627 = scalar_lea.vmem %s2, 640
      %v1628 = vld [vmem:[%s1627] sm:$0xff]
      %v1629 = vld [vmem:[%s1627 + $0x8] sm:$0xff]
      %v1630 = vld [vmem:[%s1627 + $0x10] sm:$0xff]
      %v1631 = vld [vmem:[%s1627 + $0x18] sm:$0xff]
      %v1632 = vld [vmem:[%s1627 + $0x20] sm:$0xff]
      %v1633 = vld [vmem:[%s1627 + $0x28] sm:$0xff]
      %v1634 = vld [vmem:[%s1627 + $0x30] sm:$0xff]
      %v1635 = vld [vmem:[%s1627 + $0x38] sm:$0xff]
      %v1636 = vld [vmem:[%s1627 + $0x40] sm:$0xff]
      %v1637 = vld [vmem:[%s1627 + $0x48] sm:$0xff]
      %v1638 = vld [vmem:[%s1627 + $0x50] sm:$0xff]
      %v1639 = vld [vmem:[%s1627 + $0x58] sm:$0xff]
      %v1640 = vld [vmem:[%s1627 + $0x60] sm:$0xff]
      %v1641 = vld [vmem:[%s1627 + $0x68] sm:$0xff]
      %v1642 = vld [vmem:[%s1627 + $0x70] sm:$0xff]
      %v1643 = vld [vmem:[%s1627 + $0x78] sm:$0xff]
      %1644 = vmatpush.msra.mxu0 %v1643
      %1645 = vmatpush.msra.mxu0 %v1642
      %1646 = vmatpush.msra.mxu0 %v1641
      %1647 = vmatpush.msra.mxu0 %v1640
      %1648 = vmatpush.msra.mxu0 %v1639
      %1649 = vmatpush.msra.mxu0 %v1638
      %1650 = vmatpush.msra.mxu0 %v1637
      %1651 = vmatpush.msra.mxu0 %v1636
      %1652 = vmatpush.msra.mxu0 %v1635
      %1653 = vmatpush.msra.mxu0 %v1634
      %1654 = vmatpush.msra.mxu0 %v1633
      %1655 = vmatpush.msra.mxu0 %v1632
      %1656 = vmatpush.msra.mxu0 %v1631
      %1657 = vmatpush.msra.mxu0 %v1630
      %1658 = vmatpush.msra.mxu0 %v1629
      %1659 = vmatpush.msra.mxu0 %v1628
      %1660 = vmatmul.f32.gmra.mxu0 %v1579
      %v1661 = vpop.f32.mrf.mxu0
      %v1662 = vadd.f32 0.0, %v1661
      %1663 = vmatmul.f32.gmra.mxu0 %v1580
      %v1664 = vpop.f32.mrf.mxu0
      %v1665 = vadd.f32 0.0, %v1664
      %1666 = vmatmul.f32.gmra.mxu0 %v1581
      %v1667 = vpop.f32.mrf.mxu0
      %v1668 = vadd.f32 0.0, %v1667
      %1669 = vmatmul.f32.gmra.mxu0 %v1582
      %v1670 = vpop.f32.mrf.mxu0
      %v1671 = vadd.f32 0.0, %v1670
      %1672 = vmatmul.f32.gmra.mxu0 %v1583
      %v1673 = vpop.f32.mrf.mxu0
      %v1674 = vadd.f32 0.0, %v1673
      %1675 = vmatmul.f32.gmra.mxu0 %v1584
      %v1676 = vpop.f32.mrf.mxu0
      %v1677 = vadd.f32 0.0, %v1676
      %1678 = vmatmul.f32.gmra.mxu0 %v1585
      %v1679 = vpop.f32.mrf.mxu0
      %v1680 = vadd.f32 0.0, %v1679
      %1681 = vmatmul.f32.gmra.mxu0 %v1586
      %v1682 = vpop.f32.mrf.mxu0
      %v1683 = vadd.f32 0.0, %v1682
      %1684 = vmatmul.f32.gmra.mxu0 %v1587
      %v1685 = vpop.f32.mrf.mxu0
      %v1686 = vadd.f32 0.0, %v1685
      %1687 = vmatmul.f32.gmra.mxu0 %v1588
      %v1688 = vpop.f32.mrf.mxu0
      %v1689 = vadd.f32 0.0, %v1688
      %1690 = vmatmul.f32.gmra.mxu0 %v1589
      %v1691 = vpop.f32.mrf.mxu0
      %v1692 = vadd.f32 0.0, %v1691
      %1693 = vmatmul.f32.gmra.mxu0 %v1590
      %v1694 = vpop.f32.mrf.mxu0
      %v1695 = vadd.f32 0.0, %v1694
      %1696 = vmatmul.f32.gmra.mxu0 %v1591
      %v1697 = vpop.f32.mrf.mxu0
      %v1698 = vadd.f32 0.0, %v1697
      %1699 = vmatmul.f32.gmra.mxu0 %v1592
      %v1700 = vpop.f32.mrf.mxu0
      %v1701 = vadd.f32 0.0, %v1700
      %1702 = vmatmul.f32.gmra.mxu0 %v1593
      %v1703 = vpop.f32.mrf.mxu0
      %v1704 = vadd.f32 0.0, %v1703
      %1705 = vmatmul.f32.gmra.mxu0 %v1594
      %v1706 = vpop.f32.mrf.mxu0
      %v1707 = vadd.f32 0.0, %v1706
      %1708 = vmatmul.f32.gmra.mxu0 %v1595
      %v1709 = vpop.f32.mrf.mxu0
      %v1710 = vadd.f32 0.0, %v1709
      %1711 = vmatmul.f32.gmra.mxu0 %v1596
      %v1712 = vpop.f32.mrf.mxu0
      %v1713 = vadd.f32 0.0, %v1712
      %1714 = vmatmul.f32.gmra.mxu0 %v1597
      %v1715 = vpop.f32.mrf.mxu0
      %v1716 = vadd.f32 0.0, %v1715
      %1717 = vmatmul.f32.gmra.mxu0 %v1598
      %v1718 = vpop.f32.mrf.mxu0
      %v1719 = vadd.f32 0.0, %v1718
      %1720 = vmatmul.f32.gmra.mxu0 %v1599
      %v1721 = vpop.f32.mrf.mxu0
      %v1722 = vadd.f32 0.0, %v1721
      %1723 = vmatmul.f32.gmra.mxu0 %v1600
      %v1724 = vpop.f32.mrf.mxu0
      %v1725 = vadd.f32 0.0, %v1724
      %1726 = vmatmul.f32.gmra.mxu0 %v1601
      %v1727 = vpop.f32.mrf.mxu0
      %v1728 = vadd.f32 0.0, %v1727
      %1729 = vmatmul.f32.gmra.mxu0 %v1602
      %v1730 = vpop.f32.mrf.mxu0
      %v1731 = vadd.f32 0.0, %v1730
      %1732 = vmatmul.f32.gmra.mxu0 %v1603
      %v1733 = vpop.f32.mrf.mxu0
      %v1734 = vadd.f32 0.0, %v1733
      %1735 = vmatmul.f32.gmra.mxu0 %v1604
      %v1736 = vpop.f32.mrf.mxu0
      %v1737 = vadd.f32 0.0, %v1736
      %1738 = vmatmul.f32.gmra.mxu0 %v1605
      %v1739 = vpop.f32.mrf.mxu0
      %v1740 = vadd.f32 0.0, %v1739
      %1741 = vmatmul.f32.gmra.mxu0 %v1606
      %v1742 = vpop.f32.mrf.mxu0
      %v1743 = vadd.f32 0.0, %v1742
      %1744 = vmatmul.f32.gmra.mxu0 %v1607
      %v1745 = vpop.f32.mrf.mxu0
      %v1746 = vadd.f32 0.0, %v1745
      %1747 = vmatmul.f32.gmra.mxu0 %v1608
      %v1748 = vpop.f32.mrf.mxu0
      %v1749 = vadd.f32 0.0, %v1748
      %1750 = vmatmul.f32.gmra.mxu0 %v1609
      %v1751 = vpop.f32.mrf.mxu0
      %v1752 = vadd.f32 0.0, %v1751
      %1753 = vmatmul.f32.gmra.mxu0 %v1610
      %v1754 = vpop.f32.mrf.mxu0
      %v1755 = vadd.f32 0.0, %v1754
      %1756 = vmatmul.f32.gmra.mxu0 %v1611
      %v1757 = vpop.f32.mrf.mxu0
      %v1758 = vadd.f32 0.0, %v1757
      %1759 = vmatmul.f32.gmra.mxu0 %v1612
      %v1760 = vpop.f32.mrf.mxu0
      %v1761 = vadd.f32 0.0, %v1760
      %1762 = vmatmul.f32.gmra.mxu0 %v1613
      %v1763 = vpop.f32.mrf.mxu0
      %v1764 = vadd.f32 0.0, %v1763
      %1765 = vmatmul.f32.gmra.mxu0 %v1614
      %v1766 = vpop.f32.mrf.mxu0
      %v1767 = vadd.f32 0.0, %v1766
      %1768 = vmatmul.f32.gmra.mxu0 %v1615
      %v1769 = vpop.f32.mrf.mxu0
      %v1770 = vadd.f32 0.0, %v1769
      %1771 = vmatmul.f32.gmra.mxu0 %v1616
      %v1772 = vpop.f32.mrf.mxu0
      %v1773 = vadd.f32 0.0, %v1772
      %1774 = vmatmul.f32.gmra.mxu0 %v1617
      %v1775 = vpop.f32.mrf.mxu0
      %v1776 = vadd.f32 0.0, %v1775
      %1777 = vmatmul.f32.gmra.mxu0 %v1618
      %v1778 = vpop.f32.mrf.mxu0
      %v1779 = vadd.f32 0.0, %v1778
      %1780 = vmatmul.f32.gmra.mxu0 %v1619
      %v1781 = vpop.f32.mrf.mxu0
      %v1782 = vadd.f32 0.0, %v1781
      %1783 = vmatmul.f32.gmra.mxu0 %v1620
      %v1784 = vpop.f32.mrf.mxu0
      %v1785 = vadd.f32 0.0, %v1784
      %1786 = vmatmul.f32.gmra.mxu0 %v1621
      %v1787 = vpop.f32.mrf.mxu0
      %v1788 = vadd.f32 0.0, %v1787
      %1789 = vmatmul.f32.gmra.mxu0 %v1622
      %v1790 = vpop.f32.mrf.mxu0
      %v1791 = vadd.f32 0.0, %v1790
      %1792 = vmatmul.f32.gmra.mxu0 %v1623
      %v1793 = vpop.f32.mrf.mxu0
      %v1794 = vadd.f32 0.0, %v1793
      %1795 = vmatmul.f32.gmra.mxu0 %v1624
      %v1796 = vpop.f32.mrf.mxu0
      %v1797 = vadd.f32 0.0, %v1796
      %1798 = vmatmul.f32.gmra.mxu0 %v1625
      %v1799 = vpop.f32.mrf.mxu0
      %v1800 = vadd.f32 0.0, %v1799
      %1801 = vmatmul.f32.gmra.mxu0 %v1626
      %v1802 = vpop.f32.mrf.mxu0
      %v1803 = vadd.f32 0.0, %v1802
      %1804 = vdwg.mxu0
      %v1805 = vadd.f32 %v1531, %v1662
      %v1806 = vadd.f32 %v1532, %v1665
      %v1807 = vadd.f32 %v1533, %v1668
      %v1808 = vadd.f32 %v1534, %v1671
      %v1809 = vadd.f32 %v1535, %v1674
      %v1810 = vadd.f32 %v1536, %v1677
      %v1811 = vadd.f32 %v1537, %v1680
      %v1812 = vadd.f32 %v1538, %v1683
      %v1813 = vadd.f32 %v1539, %v1686
      %v1814 = vadd.f32 %v1540, %v1689
      %v1815 = vadd.f32 %v1541, %v1692
      %v1816 = vadd.f32 %v1542, %v1695
      %v1817 = vadd.f32 %v1543, %v1698
      %v1818 = vadd.f32 %v1544, %v1701
      %v1819 = vadd.f32 %v1545, %v1704
      %v1820 = vadd.f32 %v1546, %v1707
      %v1821 = vadd.f32 %v1547, %v1710
      %v1822 = vadd.f32 %v1548, %v1713
      %v1823 = vadd.f32 %v1549, %v1716
      %v1824 = vadd.f32 %v1550, %v1719
      %v1825 = vadd.f32 %v1551, %v1722
      %v1826 = vadd.f32 %v1552, %v1725
      %v1827 = vadd.f32 %v1553, %v1728
      %v1828 = vadd.f32 %v1554, %v1731
      %v1829 = vadd.f32 %v1555, %v1734
      %v1830 = vadd.f32 %v1556, %v1737
      %v1831 = vadd.f32 %v1557, %v1740
      %v1832 = vadd.f32 %v1558, %v1743
      %v1833 = vadd.f32 %v1559, %v1746
      %v1834 = vadd.f32 %v1560, %v1749
      %v1835 = vadd.f32 %v1561, %v1752
      %v1836 = vadd.f32 %v1562, %v1755
      %v1837 = vadd.f32 %v1563, %v1758
      %v1838 = vadd.f32 %v1564, %v1761
      %v1839 = vadd.f32 %v1565, %v1764
      %v1840 = vadd.f32 %v1566, %v1767
      %v1841 = vadd.f32 %v1567, %v1770
      %v1842 = vadd.f32 %v1568, %v1773
      %v1843 = vadd.f32 %v1569, %v1776
      %v1844 = vadd.f32 %v1570, %v1779
      %v1845 = vadd.f32 %v1571, %v1782
      %v1846 = vadd.f32 %v1572, %v1785
      %v1847 = vadd.f32 %v1573, %v1788
      %v1848 = vadd.f32 %v1574, %v1791
      %v1849 = vadd.f32 %v1575, %v1794
      %v1850 = vadd.f32 %v1576, %v1797
      %v1851 = vadd.f32 %v1577, %v1800
      %v1852 = vadd.f32 %v1578, %v1803
      %v1853 = vld [vmem:[%s300 + $0x30] sm:$0xff]
      %v1854 = vld [vmem:[%s300 + $0x38] sm:$0xff]
      %v1855 = vld [vmem:[%s300 + $0x40] sm:$0xff]
      %v1856 = vld [vmem:[%s300 + $0x48] sm:$0xff]
      %v1857 = vld [vmem:[%s300 + $0x50] sm:$0xff]
      %v1858 = vld [vmem:[%s300 + $0x58] sm:$0xff]
      %v1859 = vld [vmem:[%s300 + $0x60] sm:$0xff]
      %v1860 = vld [vmem:[%s300 + $0x68] sm:$0xff]
      %v1861 = vld [vmem:[%s300 + $0x70] sm:$0xff]
      %v1862 = vld [vmem:[%s300 + $0x78] sm:$0xff]
      %v1863 = vld [vmem:[%s300 + $0x80] sm:$0xff]
      %v1864 = vld [vmem:[%s300 + $0x88] sm:$0xff]
      %v1865 = vld [vmem:[%s300 + $0x90] sm:$0xff]
      %v1866 = vld [vmem:[%s300 + $0x98] sm:$0xff]
      %v1867 = vld [vmem:[%s300 + $0xa0] sm:$0xff]
      %v1868 = vld [vmem:[%s300 + $0xa8] sm:$0xff]
      %v1869 = vld [vmem:[%s300 + $0xb0] sm:$0xff]
      %v1870 = vld [vmem:[%s300 + $0xb8] sm:$0xff]
      %v1871 = vld [vmem:[%s300 + $0xc0] sm:$0xff]
      %v1872 = vld [vmem:[%s300 + $0xc8] sm:$0xff]
      %v1873 = vld [vmem:[%s300 + $0xd0] sm:$0xff]
      %v1874 = vld [vmem:[%s300 + $0xd8] sm:$0xff]
      %v1875 = vld [vmem:[%s300 + $0xe0] sm:$0xff]
      %v1876 = vld [vmem:[%s300 + $0xe8] sm:$0xff]
      %v1877 = vld [vmem:[%s300 + $0xf0] sm:$0xff]
      %v1878 = vld [vmem:[%s300 + $0xf8] sm:$0xff]
      %v1879 = vld [vmem:[%s300 + $0x100] sm:$0xff]
      %v1880 = vld [vmem:[%s300 + $0x108] sm:$0xff]
      %v1881 = vld [vmem:[%s300 + $0x110] sm:$0xff]
      %v1882 = vld [vmem:[%s300 + $0x118] sm:$0xff]
      %v1883 = vld [vmem:[%s300 + $0x120] sm:$0xff]
      %v1884 = vld [vmem:[%s300 + $0x128] sm:$0xff]
      %v1885 = vld [vmem:[%s300 + $0x130] sm:$0xff]
      %v1886 = vld [vmem:[%s300 + $0x138] sm:$0xff]
      %v1887 = vld [vmem:[%s300 + $0x140] sm:$0xff]
      %v1888 = vld [vmem:[%s300 + $0x148] sm:$0xff]
      %v1889 = vld [vmem:[%s300 + $0x150] sm:$0xff]
      %v1890 = vld [vmem:[%s300 + $0x158] sm:$0xff]
      %v1891 = vld [vmem:[%s300 + $0x160] sm:$0xff]
      %v1892 = vld [vmem:[%s300 + $0x168] sm:$0xff]
      %v1893 = vld [vmem:[%s300 + $0x170] sm:$0xff]
      %v1894 = vld [vmem:[%s300 + $0x178] sm:$0xff]
      %v1895 = vld [vmem:[%s300 + $0x180] sm:$0xff]
      %v1896 = vld [vmem:[%s300 + $0x188] sm:$0xff]
      %v1897 = vld [vmem:[%s300 + $0x190] sm:$0xff]
      %v1898 = vld [vmem:[%s300 + $0x198] sm:$0xff]
      %v1899 = vld [vmem:[%s300 + $0x1a0] sm:$0xff]
      %v1900 = vld [vmem:[%s300 + $0x1a8] sm:$0xff]
      %s1901 = scalar_lea.vmem %s2, 768
      %v1902 = vld [vmem:[%s1901] sm:$0xff]
      %v1903 = vld [vmem:[%s1901 + $0x8] sm:$0xff]
      %v1904 = vld [vmem:[%s1901 + $0x10] sm:$0xff]
      %v1905 = vld [vmem:[%s1901 + $0x18] sm:$0xff]
      %v1906 = vld [vmem:[%s1901 + $0x20] sm:$0xff]
      %v1907 = vld [vmem:[%s1901 + $0x28] sm:$0xff]
      %v1908 = vld [vmem:[%s1901 + $0x30] sm:$0xff]
      %v1909 = vld [vmem:[%s1901 + $0x38] sm:$0xff]
      %v1910 = vld [vmem:[%s1901 + $0x40] sm:$0xff]
      %v1911 = vld [vmem:[%s1901 + $0x48] sm:$0xff]
      %v1912 = vld [vmem:[%s1901 + $0x50] sm:$0xff]
      %v1913 = vld [vmem:[%s1901 + $0x58] sm:$0xff]
      %v1914 = vld [vmem:[%s1901 + $0x60] sm:$0xff]
      %v1915 = vld [vmem:[%s1901 + $0x68] sm:$0xff]
      %v1916 = vld [vmem:[%s1901 + $0x70] sm:$0xff]
      %v1917 = vld [vmem:[%s1901 + $0x78] sm:$0xff]
      %1918 = vmatpush.msra.mxu0 %v1917
      %1919 = vmatpush.msra.mxu0 %v1916
      %1920 = vmatpush.msra.mxu0 %v1915
      %1921 = vmatpush.msra.mxu0 %v1914
      %1922 = vmatpush.msra.mxu0 %v1913
      %1923 = vmatpush.msra.mxu0 %v1912
      %1924 = vmatpush.msra.mxu0 %v1911
      %1925 = vmatpush.msra.mxu0 %v1910
      %1926 = vmatpush.msra.mxu0 %v1909
      %1927 = vmatpush.msra.mxu0 %v1908
      %1928 = vmatpush.msra.mxu0 %v1907
      %1929 = vmatpush.msra.mxu0 %v1906
      %1930 = vmatpush.msra.mxu0 %v1905
      %1931 = vmatpush.msra.mxu0 %v1904
      %1932 = vmatpush.msra.mxu0 %v1903
      %1933 = vmatpush.msra.mxu0 %v1902
      %1934 = vmatmul.f32.gmra.mxu0 %v1853
      %v1935 = vpop.f32.mrf.mxu0
      %v1936 = vadd.f32 0.0, %v1935
      %1937 = vmatmul.f32.gmra.mxu0 %v1854
      %v1938 = vpop.f32.mrf.mxu0
      %v1939 = vadd.f32 0.0, %v1938
      %1940 = vmatmul.f32.gmra.mxu0 %v1855
      %v1941 = vpop.f32.mrf.mxu0
      %v1942 = vadd.f32 0.0, %v1941
      %1943 = vmatmul.f32.gmra.mxu0 %v1856
      %v1944 = vpop.f32.mrf.mxu0
      %v1945 = vadd.f32 0.0, %v1944
      %1946 = vmatmul.f32.gmra.mxu0 %v1857
      %v1947 = vpop.f32.mrf.mxu0
      %v1948 = vadd.f32 0.0, %v1947
      %1949 = vmatmul.f32.gmra.mxu0 %v1858
      %v1950 = vpop.f32.mrf.mxu0
      %v1951 = vadd.f32 0.0, %v1950
      %1952 = vmatmul.f32.gmra.mxu0 %v1859
      %v1953 = vpop.f32.mrf.mxu0
      %v1954 = vadd.f32 0.0, %v1953
      %1955 = vmatmul.f32.gmra.mxu0 %v1860
      %v1956 = vpop.f32.mrf.mxu0
      %v1957 = vadd.f32 0.0, %v1956
      %1958 = vmatmul.f32.gmra.mxu0 %v1861
      %v1959 = vpop.f32.mrf.mxu0
      %v1960 = vadd.f32 0.0, %v1959
      %1961 = vmatmul.f32.gmra.mxu0 %v1862
      %v1962 = vpop.f32.mrf.mxu0
      %v1963 = vadd.f32 0.0, %v1962
      %1964 = vmatmul.f32.gmra.mxu0 %v1863
      %v1965 = vpop.f32.mrf.mxu0
      %v1966 = vadd.f32 0.0, %v1965
      %1967 = vmatmul.f32.gmra.mxu0 %v1864
      %v1968 = vpop.f32.mrf.mxu0
      %v1969 = vadd.f32 0.0, %v1968
      %1970 = vmatmul.f32.gmra.mxu0 %v1865
      %v1971 = vpop.f32.mrf.mxu0
      %v1972 = vadd.f32 0.0, %v1971
      %1973 = vmatmul.f32.gmra.mxu0 %v1866
      %v1974 = vpop.f32.mrf.mxu0
      %v1975 = vadd.f32 0.0, %v1974
      %1976 = vmatmul.f32.gmra.mxu0 %v1867
      %v1977 = vpop.f32.mrf.mxu0
      %v1978 = vadd.f32 0.0, %v1977
      %1979 = vmatmul.f32.gmra.mxu0 %v1868
      %v1980 = vpop.f32.mrf.mxu0
      %v1981 = vadd.f32 0.0, %v1980
      %1982 = vmatmul.f32.gmra.mxu0 %v1869
      %v1983 = vpop.f32.mrf.mxu0
      %v1984 = vadd.f32 0.0, %v1983
      %1985 = vmatmul.f32.gmra.mxu0 %v1870
      %v1986 = vpop.f32.mrf.mxu0
      %v1987 = vadd.f32 0.0, %v1986
      %1988 = vmatmul.f32.gmra.mxu0 %v1871
      %v1989 = vpop.f32.mrf.mxu0
      %v1990 = vadd.f32 0.0, %v1989
      %1991 = vmatmul.f32.gmra.mxu0 %v1872
      %v1992 = vpop.f32.mrf.mxu0
      %v1993 = vadd.f32 0.0, %v1992
      %1994 = vmatmul.f32.gmra.mxu0 %v1873
      %v1995 = vpop.f32.mrf.mxu0
      %v1996 = vadd.f32 0.0, %v1995
      %1997 = vmatmul.f32.gmra.mxu0 %v1874
      %v1998 = vpop.f32.mrf.mxu0
      %v1999 = vadd.f32 0.0, %v1998
      %2000 = vmatmul.f32.gmra.mxu0 %v1875
      %v2001 = vpop.f32.mrf.mxu0
      %v2002 = vadd.f32 0.0, %v2001
      %2003 = vmatmul.f32.gmra.mxu0 %v1876
      %v2004 = vpop.f32.mrf.mxu0
      %v2005 = vadd.f32 0.0, %v2004
      %2006 = vmatmul.f32.gmra.mxu0 %v1877
      %v2007 = vpop.f32.mrf.mxu0
      %v2008 = vadd.f32 0.0, %v2007
      %2009 = vmatmul.f32.gmra.mxu0 %v1878
      %v2010 = vpop.f32.mrf.mxu0
      %v2011 = vadd.f32 0.0, %v2010
      %2012 = vmatmul.f32.gmra.mxu0 %v1879
      %v2013 = vpop.f32.mrf.mxu0
      %v2014 = vadd.f32 0.0, %v2013
      %2015 = vmatmul.f32.gmra.mxu0 %v1880
      %v2016 = vpop.f32.mrf.mxu0
      %v2017 = vadd.f32 0.0, %v2016
      %2018 = vmatmul.f32.gmra.mxu0 %v1881
      %v2019 = vpop.f32.mrf.mxu0
      %v2020 = vadd.f32 0.0, %v2019
      %2021 = vmatmul.f32.gmra.mxu0 %v1882
      %v2022 = vpop.f32.mrf.mxu0
      %v2023 = vadd.f32 0.0, %v2022
      %2024 = vmatmul.f32.gmra.mxu0 %v1883
      %v2025 = vpop.f32.mrf.mxu0
      %v2026 = vadd.f32 0.0, %v2025
      %2027 = vmatmul.f32.gmra.mxu0 %v1884
      %v2028 = vpop.f32.mrf.mxu0
      %v2029 = vadd.f32 0.0, %v2028
      %2030 = vmatmul.f32.gmra.mxu0 %v1885
      %v2031 = vpop.f32.mrf.mxu0
      %v2032 = vadd.f32 0.0, %v2031
      %2033 = vmatmul.f32.gmra.mxu0 %v1886
      %v2034 = vpop.f32.mrf.mxu0
      %v2035 = vadd.f32 0.0, %v2034
      %2036 = vmatmul.f32.gmra.mxu0 %v1887
      %v2037 = vpop.f32.mrf.mxu0
      %v2038 = vadd.f32 0.0, %v2037
      %2039 = vmatmul.f32.gmra.mxu0 %v1888
      %v2040 = vpop.f32.mrf.mxu0
      %v2041 = vadd.f32 0.0, %v2040
      %2042 = vmatmul.f32.gmra.mxu0 %v1889
      %v2043 = vpop.f32.mrf.mxu0
      %v2044 = vadd.f32 0.0, %v2043
      %2045 = vmatmul.f32.gmra.mxu0 %v1890
      %v2046 = vpop.f32.mrf.mxu0
      %v2047 = vadd.f32 0.0, %v2046
      %2048 = vmatmul.f32.gmra.mxu0 %v1891
      %v2049 = vpop.f32.mrf.mxu0
      %v2050 = vadd.f32 0.0, %v2049
      %2051 = vmatmul.f32.gmra.mxu0 %v1892
      %v2052 = vpop.f32.mrf.mxu0
      %v2053 = vadd.f32 0.0, %v2052
      %2054 = vmatmul.f32.gmra.mxu0 %v1893
      %v2055 = vpop.f32.mrf.mxu0
      %v2056 = vadd.f32 0.0, %v2055
      %2057 = vmatmul.f32.gmra.mxu0 %v1894
      %v2058 = vpop.f32.mrf.mxu0
      %v2059 = vadd.f32 0.0, %v2058
      %2060 = vmatmul.f32.gmra.mxu0 %v1895
      %v2061 = vpop.f32.mrf.mxu0
      %v2062 = vadd.f32 0.0, %v2061
      %2063 = vmatmul.f32.gmra.mxu0 %v1896
      %v2064 = vpop.f32.mrf.mxu0
      %v2065 = vadd.f32 0.0, %v2064
      %2066 = vmatmul.f32.gmra.mxu0 %v1897
      %v2067 = vpop.f32.mrf.mxu0
      %v2068 = vadd.f32 0.0, %v2067
      %2069 = vmatmul.f32.gmra.mxu0 %v1898
      %v2070 = vpop.f32.mrf.mxu0
      %v2071 = vadd.f32 0.0, %v2070
      %2072 = vmatmul.f32.gmra.mxu0 %v1899
      %v2073 = vpop.f32.mrf.mxu0
      %v2074 = vadd.f32 0.0, %v2073
      %2075 = vmatmul.f32.gmra.mxu0 %v1900
      %v2076 = vpop.f32.mrf.mxu0
      %v2077 = vadd.f32 0.0, %v2076
      %2078 = vdwg.mxu0
      %v2079 = vadd.f32 %v1805, %v1936
      %v2080 = vadd.f32 %v1806, %v1939
      %v2081 = vadd.f32 %v1807, %v1942
      %v2082 = vadd.f32 %v1808, %v1945
      %v2083 = vadd.f32 %v1809, %v1948
      %v2084 = vadd.f32 %v1810, %v1951
      %v2085 = vadd.f32 %v1811, %v1954
      %v2086 = vadd.f32 %v1812, %v1957
      %v2087 = vadd.f32 %v1813, %v1960
      %v2088 = vadd.f32 %v1814, %v1963
      %v2089 = vadd.f32 %v1815, %v1966
      %v2090 = vadd.f32 %v1816, %v1969
      %v2091 = vadd.f32 %v1817, %v1972
      %v2092 = vadd.f32 %v1818, %v1975
      %v2093 = vadd.f32 %v1819, %v1978
      %v2094 = vadd.f32 %v1820, %v1981
      %v2095 = vadd.f32 %v1821, %v1984
      %v2096 = vadd.f32 %v1822, %v1987
      %v2097 = vadd.f32 %v1823, %v1990
      %v2098 = vadd.f32 %v1824, %v1993
      %v2099 = vadd.f32 %v1825, %v1996
      %v2100 = vadd.f32 %v1826, %v1999
      %v2101 = vadd.f32 %v1827, %v2002
      %v2102 = vadd.f32 %v1828, %v2005
      %v2103 = vadd.f32 %v1829, %v2008
      %v2104 = vadd.f32 %v1830, %v2011
      %v2105 = vadd.f32 %v1831, %v2014
      %v2106 = vadd.f32 %v1832, %v2017
      %v2107 = vadd.f32 %v1833, %v2020
      %v2108 = vadd.f32 %v1834, %v2023
      %v2109 = vadd.f32 %v1835, %v2026
      %v2110 = vadd.f32 %v1836, %v2029
      %v2111 = vadd.f32 %v1837, %v2032
      %v2112 = vadd.f32 %v1838, %v2035
      %v2113 = vadd.f32 %v1839, %v2038
      %v2114 = vadd.f32 %v1840, %v2041
      %v2115 = vadd.f32 %v1841, %v2044
      %v2116 = vadd.f32 %v1842, %v2047
      %v2117 = vadd.f32 %v1843, %v2050
      %v2118 = vadd.f32 %v1844, %v2053
      %v2119 = vadd.f32 %v1845, %v2056
      %v2120 = vadd.f32 %v1846, %v2059
      %v2121 = vadd.f32 %v1847, %v2062
      %v2122 = vadd.f32 %v1848, %v2065
      %v2123 = vadd.f32 %v1849, %v2068
      %v2124 = vadd.f32 %v1850, %v2071
      %v2125 = vadd.f32 %v1851, %v2074
      %v2126 = vadd.f32 %v1852, %v2077
      %v2127 = vld [vmem:[%s300 + $0x31] sm:$0xff]
      %v2128 = vld [vmem:[%s300 + $0x39] sm:$0xff]
      %v2129 = vld [vmem:[%s300 + $0x41] sm:$0xff]
      %v2130 = vld [vmem:[%s300 + $0x49] sm:$0xff]
      %v2131 = vld [vmem:[%s300 + $0x51] sm:$0xff]
      %v2132 = vld [vmem:[%s300 + $0x59] sm:$0xff]
      %v2133 = vld [vmem:[%s300 + $0x61] sm:$0xff]
      %v2134 = vld [vmem:[%s300 + $0x69] sm:$0xff]
      %v2135 = vld [vmem:[%s300 + $0x71] sm:$0xff]
      %v2136 = vld [vmem:[%s300 + $0x79] sm:$0xff]
      %v2137 = vld [vmem:[%s300 + $0x81] sm:$0xff]
      %v2138 = vld [vmem:[%s300 + $0x89] sm:$0xff]
      %v2139 = vld [vmem:[%s300 + $0x91] sm:$0xff]
      %v2140 = vld [vmem:[%s300 + $0x99] sm:$0xff]
      %v2141 = vld [vmem:[%s300 + $0xa1] sm:$0xff]
      %v2142 = vld [vmem:[%s300 + $0xa9] sm:$0xff]
      %v2143 = vld [vmem:[%s300 + $0xb1] sm:$0xff]
      %v2144 = vld [vmem:[%s300 + $0xb9] sm:$0xff]
      %v2145 = vld [vmem:[%s300 + $0xc1] sm:$0xff]
      %v2146 = vld [vmem:[%s300 + $0xc9] sm:$0xff]
      %v2147 = vld [vmem:[%s300 + $0xd1] sm:$0xff]
      %v2148 = vld [vmem:[%s300 + $0xd9] sm:$0xff]
      %v2149 = vld [vmem:[%s300 + $0xe1] sm:$0xff]
      %v2150 = vld [vmem:[%s300 + $0xe9] sm:$0xff]
      %v2151 = vld [vmem:[%s300 + $0xf1] sm:$0xff]
      %v2152 = vld [vmem:[%s300 + $0xf9] sm:$0xff]
      %v2153 = vld [vmem:[%s300 + $0x101] sm:$0xff]
      %v2154 = vld [vmem:[%s300 + $0x109] sm:$0xff]
      %v2155 = vld [vmem:[%s300 + $0x111] sm:$0xff]
      %v2156 = vld [vmem:[%s300 + $0x119] sm:$0xff]
      %v2157 = vld [vmem:[%s300 + $0x121] sm:$0xff]
      %v2158 = vld [vmem:[%s300 + $0x129] sm:$0xff]
      %v2159 = vld [vmem:[%s300 + $0x131] sm:$0xff]
      %v2160 = vld [vmem:[%s300 + $0x139] sm:$0xff]
      %v2161 = vld [vmem:[%s300 + $0x141] sm:$0xff]
      %v2162 = vld [vmem:[%s300 + $0x149] sm:$0xff]
      %v2163 = vld [vmem:[%s300 + $0x151] sm:$0xff]
      %v2164 = vld [vmem:[%s300 + $0x159] sm:$0xff]
      %v2165 = vld [vmem:[%s300 + $0x161] sm:$0xff]
      %v2166 = vld [vmem:[%s300 + $0x169] sm:$0xff]
      %v2167 = vld [vmem:[%s300 + $0x171] sm:$0xff]
      %v2168 = vld [vmem:[%s300 + $0x179] sm:$0xff]
      %v2169 = vld [vmem:[%s300 + $0x181] sm:$0xff]
      %v2170 = vld [vmem:[%s300 + $0x189] sm:$0xff]
      %v2171 = vld [vmem:[%s300 + $0x191] sm:$0xff]
      %v2172 = vld [vmem:[%s300 + $0x199] sm:$0xff]
      %v2173 = vld [vmem:[%s300 + $0x1a1] sm:$0xff]
      %v2174 = vld [vmem:[%s300 + $0x1a9] sm:$0xff]
      %s2175 = scalar_lea.vmem %s2, 896
      %v2176 = vld [vmem:[%s2175] sm:$0xff]
      %v2177 = vld [vmem:[%s2175 + $0x8] sm:$0xff]
      %v2178 = vld [vmem:[%s2175 + $0x10] sm:$0xff]
      %v2179 = vld [vmem:[%s2175 + $0x18] sm:$0xff]
      %v2180 = vld [vmem:[%s2175 + $0x20] sm:$0xff]
      %v2181 = vld [vmem:[%s2175 + $0x28] sm:$0xff]
      %v2182 = vld [vmem:[%s2175 + $0x30] sm:$0xff]
      %v2183 = vld [vmem:[%s2175 + $0x38] sm:$0xff]
      %v2184 = vld [vmem:[%s2175 + $0x40] sm:$0xff]
      %v2185 = vld [vmem:[%s2175 + $0x48] sm:$0xff]
      %v2186 = vld [vmem:[%s2175 + $0x50] sm:$0xff]
      %v2187 = vld [vmem:[%s2175 + $0x58] sm:$0xff]
      %v2188 = vld [vmem:[%s2175 + $0x60] sm:$0xff]
      %v2189 = vld [vmem:[%s2175 + $0x68] sm:$0xff]
      %v2190 = vld [vmem:[%s2175 + $0x70] sm:$0xff]
      %v2191 = vld [vmem:[%s2175 + $0x78] sm:$0xff]
      %2192 = vmatpush.msra.mxu0 %v2191
      %2193 = vmatpush.msra.mxu0 %v2190
      %2194 = vmatpush.msra.mxu0 %v2189
      %2195 = vmatpush.msra.mxu0 %v2188
      %2196 = vmatpush.msra.mxu0 %v2187
      %2197 = vmatpush.msra.mxu0 %v2186
      %2198 = vmatpush.msra.mxu0 %v2185
      %2199 = vmatpush.msra.mxu0 %v2184
      %2200 = vmatpush.msra.mxu0 %v2183
      %2201 = vmatpush.msra.mxu0 %v2182
      %2202 = vmatpush.msra.mxu0 %v2181
      %2203 = vmatpush.msra.mxu0 %v2180
      %2204 = vmatpush.msra.mxu0 %v2179
      %2205 = vmatpush.msra.mxu0 %v2178
      %2206 = vmatpush.msra.mxu0 %v2177
      %2207 = vmatpush.msra.mxu0 %v2176
      %2208 = vmatmul.f32.gmra.mxu0 %v2127
      %v2209 = vpop.f32.mrf.mxu0
      %v2210 = vadd.f32 0.0, %v2209
      %2211 = vmatmul.f32.gmra.mxu0 %v2128
      %v2212 = vpop.f32.mrf.mxu0
      %v2213 = vadd.f32 0.0, %v2212
      %2214 = vmatmul.f32.gmra.mxu0 %v2129
      %v2215 = vpop.f32.mrf.mxu0
      %v2216 = vadd.f32 0.0, %v2215
      %2217 = vmatmul.f32.gmra.mxu0 %v2130
      %v2218 = vpop.f32.mrf.mxu0
      %v2219 = vadd.f32 0.0, %v2218
      %2220 = vmatmul.f32.gmra.mxu0 %v2131
      %v2221 = vpop.f32.mrf.mxu0
      %v2222 = vadd.f32 0.0, %v2221
      %2223 = vmatmul.f32.gmra.mxu0 %v2132
      %v2224 = vpop.f32.mrf.mxu0
      %v2225 = vadd.f32 0.0, %v2224
      %2226 = vmatmul.f32.gmra.mxu0 %v2133
      %v2227 = vpop.f32.mrf.mxu0
      %v2228 = vadd.f32 0.0, %v2227
      %2229 = vmatmul.f32.gmra.mxu0 %v2134
      %v2230 = vpop.f32.mrf.mxu0
      %v2231 = vadd.f32 0.0, %v2230
      %2232 = vmatmul.f32.gmra.mxu0 %v2135
      %v2233 = vpop.f32.mrf.mxu0
      %v2234 = vadd.f32 0.0, %v2233
      %2235 = vmatmul.f32.gmra.mxu0 %v2136
      %v2236 = vpop.f32.mrf.mxu0
      %v2237 = vadd.f32 0.0, %v2236
      %2238 = vmatmul.f32.gmra.mxu0 %v2137
      %v2239 = vpop.f32.mrf.mxu0
      %v2240 = vadd.f32 0.0, %v2239
      %2241 = vmatmul.f32.gmra.mxu0 %v2138
      %v2242 = vpop.f32.mrf.mxu0
      %v2243 = vadd.f32 0.0, %v2242
      %2244 = vmatmul.f32.gmra.mxu0 %v2139
      %v2245 = vpop.f32.mrf.mxu0
      %v2246 = vadd.f32 0.0, %v2245
      %2247 = vmatmul.f32.gmra.mxu0 %v2140
      %v2248 = vpop.f32.mrf.mxu0
      %v2249 = vadd.f32 0.0, %v2248
      %2250 = vmatmul.f32.gmra.mxu0 %v2141
      %v2251 = vpop.f32.mrf.mxu0
      %v2252 = vadd.f32 0.0, %v2251
      %2253 = vmatmul.f32.gmra.mxu0 %v2142
      %v2254 = vpop.f32.mrf.mxu0
      %v2255 = vadd.f32 0.0, %v2254
      %2256 = vmatmul.f32.gmra.mxu0 %v2143
      %v2257 = vpop.f32.mrf.mxu0
      %v2258 = vadd.f32 0.0, %v2257
      %2259 = vmatmul.f32.gmra.mxu0 %v2144
      %v2260 = vpop.f32.mrf.mxu0
      %v2261 = vadd.f32 0.0, %v2260
      %2262 = vmatmul.f32.gmra.mxu0 %v2145
      %v2263 = vpop.f32.mrf.mxu0
      %v2264 = vadd.f32 0.0, %v2263
      %2265 = vmatmul.f32.gmra.mxu0 %v2146
      %v2266 = vpop.f32.mrf.mxu0
      %v2267 = vadd.f32 0.0, %v2266
      %2268 = vmatmul.f32.gmra.mxu0 %v2147
      %v2269 = vpop.f32.mrf.mxu0
      %v2270 = vadd.f32 0.0, %v2269
      %2271 = vmatmul.f32.gmra.mxu0 %v2148
      %v2272 = vpop.f32.mrf.mxu0
      %v2273 = vadd.f32 0.0, %v2272
      %2274 = vmatmul.f32.gmra.mxu0 %v2149
      %v2275 = vpop.f32.mrf.mxu0
      %v2276 = vadd.f32 0.0, %v2275
      %2277 = vmatmul.f32.gmra.mxu0 %v2150
      %v2278 = vpop.f32.mrf.mxu0
      %v2279 = vadd.f32 0.0, %v2278
      %2280 = vmatmul.f32.gmra.mxu0 %v2151
      %v2281 = vpop.f32.mrf.mxu0
      %v2282 = vadd.f32 0.0, %v2281
      %2283 = vmatmul.f32.gmra.mxu0 %v2152
      %v2284 = vpop.f32.mrf.mxu0
      %v2285 = vadd.f32 0.0, %v2284
      %2286 = vmatmul.f32.gmra.mxu0 %v2153
      %v2287 = vpop.f32.mrf.mxu0
      %v2288 = vadd.f32 0.0, %v2287
      %2289 = vmatmul.f32.gmra.mxu0 %v2154
      %v2290 = vpop.f32.mrf.mxu0
      %v2291 = vadd.f32 0.0, %v2290
      %2292 = vmatmul.f32.gmra.mxu0 %v2155
      %v2293 = vpop.f32.mrf.mxu0
      %v2294 = vadd.f32 0.0, %v2293
      %2295 = vmatmul.f32.gmra.mxu0 %v2156
      %v2296 = vpop.f32.mrf.mxu0
      %v2297 = vadd.f32 0.0, %v2296
      %2298 = vmatmul.f32.gmra.mxu0 %v2157
      %v2299 = vpop.f32.mrf.mxu0
      %v2300 = vadd.f32 0.0, %v2299
      %2301 = vmatmul.f32.gmra.mxu0 %v2158
      %v2302 = vpop.f32.mrf.mxu0
      %v2303 = vadd.f32 0.0, %v2302
      %2304 = vmatmul.f32.gmra.mxu0 %v2159
      %v2305 = vpop.f32.mrf.mxu0
      %v2306 = vadd.f32 0.0, %v2305
      %2307 = vmatmul.f32.gmra.mxu0 %v2160
      %v2308 = vpop.f32.mrf.mxu0
      %v2309 = vadd.f32 0.0, %v2308
      %2310 = vmatmul.f32.gmra.mxu0 %v2161
      %v2311 = vpop.f32.mrf.mxu0
      %v2312 = vadd.f32 0.0, %v2311
      %2313 = vmatmul.f32.gmra.mxu0 %v2162
      %v2314 = vpop.f32.mrf.mxu0
      %v2315 = vadd.f32 0.0, %v2314
      %2316 = vmatmul.f32.gmra.mxu0 %v2163
      %v2317 = vpop.f32.mrf.mxu0
      %v2318 = vadd.f32 0.0, %v2317
      %2319 = vmatmul.f32.gmra.mxu0 %v2164
      %v2320 = vpop.f32.mrf.mxu0
      %v2321 = vadd.f32 0.0, %v2320
      %2322 = vmatmul.f32.gmra.mxu0 %v2165
      %v2323 = vpop.f32.mrf.mxu0
      %v2324 = vadd.f32 0.0, %v2323
      %2325 = vmatmul.f32.gmra.mxu0 %v2166
      %v2326 = vpop.f32.mrf.mxu0
      %v2327 = vadd.f32 0.0, %v2326
      %2328 = vmatmul.f32.gmra.mxu0 %v2167
      %v2329 = vpop.f32.mrf.mxu0
      %v2330 = vadd.f32 0.0, %v2329
      %2331 = vmatmul.f32.gmra.mxu0 %v2168
      %v2332 = vpop.f32.mrf.mxu0
      %v2333 = vadd.f32 0.0, %v2332
      %2334 = vmatmul.f32.gmra.mxu0 %v2169
      %v2335 = vpop.f32.mrf.mxu0
      %v2336 = vadd.f32 0.0, %v2335
      %2337 = vmatmul.f32.gmra.mxu0 %v2170
      %v2338 = vpop.f32.mrf.mxu0
      %v2339 = vadd.f32 0.0, %v2338
      %2340 = vmatmul.f32.gmra.mxu0 %v2171
      %v2341 = vpop.f32.mrf.mxu0
      %v2342 = vadd.f32 0.0, %v2341
      %2343 = vmatmul.f32.gmra.mxu0 %v2172
      %v2344 = vpop.f32.mrf.mxu0
      %v2345 = vadd.f32 0.0, %v2344
      %2346 = vmatmul.f32.gmra.mxu0 %v2173
      %v2347 = vpop.f32.mrf.mxu0
      %v2348 = vadd.f32 0.0, %v2347
      %2349 = vmatmul.f32.gmra.mxu0 %v2174
      %v2350 = vpop.f32.mrf.mxu0
      %v2351 = vadd.f32 0.0, %v2350
      %2352 = vdwg.mxu0
      %v2353 = vadd.f32 %v2079, %v2210
      %v2354 = vadd.f32 %v2080, %v2213
      %v2355 = vadd.f32 %v2081, %v2216
      %v2356 = vadd.f32 %v2082, %v2219
      %v2357 = vadd.f32 %v2083, %v2222
      %v2358 = vadd.f32 %v2084, %v2225
      %v2359 = vadd.f32 %v2085, %v2228
      %v2360 = vadd.f32 %v2086, %v2231
      %v2361 = vadd.f32 %v2087, %v2234
      %v2362 = vadd.f32 %v2088, %v2237
      %v2363 = vadd.f32 %v2089, %v2240
      %v2364 = vadd.f32 %v2090, %v2243
      %v2365 = vadd.f32 %v2091, %v2246
      %v2366 = vadd.f32 %v2092, %v2249
      %v2367 = vadd.f32 %v2093, %v2252
      %v2368 = vadd.f32 %v2094, %v2255
      %v2369 = vadd.f32 %v2095, %v2258
      %v2370 = vadd.f32 %v2096, %v2261
      %v2371 = vadd.f32 %v2097, %v2264
      %v2372 = vadd.f32 %v2098, %v2267
      %v2373 = vadd.f32 %v2099, %v2270
      %v2374 = vadd.f32 %v2100, %v2273
      %v2375 = vadd.f32 %v2101, %v2276
      %v2376 = vadd.f32 %v2102, %v2279
      %v2377 = vadd.f32 %v2103, %v2282
      %v2378 = vadd.f32 %v2104, %v2285
      %v2379 = vadd.f32 %v2105, %v2288
      %v2380 = vadd.f32 %v2106, %v2291
      %v2381 = vadd.f32 %v2107, %v2294
      %v2382 = vadd.f32 %v2108, %v2297
      %v2383 = vadd.f32 %v2109, %v2300
      %v2384 = vadd.f32 %v2110, %v2303
      %v2385 = vadd.f32 %v2111, %v2306
      %v2386 = vadd.f32 %v2112, %v2309
      %v2387 = vadd.f32 %v2113, %v2312
      %v2388 = vadd.f32 %v2114, %v2315
      %v2389 = vadd.f32 %v2115, %v2318
      %v2390 = vadd.f32 %v2116, %v2321
      %v2391 = vadd.f32 %v2117, %v2324
      %v2392 = vadd.f32 %v2118, %v2327
      %v2393 = vadd.f32 %v2119, %v2330
      %v2394 = vadd.f32 %v2120, %v2333
      %v2395 = vadd.f32 %v2121, %v2336
      %v2396 = vadd.f32 %v2122, %v2339
      %v2397 = vadd.f32 %v2123, %v2342
      %v2398 = vadd.f32 %v2124, %v2345
      %v2399 = vadd.f32 %v2125, %v2348
      %v2400 = vadd.f32 %v2126, %v2351
      %v2401 = vld [vmem:[%s300 + $0x32] sm:$0xff]
      %v2402 = vld [vmem:[%s300 + $0x3a] sm:$0xff]
      %v2403 = vld [vmem:[%s300 + $0x42] sm:$0xff]
      %v2404 = vld [vmem:[%s300 + $0x4a] sm:$0xff]
      %v2405 = vld [vmem:[%s300 + $0x52] sm:$0xff]
      %v2406 = vld [vmem:[%s300 + $0x5a] sm:$0xff]
      %v2407 = vld [vmem:[%s300 + $0x62] sm:$0xff]
      %v2408 = vld [vmem:[%s300 + $0x6a] sm:$0xff]
      %v2409 = vld [vmem:[%s300 + $0x72] sm:$0xff]
      %v2410 = vld [vmem:[%s300 + $0x7a] sm:$0xff]
      %v2411 = vld [vmem:[%s300 + $0x82] sm:$0xff]
      %v2412 = vld [vmem:[%s300 + $0x8a] sm:$0xff]
      %v2413 = vld [vmem:[%s300 + $0x92] sm:$0xff]
      %v2414 = vld [vmem:[%s300 + $0x9a] sm:$0xff]
      %v2415 = vld [vmem:[%s300 + $0xa2] sm:$0xff]
      %v2416 = vld [vmem:[%s300 + $0xaa] sm:$0xff]
      %v2417 = vld [vmem:[%s300 + $0xb2] sm:$0xff]
      %v2418 = vld [vmem:[%s300 + $0xba] sm:$0xff]
      %v2419 = vld [vmem:[%s300 + $0xc2] sm:$0xff]
      %v2420 = vld [vmem:[%s300 + $0xca] sm:$0xff]
      %v2421 = vld [vmem:[%s300 + $0xd2] sm:$0xff]
      %v2422 = vld [vmem:[%s300 + $0xda] sm:$0xff]
      %v2423 = vld [vmem:[%s300 + $0xe2] sm:$0xff]
      %v2424 = vld [vmem:[%s300 + $0xea] sm:$0xff]
      %v2425 = vld [vmem:[%s300 + $0xf2] sm:$0xff]
      %v2426 = vld [vmem:[%s300 + $0xfa] sm:$0xff]
      %v2427 = vld [vmem:[%s300 + $0x102] sm:$0xff]
      %v2428 = vld [vmem:[%s300 + $0x10a] sm:$0xff]
      %v2429 = vld [vmem:[%s300 + $0x112] sm:$0xff]
      %v2430 = vld [vmem:[%s300 + $0x11a] sm:$0xff]
      %v2431 = vld [vmem:[%s300 + $0x122] sm:$0xff]
      %v2432 = vld [vmem:[%s300 + $0x12a] sm:$0xff]
      %v2433 = vld [vmem:[%s300 + $0x132] sm:$0xff]
      %v2434 = vld [vmem:[%s300 + $0x13a] sm:$0xff]
      %v2435 = vld [vmem:[%s300 + $0x142] sm:$0xff]
      %v2436 = vld [vmem:[%s300 + $0x14a] sm:$0xff]
      %v2437 = vld [vmem:[%s300 + $0x152] sm:$0xff]
      %v2438 = vld [vmem:[%s300 + $0x15a] sm:$0xff]
      %v2439 = vld [vmem:[%s300 + $0x162] sm:$0xff]
      %v2440 = vld [vmem:[%s300 + $0x16a] sm:$0xff]
      %v2441 = vld [vmem:[%s300 + $0x172] sm:$0xff]
      %v2442 = vld [vmem:[%s300 + $0x17a] sm:$0xff]
      %v2443 = vld [vmem:[%s300 + $0x182] sm:$0xff]
      %v2444 = vld [vmem:[%s300 + $0x18a] sm:$0xff]
      %v2445 = vld [vmem:[%s300 + $0x192] sm:$0xff]
      %v2446 = vld [vmem:[%s300 + $0x19a] sm:$0xff]
      %v2447 = vld [vmem:[%s300 + $0x1a2] sm:$0xff]
      %v2448 = vld [vmem:[%s300 + $0x1aa] sm:$0xff]
      %s2449 = scalar_lea.vmem %s2, 1024
      %v2450 = vld [vmem:[%s2449] sm:$0xff]
      %v2451 = vld [vmem:[%s2449 + $0x8] sm:$0xff]
      %v2452 = vld [vmem:[%s2449 + $0x10] sm:$0xff]
      %v2453 = vld [vmem:[%s2449 + $0x18] sm:$0xff]
      %v2454 = vld [vmem:[%s2449 + $0x20] sm:$0xff]
      %v2455 = vld [vmem:[%s2449 + $0x28] sm:$0xff]
      %v2456 = vld [vmem:[%s2449 + $0x30] sm:$0xff]
      %v2457 = vld [vmem:[%s2449 + $0x38] sm:$0xff]
      %v2458 = vld [vmem:[%s2449 + $0x40] sm:$0xff]
      %v2459 = vld [vmem:[%s2449 + $0x48] sm:$0xff]
      %v2460 = vld [vmem:[%s2449 + $0x50] sm:$0xff]
      %v2461 = vld [vmem:[%s2449 + $0x58] sm:$0xff]
      %v2462 = vld [vmem:[%s2449 + $0x60] sm:$0xff]
      %v2463 = vld [vmem:[%s2449 + $0x68] sm:$0xff]
      %v2464 = vld [vmem:[%s2449 + $0x70] sm:$0xff]
      %v2465 = vld [vmem:[%s2449 + $0x78] sm:$0xff]
      %2466 = vmatpush.msra.mxu0 %v2465
      %2467 = vmatpush.msra.mxu0 %v2464
      %2468 = vmatpush.msra.mxu0 %v2463
      %2469 = vmatpush.msra.mxu0 %v2462
      %2470 = vmatpush.msra.mxu0 %v2461
      %2471 = vmatpush.msra.mxu0 %v2460
      %2472 = vmatpush.msra.mxu0 %v2459
      %2473 = vmatpush.msra.mxu0 %v2458
      %2474 = vmatpush.msra.mxu0 %v2457
      %2475 = vmatpush.msra.mxu0 %v2456
      %2476 = vmatpush.msra.mxu0 %v2455
      %2477 = vmatpush.msra.mxu0 %v2454
      %2478 = vmatpush.msra.mxu0 %v2453
      %2479 = vmatpush.msra.mxu0 %v2452
      %2480 = vmatpush.msra.mxu0 %v2451
      %2481 = vmatpush.msra.mxu0 %v2450
      %2482 = vmatmul.f32.gmra.mxu0 %v2401
      %v2483 = vpop.f32.mrf.mxu0
      %v2484 = vadd.f32 0.0, %v2483
      %2485 = vmatmul.f32.gmra.mxu0 %v2402
      %v2486 = vpop.f32.mrf.mxu0
      %v2487 = vadd.f32 0.0, %v2486
      %2488 = vmatmul.f32.gmra.mxu0 %v2403
      %v2489 = vpop.f32.mrf.mxu0
      %v2490 = vadd.f32 0.0, %v2489
      %2491 = vmatmul.f32.gmra.mxu0 %v2404
      %v2492 = vpop.f32.mrf.mxu0
      %v2493 = vadd.f32 0.0, %v2492
      %2494 = vmatmul.f32.gmra.mxu0 %v2405
      %v2495 = vpop.f32.mrf.mxu0
      %v2496 = vadd.f32 0.0, %v2495
      %2497 = vmatmul.f32.gmra.mxu0 %v2406
      %v2498 = vpop.f32.mrf.mxu0
      %v2499 = vadd.f32 0.0, %v2498
      %2500 = vmatmul.f32.gmra.mxu0 %v2407
      %v2501 = vpop.f32.mrf.mxu0
      %v2502 = vadd.f32 0.0, %v2501
      %2503 = vmatmul.f32.gmra.mxu0 %v2408
      %v2504 = vpop.f32.mrf.mxu0
      %v2505 = vadd.f32 0.0, %v2504
      %2506 = vmatmul.f32.gmra.mxu0 %v2409
      %v2507 = vpop.f32.mrf.mxu0
      %v2508 = vadd.f32 0.0, %v2507
      %2509 = vmatmul.f32.gmra.mxu0 %v2410
      %v2510 = vpop.f32.mrf.mxu0
      %v2511 = vadd.f32 0.0, %v2510
      %2512 = vmatmul.f32.gmra.mxu0 %v2411
      %v2513 = vpop.f32.mrf.mxu0
      %v2514 = vadd.f32 0.0, %v2513
      %2515 = vmatmul.f32.gmra.mxu0 %v2412
      %v2516 = vpop.f32.mrf.mxu0
      %v2517 = vadd.f32 0.0, %v2516
      %2518 = vmatmul.f32.gmra.mxu0 %v2413
      %v2519 = vpop.f32.mrf.mxu0
      %v2520 = vadd.f32 0.0, %v2519
      %2521 = vmatmul.f32.gmra.mxu0 %v2414
      %v2522 = vpop.f32.mrf.mxu0
      %v2523 = vadd.f32 0.0, %v2522
      %2524 = vmatmul.f32.gmra.mxu0 %v2415
      %v2525 = vpop.f32.mrf.mxu0
      %v2526 = vadd.f32 0.0, %v2525
      %2527 = vmatmul.f32.gmra.mxu0 %v2416
      %v2528 = vpop.f32.mrf.mxu0
      %v2529 = vadd.f32 0.0, %v2528
      %2530 = vmatmul.f32.gmra.mxu0 %v2417
      %v2531 = vpop.f32.mrf.mxu0
      %v2532 = vadd.f32 0.0, %v2531
      %2533 = vmatmul.f32.gmra.mxu0 %v2418
      %v2534 = vpop.f32.mrf.mxu0
      %v2535 = vadd.f32 0.0, %v2534
      %2536 = vmatmul.f32.gmra.mxu0 %v2419
      %v2537 = vpop.f32.mrf.mxu0
      %v2538 = vadd.f32 0.0, %v2537
      %2539 = vmatmul.f32.gmra.mxu0 %v2420
      %v2540 = vpop.f32.mrf.mxu0
      %v2541 = vadd.f32 0.0, %v2540
      %2542 = vmatmul.f32.gmra.mxu0 %v2421
      %v2543 = vpop.f32.mrf.mxu0
      %v2544 = vadd.f32 0.0, %v2543
      %2545 = vmatmul.f32.gmra.mxu0 %v2422
      %v2546 = vpop.f32.mrf.mxu0
      %v2547 = vadd.f32 0.0, %v2546
      %2548 = vmatmul.f32.gmra.mxu0 %v2423
      %v2549 = vpop.f32.mrf.mxu0
      %v2550 = vadd.f32 0.0, %v2549
      %2551 = vmatmul.f32.gmra.mxu0 %v2424
      %v2552 = vpop.f32.mrf.mxu0
      %v2553 = vadd.f32 0.0, %v2552
      %2554 = vmatmul.f32.gmra.mxu0 %v2425
      %v2555 = vpop.f32.mrf.mxu0
      %v2556 = vadd.f32 0.0, %v2555
      %2557 = vmatmul.f32.gmra.mxu0 %v2426
      %v2558 = vpop.f32.mrf.mxu0
      %v2559 = vadd.f32 0.0, %v2558
      %2560 = vmatmul.f32.gmra.mxu0 %v2427
      %v2561 = vpop.f32.mrf.mxu0
      %v2562 = vadd.f32 0.0, %v2561
      %2563 = vmatmul.f32.gmra.mxu0 %v2428
      %v2564 = vpop.f32.mrf.mxu0
      %v2565 = vadd.f32 0.0, %v2564
      %2566 = vmatmul.f32.gmra.mxu0 %v2429
      %v2567 = vpop.f32.mrf.mxu0
      %v2568 = vadd.f32 0.0, %v2567
      %2569 = vmatmul.f32.gmra.mxu0 %v2430
      %v2570 = vpop.f32.mrf.mxu0
      %v2571 = vadd.f32 0.0, %v2570
      %2572 = vmatmul.f32.gmra.mxu0 %v2431
      %v2573 = vpop.f32.mrf.mxu0
      %v2574 = vadd.f32 0.0, %v2573
      %2575 = vmatmul.f32.gmra.mxu0 %v2432
      %v2576 = vpop.f32.mrf.mxu0
      %v2577 = vadd.f32 0.0, %v2576
      %2578 = vmatmul.f32.gmra.mxu0 %v2433
      %v2579 = vpop.f32.mrf.mxu0
      %v2580 = vadd.f32 0.0, %v2579
      %2581 = vmatmul.f32.gmra.mxu0 %v2434
      %v2582 = vpop.f32.mrf.mxu0
      %v2583 = vadd.f32 0.0, %v2582
      %2584 = vmatmul.f32.gmra.mxu0 %v2435
      %v2585 = vpop.f32.mrf.mxu0
      %v2586 = vadd.f32 0.0, %v2585
      %2587 = vmatmul.f32.gmra.mxu0 %v2436
      %v2588 = vpop.f32.mrf.mxu0
      %v2589 = vadd.f32 0.0, %v2588
      %2590 = vmatmul.f32.gmra.mxu0 %v2437
      %v2591 = vpop.f32.mrf.mxu0
      %v2592 = vadd.f32 0.0, %v2591
      %2593 = vmatmul.f32.gmra.mxu0 %v2438
      %v2594 = vpop.f32.mrf.mxu0
      %v2595 = vadd.f32 0.0, %v2594
      %2596 = vmatmul.f32.gmra.mxu0 %v2439
      %v2597 = vpop.f32.mrf.mxu0
      %v2598 = vadd.f32 0.0, %v2597
      %2599 = vmatmul.f32.gmra.mxu0 %v2440
      %v2600 = vpop.f32.mrf.mxu0
      %v2601 = vadd.f32 0.0, %v2600
      %2602 = vmatmul.f32.gmra.mxu0 %v2441
      %v2603 = vpop.f32.mrf.mxu0
      %v2604 = vadd.f32 0.0, %v2603
      %2605 = vmatmul.f32.gmra.mxu0 %v2442
      %v2606 = vpop.f32.mrf.mxu0
      %v2607 = vadd.f32 0.0, %v2606
      %2608 = vmatmul.f32.gmra.mxu0 %v2443
      %v2609 = vpop.f32.mrf.mxu0
      %v2610 = vadd.f32 0.0, %v2609
      %2611 = vmatmul.f32.gmra.mxu0 %v2444
      %v2612 = vpop.f32.mrf.mxu0
      %v2613 = vadd.f32 0.0, %v2612
      %2614 = vmatmul.f32.gmra.mxu0 %v2445
      %v2615 = vpop.f32.mrf.mxu0
      %v2616 = vadd.f32 0.0, %v2615
      %2617 = vmatmul.f32.gmra.mxu0 %v2446
      %v2618 = vpop.f32.mrf.mxu0
      %v2619 = vadd.f32 0.0, %v2618
      %2620 = vmatmul.f32.gmra.mxu0 %v2447
      %v2621 = vpop.f32.mrf.mxu0
      %v2622 = vadd.f32 0.0, %v2621
      %2623 = vmatmul.f32.gmra.mxu0 %v2448
      %v2624 = vpop.f32.mrf.mxu0
      %v2625 = vadd.f32 0.0, %v2624
      %2626 = vdwg.mxu0
      %v2627 = vadd.f32 %v2353, %v2484
      %v2628 = vadd.f32 %v2354, %v2487
      %v2629 = vadd.f32 %v2355, %v2490
      %v2630 = vadd.f32 %v2356, %v2493
      %v2631 = vadd.f32 %v2357, %v2496
      %v2632 = vadd.f32 %v2358, %v2499
      %v2633 = vadd.f32 %v2359, %v2502
      %v2634 = vadd.f32 %v2360, %v2505
      %v2635 = vadd.f32 %v2361, %v2508
      %v2636 = vadd.f32 %v2362, %v2511
      %v2637 = vadd.f32 %v2363, %v2514
      %v2638 = vadd.f32 %v2364, %v2517
      %v2639 = vadd.f32 %v2365, %v2520
      %v2640 = vadd.f32 %v2366, %v2523
      %v2641 = vadd.f32 %v2367, %v2526
      %v2642 = vadd.f32 %v2368, %v2529
      %v2643 = vadd.f32 %v2369, %v2532
      %v2644 = vadd.f32 %v2370, %v2535
      %v2645 = vadd.f32 %v2371, %v2538
      %v2646 = vadd.f32 %v2372, %v2541
      %v2647 = vadd.f32 %v2373, %v2544
      %v2648 = vadd.f32 %v2374, %v2547
      %v2649 = vadd.f32 %v2375, %v2550
      %v2650 = vadd.f32 %v2376, %v2553
      %v2651 = vadd.f32 %v2377, %v2556
      %v2652 = vadd.f32 %v2378, %v2559
      %v2653 = vadd.f32 %v2379, %v2562
      %v2654 = vadd.f32 %v2380, %v2565
      %v2655 = vadd.f32 %v2381, %v2568
      %v2656 = vadd.f32 %v2382, %v2571
      %v2657 = vadd.f32 %v2383, %v2574
      %v2658 = vadd.f32 %v2384, %v2577
      %v2659 = vadd.f32 %v2385, %v2580
      %v2660 = vadd.f32 %v2386, %v2583
      %v2661 = vadd.f32 %v2387, %v2586
      %v2662 = vadd.f32 %v2388, %v2589
      %v2663 = vadd.f32 %v2389, %v2592
      %v2664 = vadd.f32 %v2390, %v2595
      %v2665 = vadd.f32 %v2391, %v2598
      %v2666 = vadd.f32 %v2392, %v2601
      %v2667 = vadd.f32 %v2393, %v2604
      %v2668 = vadd.f32 %v2394, %v2607
      %v2669 = vadd.f32 %v2395, %v2610
      %v2670 = vadd.f32 %v2396, %v2613
      %v2671 = vadd.f32 %v2397, %v2616
      %v2672 = vadd.f32 %v2398, %v2619
      %v2673 = vadd.f32 %v2399, %v2622
      %v2674 = vadd.f32 %v2400, %v2625
      %v2675 = vld [vmem:[%s3] sm:$0x1]
      %v2677 = vperm.slane %v2675, 0
      %v2679 = vmul.f32 %v2627, %v2677
      %v2680 = vmul.f32 %v2628, %v2677
      %v2681 = vmul.f32 %v2629, %v2677
      %v2682 = vmul.f32 %v2630, %v2677
      %v2683 = vmul.f32 %v2631, %v2677
      %v2684 = vmul.f32 %v2632, %v2677
      %v2685 = vmul.f32 %v2633, %v2677
      %v2686 = vmul.f32 %v2634, %v2677
      %v2687 = vmul.f32 %v2635, %v2677
      %v2688 = vmul.f32 %v2636, %v2677
      %v2689 = vmul.f32 %v2637, %v2677
      %v2690 = vmul.f32 %v2638, %v2677
      %v2691 = vmul.f32 %v2639, %v2677
      %v2692 = vmul.f32 %v2640, %v2677
      %v2693 = vmul.f32 %v2641, %v2677
      %v2694 = vmul.f32 %v2642, %v2677
      %v2695 = vmul.f32 %v2643, %v2677
      %v2696 = vmul.f32 %v2644, %v2677
      %v2697 = vmul.f32 %v2645, %v2677
      %v2698 = vmul.f32 %v2646, %v2677
      %v2699 = vmul.f32 %v2647, %v2677
      %v2700 = vmul.f32 %v2648, %v2677
      %v2701 = vmul.f32 %v2649, %v2677
      %v2702 = vmul.f32 %v2650, %v2677
      %v2703 = vmul.f32 %v2651, %v2677
      %v2704 = vmul.f32 %v2652, %v2677
      %v2705 = vmul.f32 %v2653, %v2677
      %v2706 = vmul.f32 %v2654, %v2677
      %v2707 = vmul.f32 %v2655, %v2677
      %v2708 = vmul.f32 %v2656, %v2677
      %v2709 = vmul.f32 %v2657, %v2677
      %v2710 = vmul.f32 %v2658, %v2677
      %v2711 = vmul.f32 %v2659, %v2677
      %v2712 = vmul.f32 %v2660, %v2677
      %v2713 = vmul.f32 %v2661, %v2677
      %v2714 = vmul.f32 %v2662, %v2677
      %v2715 = vmul.f32 %v2663, %v2677
      %v2716 = vmul.f32 %v2664, %v2677
      %v2717 = vmul.f32 %v2665, %v2677
      %v2718 = vmul.f32 %v2666, %v2677
      %v2719 = vmul.f32 %v2667, %v2677
      %v2720 = vmul.f32 %v2668, %v2677
      %v2721 = vmul.f32 %v2669, %v2677
      %v2722 = vmul.f32 %v2670, %v2677
      %v2723 = vmul.f32 %v2671, %v2677
      %v2724 = vmul.f32 %v2672, %v2677
      %v2725 = vmul.f32 %v2673, %v2677
      %v2726 = vmul.f32 %v2674, %v2677
      %v2727 = vld [vmem:[%s4] sm:$0x1]
      %v2729 = vperm.slane %v2727, 0
      %v2731 = vadd.f32 %v2679, %v2729
      %v2732 = vadd.f32 %v2680, %v2729
      %v2733 = vadd.f32 %v2681, %v2729
      %v2734 = vadd.f32 %v2682, %v2729
      %v2735 = vadd.f32 %v2683, %v2729
      %v2736 = vadd.f32 %v2684, %v2729
      %v2737 = vadd.f32 %v2685, %v2729
      %v2738 = vadd.f32 %v2686, %v2729
      %v2739 = vadd.f32 %v2687, %v2729
      %v2740 = vadd.f32 %v2688, %v2729
      %v2741 = vadd.f32 %v2689, %v2729
      %v2742 = vadd.f32 %v2690, %v2729
      %v2743 = vadd.f32 %v2691, %v2729
      %v2744 = vadd.f32 %v2692, %v2729
      %v2745 = vadd.f32 %v2693, %v2729
      %v2746 = vadd.f32 %v2694, %v2729
      %v2747 = vadd.f32 %v2695, %v2729
      %v2748 = vadd.f32 %v2696, %v2729
      %v2749 = vadd.f32 %v2697, %v2729
      %v2750 = vadd.f32 %v2698, %v2729
      %v2751 = vadd.f32 %v2699, %v2729
      %v2752 = vadd.f32 %v2700, %v2729
      %v2753 = vadd.f32 %v2701, %v2729
      %v2754 = vadd.f32 %v2702, %v2729
      %v2755 = vadd.f32 %v2703, %v2729
      %v2756 = vadd.f32 %v2704, %v2729
      %v2757 = vadd.f32 %v2705, %v2729
      %v2758 = vadd.f32 %v2706, %v2729
      %v2759 = vadd.f32 %v2707, %v2729
      %v2760 = vadd.f32 %v2708, %v2729
      %v2761 = vadd.f32 %v2709, %v2729
      %v2762 = vadd.f32 %v2710, %v2729
      %v2763 = vadd.f32 %v2711, %v2729
      %v2764 = vadd.f32 %v2712, %v2729
      %v2765 = vadd.f32 %v2713, %v2729
      %v2766 = vadd.f32 %v2714, %v2729
      %v2767 = vadd.f32 %v2715, %v2729
      %v2768 = vadd.f32 %v2716, %v2729
      %v2769 = vadd.f32 %v2717, %v2729
      %v2770 = vadd.f32 %v2718, %v2729
      %v2771 = vadd.f32 %v2719, %v2729
      %v2772 = vadd.f32 %v2720, %v2729
      %v2773 = vadd.f32 %v2721, %v2729
      %v2774 = vadd.f32 %v2722, %v2729
      %v2775 = vadd.f32 %v2723, %v2729
      %v2776 = vadd.f32 %v2724, %v2729
      %v2777 = vadd.f32 %v2725, %v2729
      %v2778 = vadd.f32 %v2726, %v2729
      %v2779 = vmax.f32 %v2731, 0.0
      %v2780 = vmax.f32 %v2732, 0.0
      %v2781 = vmax.f32 %v2733, 0.0
      %v2782 = vmax.f32 %v2734, 0.0
      %v2783 = vmax.f32 %v2735, 0.0
      %v2784 = vmax.f32 %v2736, 0.0
      %v2785 = vmax.f32 %v2737, 0.0
      %v2786 = vmax.f32 %v2738, 0.0
      %v2787 = vmax.f32 %v2739, 0.0
      %v2788 = vmax.f32 %v2740, 0.0
      %v2789 = vmax.f32 %v2741, 0.0
      %v2790 = vmax.f32 %v2742, 0.0
      %v2791 = vmax.f32 %v2743, 0.0
      %v2792 = vmax.f32 %v2744, 0.0
      %v2793 = vmax.f32 %v2745, 0.0
      %v2794 = vmax.f32 %v2746, 0.0
      %v2795 = vmax.f32 %v2747, 0.0
      %v2796 = vmax.f32 %v2748, 0.0
      %v2797 = vmax.f32 %v2749, 0.0
      %v2798 = vmax.f32 %v2750, 0.0
      %v2799 = vmax.f32 %v2751, 0.0
      %v2800 = vmax.f32 %v2752, 0.0
      %v2801 = vmax.f32 %v2753, 0.0
      %v2802 = vmax.f32 %v2754, 0.0
      %v2803 = vmax.f32 %v2755, 0.0
      %v2804 = vmax.f32 %v2756, 0.0
      %v2805 = vmax.f32 %v2757, 0.0
      %v2806 = vmax.f32 %v2758, 0.0
      %v2807 = vmax.f32 %v2759, 0.0
      %v2808 = vmax.f32 %v2760, 0.0
      %v2809 = vmax.f32 %v2761, 0.0
      %v2810 = vmax.f32 %v2762, 0.0
      %v2811 = vmax.f32 %v2763, 0.0
      %v2812 = vmax.f32 %v2764, 0.0
      %v2813 = vmax.f32 %v2765, 0.0
      %v2814 = vmax.f32 %v2766, 0.0
      %v2815 = vmax.f32 %v2767, 0.0
      %v2816 = vmax.f32 %v2768, 0.0
      %v2817 = vmax.f32 %v2769, 0.0
      %v2818 = vmax.f32 %v2770, 0.0
      %v2819 = vmax.f32 %v2771, 0.0
      %v2820 = vmax.f32 %v2772, 0.0
      %v2821 = vmax.f32 %v2773, 0.0
      %v2822 = vmax.f32 %v2774, 0.0
      %v2823 = vmax.f32 %v2775, 0.0
      %v2824 = vmax.f32 %v2776, 0.0
      %v2825 = vmax.f32 %v2777, 0.0
      %v2826 = vmax.f32 %v2778, 0.0
      %v2827 = vld [vmem:[%s1] sm:$0xff]
      %v2828 = vld [vmem:[%s1 + $0x8] sm:$0xff]
      %v2829 = vld [vmem:[%s1 + $0x10] sm:$0xff]
      %v2830 = vld [vmem:[%s1 + $0x18] sm:$0xff]
      %v2831 = vld [vmem:[%s1 + $0x20] sm:$0xff]
      %v2832 = vld [vmem:[%s1 + $0x28] sm:$0xff]
      %v2833 = vld [vmem:[%s1 + $0x30] sm:$0xff]
      %v2834 = vld [vmem:[%s1 + $0x38] sm:$0xff]
      %v2835 = vld [vmem:[%s1 + $0x40] sm:$0xff]
      %v2836 = vld [vmem:[%s1 + $0x48] sm:$0xff]
      %v2837 = vld [vmem:[%s1 + $0x50] sm:$0xff]
      %v2838 = vld [vmem:[%s1 + $0x58] sm:$0xff]
      %v2839 = vld [vmem:[%s1 + $0x60] sm:$0xff]
      %v2840 = vld [vmem:[%s1 + $0x68] sm:$0xff]
      %v2841 = vld [vmem:[%s1 + $0x70] sm:$0xff]
      %v2842 = vld [vmem:[%s1 + $0x78] sm:$0xff]
      %v2843 = vld [vmem:[%s1 + $0x80] sm:$0xff]
      %v2844 = vld [vmem:[%s1 + $0x88] sm:$0xff]
      %v2845 = vld [vmem:[%s1 + $0x90] sm:$0xff]
      %v2846 = vld [vmem:[%s1 + $0x98] sm:$0xff]
      %v2847 = vld [vmem:[%s1 + $0xa0] sm:$0xff]
      %v2848 = vld [vmem:[%s1 + $0xa8] sm:$0xff]
      %v2849 = vld [vmem:[%s1 + $0xb0] sm:$0xff]
      %v2850 = vld [vmem:[%s1 + $0xb8] sm:$0xff]
      %v2851 = vld [vmem:[%s1 + $0xc0] sm:$0xff]
      %v2852 = vld [vmem:[%s1 + $0xc8] sm:$0xff]
      %v2853 = vld [vmem:[%s1 + $0xd0] sm:$0xff]
      %v2854 = vld [vmem:[%s1 + $0xd8] sm:$0xff]
      %v2855 = vld [vmem:[%s1 + $0xe0] sm:$0xff]
      %v2856 = vld [vmem:[%s1 + $0xe8] sm:$0xff]
      %v2857 = vld [vmem:[%s1 + $0xf0] sm:$0xff]
      %v2858 = vld [vmem:[%s1 + $0xf8] sm:$0xff]
      %v2859 = vld [vmem:[%s1 + $0x100] sm:$0xff]
      %v2860 = vld [vmem:[%s1 + $0x108] sm:$0xff]
      %v2861 = vld [vmem:[%s1 + $0x110] sm:$0xff]
      %v2862 = vld [vmem:[%s1 + $0x118] sm:$0xff]
      %v2863 = vld [vmem:[%s1 + $0x120] sm:$0xff]
      %v2864 = vld [vmem:[%s1 + $0x128] sm:$0xff]
      %v2865 = vld [vmem:[%s1 + $0x130] sm:$0xff]
      %v2866 = vld [vmem:[%s1 + $0x138] sm:$0xff]
      %v2867 = vld [vmem:[%s1 + $0x140] sm:$0xff]
      %v2868 = vld [vmem:[%s1 + $0x148] sm:$0xff]
      %v2869 = vld [vmem:[%s1 + $0x150] sm:$0xff]
      %v2870 = vld [vmem:[%s1 + $0x158] sm:$0xff]
      %v2871 = vld [vmem:[%s1 + $0x160] sm:$0xff]
      %v2872 = vld [vmem:[%s1 + $0x168] sm:$0xff]
      %v2873 = vld [vmem:[%s1 + $0x170] sm:$0xff]
      %v2874 = vld [vmem:[%s1 + $0x178] sm:$0xff]
      %2876 = vset.pattern.permute.xlu0 0
      %2877 = vperm.xlu0 %2876, %v2827
      %v2878 = vpop.permute.xlu0 %2877
      %2881 = vset.pattern.permute.xlu0 0
      %2882 = vperm.xlu0 %2881, %v2828
      %v2883 = vpop.permute.xlu0 %2882
      %2886 = vset.pattern.permute.xlu0 0
      %2887 = vperm.xlu0 %2886, %v2829
      %v2888 = vpop.permute.xlu0 %2887
      %2891 = vset.pattern.permute.xlu0 0
      %2892 = vperm.xlu0 %2891, %v2830
      %v2893 = vpop.permute.xlu0 %2892
      %2896 = vset.pattern.permute.xlu0 0
      %2897 = vperm.xlu0 %2896, %v2831
      %v2898 = vpop.permute.xlu0 %2897
      %2901 = vset.pattern.permute.xlu0 0
      %2902 = vperm.xlu0 %2901, %v2832
      %v2903 = vpop.permute.xlu0 %2902
      %2906 = vset.pattern.permute.xlu0 0
      %2907 = vperm.xlu0 %2906, %v2833
      %v2908 = vpop.permute.xlu0 %2907
      %2911 = vset.pattern.permute.xlu0 0
      %2912 = vperm.xlu0 %2911, %v2834
      %v2913 = vpop.permute.xlu0 %2912
      %2916 = vset.pattern.permute.xlu0 0
      %2917 = vperm.xlu0 %2916, %v2835
      %v2918 = vpop.permute.xlu0 %2917
      %2921 = vset.pattern.permute.xlu0 0
      %2922 = vperm.xlu0 %2921, %v2836
      %v2923 = vpop.permute.xlu0 %2922
      %2926 = vset.pattern.permute.xlu0 0
      %2927 = vperm.xlu0 %2926, %v2837
      %v2928 = vpop.permute.xlu0 %2927
      %2931 = vset.pattern.permute.xlu0 0
      %2932 = vperm.xlu0 %2931, %v2838
      %v2933 = vpop.permute.xlu0 %2932
      %2936 = vset.pattern.permute.xlu0 0
      %2937 = vperm.xlu0 %2936, %v2839
      %v2938 = vpop.permute.xlu0 %2937
      %2941 = vset.pattern.permute.xlu0 0
      %2942 = vperm.xlu0 %2941, %v2840
      %v2943 = vpop.permute.xlu0 %2942
      %2946 = vset.pattern.permute.xlu0 0
      %2947 = vperm.xlu0 %2946, %v2841
      %v2948 = vpop.permute.xlu0 %2947
      %2951 = vset.pattern.permute.xlu0 0
      %2952 = vperm.xlu0 %2951, %v2842
      %v2953 = vpop.permute.xlu0 %2952
      %2956 = vset.pattern.permute.xlu0 0
      %2957 = vperm.xlu0 %2956, %v2843
      %v2958 = vpop.permute.xlu0 %2957
      %2961 = vset.pattern.permute.xlu0 0
      %2962 = vperm.xlu0 %2961, %v2844
      %v2963 = vpop.permute.xlu0 %2962
      %2966 = vset.pattern.permute.xlu0 0
      %2967 = vperm.xlu0 %2966, %v2845
      %v2968 = vpop.permute.xlu0 %2967
      %2971 = vset.pattern.permute.xlu0 0
      %2972 = vperm.xlu0 %2971, %v2846
      %v2973 = vpop.permute.xlu0 %2972
      %2976 = vset.pattern.permute.xlu0 0
      %2977 = vperm.xlu0 %2976, %v2847
      %v2978 = vpop.permute.xlu0 %2977
      %2981 = vset.pattern.permute.xlu0 0
      %2982 = vperm.xlu0 %2981, %v2848
      %v2983 = vpop.permute.xlu0 %2982
      %2986 = vset.pattern.permute.xlu0 0
      %2987 = vperm.xlu0 %2986, %v2849
      %v2988 = vpop.permute.xlu0 %2987
      %2991 = vset.pattern.permute.xlu0 0
      %2992 = vperm.xlu0 %2991, %v2850
      %v2993 = vpop.permute.xlu0 %2992
      %2996 = vset.pattern.permute.xlu0 0
      %2997 = vperm.xlu0 %2996, %v2851
      %v2998 = vpop.permute.xlu0 %2997
      %3001 = vset.pattern.permute.xlu0 0
      %3002 = vperm.xlu0 %3001, %v2852
      %v3003 = vpop.permute.xlu0 %3002
      %3006 = vset.pattern.permute.xlu0 0
      %3007 = vperm.xlu0 %3006, %v2853
      %v3008 = vpop.permute.xlu0 %3007
      %3011 = vset.pattern.permute.xlu0 0
      %3012 = vperm.xlu0 %3011, %v2854
      %v3013 = vpop.permute.xlu0 %3012
      %3016 = vset.pattern.permute.xlu0 0
      %3017 = vperm.xlu0 %3016, %v2855
      %v3018 = vpop.permute.xlu0 %3017
      %3021 = vset.pattern.permute.xlu0 0
      %3022 = vperm.xlu0 %3021, %v2856
      %v3023 = vpop.permute.xlu0 %3022
      %3026 = vset.pattern.permute.xlu0 0
      %3027 = vperm.xlu0 %3026, %v2857
      %v3028 = vpop.permute.xlu0 %3027
      %3031 = vset.pattern.permute.xlu0 0
      %3032 = vperm.xlu0 %3031, %v2858
      %v3033 = vpop.permute.xlu0 %3032
      %3036 = vset.pattern.permute.xlu0 0
      %3037 = vperm.xlu0 %3036, %v2859
      %v3038 = vpop.permute.xlu0 %3037
      %3041 = vset.pattern.permute.xlu0 0
      %3042 = vperm.xlu0 %3041, %v2860
      %v3043 = vpop.permute.xlu0 %3042
      %3046 = vset.pattern.permute.xlu0 0
      %3047 = vperm.xlu0 %3046, %v2861
      %v3048 = vpop.permute.xlu0 %3047
      %3051 = vset.pattern.permute.xlu0 0
      %3052 = vperm.xlu0 %3051, %v2862
      %v3053 = vpop.permute.xlu0 %3052
      %3056 = vset.pattern.permute.xlu0 0
      %3057 = vperm.xlu0 %3056, %v2863
      %v3058 = vpop.permute.xlu0 %3057
      %3061 = vset.pattern.permute.xlu0 0
      %3062 = vperm.xlu0 %3061, %v2864
      %v3063 = vpop.permute.xlu0 %3062
      %3066 = vset.pattern.permute.xlu0 0
      %3067 = vperm.xlu0 %3066, %v2865
      %v3068 = vpop.permute.xlu0 %3067
      %3071 = vset.pattern.permute.xlu0 0
      %3072 = vperm.xlu0 %3071, %v2866
      %v3073 = vpop.permute.xlu0 %3072
      %3076 = vset.pattern.permute.xlu0 0
      %3077 = vperm.xlu0 %3076, %v2867
      %v3078 = vpop.permute.xlu0 %3077
      %3081 = vset.pattern.permute.xlu0 0
      %3082 = vperm.xlu0 %3081, %v2868
      %v3083 = vpop.permute.xlu0 %3082
      %3086 = vset.pattern.permute.xlu0 0
      %3087 = vperm.xlu0 %3086, %v2869
      %v3088 = vpop.permute.xlu0 %3087
      %3091 = vset.pattern.permute.xlu0 0
      %3092 = vperm.xlu0 %3091, %v2870
      %v3093 = vpop.permute.xlu0 %3092
      %3096 = vset.pattern.permute.xlu0 0
      %3097 = vperm.xlu0 %3096, %v2871
      %v3098 = vpop.permute.xlu0 %3097
      %3101 = vset.pattern.permute.xlu0 0
      %3102 = vperm.xlu0 %3101, %v2872
      %v3103 = vpop.permute.xlu0 %3102
      %3106 = vset.pattern.permute.xlu0 0
      %3107 = vperm.xlu0 %3106, %v2873
      %v3108 = vpop.permute.xlu0 %3107
      %3111 = vset.pattern.permute.xlu0 0
      %3112 = vperm.xlu0 %3111, %v2874
      %v3113 = vpop.permute.xlu0 %3112
      %v3115 = vmul.f32 %v2779, %v2878
      %v3116 = vmul.f32 %v2780, %v2883
      %v3117 = vmul.f32 %v2781, %v2888
      %v3118 = vmul.f32 %v2782, %v2893
      %v3119 = vmul.f32 %v2783, %v2898
      %v3120 = vmul.f32 %v2784, %v2903
      %v3121 = vmul.f32 %v2785, %v2908
      %v3122 = vmul.f32 %v2786, %v2913
      %v3123 = vmul.f32 %v2787, %v2918
      %v3124 = vmul.f32 %v2788, %v2923
      %v3125 = vmul.f32 %v2789, %v2928
      %v3126 = vmul.f32 %v2790, %v2933
      %v3127 = vmul.f32 %v2791, %v2938
      %v3128 = vmul.f32 %v2792, %v2943
      %v3129 = vmul.f32 %v2793, %v2948
      %v3130 = vmul.f32 %v2794, %v2953
      %v3131 = vmul.f32 %v2795, %v2958
      %v3132 = vmul.f32 %v2796, %v2963
      %v3133 = vmul.f32 %v2797, %v2968
      %v3134 = vmul.f32 %v2798, %v2973
      %v3135 = vmul.f32 %v2799, %v2978
      %v3136 = vmul.f32 %v2800, %v2983
      %v3137 = vmul.f32 %v2801, %v2988
      %v3138 = vmul.f32 %v2802, %v2993
      %v3139 = vmul.f32 %v2803, %v2998
      %v3140 = vmul.f32 %v2804, %v3003
      %v3141 = vmul.f32 %v2805, %v3008
      %v3142 = vmul.f32 %v2806, %v3013
      %v3143 = vmul.f32 %v2807, %v3018
      %v3144 = vmul.f32 %v2808, %v3023
      %v3145 = vmul.f32 %v2809, %v3028
      %v3146 = vmul.f32 %v2810, %v3033
      %v3147 = vmul.f32 %v2811, %v3038
      %v3148 = vmul.f32 %v2812, %v3043
      %v3149 = vmul.f32 %v2813, %v3048
      %v3150 = vmul.f32 %v2814, %v3053
      %v3151 = vmul.f32 %v2815, %v3058
      %v3152 = vmul.f32 %v2816, %v3063
      %v3153 = vmul.f32 %v2817, %v3068
      %v3154 = vmul.f32 %v2818, %v3073
      %v3155 = vmul.f32 %v2819, %v3078
      %v3156 = vmul.f32 %v2820, %v3083
      %v3157 = vmul.f32 %v2821, %v3088
      %v3158 = vmul.f32 %v2822, %v3093
      %v3159 = vmul.f32 %v2823, %v3098
      %v3160 = vmul.f32 %v2824, %v3103
      %v3161 = vmul.f32 %v2825, %v3108
      %v3162 = vmul.f32 %v2826, %v3113
      %3163 = vst [vmem:[#allocation2] sm:$0xff] 0.0
      %3164 = vst [vmem:[#allocation2 + $0x8] sm:$0xff] 0.0
      %3165 = vst [vmem:[#allocation2 + $0x10] sm:$0xff] 0.0
      %3166 = vst [vmem:[#allocation2 + $0x18] sm:$0xff] 0.0
      %3167 = vst [vmem:[#allocation2 + $0x1a0] sm:$0xff] 0.0
      %3168 = vst [vmem:[#allocation2 + $0x1a8] sm:$0xff] 0.0
      %3169 = vst [vmem:[#allocation2 + $0x1b0] sm:$0xff] 0.0
      %3170 = vst [vmem:[#allocation2 + $0x1b8] sm:$0xff] 0.0
      %3171 = vst [vmem:[#allocation2 + $0x20] sm:$0xff] %v3115
      %3172 = vst [vmem:[#allocation2 + $0x28] sm:$0xff] %v3116
      %3173 = vst [vmem:[#allocation2 + $0x30] sm:$0xff] %v3117
      %3174 = vst [vmem:[#allocation2 + $0x38] sm:$0xff] %v3118
      %3175 = vst [vmem:[#allocation2 + $0x40] sm:$0xff] %v3119
      %3176 = vst [vmem:[#allocation2 + $0x48] sm:$0xff] %v3120
      %3177 = vst [vmem:[#allocation2 + $0x50] sm:$0xff] %v3121
      %3178 = vst [vmem:[#allocation2 + $0x58] sm:$0xff] %v3122
      %3179 = vst [vmem:[#allocation2 + $0x60] sm:$0xff] %v3123
      %3180 = vst [vmem:[#allocation2 + $0x68] sm:$0xff] %v3124
      %3181 = vst [vmem:[#allocation2 + $0x70] sm:$0xff] %v3125
      %3182 = vst [vmem:[#allocation2 + $0x78] sm:$0xff] %v3126
      %3183 = vst [vmem:[#allocation2 + $0x80] sm:$0xff] %v3127
      %3184 = vst [vmem:[#allocation2 + $0x88] sm:$0xff] %v3128
      %3185 = vst [vmem:[#allocation2 + $0x90] sm:$0xff] %v3129
      %3186 = vst [vmem:[#allocation2 + $0x98] sm:$0xff] %v3130
      %3187 = vst [vmem:[#allocation2 + $0xa0] sm:$0xff] %v3131
      %3188 = vst [vmem:[#allocation2 + $0xa8] sm:$0xff] %v3132
      %3189 = vst [vmem:[#allocation2 + $0xb0] sm:$0xff] %v3133
      %3190 = vst [vmem:[#allocation2 + $0xb8] sm:$0xff] %v3134
      %3191 = vst [vmem:[#allocation2 + $0xc0] sm:$0xff] %v3135
      %3192 = vst [vmem:[#allocation2 + $0xc8] sm:$0xff] %v3136
      %3193 = vst [vmem:[#allocation2 + $0xd0] sm:$0xff] %v3137
      %3194 = vst [vmem:[#allocation2 + $0xd8] sm:$0xff] %v3138
      %3195 = vst [vmem:[#allocation2 + $0xe0] sm:$0xff] %v3139
      %3196 = vst [vmem:[#allocation2 + $0xe8] sm:$0xff] %v3140
      %3197 = vst [vmem:[#allocation2 + $0xf0] sm:$0xff] %v3141
      %3198 = vst [vmem:[#allocation2 + $0xf8] sm:$0xff] %v3142
      %3199 = vst [vmem:[#allocation2 + $0x100] sm:$0xff] %v3143
      %3200 = vst [vmem:[#allocation2 + $0x108] sm:$0xff] %v3144
      %3201 = vst [vmem:[#allocation2 + $0x110] sm:$0xff] %v3145
      %3202 = vst [vmem:[#allocation2 + $0x118] sm:$0xff] %v3146
      %3203 = vst [vmem:[#allocation2 + $0x120] sm:$0xff] %v3147
      %3204 = vst [vmem:[#allocation2 + $0x128] sm:$0xff] %v3148
      %3205 = vst [vmem:[#allocation2 + $0x130] sm:$0xff] %v3149
      %3206 = vst [vmem:[#allocation2 + $0x138] sm:$0xff] %v3150
      %3207 = vst [vmem:[#allocation2 + $0x140] sm:$0xff] %v3151
      %3208 = vst [vmem:[#allocation2 + $0x148] sm:$0xff] %v3152
      %3209 = vst [vmem:[#allocation2 + $0x150] sm:$0xff] %v3153
      %3210 = vst [vmem:[#allocation2 + $0x158] sm:$0xff] %v3154
      %3211 = vst [vmem:[#allocation2 + $0x160] sm:$0xff] %v3155
      %3212 = vst [vmem:[#allocation2 + $0x168] sm:$0xff] %v3156
      %3213 = vst [vmem:[#allocation2 + $0x170] sm:$0xff] %v3157
      %3214 = vst [vmem:[#allocation2 + $0x178] sm:$0xff] %v3158
      %3215 = vst [vmem:[#allocation2 + $0x180] sm:$0xff] %v3159
      %3216 = vst [vmem:[#allocation2 + $0x188] sm:$0xff] %v3160
      %3217 = vst [vmem:[#allocation2 + $0x190] sm:$0xff] %v3161
      %3218 = vst [vmem:[#allocation2 + $0x198] sm:$0xff] %v3162
      %v3219 = vld [vmem:[#allocation2 + $0x7] sm:$0xff]
      %v3220 = vld [vmem:[#allocation2 + $0xf] sm:$0xff]
      %v3221 = vld [vmem:[#allocation2 + $0x17] sm:$0xff]
      %v3222 = vld [vmem:[#allocation2 + $0x1f] sm:$0xff]
      %v3223 = vld [vmem:[#allocation2 + $0x27] sm:$0xff]
      %v3224 = vld [vmem:[#allocation2 + $0x2f] sm:$0xff]
      %v3225 = vld [vmem:[#allocation2 + $0x37] sm:$0xff]
      %v3226 = vld [vmem:[#allocation2 + $0x3f] sm:$0xff]
      %v3227 = vld [vmem:[#allocation2 + $0x47] sm:$0xff]
      %v3228 = vld [vmem:[#allocation2 + $0x4f] sm:$0xff]
      %v3229 = vld [vmem:[#allocation2 + $0x57] sm:$0xff]
      %v3230 = vld [vmem:[#allocation2 + $0x5f] sm:$0xff]
      %v3231 = vld [vmem:[#allocation2 + $0x67] sm:$0xff]
      %v3232 = vld [vmem:[#allocation2 + $0x6f] sm:$0xff]
      %v3233 = vld [vmem:[#allocation2 + $0x77] sm:$0xff]
      %v3234 = vld [vmem:[#allocation2 + $0x7f] sm:$0xff]
      %v3235 = vld [vmem:[#allocation2 + $0x87] sm:$0xff]
      %v3236 = vld [vmem:[#allocation2 + $0x8f] sm:$0xff]
      %v3237 = vld [vmem:[#allocation2 + $0x97] sm:$0xff]
      %v3238 = vld [vmem:[#allocation2 + $0x9f] sm:$0xff]
      %v3239 = vld [vmem:[#allocation2 + $0xa7] sm:$0xff]
      %v3240 = vld [vmem:[#allocation2 + $0xaf] sm:$0xff]
      %v3241 = vld [vmem:[#allocation2 + $0xb7] sm:$0xff]
      %v3242 = vld [vmem:[#allocation2 + $0xbf] sm:$0xff]
      %v3243 = vld [vmem:[#allocation2 + $0xc7] sm:$0xff]
      %v3244 = vld [vmem:[#allocation2 + $0xcf] sm:$0xff]
      %v3245 = vld [vmem:[#allocation2 + $0xd7] sm:$0xff]
      %v3246 = vld [vmem:[#allocation2 + $0xdf] sm:$0xff]
      %v3247 = vld [vmem:[#allocation2 + $0xe7] sm:$0xff]
      %v3248 = vld [vmem:[#allocation2 + $0xef] sm:$0xff]
      %v3249 = vld [vmem:[#allocation2 + $0xf7] sm:$0xff]
      %v3250 = vld [vmem:[#allocation2 + $0xff] sm:$0xff]
      %v3251 = vld [vmem:[#allocation2 + $0x107] sm:$0xff]
      %v3252 = vld [vmem:[#allocation2 + $0x10f] sm:$0xff]
      %v3253 = vld [vmem:[#allocation2 + $0x117] sm:$0xff]
      %v3254 = vld [vmem:[#allocation2 + $0x11f] sm:$0xff]
      %v3255 = vld [vmem:[#allocation2 + $0x127] sm:$0xff]
      %v3256 = vld [vmem:[#allocation2 + $0x12f] sm:$0xff]
      %v3257 = vld [vmem:[#allocation2 + $0x137] sm:$0xff]
      %v3258 = vld [vmem:[#allocation2 + $0x13f] sm:$0xff]
      %v3259 = vld [vmem:[#allocation2 + $0x147] sm:$0xff]
      %v3260 = vld [vmem:[#allocation2 + $0x14f] sm:$0xff]
      %v3261 = vld [vmem:[#allocation2 + $0x157] sm:$0xff]
      %v3262 = vld [vmem:[#allocation2 + $0x15f] sm:$0xff]
      %v3263 = vld [vmem:[#allocation2 + $0x167] sm:$0xff]
      %v3264 = vld [vmem:[#allocation2 + $0x16f] sm:$0xff]
      %v3265 = vld [vmem:[#allocation2 + $0x177] sm:$0xff]
      %v3266 = vld [vmem:[#allocation2 + $0x17f] sm:$0xff]
      %v3267 = vld [vmem:[%s5] sm:$0xff]
      %v3268 = vld [vmem:[%s5 + $0x8] sm:$0xff]
      %v3269 = vld [vmem:[%s5 + $0x10] sm:$0xff]
      %v3270 = vld [vmem:[%s5 + $0x18] sm:$0xff]
      %v3271 = vld [vmem:[%s5 + $0x20] sm:$0xff]
      %v3272 = vld [vmem:[%s5 + $0x28] sm:$0xff]
      %v3273 = vld [vmem:[%s5 + $0x30] sm:$0xff]
      %v3274 = vld [vmem:[%s5 + $0x38] sm:$0xff]
      %v3275 = vld [vmem:[%s5 + $0x40] sm:$0xff]
      %v3276 = vld [vmem:[%s5 + $0x48] sm:$0xff]
      %v3277 = vld [vmem:[%s5 + $0x50] sm:$0xff]
      %v3278 = vld [vmem:[%s5 + $0x58] sm:$0xff]
      %v3279 = vld [vmem:[%s5 + $0x60] sm:$0xff]
      %v3280 = vld [vmem:[%s5 + $0x68] sm:$0xff]
      %v3281 = vld [vmem:[%s5 + $0x70] sm:$0xff]
      %v3282 = vld [vmem:[%s5 + $0x78] sm:$0xff]
      %v3283 = vld [vmem:[#allocation2 + $0x8] sm:$0xff]
      %v3284 = vld [vmem:[#allocation2 + $0x10] sm:$0xff]
      %v3285 = vld [vmem:[#allocation2 + $0x18] sm:$0xff]
      %v3286 = vld [vmem:[#allocation2 + $0x20] sm:$0xff]
      %v3287 = vld [vmem:[#allocation2 + $0x28] sm:$0xff]
      %v3288 = vld [vmem:[#allocation2 + $0x30] sm:$0xff]
      %v3289 = vld [vmem:[#allocation2 + $0x38] sm:$0xff]
      %v3290 = vld [vmem:[#allocation2 + $0x40] sm:$0xff]
      %v3291 = vld [vmem:[#allocation2 + $0x48] sm:$0xff]
      %v3292 = vld [vmem:[#allocation2 + $0x50] sm:$0xff]
      %v3293 = vld [vmem:[#allocation2 + $0x58] sm:$0xff]
      %v3294 = vld [vmem:[#allocation2 + $0x60] sm:$0xff]
      %v3295 = vld [vmem:[#allocation2 + $0x68] sm:$0xff]
      %v3296 = vld [vmem:[#allocation2 + $0x70] sm:$0xff]
      %v3297 = vld [vmem:[#allocation2 + $0x78] sm:$0xff]
      %v3298 = vld [vmem:[#allocation2 + $0x80] sm:$0xff]
      %v3299 = vld [vmem:[#allocation2 + $0x88] sm:$0xff]
      %v3300 = vld [vmem:[#allocation2 + $0x90] sm:$0xff]
      %v3301 = vld [vmem:[#allocation2 + $0x98] sm:$0xff]
      %v3302 = vld [vmem:[#allocation2 + $0xa0] sm:$0xff]
      %v3303 = vld [vmem:[#allocation2 + $0xa8] sm:$0xff]
      %v3304 = vld [vmem:[#allocation2 + $0xb0] sm:$0xff]
      %v3305 = vld [vmem:[#allocation2 + $0xb8] sm:$0xff]
      %v3306 = vld [vmem:[#allocation2 + $0xc0] sm:$0xff]
      %v3307 = vld [vmem:[#allocation2 + $0xc8] sm:$0xff]
      %v3308 = vld [vmem:[#allocation2 + $0xd0] sm:$0xff]
      %v3309 = vld [vmem:[#allocation2 + $0xd8] sm:$0xff]
      %v3310 = vld [vmem:[#allocation2 + $0xe0] sm:$0xff]
      %v3311 = vld [vmem:[#allocation2 + $0xe8] sm:$0xff]
      %v3312 = vld [vmem:[#allocation2 + $0xf0] sm:$0xff]
      %v3313 = vld [vmem:[#allocation2 + $0xf8] sm:$0xff]
      %v3314 = vld [vmem:[#allocation2 + $0x100] sm:$0xff]
      %v3315 = vld [vmem:[#allocation2 + $0x108] sm:$0xff]
      %v3316 = vld [vmem:[#allocation2 + $0x110] sm:$0xff]
      %v3317 = vld [vmem:[#allocation2 + $0x118] sm:$0xff]
      %v3318 = vld [vmem:[#allocation2 + $0x120] sm:$0xff]
      %v3319 = vld [vmem:[#allocation2 + $0x128] sm:$0xff]
      %v3320 = vld [vmem:[#allocation2 + $0x130] sm:$0xff]
      %v3321 = vld [vmem:[#allocation2 + $0x138] sm:$0xff]
      %v3322 = vld [vmem:[#allocation2 + $0x140] sm:$0xff]
      %v3323 = vld [vmem:[#allocation2 + $0x148] sm:$0xff]
      %v3324 = vld [vmem:[#allocation2 + $0x150] sm:$0xff]
      %v3325 = vld [vmem:[#allocation2 + $0x158] sm:$0xff]
      %v3326 = vld [vmem:[#allocation2 + $0x160] sm:$0xff]
      %v3327 = vld [vmem:[#allocation2 + $0x168] sm:$0xff]
      %v3328 = vld [vmem:[#allocation2 + $0x170] sm:$0xff]
      %v3329 = vld [vmem:[#allocation2 + $0x178] sm:$0xff]
      %v3330 = vld [vmem:[#allocation2 + $0x180] sm:$0xff]
      %s3331 = scalar_lea.vmem %s5, 128
      %v3332 = vld [vmem:[%s3331] sm:$0xff]
      %v3333 = vld [vmem:[%s3331 + $0x8] sm:$0xff]
      %v3334 = vld [vmem:[%s3331 + $0x10] sm:$0xff]
      %v3335 = vld [vmem:[%s3331 + $0x18] sm:$0xff]
      %v3336 = vld [vmem:[%s3331 + $0x20] sm:$0xff]
      %v3337 = vld [vmem:[%s3331 + $0x28] sm:$0xff]
      %v3338 = vld [vmem:[%s3331 + $0x30] sm:$0xff]
      %v3339 = vld [vmem:[%s3331 + $0x38] sm:$0xff]
      %v3340 = vld [vmem:[%s3331 + $0x40] sm:$0xff]
      %v3341 = vld [vmem:[%s3331 + $0x48] sm:$0xff]
      %v3342 = vld [vmem:[%s3331 + $0x50] sm:$0xff]
      %v3343 = vld [vmem:[%s3331 + $0x58] sm:$0xff]
      %v3344 = vld [vmem:[%s3331 + $0x60] sm:$0xff]
      %v3345 = vld [vmem:[%s3331 + $0x68] sm:$0xff]
      %v3346 = vld [vmem:[%s3331 + $0x70] sm:$0xff]
      %v3347 = vld [vmem:[%s3331 + $0x78] sm:$0xff]
      %3348 = vmatpush.msra.mxu0 %v3347
      %3349 = vmatpush.msra.mxu0 %v3346
      %3350 = vmatpush.msra.mxu0 %v3345
      %3351 = vmatpush.msra.mxu0 %v3344
      %3352 = vmatpush.msra.mxu0 %v3343
      %3353 = vmatpush.msra.mxu0 %v3342
      %3354 = vmatpush.msra.mxu0 %v3341
      %3355 = vmatpush.msra.mxu0 %v3340
      %3356 = vmatpush.msra.mxu0 %v3339
      %3357 = vmatpush.msra.mxu0 %v3338
      %3358 = vmatpush.msra.mxu0 %v3337
      %3359 = vmatpush.msra.mxu0 %v3336
      %3360 = vmatpush.msra.mxu0 %v3335
      %3361 = vmatpush.msra.mxu0 %v3334
      %3362 = vmatpush.msra.mxu0 %v3333
      %3363 = vmatpush.msra.mxu0 %v3332
      %3364 = vmatmul.f32.gmra.mxu0 %v3283
      %v3365 = vpop.f32.mrf.mxu0
      %v3366 = vadd.f32 0.0, %v3365
      %3367 = vmatmul.f32.gmra.mxu0 %v3284
      %v3368 = vpop.f32.mrf.mxu0
      %v3369 = vadd.f32 0.0, %v3368
      %3370 = vmatmul.f32.gmra.mxu0 %v3285
      %v3371 = vpop.f32.mrf.mxu0
      %v3372 = vadd.f32 0.0, %v3371
      %3373 = vmatmul.f32.gmra.mxu0 %v3286
      %v3374 = vpop.f32.mrf.mxu0
      %v3375 = vadd.f32 0.0, %v3374
      %3376 = vmatmul.f32.gmra.mxu0 %v3287
      %v3377 = vpop.f32.mrf.mxu0
      %v3378 = vadd.f32 0.0, %v3377
      %3379 = vmatmul.f32.gmra.mxu0 %v3288
      %v3380 = vpop.f32.mrf.mxu0
      %v3381 = vadd.f32 0.0, %v3380
      %3382 = vmatmul.f32.gmra.mxu0 %v3289
      %v3383 = vpop.f32.mrf.mxu0
      %v3384 = vadd.f32 0.0, %v3383
      %3385 = vmatmul.f32.gmra.mxu0 %v3290
      %v3386 = vpop.f32.mrf.mxu0
      %v3387 = vadd.f32 0.0, %v3386
      %3388 = vmatmul.f32.gmra.mxu0 %v3291
      %v3389 = vpop.f32.mrf.mxu0
      %v3390 = vadd.f32 0.0, %v3389
      %3391 = vmatmul.f32.gmra.mxu0 %v3292
      %v3392 = vpop.f32.mrf.mxu0
      %v3393 = vadd.f32 0.0, %v3392
      %3394 = vmatmul.f32.gmra.mxu0 %v3293
      %v3395 = vpop.f32.mrf.mxu0
      %v3396 = vadd.f32 0.0, %v3395
      %3397 = vmatmul.f32.gmra.mxu0 %v3294
      %v3398 = vpop.f32.mrf.mxu0
      %v3399 = vadd.f32 0.0, %v3398
      %3400 = vmatmul.f32.gmra.mxu0 %v3295
      %v3401 = vpop.f32.mrf.mxu0
      %v3402 = vadd.f32 0.0, %v3401
      %3403 = vmatmul.f32.gmra.mxu0 %v3296
      %v3404 = vpop.f32.mrf.mxu0
      %v3405 = vadd.f32 0.0, %v3404
      %3406 = vmatmul.f32.gmra.mxu0 %v3297
      %v3407 = vpop.f32.mrf.mxu0
      %v3408 = vadd.f32 0.0, %v3407
      %3409 = vmatmul.f32.gmra.mxu0 %v3298
      %v3410 = vpop.f32.mrf.mxu0
      %v3411 = vadd.f32 0.0, %v3410
      %3412 = vmatmul.f32.gmra.mxu0 %v3299
      %v3413 = vpop.f32.mrf.mxu0
      %v3414 = vadd.f32 0.0, %v3413
      %3415 = vmatmul.f32.gmra.mxu0 %v3300
      %v3416 = vpop.f32.mrf.mxu0
      %v3417 = vadd.f32 0.0, %v3416
      %3418 = vmatmul.f32.gmra.mxu0 %v3301
      %v3419 = vpop.f32.mrf.mxu0
      %v3420 = vadd.f32 0.0, %v3419
      %3421 = vmatmul.f32.gmra.mxu0 %v3302
      %v3422 = vpop.f32.mrf.mxu0
      %v3423 = vadd.f32 0.0, %v3422
      %3424 = vmatmul.f32.gmra.mxu0 %v3303
      %v3425 = vpop.f32.mrf.mxu0
      %v3426 = vadd.f32 0.0, %v3425
      %3427 = vmatmul.f32.gmra.mxu0 %v3304
      %v3428 = vpop.f32.mrf.mxu0
      %v3429 = vadd.f32 0.0, %v3428
      %3430 = vmatmul.f32.gmra.mxu0 %v3305
      %v3431 = vpop.f32.mrf.mxu0
      %v3432 = vadd.f32 0.0, %v3431
      %3433 = vmatmul.f32.gmra.mxu0 %v3306
      %v3434 = vpop.f32.mrf.mxu0
      %v3435 = vadd.f32 0.0, %v3434
      %3436 = vmatmul.f32.gmra.mxu0 %v3307
      %v3437 = vpop.f32.mrf.mxu0
      %v3438 = vadd.f32 0.0, %v3437
      %3439 = vmatmul.f32.gmra.mxu0 %v3308
      %v3440 = vpop.f32.mrf.mxu0
      %v3441 = vadd.f32 0.0, %v3440
      %3442 = vmatmul.f32.gmra.mxu0 %v3309
      %v3443 = vpop.f32.mrf.mxu0
      %v3444 = vadd.f32 0.0, %v3443
      %3445 = vmatmul.f32.gmra.mxu0 %v3310
      %v3446 = vpop.f32.mrf.mxu0
      %v3447 = vadd.f32 0.0, %v3446
      %3448 = vmatmul.f32.gmra.mxu0 %v3311
      %v3449 = vpop.f32.mrf.mxu0
      %v3450 = vadd.f32 0.0, %v3449
      %3451 = vmatmul.f32.gmra.mxu0 %v3312
      %v3452 = vpop.f32.mrf.mxu0
      %v3453 = vadd.f32 0.0, %v3452
      %3454 = vmatmul.f32.gmra.mxu0 %v3313
      %v3455 = vpop.f32.mrf.mxu0
      %v3456 = vadd.f32 0.0, %v3455
      %3457 = vmatmul.f32.gmra.mxu0 %v3314
      %v3458 = vpop.f32.mrf.mxu0
      %v3459 = vadd.f32 0.0, %v3458
      %3460 = vmatmul.f32.gmra.mxu0 %v3315
      %v3461 = vpop.f32.mrf.mxu0
      %v3462 = vadd.f32 0.0, %v3461
      %3463 = vmatmul.f32.gmra.mxu0 %v3316
      %v3464 = vpop.f32.mrf.mxu0
      %v3465 = vadd.f32 0.0, %v3464
      %3466 = vmatmul.f32.gmra.mxu0 %v3317
      %v3467 = vpop.f32.mrf.mxu0
      %v3468 = vadd.f32 0.0, %v3467
      %3469 = vmatmul.f32.gmra.mxu0 %v3318
      %v3470 = vpop.f32.mrf.mxu0
      %v3471 = vadd.f32 0.0, %v3470
      %3472 = vmatmul.f32.gmra.mxu0 %v3319
      %v3473 = vpop.f32.mrf.mxu0
      %v3474 = vadd.f32 0.0, %v3473
      %3475 = vmatmul.f32.gmra.mxu0 %v3320
      %v3476 = vpop.f32.mrf.mxu0
      %v3477 = vadd.f32 0.0, %v3476
      %3478 = vmatmul.f32.gmra.mxu0 %v3321
      %v3479 = vpop.f32.mrf.mxu0
      %v3480 = vadd.f32 0.0, %v3479
      %3481 = vmatmul.f32.gmra.mxu0 %v3322
      %v3482 = vpop.f32.mrf.mxu0
      %v3483 = vadd.f32 0.0, %v3482
      %3484 = vmatmul.f32.gmra.mxu0 %v3323
      %v3485 = vpop.f32.mrf.mxu0
      %v3486 = vadd.f32 0.0, %v3485
      %3487 = vmatmul.f32.gmra.mxu0 %v3324
      %v3488 = vpop.f32.mrf.mxu0
      %v3489 = vadd.f32 0.0, %v3488
      %3490 = vmatmul.f32.gmra.mxu0 %v3325
      %v3491 = vpop.f32.mrf.mxu0
      %v3492 = vadd.f32 0.0, %v3491
      %3493 = vmatmul.f32.gmra.mxu0 %v3326
      %v3494 = vpop.f32.mrf.mxu0
      %v3495 = vadd.f32 0.0, %v3494
      %3496 = vmatmul.f32.gmra.mxu0 %v3327
      %v3497 = vpop.f32.mrf.mxu0
      %v3498 = vadd.f32 0.0, %v3497
      %3499 = vmatmul.f32.gmra.mxu0 %v3328
      %v3500 = vpop.f32.mrf.mxu0
      %v3501 = vadd.f32 0.0, %v3500
      %3502 = vmatmul.f32.gmra.mxu0 %v3329
      %v3503 = vpop.f32.mrf.mxu0
      %v3504 = vadd.f32 0.0, %v3503
      %3505 = vmatmul.f32.gmra.mxu0 %v3330
      %v3506 = vpop.f32.mrf.mxu0
      %v3507 = vadd.f32 0.0, %v3506
      %3508 = vdwg.mxu0
      %3509 = vmatpush.msra.mxu0 %v3282
      %3510 = vmatpush.msra.mxu0 %v3281
      %3511 = vmatpush.msra.mxu0 %v3280
      %3512 = vmatpush.msra.mxu0 %v3279
      %3513 = vmatpush.msra.mxu0 %v3278
      %3514 = vmatpush.msra.mxu0 %v3277
      %3515 = vmatpush.msra.mxu0 %v3276
      %3516 = vmatpush.msra.mxu0 %v3275
      %3517 = vmatpush.msra.mxu0 %v3274
      %3518 = vmatpush.msra.mxu0 %v3273
      %3519 = vmatpush.msra.mxu0 %v3272
      %3520 = vmatpush.msra.mxu0 %v3271
      %3521 = vmatpush.msra.mxu0 %v3270
      %3522 = vmatpush.msra.mxu0 %v3269
      %3523 = vmatpush.msra.mxu0 %v3268
      %3524 = vmatpush.msra.mxu0 %v3267
      %3525 = vmatmul.f32.gmra.mxu0 %v3219
      %v3526 = vpop.f32.mrf.mxu0
      %v3527 = vadd.f32 %v3366, %v3526
      %3528 = vmatmul.f32.gmra.mxu0 %v3220
      %v3529 = vpop.f32.mrf.mxu0
      %v3530 = vadd.f32 %v3369, %v3529
      %3531 = vmatmul.f32.gmra.mxu0 %v3221
      %v3532 = vpop.f32.mrf.mxu0
      %v3533 = vadd.f32 %v3372, %v3532
      %3534 = vmatmul.f32.gmra.mxu0 %v3222
      %v3535 = vpop.f32.mrf.mxu0
      %v3536 = vadd.f32 %v3375, %v3535
      %3537 = vmatmul.f32.gmra.mxu0 %v3223
      %v3538 = vpop.f32.mrf.mxu0
      %v3539 = vadd.f32 %v3378, %v3538
      %3540 = vmatmul.f32.gmra.mxu0 %v3224
      %v3541 = vpop.f32.mrf.mxu0
      %v3542 = vadd.f32 %v3381, %v3541
      %3543 = vmatmul.f32.gmra.mxu0 %v3225
      %v3544 = vpop.f32.mrf.mxu0
      %v3545 = vadd.f32 %v3384, %v3544
      %3546 = vmatmul.f32.gmra.mxu0 %v3226
      %v3547 = vpop.f32.mrf.mxu0
      %v3548 = vadd.f32 %v3387, %v3547
      %3549 = vmatmul.f32.gmra.mxu0 %v3227
      %v3550 = vpop.f32.mrf.mxu0
      %v3551 = vadd.f32 %v3390, %v3550
      %3552 = vmatmul.f32.gmra.mxu0 %v3228
      %v3553 = vpop.f32.mrf.mxu0
      %v3554 = vadd.f32 %v3393, %v3553
      %3555 = vmatmul.f32.gmra.mxu0 %v3229
      %v3556 = vpop.f32.mrf.mxu0
      %v3557 = vadd.f32 %v3396, %v3556
      %3558 = vmatmul.f32.gmra.mxu0 %v3230
      %v3559 = vpop.f32.mrf.mxu0
      %v3560 = vadd.f32 %v3399, %v3559
      %3561 = vmatmul.f32.gmra.mxu0 %v3231
      %v3562 = vpop.f32.mrf.mxu0
      %v3563 = vadd.f32 %v3402, %v3562
      %3564 = vmatmul.f32.gmra.mxu0 %v3232
      %v3565 = vpop.f32.mrf.mxu0
      %v3566 = vadd.f32 %v3405, %v3565
      %3567 = vmatmul.f32.gmra.mxu0 %v3233
      %v3568 = vpop.f32.mrf.mxu0
      %v3569 = vadd.f32 %v3408, %v3568
      %3570 = vmatmul.f32.gmra.mxu0 %v3234
      %v3571 = vpop.f32.mrf.mxu0
      %v3572 = vadd.f32 %v3411, %v3571
      %3573 = vmatmul.f32.gmra.mxu0 %v3235
      %v3574 = vpop.f32.mrf.mxu0
      %v3575 = vadd.f32 %v3414, %v3574
      %3576 = vmatmul.f32.gmra.mxu0 %v3236
      %v3577 = vpop.f32.mrf.mxu0
      %v3578 = vadd.f32 %v3417, %v3577
      %3579 = vmatmul.f32.gmra.mxu0 %v3237
      %v3580 = vpop.f32.mrf.mxu0
      %v3581 = vadd.f32 %v3420, %v3580
      %3582 = vmatmul.f32.gmra.mxu0 %v3238
      %v3583 = vpop.f32.mrf.mxu0
      %v3584 = vadd.f32 %v3423, %v3583
      %3585 = vmatmul.f32.gmra.mxu0 %v3239
      %v3586 = vpop.f32.mrf.mxu0
      %v3587 = vadd.f32 %v3426, %v3586
      %3588 = vmatmul.f32.gmra.mxu0 %v3240
      %v3589 = vpop.f32.mrf.mxu0
      %v3590 = vadd.f32 %v3429, %v3589
      %3591 = vmatmul.f32.gmra.mxu0 %v3241
      %v3592 = vpop.f32.mrf.mxu0
      %v3593 = vadd.f32 %v3432, %v3592
      %3594 = vmatmul.f32.gmra.mxu0 %v3242
      %v3595 = vpop.f32.mrf.mxu0
      %v3596 = vadd.f32 %v3435, %v3595
      %3597 = vmatmul.f32.gmra.mxu0 %v3243
      %v3598 = vpop.f32.mrf.mxu0
      %v3599 = vadd.f32 %v3438, %v3598
      %3600 = vmatmul.f32.gmra.mxu0 %v3244
      %v3601 = vpop.f32.mrf.mxu0
      %v3602 = vadd.f32 %v3441, %v3601
      %3603 = vmatmul.f32.gmra.mxu0 %v3245
      %v3604 = vpop.f32.mrf.mxu0
      %v3605 = vadd.f32 %v3444, %v3604
      %3606 = vmatmul.f32.gmra.mxu0 %v3246
      %v3607 = vpop.f32.mrf.mxu0
      %v3608 = vadd.f32 %v3447, %v3607
      %3609 = vmatmul.f32.gmra.mxu0 %v3247
      %v3610 = vpop.f32.mrf.mxu0
      %v3611 = vadd.f32 %v3450, %v3610
      %3612 = vmatmul.f32.gmra.mxu0 %v3248
      %v3613 = vpop.f32.mrf.mxu0
      %v3614 = vadd.f32 %v3453, %v3613
      %3615 = vmatmul.f32.gmra.mxu0 %v3249
      %v3616 = vpop.f32.mrf.mxu0
      %v3617 = vadd.f32 %v3456, %v3616
      %3618 = vmatmul.f32.gmra.mxu0 %v3250
      %v3619 = vpop.f32.mrf.mxu0
      %v3620 = vadd.f32 %v3459, %v3619
      %3621 = vmatmul.f32.gmra.mxu0 %v3251
      %v3622 = vpop.f32.mrf.mxu0
      %v3623 = vadd.f32 %v3462, %v3622
      %3624 = vmatmul.f32.gmra.mxu0 %v3252
      %v3625 = vpop.f32.mrf.mxu0
      %v3626 = vadd.f32 %v3465, %v3625
      %3627 = vmatmul.f32.gmra.mxu0 %v3253
      %v3628 = vpop.f32.mrf.mxu0
      %v3629 = vadd.f32 %v3468, %v3628
      %3630 = vmatmul.f32.gmra.mxu0 %v3254
      %v3631 = vpop.f32.mrf.mxu0
      %v3632 = vadd.f32 %v3471, %v3631
      %3633 = vmatmul.f32.gmra.mxu0 %v3255
      %v3634 = vpop.f32.mrf.mxu0
      %v3635 = vadd.f32 %v3474, %v3634
      %3636 = vmatmul.f32.gmra.mxu0 %v3256
      %v3637 = vpop.f32.mrf.mxu0
      %v3638 = vadd.f32 %v3477, %v3637
      %3639 = vmatmul.f32.gmra.mxu0 %v3257
      %v3640 = vpop.f32.mrf.mxu0
      %v3641 = vadd.f32 %v3480, %v3640
      %3642 = vmatmul.f32.gmra.mxu0 %v3258
      %v3643 = vpop.f32.mrf.mxu0
      %v3644 = vadd.f32 %v3483, %v3643
      %3645 = vmatmul.f32.gmra.mxu0 %v3259
      %v3646 = vpop.f32.mrf.mxu0
      %v3647 = vadd.f32 %v3486, %v3646
      %3648 = vmatmul.f32.gmra.mxu0 %v3260
      %v3649 = vpop.f32.mrf.mxu0
      %v3650 = vadd.f32 %v3489, %v3649
      %3651 = vmatmul.f32.gmra.mxu0 %v3261
      %v3652 = vpop.f32.mrf.mxu0
      %v3653 = vadd.f32 %v3492, %v3652
      %3654 = vmatmul.f32.gmra.mxu0 %v3262
      %v3655 = vpop.f32.mrf.mxu0
      %v3656 = vadd.f32 %v3495, %v3655
      %3657 = vmatmul.f32.gmra.mxu0 %v3263
      %v3658 = vpop.f32.mrf.mxu0
      %v3659 = vadd.f32 %v3498, %v3658
      %3660 = vmatmul.f32.gmra.mxu0 %v3264
      %v3661 = vpop.f32.mrf.mxu0
      %v3662 = vadd.f32 %v3501, %v3661
      %3663 = vmatmul.f32.gmra.mxu0 %v3265
      %v3664 = vpop.f32.mrf.mxu0
      %v3665 = vadd.f32 %v3504, %v3664
      %3666 = vmatmul.f32.gmra.mxu0 %v3266
      %v3667 = vpop.f32.mrf.mxu0
      %v3668 = vadd.f32 %v3507, %v3667
      %3669 = vdwg.mxu0
      %v3670 = vld [vmem:[#allocation2 + $0x9] sm:$0xff]
      %v3671 = vld [vmem:[#allocation2 + $0x11] sm:$0xff]
      %v3672 = vld [vmem:[#allocation2 + $0x19] sm:$0xff]
      %v3673 = vld [vmem:[#allocation2 + $0x21] sm:$0xff]
      %v3674 = vld [vmem:[#allocation2 + $0x29] sm:$0xff]
      %v3675 = vld [vmem:[#allocation2 + $0x31] sm:$0xff]
      %v3676 = vld [vmem:[#allocation2 + $0x39] sm:$0xff]
      %v3677 = vld [vmem:[#allocation2 + $0x41] sm:$0xff]
      %v3678 = vld [vmem:[#allocation2 + $0x49] sm:$0xff]
      %v3679 = vld [vmem:[#allocation2 + $0x51] sm:$0xff]
      %v3680 = vld [vmem:[#allocation2 + $0x59] sm:$0xff]
      %v3681 = vld [vmem:[#allocation2 + $0x61] sm:$0xff]
      %v3682 = vld [vmem:[#allocation2 + $0x69] sm:$0xff]
      %v3683 = vld [vmem:[#allocation2 + $0x71] sm:$0xff]
      %v3684 = vld [vmem:[#allocation2 + $0x79] sm:$0xff]
      %v3685 = vld [vmem:[#allocation2 + $0x81] sm:$0xff]
      %v3686 = vld [vmem:[#allocation2 + $0x89] sm:$0xff]
      %v3687 = vld [vmem:[#allocation2 + $0x91] sm:$0xff]
      %v3688 = vld [vmem:[#allocation2 + $0x99] sm:$0xff]
      %v3689 = vld [vmem:[#allocation2 + $0xa1] sm:$0xff]
      %v3690 = vld [vmem:[#allocation2 + $0xa9] sm:$0xff]
      %v3691 = vld [vmem:[#allocation2 + $0xb1] sm:$0xff]
      %v3692 = vld [vmem:[#allocation2 + $0xb9] sm:$0xff]
      %v3693 = vld [vmem:[#allocation2 + $0xc1] sm:$0xff]
      %v3694 = vld [vmem:[#allocation2 + $0xc9] sm:$0xff]
      %v3695 = vld [vmem:[#allocation2 + $0xd1] sm:$0xff]
      %v3696 = vld [vmem:[#allocation2 + $0xd9] sm:$0xff]
      %v3697 = vld [vmem:[#allocation2 + $0xe1] sm:$0xff]
      %v3698 = vld [vmem:[#allocation2 + $0xe9] sm:$0xff]
      %v3699 = vld [vmem:[#allocation2 + $0xf1] sm:$0xff]
      %v3700 = vld [vmem:[#allocation2 + $0xf9] sm:$0xff]
      %v3701 = vld [vmem:[#allocation2 + $0x101] sm:$0xff]
      %v3702 = vld [vmem:[#allocation2 + $0x109] sm:$0xff]
      %v3703 = vld [vmem:[#allocation2 + $0x111] sm:$0xff]
      %v3704 = vld [vmem:[#allocation2 + $0x119] sm:$0xff]
      %v3705 = vld [vmem:[#allocation2 + $0x121] sm:$0xff]
      %v3706 = vld [vmem:[#allocation2 + $0x129] sm:$0xff]
      %v3707 = vld [vmem:[#allocation2 + $0x131] sm:$0xff]
      %v3708 = vld [vmem:[#allocation2 + $0x139] sm:$0xff]
      %v3709 = vld [vmem:[#allocation2 + $0x141] sm:$0xff]
      %v3710 = vld [vmem:[#allocation2 + $0x149] sm:$0xff]
      %v3711 = vld [vmem:[#allocation2 + $0x151] sm:$0xff]
      %v3712 = vld [vmem:[#allocation2 + $0x159] sm:$0xff]
      %v3713 = vld [vmem:[#allocation2 + $0x161] sm:$0xff]
      %v3714 = vld [vmem:[#allocation2 + $0x169] sm:$0xff]
      %v3715 = vld [vmem:[#allocation2 + $0x171] sm:$0xff]
      %v3716 = vld [vmem:[#allocation2 + $0x179] sm:$0xff]
      %v3717 = vld [vmem:[#allocation2 + $0x181] sm:$0xff]
      %s3718 = scalar_lea.vmem %s5, 256
      %v3719 = vld [vmem:[%s3718] sm:$0xff]
      %v3720 = vld [vmem:[%s3718 + $0x8] sm:$0xff]
      %v3721 = vld [vmem:[%s3718 + $0x10] sm:$0xff]
      %v3722 = vld [vmem:[%s3718 + $0x18] sm:$0xff]
      %v3723 = vld [vmem:[%s3718 + $0x20] sm:$0xff]
      %v3724 = vld [vmem:[%s3718 + $0x28] sm:$0xff]
      %v3725 = vld [vmem:[%s3718 + $0x30] sm:$0xff]
      %v3726 = vld [vmem:[%s3718 + $0x38] sm:$0xff]
      %v3727 = vld [vmem:[%s3718 + $0x40] sm:$0xff]
      %v3728 = vld [vmem:[%s3718 + $0x48] sm:$0xff]
      %v3729 = vld [vmem:[%s3718 + $0x50] sm:$0xff]
      %v3730 = vld [vmem:[%s3718 + $0x58] sm:$0xff]
      %v3731 = vld [vmem:[%s3718 + $0x60] sm:$0xff]
      %v3732 = vld [vmem:[%s3718 + $0x68] sm:$0xff]
      %v3733 = vld [vmem:[%s3718 + $0x70] sm:$0xff]
      %v3734 = vld [vmem:[%s3718 + $0x78] sm:$0xff]
      %3735 = vmatpush.msra.mxu0 %v3734
      %3736 = vmatpush.msra.mxu0 %v3733
      %3737 = vmatpush.msra.mxu0 %v3732
      %3738 = vmatpush.msra.mxu0 %v3731
      %3739 = vmatpush.msra.mxu0 %v3730
      %3740 = vmatpush.msra.mxu0 %v3729
      %3741 = vmatpush.msra.mxu0 %v3728
      %3742 = vmatpush.msra.mxu0 %v3727
      %3743 = vmatpush.msra.mxu0 %v3726
      %3744 = vmatpush.msra.mxu0 %v3725
      %3745 = vmatpush.msra.mxu0 %v3724
      %3746 = vmatpush.msra.mxu0 %v3723
      %3747 = vmatpush.msra.mxu0 %v3722
      %3748 = vmatpush.msra.mxu0 %v3721
      %3749 = vmatpush.msra.mxu0 %v3720
      %3750 = vmatpush.msra.mxu0 %v3719
      %3751 = vmatmul.f32.gmra.mxu0 %v3670
      %v3752 = vpop.f32.mrf.mxu0
      %v3753 = vadd.f32 0.0, %v3752
      %3754 = vmatmul.f32.gmra.mxu0 %v3671
      %v3755 = vpop.f32.mrf.mxu0
      %v3756 = vadd.f32 0.0, %v3755
      %3757 = vmatmul.f32.gmra.mxu0 %v3672
      %v3758 = vpop.f32.mrf.mxu0
      %v3759 = vadd.f32 0.0, %v3758
      %3760 = vmatmul.f32.gmra.mxu0 %v3673
      %v3761 = vpop.f32.mrf.mxu0
      %v3762 = vadd.f32 0.0, %v3761
      %3763 = vmatmul.f32.gmra.mxu0 %v3674
      %v3764 = vpop.f32.mrf.mxu0
      %v3765 = vadd.f32 0.0, %v3764
      %3766 = vmatmul.f32.gmra.mxu0 %v3675
      %v3767 = vpop.f32.mrf.mxu0
      %v3768 = vadd.f32 0.0, %v3767
      %3769 = vmatmul.f32.gmra.mxu0 %v3676
      %v3770 = vpop.f32.mrf.mxu0
      %v3771 = vadd.f32 0.0, %v3770
      %3772 = vmatmul.f32.gmra.mxu0 %v3677
      %v3773 = vpop.f32.mrf.mxu0
      %v3774 = vadd.f32 0.0, %v3773
      %3775 = vmatmul.f32.gmra.mxu0 %v3678
      %v3776 = vpop.f32.mrf.mxu0
      %v3777 = vadd.f32 0.0, %v3776
      %3778 = vmatmul.f32.gmra.mxu0 %v3679
      %v3779 = vpop.f32.mrf.mxu0
      %v3780 = vadd.f32 0.0, %v3779
      %3781 = vmatmul.f32.gmra.mxu0 %v3680
      %v3782 = vpop.f32.mrf.mxu0
      %v3783 = vadd.f32 0.0, %v3782
      %3784 = vmatmul.f32.gmra.mxu0 %v3681
      %v3785 = vpop.f32.mrf.mxu0
      %v3786 = vadd.f32 0.0, %v3785
      %3787 = vmatmul.f32.gmra.mxu0 %v3682
      %v3788 = vpop.f32.mrf.mxu0
      %v3789 = vadd.f32 0.0, %v3788
      %3790 = vmatmul.f32.gmra.mxu0 %v3683
      %v3791 = vpop.f32.mrf.mxu0
      %v3792 = vadd.f32 0.0, %v3791
      %3793 = vmatmul.f32.gmra.mxu0 %v3684
      %v3794 = vpop.f32.mrf.mxu0
      %v3795 = vadd.f32 0.0, %v3794
      %3796 = vmatmul.f32.gmra.mxu0 %v3685
      %v3797 = vpop.f32.mrf.mxu0
      %v3798 = vadd.f32 0.0, %v3797
      %3799 = vmatmul.f32.gmra.mxu0 %v3686
      %v3800 = vpop.f32.mrf.mxu0
      %v3801 = vadd.f32 0.0, %v3800
      %3802 = vmatmul.f32.gmra.mxu0 %v3687
      %v3803 = vpop.f32.mrf.mxu0
      %v3804 = vadd.f32 0.0, %v3803
      %3805 = vmatmul.f32.gmra.mxu0 %v3688
      %v3806 = vpop.f32.mrf.mxu0
      %v3807 = vadd.f32 0.0, %v3806
      %3808 = vmatmul.f32.gmra.mxu0 %v3689
      %v3809 = vpop.f32.mrf.mxu0
      %v3810 = vadd.f32 0.0, %v3809
      %3811 = vmatmul.f32.gmra.mxu0 %v3690
      %v3812 = vpop.f32.mrf.mxu0
      %v3813 = vadd.f32 0.0, %v3812
      %3814 = vmatmul.f32.gmra.mxu0 %v3691
      %v3815 = vpop.f32.mrf.mxu0
      %v3816 = vadd.f32 0.0, %v3815
      %3817 = vmatmul.f32.gmra.mxu0 %v3692
      %v3818 = vpop.f32.mrf.mxu0
      %v3819 = vadd.f32 0.0, %v3818
      %3820 = vmatmul.f32.gmra.mxu0 %v3693
      %v3821 = vpop.f32.mrf.mxu0
      %v3822 = vadd.f32 0.0, %v3821
      %3823 = vmatmul.f32.gmra.mxu0 %v3694
      %v3824 = vpop.f32.mrf.mxu0
      %v3825 = vadd.f32 0.0, %v3824
      %3826 = vmatmul.f32.gmra.mxu0 %v3695
      %v3827 = vpop.f32.mrf.mxu0
      %v3828 = vadd.f32 0.0, %v3827
      %3829 = vmatmul.f32.gmra.mxu0 %v3696
      %v3830 = vpop.f32.mrf.mxu0
      %v3831 = vadd.f32 0.0, %v3830
      %3832 = vmatmul.f32.gmra.mxu0 %v3697
      %v3833 = vpop.f32.mrf.mxu0
      %v3834 = vadd.f32 0.0, %v3833
      %3835 = vmatmul.f32.gmra.mxu0 %v3698
      %v3836 = vpop.f32.mrf.mxu0
      %v3837 = vadd.f32 0.0, %v3836
      %3838 = vmatmul.f32.gmra.mxu0 %v3699
      %v3839 = vpop.f32.mrf.mxu0
      %v3840 = vadd.f32 0.0, %v3839
      %3841 = vmatmul.f32.gmra.mxu0 %v3700
      %v3842 = vpop.f32.mrf.mxu0
      %v3843 = vadd.f32 0.0, %v3842
      %3844 = vmatmul.f32.gmra.mxu0 %v3701
      %v3845 = vpop.f32.mrf.mxu0
      %v3846 = vadd.f32 0.0, %v3845
      %3847 = vmatmul.f32.gmra.mxu0 %v3702
      %v3848 = vpop.f32.mrf.mxu0
      %v3849 = vadd.f32 0.0, %v3848
      %3850 = vmatmul.f32.gmra.mxu0 %v3703
      %v3851 = vpop.f32.mrf.mxu0
      %v3852 = vadd.f32 0.0, %v3851
      %3853 = vmatmul.f32.gmra.mxu0 %v3704
      %v3854 = vpop.f32.mrf.mxu0
      %v3855 = vadd.f32 0.0, %v3854
      %3856 = vmatmul.f32.gmra.mxu0 %v3705
      %v3857 = vpop.f32.mrf.mxu0
      %v3858 = vadd.f32 0.0, %v3857
      %3859 = vmatmul.f32.gmra.mxu0 %v3706
      %v3860 = vpop.f32.mrf.mxu0
      %v3861 = vadd.f32 0.0, %v3860
      %3862 = vmatmul.f32.gmra.mxu0 %v3707
      %v3863 = vpop.f32.mrf.mxu0
      %v3864 = vadd.f32 0.0, %v3863
      %3865 = vmatmul.f32.gmra.mxu0 %v3708
      %v3866 = vpop.f32.mrf.mxu0
      %v3867 = vadd.f32 0.0, %v3866
      %3868 = vmatmul.f32.gmra.mxu0 %v3709
      %v3869 = vpop.f32.mrf.mxu0
      %v3870 = vadd.f32 0.0, %v3869
      %3871 = vmatmul.f32.gmra.mxu0 %v3710
      %v3872 = vpop.f32.mrf.mxu0
      %v3873 = vadd.f32 0.0, %v3872
      %3874 = vmatmul.f32.gmra.mxu0 %v3711
      %v3875 = vpop.f32.mrf.mxu0
      %v3876 = vadd.f32 0.0, %v3875
      %3877 = vmatmul.f32.gmra.mxu0 %v3712
      %v3878 = vpop.f32.mrf.mxu0
      %v3879 = vadd.f32 0.0, %v3878
      %3880 = vmatmul.f32.gmra.mxu0 %v3713
      %v3881 = vpop.f32.mrf.mxu0
      %v3882 = vadd.f32 0.0, %v3881
      %3883 = vmatmul.f32.gmra.mxu0 %v3714
      %v3884 = vpop.f32.mrf.mxu0
      %v3885 = vadd.f32 0.0, %v3884
      %3886 = vmatmul.f32.gmra.mxu0 %v3715
      %v3887 = vpop.f32.mrf.mxu0
      %v3888 = vadd.f32 0.0, %v3887
      %3889 = vmatmul.f32.gmra.mxu0 %v3716
      %v3890 = vpop.f32.mrf.mxu0
      %v3891 = vadd.f32 0.0, %v3890
      %3892 = vmatmul.f32.gmra.mxu0 %v3717
      %v3893 = vpop.f32.mrf.mxu0
      %v3894 = vadd.f32 0.0, %v3893
      %3895 = vdwg.mxu0
      %v3896 = vadd.f32 %v3527, %v3753
      %v3897 = vadd.f32 %v3530, %v3756
      %v3898 = vadd.f32 %v3533, %v3759
      %v3899 = vadd.f32 %v3536, %v3762
      %v3900 = vadd.f32 %v3539, %v3765
      %v3901 = vadd.f32 %v3542, %v3768
      %v3902 = vadd.f32 %v3545, %v3771
      %v3903 = vadd.f32 %v3548, %v3774
      %v3904 = vadd.f32 %v3551, %v3777
      %v3905 = vadd.f32 %v3554, %v3780
      %v3906 = vadd.f32 %v3557, %v3783
      %v3907 = vadd.f32 %v3560, %v3786
      %v3908 = vadd.f32 %v3563, %v3789
      %v3909 = vadd.f32 %v3566, %v3792
      %v3910 = vadd.f32 %v3569, %v3795
      %v3911 = vadd.f32 %v3572, %v3798
      %v3912 = vadd.f32 %v3575, %v3801
      %v3913 = vadd.f32 %v3578, %v3804
      %v3914 = vadd.f32 %v3581, %v3807
      %v3915 = vadd.f32 %v3584, %v3810
      %v3916 = vadd.f32 %v3587, %v3813
      %v3917 = vadd.f32 %v3590, %v3816
      %v3918 = vadd.f32 %v3593, %v3819
      %v3919 = vadd.f32 %v3596, %v3822
      %v3920 = vadd.f32 %v3599, %v3825
      %v3921 = vadd.f32 %v3602, %v3828
      %v3922 = vadd.f32 %v3605, %v3831
      %v3923 = vadd.f32 %v3608, %v3834
      %v3924 = vadd.f32 %v3611, %v3837
      %v3925 = vadd.f32 %v3614, %v3840
      %v3926 = vadd.f32 %v3617, %v3843
      %v3927 = vadd.f32 %v3620, %v3846
      %v3928 = vadd.f32 %v3623, %v3849
      %v3929 = vadd.f32 %v3626, %v3852
      %v3930 = vadd.f32 %v3629, %v3855
      %v3931 = vadd.f32 %v3632, %v3858
      %v3932 = vadd.f32 %v3635, %v3861
      %v3933 = vadd.f32 %v3638, %v3864
      %v3934 = vadd.f32 %v3641, %v3867
      %v3935 = vadd.f32 %v3644, %v3870
      %v3936 = vadd.f32 %v3647, %v3873
      %v3937 = vadd.f32 %v3650, %v3876
      %v3938 = vadd.f32 %v3653, %v3879
      %v3939 = vadd.f32 %v3656, %v3882
      %v3940 = vadd.f32 %v3659, %v3885
      %v3941 = vadd.f32 %v3662, %v3888
      %v3942 = vadd.f32 %v3665, %v3891
      %v3943 = vadd.f32 %v3668, %v3894
      %v3944 = vld [vmem:[#allocation2 + $0x1f] sm:$0xff]
      %v3945 = vld [vmem:[#allocation2 + $0x27] sm:$0xff]
      %v3946 = vld [vmem:[#allocation2 + $0x2f] sm:$0xff]
      %v3947 = vld [vmem:[#allocation2 + $0x37] sm:$0xff]
      %v3948 = vld [vmem:[#allocation2 + $0x3f] sm:$0xff]
      %v3949 = vld [vmem:[#allocation2 + $0x47] sm:$0xff]
      %v3950 = vld [vmem:[#allocation2 + $0x4f] sm:$0xff]
      %v3951 = vld [vmem:[#allocation2 + $0x57] sm:$0xff]
      %v3952 = vld [vmem:[#allocation2 + $0x5f] sm:$0xff]
      %v3953 = vld [vmem:[#allocation2 + $0x67] sm:$0xff]
      %v3954 = vld [vmem:[#allocation2 + $0x6f] sm:$0xff]
      %v3955 = vld [vmem:[#allocation2 + $0x77] sm:$0xff]
      %v3956 = vld [vmem:[#allocation2 + $0x7f] sm:$0xff]
      %v3957 = vld [vmem:[#allocation2 + $0x87] sm:$0xff]
      %v3958 = vld [vmem:[#allocation2 + $0x8f] sm:$0xff]
      %v3959 = vld [vmem:[#allocation2 + $0x97] sm:$0xff]
      %v3960 = vld [vmem:[#allocation2 + $0x9f] sm:$0xff]
      %v3961 = vld [vmem:[#allocation2 + $0xa7] sm:$0xff]
      %v3962 = vld [vmem:[#allocation2 + $0xaf] sm:$0xff]
      %v3963 = vld [vmem:[#allocation2 + $0xb7] sm:$0xff]
      %v3964 = vld [vmem:[#allocation2 + $0xbf] sm:$0xff]
      %v3965 = vld [vmem:[#allocation2 + $0xc7] sm:$0xff]
      %v3966 = vld [vmem:[#allocation2 + $0xcf] sm:$0xff]
      %v3967 = vld [vmem:[#allocation2 + $0xd7] sm:$0xff]
      %v3968 = vld [vmem:[#allocation2 + $0xdf] sm:$0xff]
      %v3969 = vld [vmem:[#allocation2 + $0xe7] sm:$0xff]
      %v3970 = vld [vmem:[#allocation2 + $0xef] sm:$0xff]
      %v3971 = vld [vmem:[#allocation2 + $0xf7] sm:$0xff]
      %v3972 = vld [vmem:[#allocation2 + $0xff] sm:$0xff]
      %v3973 = vld [vmem:[#allocation2 + $0x107] sm:$0xff]
      %v3974 = vld [vmem:[#allocation2 + $0x10f] sm:$0xff]
      %v3975 = vld [vmem:[#allocation2 + $0x117] sm:$0xff]
      %v3976 = vld [vmem:[#allocation2 + $0x11f] sm:$0xff]
      %v3977 = vld [vmem:[#allocation2 + $0x127] sm:$0xff]
      %v3978 = vld [vmem:[#allocation2 + $0x12f] sm:$0xff]
      %v3979 = vld [vmem:[#allocation2 + $0x137] sm:$0xff]
      %v3980 = vld [vmem:[#allocation2 + $0x13f] sm:$0xff]
      %v3981 = vld [vmem:[#allocation2 + $0x147] sm:$0xff]
      %v3982 = vld [vmem:[#allocation2 + $0x14f] sm:$0xff]
      %v3983 = vld [vmem:[#allocation2 + $0x157] sm:$0xff]
      %v3984 = vld [vmem:[#allocation2 + $0x15f] sm:$0xff]
      %v3985 = vld [vmem:[#allocation2 + $0x167] sm:$0xff]
      %v3986 = vld [vmem:[#allocation2 + $0x16f] sm:$0xff]
      %v3987 = vld [vmem:[#allocation2 + $0x177] sm:$0xff]
      %v3988 = vld [vmem:[#allocation2 + $0x17f] sm:$0xff]
      %v3989 = vld [vmem:[#allocation2 + $0x187] sm:$0xff]
      %v3990 = vld [vmem:[#allocation2 + $0x18f] sm:$0xff]
      %v3991 = vld [vmem:[#allocation2 + $0x197] sm:$0xff]
      %s3992 = scalar_lea.vmem %s5, 384
      %v3993 = vld [vmem:[%s3992] sm:$0xff]
      %v3994 = vld [vmem:[%s3992 + $0x8] sm:$0xff]
      %v3995 = vld [vmem:[%s3992 + $0x10] sm:$0xff]
      %v3996 = vld [vmem:[%s3992 + $0x18] sm:$0xff]
      %v3997 = vld [vmem:[%s3992 + $0x20] sm:$0xff]
      %v3998 = vld [vmem:[%s3992 + $0x28] sm:$0xff]
      %v3999 = vld [vmem:[%s3992 + $0x30] sm:$0xff]
      %v4000 = vld [vmem:[%s3992 + $0x38] sm:$0xff]
      %v4001 = vld [vmem:[%s3992 + $0x40] sm:$0xff]
      %v4002 = vld [vmem:[%s3992 + $0x48] sm:$0xff]
      %v4003 = vld [vmem:[%s3992 + $0x50] sm:$0xff]
      %v4004 = vld [vmem:[%s3992 + $0x58] sm:$0xff]
      %v4005 = vld [vmem:[%s3992 + $0x60] sm:$0xff]
      %v4006 = vld [vmem:[%s3992 + $0x68] sm:$0xff]
      %v4007 = vld [vmem:[%s3992 + $0x70] sm:$0xff]
      %v4008 = vld [vmem:[%s3992 + $0x78] sm:$0xff]
      %4009 = vmatpush.msra.mxu0 %v4008
      %4010 = vmatpush.msra.mxu0 %v4007
      %4011 = vmatpush.msra.mxu0 %v4006
      %4012 = vmatpush.msra.mxu0 %v4005
      %4013 = vmatpush.msra.mxu0 %v4004
      %4014 = vmatpush.msra.mxu0 %v4003
      %4015 = vmatpush.msra.mxu0 %v4002
      %4016 = vmatpush.msra.mxu0 %v4001
      %4017 = vmatpush.msra.mxu0 %v4000
      %4018 = vmatpush.msra.mxu0 %v3999
      %4019 = vmatpush.msra.mxu0 %v3998
      %4020 = vmatpush.msra.mxu0 %v3997
      %4021 = vmatpush.msra.mxu0 %v3996
      %4022 = vmatpush.msra.mxu0 %v3995
      %4023 = vmatpush.msra.mxu0 %v3994
      %4024 = vmatpush.msra.mxu0 %v3993
      %4025 = vmatmul.f32.gmra.mxu0 %v3944
      %v4026 = vpop.f32.mrf.mxu0
      %v4027 = vadd.f32 0.0, %v4026
      %4028 = vmatmul.f32.gmra.mxu0 %v3945
      %v4029 = vpop.f32.mrf.mxu0
      %v4030 = vadd.f32 0.0, %v4029
      %4031 = vmatmul.f32.gmra.mxu0 %v3946
      %v4032 = vpop.f32.mrf.mxu0
      %v4033 = vadd.f32 0.0, %v4032
      %4034 = vmatmul.f32.gmra.mxu0 %v3947
      %v4035 = vpop.f32.mrf.mxu0
      %v4036 = vadd.f32 0.0, %v4035
      %4037 = vmatmul.f32.gmra.mxu0 %v3948
      %v4038 = vpop.f32.mrf.mxu0
      %v4039 = vadd.f32 0.0, %v4038
      %4040 = vmatmul.f32.gmra.mxu0 %v3949
      %v4041 = vpop.f32.mrf.mxu0
      %v4042 = vadd.f32 0.0, %v4041
      %4043 = vmatmul.f32.gmra.mxu0 %v3950
      %v4044 = vpop.f32.mrf.mxu0
      %v4045 = vadd.f32 0.0, %v4044
      %4046 = vmatmul.f32.gmra.mxu0 %v3951
      %v4047 = vpop.f32.mrf.mxu0
      %v4048 = vadd.f32 0.0, %v4047
      %4049 = vmatmul.f32.gmra.mxu0 %v3952
      %v4050 = vpop.f32.mrf.mxu0
      %v4051 = vadd.f32 0.0, %v4050
      %4052 = vmatmul.f32.gmra.mxu0 %v3953
      %v4053 = vpop.f32.mrf.mxu0
      %v4054 = vadd.f32 0.0, %v4053
      %4055 = vmatmul.f32.gmra.mxu0 %v3954
      %v4056 = vpop.f32.mrf.mxu0
      %v4057 = vadd.f32 0.0, %v4056
      %4058 = vmatmul.f32.gmra.mxu0 %v3955
      %v4059 = vpop.f32.mrf.mxu0
      %v4060 = vadd.f32 0.0, %v4059
      %4061 = vmatmul.f32.gmra.mxu0 %v3956
      %v4062 = vpop.f32.mrf.mxu0
      %v4063 = vadd.f32 0.0, %v4062
      %4064 = vmatmul.f32.gmra.mxu0 %v3957
      %v4065 = vpop.f32.mrf.mxu0
      %v4066 = vadd.f32 0.0, %v4065
      %4067 = vmatmul.f32.gmra.mxu0 %v3958
      %v4068 = vpop.f32.mrf.mxu0
      %v4069 = vadd.f32 0.0, %v4068
      %4070 = vmatmul.f32.gmra.mxu0 %v3959
      %v4071 = vpop.f32.mrf.mxu0
      %v4072 = vadd.f32 0.0, %v4071
      %4073 = vmatmul.f32.gmra.mxu0 %v3960
      %v4074 = vpop.f32.mrf.mxu0
      %v4075 = vadd.f32 0.0, %v4074
      %4076 = vmatmul.f32.gmra.mxu0 %v3961
      %v4077 = vpop.f32.mrf.mxu0
      %v4078 = vadd.f32 0.0, %v4077
      %4079 = vmatmul.f32.gmra.mxu0 %v3962
      %v4080 = vpop.f32.mrf.mxu0
      %v4081 = vadd.f32 0.0, %v4080
      %4082 = vmatmul.f32.gmra.mxu0 %v3963
      %v4083 = vpop.f32.mrf.mxu0
      %v4084 = vadd.f32 0.0, %v4083
      %4085 = vmatmul.f32.gmra.mxu0 %v3964
      %v4086 = vpop.f32.mrf.mxu0
      %v4087 = vadd.f32 0.0, %v4086
      %4088 = vmatmul.f32.gmra.mxu0 %v3965
      %v4089 = vpop.f32.mrf.mxu0
      %v4090 = vadd.f32 0.0, %v4089
      %4091 = vmatmul.f32.gmra.mxu0 %v3966
      %v4092 = vpop.f32.mrf.mxu0
      %v4093 = vadd.f32 0.0, %v4092
      %4094 = vmatmul.f32.gmra.mxu0 %v3967
      %v4095 = vpop.f32.mrf.mxu0
      %v4096 = vadd.f32 0.0, %v4095
      %4097 = vmatmul.f32.gmra.mxu0 %v3968
      %v4098 = vpop.f32.mrf.mxu0
      %v4099 = vadd.f32 0.0, %v4098
      %4100 = vmatmul.f32.gmra.mxu0 %v3969
      %v4101 = vpop.f32.mrf.mxu0
      %v4102 = vadd.f32 0.0, %v4101
      %4103 = vmatmul.f32.gmra.mxu0 %v3970
      %v4104 = vpop.f32.mrf.mxu0
      %v4105 = vadd.f32 0.0, %v4104
      %4106 = vmatmul.f32.gmra.mxu0 %v3971
      %v4107 = vpop.f32.mrf.mxu0
      %v4108 = vadd.f32 0.0, %v4107
      %4109 = vmatmul.f32.gmra.mxu0 %v3972
      %v4110 = vpop.f32.mrf.mxu0
      %v4111 = vadd.f32 0.0, %v4110
      %4112 = vmatmul.f32.gmra.mxu0 %v3973
      %v4113 = vpop.f32.mrf.mxu0
      %v4114 = vadd.f32 0.0, %v4113
      %4115 = vmatmul.f32.gmra.mxu0 %v3974
      %v4116 = vpop.f32.mrf.mxu0
      %v4117 = vadd.f32 0.0, %v4116
      %4118 = vmatmul.f32.gmra.mxu0 %v3975
      %v4119 = vpop.f32.mrf.mxu0
      %v4120 = vadd.f32 0.0, %v4119
      %4121 = vmatmul.f32.gmra.mxu0 %v3976
      %v4122 = vpop.f32.mrf.mxu0
      %v4123 = vadd.f32 0.0, %v4122
      %4124 = vmatmul.f32.gmra.mxu0 %v3977
      %v4125 = vpop.f32.mrf.mxu0
      %v4126 = vadd.f32 0.0, %v4125
      %4127 = vmatmul.f32.gmra.mxu0 %v3978
      %v4128 = vpop.f32.mrf.mxu0
      %v4129 = vadd.f32 0.0, %v4128
      %4130 = vmatmul.f32.gmra.mxu0 %v3979
      %v4131 = vpop.f32.mrf.mxu0
      %v4132 = vadd.f32 0.0, %v4131
      %4133 = vmatmul.f32.gmra.mxu0 %v3980
      %v4134 = vpop.f32.mrf.mxu0
      %v4135 = vadd.f32 0.0, %v4134
      %4136 = vmatmul.f32.gmra.mxu0 %v3981
      %v4137 = vpop.f32.mrf.mxu0
      %v4138 = vadd.f32 0.0, %v4137
      %4139 = vmatmul.f32.gmra.mxu0 %v3982
      %v4140 = vpop.f32.mrf.mxu0
      %v4141 = vadd.f32 0.0, %v4140
      %4142 = vmatmul.f32.gmra.mxu0 %v3983
      %v4143 = vpop.f32.mrf.mxu0
      %v4144 = vadd.f32 0.0, %v4143
      %4145 = vmatmul.f32.gmra.mxu0 %v3984
      %v4146 = vpop.f32.mrf.mxu0
      %v4147 = vadd.f32 0.0, %v4146
      %4148 = vmatmul.f32.gmra.mxu0 %v3985
      %v4149 = vpop.f32.mrf.mxu0
      %v4150 = vadd.f32 0.0, %v4149
      %4151 = vmatmul.f32.gmra.mxu0 %v3986
      %v4152 = vpop.f32.mrf.mxu0
      %v4153 = vadd.f32 0.0, %v4152
      %4154 = vmatmul.f32.gmra.mxu0 %v3987
      %v4155 = vpop.f32.mrf.mxu0
      %v4156 = vadd.f32 0.0, %v4155
      %4157 = vmatmul.f32.gmra.mxu0 %v3988
      %v4158 = vpop.f32.mrf.mxu0
      %v4159 = vadd.f32 0.0, %v4158
      %4160 = vmatmul.f32.gmra.mxu0 %v3989
      %v4161 = vpop.f32.mrf.mxu0
      %v4162 = vadd.f32 0.0, %v4161
      %4163 = vmatmul.f32.gmra.mxu0 %v3990
      %v4164 = vpop.f32.mrf.mxu0
      %v4165 = vadd.f32 0.0, %v4164
      %4166 = vmatmul.f32.gmra.mxu0 %v3991
      %v4167 = vpop.f32.mrf.mxu0
      %v4168 = vadd.f32 0.0, %v4167
      %4169 = vdwg.mxu0
      %v4170 = vadd.f32 %v3896, %v4027
      %v4171 = vadd.f32 %v3897, %v4030
      %v4172 = vadd.f32 %v3898, %v4033
      %v4173 = vadd.f32 %v3899, %v4036
      %v4174 = vadd.f32 %v3900, %v4039
      %v4175 = vadd.f32 %v3901, %v4042
      %v4176 = vadd.f32 %v3902, %v4045
      %v4177 = vadd.f32 %v3903, %v4048
      %v4178 = vadd.f32 %v3904, %v4051
      %v4179 = vadd.f32 %v3905, %v4054
      %v4180 = vadd.f32 %v3906, %v4057
      %v4181 = vadd.f32 %v3907, %v4060
      %v4182 = vadd.f32 %v3908, %v4063
      %v4183 = vadd.f32 %v3909, %v4066
      %v4184 = vadd.f32 %v3910, %v4069
      %v4185 = vadd.f32 %v3911, %v4072
      %v4186 = vadd.f32 %v3912, %v4075
      %v4187 = vadd.f32 %v3913, %v4078
      %v4188 = vadd.f32 %v3914, %v4081
      %v4189 = vadd.f32 %v3915, %v4084
      %v4190 = vadd.f32 %v3916, %v4087
      %v4191 = vadd.f32 %v3917, %v4090
      %v4192 = vadd.f32 %v3918, %v4093
      %v4193 = vadd.f32 %v3919, %v4096
      %v4194 = vadd.f32 %v3920, %v4099
      %v4195 = vadd.f32 %v3921, %v4102
      %v4196 = vadd.f32 %v3922, %v4105
      %v4197 = vadd.f32 %v3923, %v4108
      %v4198 = vadd.f32 %v3924, %v4111
      %v4199 = vadd.f32 %v3925, %v4114
      %v4200 = vadd.f32 %v3926, %v4117
      %v4201 = vadd.f32 %v3927, %v4120
      %v4202 = vadd.f32 %v3928, %v4123
      %v4203 = vadd.f32 %v3929, %v4126
      %v4204 = vadd.f32 %v3930, %v4129
      %v4205 = vadd.f32 %v3931, %v4132
      %v4206 = vadd.f32 %v3932, %v4135
      %v4207 = vadd.f32 %v3933, %v4138
      %v4208 = vadd.f32 %v3934, %v4141
      %v4209 = vadd.f32 %v3935, %v4144
      %v4210 = vadd.f32 %v3936, %v4147
      %v4211 = vadd.f32 %v3937, %v4150
      %v4212 = vadd.f32 %v3938, %v4153
      %v4213 = vadd.f32 %v3939, %v4156
      %v4214 = vadd.f32 %v3940, %v4159
      %v4215 = vadd.f32 %v3941, %v4162
      %v4216 = vadd.f32 %v3942, %v4165
      %v4217 = vadd.f32 %v3943, %v4168
      %v4218 = vld [vmem:[#allocation2 + $0x20] sm:$0xff]
      %v4219 = vld [vmem:[#allocation2 + $0x28] sm:$0xff]
      %v4220 = vld [vmem:[#allocation2 + $0x30] sm:$0xff]
      %v4221 = vld [vmem:[#allocation2 + $0x38] sm:$0xff]
      %v4222 = vld [vmem:[#allocation2 + $0x40] sm:$0xff]
      %v4223 = vld [vmem:[#allocation2 + $0x48] sm:$0xff]
      %v4224 = vld [vmem:[#allocation2 + $0x50] sm:$0xff]
      %v4225 = vld [vmem:[#allocation2 + $0x58] sm:$0xff]
      %v4226 = vld [vmem:[#allocation2 + $0x60] sm:$0xff]
      %v4227 = vld [vmem:[#allocation2 + $0x68] sm:$0xff]
      %v4228 = vld [vmem:[#allocation2 + $0x70] sm:$0xff]
      %v4229 = vld [vmem:[#allocation2 + $0x78] sm:$0xff]
      %v4230 = vld [vmem:[#allocation2 + $0x80] sm:$0xff]
      %v4231 = vld [vmem:[#allocation2 + $0x88] sm:$0xff]
      %v4232 = vld [vmem:[#allocation2 + $0x90] sm:$0xff]
      %v4233 = vld [vmem:[#allocation2 + $0x98] sm:$0xff]
      %v4234 = vld [vmem:[#allocation2 + $0xa0] sm:$0xff]
      %v4235 = vld [vmem:[#allocation2 + $0xa8] sm:$0xff]
      %v4236 = vld [vmem:[#allocation2 + $0xb0] sm:$0xff]
      %v4237 = vld [vmem:[#allocation2 + $0xb8] sm:$0xff]
      %v4238 = vld [vmem:[#allocation2 + $0xc0] sm:$0xff]
      %v4239 = vld [vmem:[#allocation2 + $0xc8] sm:$0xff]
      %v4240 = vld [vmem:[#allocation2 + $0xd0] sm:$0xff]
      %v4241 = vld [vmem:[#allocation2 + $0xd8] sm:$0xff]
      %v4242 = vld [vmem:[#allocation2 + $0xe0] sm:$0xff]
      %v4243 = vld [vmem:[#allocation2 + $0xe8] sm:$0xff]
      %v4244 = vld [vmem:[#allocation2 + $0xf0] sm:$0xff]
      %v4245 = vld [vmem:[#allocation2 + $0xf8] sm:$0xff]
      %v4246 = vld [vmem:[#allocation2 + $0x100] sm:$0xff]
      %v4247 = vld [vmem:[#allocation2 + $0x108] sm:$0xff]
      %v4248 = vld [vmem:[#allocation2 + $0x110] sm:$0xff]
      %v4249 = vld [vmem:[#allocation2 + $0x118] sm:$0xff]
      %v4250 = vld [vmem:[#allocation2 + $0x120] sm:$0xff]
      %v4251 = vld [vmem:[#allocation2 + $0x128] sm:$0xff]
      %v4252 = vld [vmem:[#allocation2 + $0x130] sm:$0xff]
      %v4253 = vld [vmem:[#allocation2 + $0x138] sm:$0xff]
      %v4254 = vld [vmem:[#allocation2 + $0x140] sm:$0xff]
      %v4255 = vld [vmem:[#allocation2 + $0x148] sm:$0xff]
      %v4256 = vld [vmem:[#allocation2 + $0x150] sm:$0xff]
      %v4257 = vld [vmem:[#allocation2 + $0x158] sm:$0xff]
      %v4258 = vld [vmem:[#allocation2 + $0x160] sm:$0xff]
      %v4259 = vld [vmem:[#allocation2 + $0x168] sm:$0xff]
      %v4260 = vld [vmem:[#allocation2 + $0x170] sm:$0xff]
      %v4261 = vld [vmem:[#allocation2 + $0x178] sm:$0xff]
      %v4262 = vld [vmem:[#allocation2 + $0x180] sm:$0xff]
      %v4263 = vld [vmem:[#allocation2 + $0x188] sm:$0xff]
      %v4264 = vld [vmem:[#allocation2 + $0x190] sm:$0xff]
      %v4265 = vld [vmem:[#allocation2 + $0x198] sm:$0xff]
      %s4266 = scalar_lea.vmem %s5, 512
      %v4267 = vld [vmem:[%s4266] sm:$0xff]
      %v4268 = vld [vmem:[%s4266 + $0x8] sm:$0xff]
      %v4269 = vld [vmem:[%s4266 + $0x10] sm:$0xff]
      %v4270 = vld [vmem:[%s4266 + $0x18] sm:$0xff]
      %v4271 = vld [vmem:[%s4266 + $0x20] sm:$0xff]
      %v4272 = vld [vmem:[%s4266 + $0x28] sm:$0xff]
      %v4273 = vld [vmem:[%s4266 + $0x30] sm:$0xff]
      %v4274 = vld [vmem:[%s4266 + $0x38] sm:$0xff]
      %v4275 = vld [vmem:[%s4266 + $0x40] sm:$0xff]
      %v4276 = vld [vmem:[%s4266 + $0x48] sm:$0xff]
      %v4277 = vld [vmem:[%s4266 + $0x50] sm:$0xff]
      %v4278 = vld [vmem:[%s4266 + $0x58] sm:$0xff]
      %v4279 = vld [vmem:[%s4266 + $0x60] sm:$0xff]
      %v4280 = vld [vmem:[%s4266 + $0x68] sm:$0xff]
      %v4281 = vld [vmem:[%s4266 + $0x70] sm:$0xff]
      %v4282 = vld [vmem:[%s4266 + $0x78] sm:$0xff]
      %4283 = vmatpush.msra.mxu0 %v4282
      %4284 = vmatpush.msra.mxu0 %v4281
      %4285 = vmatpush.msra.mxu0 %v4280
      %4286 = vmatpush.msra.mxu0 %v4279
      %4287 = vmatpush.msra.mxu0 %v4278
      %4288 = vmatpush.msra.mxu0 %v4277
      %4289 = vmatpush.msra.mxu0 %v4276
      %4290 = vmatpush.msra.mxu0 %v4275
      %4291 = vmatpush.msra.mxu0 %v4274
      %4292 = vmatpush.msra.mxu0 %v4273
      %4293 = vmatpush.msra.mxu0 %v4272
      %4294 = vmatpush.msra.mxu0 %v4271
      %4295 = vmatpush.msra.mxu0 %v4270
      %4296 = vmatpush.msra.mxu0 %v4269
      %4297 = vmatpush.msra.mxu0 %v4268
      %4298 = vmatpush.msra.mxu0 %v4267
      %4299 = vmatmul.f32.gmra.mxu0 %v4218
      %v4300 = vpop.f32.mrf.mxu0
      %v4301 = vadd.f32 0.0, %v4300
      %4302 = vmatmul.f32.gmra.mxu0 %v4219
      %v4303 = vpop.f32.mrf.mxu0
      %v4304 = vadd.f32 0.0, %v4303
      %4305 = vmatmul.f32.gmra.mxu0 %v4220
      %v4306 = vpop.f32.mrf.mxu0
      %v4307 = vadd.f32 0.0, %v4306
      %4308 = vmatmul.f32.gmra.mxu0 %v4221
      %v4309 = vpop.f32.mrf.mxu0
      %v4310 = vadd.f32 0.0, %v4309
      %4311 = vmatmul.f32.gmra.mxu0 %v4222
      %v4312 = vpop.f32.mrf.mxu0
      %v4313 = vadd.f32 0.0, %v4312
      %4314 = vmatmul.f32.gmra.mxu0 %v4223
      %v4315 = vpop.f32.mrf.mxu0
      %v4316 = vadd.f32 0.0, %v4315
      %4317 = vmatmul.f32.gmra.mxu0 %v4224
      %v4318 = vpop.f32.mrf.mxu0
      %v4319 = vadd.f32 0.0, %v4318
      %4320 = vmatmul.f32.gmra.mxu0 %v4225
      %v4321 = vpop.f32.mrf.mxu0
      %v4322 = vadd.f32 0.0, %v4321
      %4323 = vmatmul.f32.gmra.mxu0 %v4226
      %v4324 = vpop.f32.mrf.mxu0
      %v4325 = vadd.f32 0.0, %v4324
      %4326 = vmatmul.f32.gmra.mxu0 %v4227
      %v4327 = vpop.f32.mrf.mxu0
      %v4328 = vadd.f32 0.0, %v4327
      %4329 = vmatmul.f32.gmra.mxu0 %v4228
      %v4330 = vpop.f32.mrf.mxu0
      %v4331 = vadd.f32 0.0, %v4330
      %4332 = vmatmul.f32.gmra.mxu0 %v4229
      %v4333 = vpop.f32.mrf.mxu0
      %v4334 = vadd.f32 0.0, %v4333
      %4335 = vmatmul.f32.gmra.mxu0 %v4230
      %v4336 = vpop.f32.mrf.mxu0
      %v4337 = vadd.f32 0.0, %v4336
      %4338 = vmatmul.f32.gmra.mxu0 %v4231
      %v4339 = vpop.f32.mrf.mxu0
      %v4340 = vadd.f32 0.0, %v4339
      %4341 = vmatmul.f32.gmra.mxu0 %v4232
      %v4342 = vpop.f32.mrf.mxu0
      %v4343 = vadd.f32 0.0, %v4342
      %4344 = vmatmul.f32.gmra.mxu0 %v4233
      %v4345 = vpop.f32.mrf.mxu0
      %v4346 = vadd.f32 0.0, %v4345
      %4347 = vmatmul.f32.gmra.mxu0 %v4234
      %v4348 = vpop.f32.mrf.mxu0
      %v4349 = vadd.f32 0.0, %v4348
      %4350 = vmatmul.f32.gmra.mxu0 %v4235
      %v4351 = vpop.f32.mrf.mxu0
      %v4352 = vadd.f32 0.0, %v4351
      %4353 = vmatmul.f32.gmra.mxu0 %v4236
      %v4354 = vpop.f32.mrf.mxu0
      %v4355 = vadd.f32 0.0, %v4354
      %4356 = vmatmul.f32.gmra.mxu0 %v4237
      %v4357 = vpop.f32.mrf.mxu0
      %v4358 = vadd.f32 0.0, %v4357
      %4359 = vmatmul.f32.gmra.mxu0 %v4238
      %v4360 = vpop.f32.mrf.mxu0
      %v4361 = vadd.f32 0.0, %v4360
      %4362 = vmatmul.f32.gmra.mxu0 %v4239
      %v4363 = vpop.f32.mrf.mxu0
      %v4364 = vadd.f32 0.0, %v4363
      %4365 = vmatmul.f32.gmra.mxu0 %v4240
      %v4366 = vpop.f32.mrf.mxu0
      %v4367 = vadd.f32 0.0, %v4366
      %4368 = vmatmul.f32.gmra.mxu0 %v4241
      %v4369 = vpop.f32.mrf.mxu0
      %v4370 = vadd.f32 0.0, %v4369
      %4371 = vmatmul.f32.gmra.mxu0 %v4242
      %v4372 = vpop.f32.mrf.mxu0
      %v4373 = vadd.f32 0.0, %v4372
      %4374 = vmatmul.f32.gmra.mxu0 %v4243
      %v4375 = vpop.f32.mrf.mxu0
      %v4376 = vadd.f32 0.0, %v4375
      %4377 = vmatmul.f32.gmra.mxu0 %v4244
      %v4378 = vpop.f32.mrf.mxu0
      %v4379 = vadd.f32 0.0, %v4378
      %4380 = vmatmul.f32.gmra.mxu0 %v4245
      %v4381 = vpop.f32.mrf.mxu0
      %v4382 = vadd.f32 0.0, %v4381
      %4383 = vmatmul.f32.gmra.mxu0 %v4246
      %v4384 = vpop.f32.mrf.mxu0
      %v4385 = vadd.f32 0.0, %v4384
      %4386 = vmatmul.f32.gmra.mxu0 %v4247
      %v4387 = vpop.f32.mrf.mxu0
      %v4388 = vadd.f32 0.0, %v4387
      %4389 = vmatmul.f32.gmra.mxu0 %v4248
      %v4390 = vpop.f32.mrf.mxu0
      %v4391 = vadd.f32 0.0, %v4390
      %4392 = vmatmul.f32.gmra.mxu0 %v4249
      %v4393 = vpop.f32.mrf.mxu0
      %v4394 = vadd.f32 0.0, %v4393
      %4395 = vmatmul.f32.gmra.mxu0 %v4250
      %v4396 = vpop.f32.mrf.mxu0
      %v4397 = vadd.f32 0.0, %v4396
      %4398 = vmatmul.f32.gmra.mxu0 %v4251
      %v4399 = vpop.f32.mrf.mxu0
      %v4400 = vadd.f32 0.0, %v4399
      %4401 = vmatmul.f32.gmra.mxu0 %v4252
      %v4402 = vpop.f32.mrf.mxu0
      %v4403 = vadd.f32 0.0, %v4402
      %4404 = vmatmul.f32.gmra.mxu0 %v4253
      %v4405 = vpop.f32.mrf.mxu0
      %v4406 = vadd.f32 0.0, %v4405
      %4407 = vmatmul.f32.gmra.mxu0 %v4254
      %v4408 = vpop.f32.mrf.mxu0
      %v4409 = vadd.f32 0.0, %v4408
      %4410 = vmatmul.f32.gmra.mxu0 %v4255
      %v4411 = vpop.f32.mrf.mxu0
      %v4412 = vadd.f32 0.0, %v4411
      %4413 = vmatmul.f32.gmra.mxu0 %v4256
      %v4414 = vpop.f32.mrf.mxu0
      %v4415 = vadd.f32 0.0, %v4414
      %4416 = vmatmul.f32.gmra.mxu0 %v4257
      %v4417 = vpop.f32.mrf.mxu0
      %v4418 = vadd.f32 0.0, %v4417
      %4419 = vmatmul.f32.gmra.mxu0 %v4258
      %v4420 = vpop.f32.mrf.mxu0
      %v4421 = vadd.f32 0.0, %v4420
      %4422 = vmatmul.f32.gmra.mxu0 %v4259
      %v4423 = vpop.f32.mrf.mxu0
      %v4424 = vadd.f32 0.0, %v4423
      %4425 = vmatmul.f32.gmra.mxu0 %v4260
      %v4426 = vpop.f32.mrf.mxu0
      %v4427 = vadd.f32 0.0, %v4426
      %4428 = vmatmul.f32.gmra.mxu0 %v4261
      %v4429 = vpop.f32.mrf.mxu0
      %v4430 = vadd.f32 0.0, %v4429
      %4431 = vmatmul.f32.gmra.mxu0 %v4262
      %v4432 = vpop.f32.mrf.mxu0
      %v4433 = vadd.f32 0.0, %v4432
      %4434 = vmatmul.f32.gmra.mxu0 %v4263
      %v4435 = vpop.f32.mrf.mxu0
      %v4436 = vadd.f32 0.0, %v4435
      %4437 = vmatmul.f32.gmra.mxu0 %v4264
      %v4438 = vpop.f32.mrf.mxu0
      %v4439 = vadd.f32 0.0, %v4438
      %4440 = vmatmul.f32.gmra.mxu0 %v4265
      %v4441 = vpop.f32.mrf.mxu0
      %v4442 = vadd.f32 0.0, %v4441
      %4443 = vdwg.mxu0
      %v4444 = vadd.f32 %v4170, %v4301
      %v4445 = vadd.f32 %v4171, %v4304
      %v4446 = vadd.f32 %v4172, %v4307
      %v4447 = vadd.f32 %v4173, %v4310
      %v4448 = vadd.f32 %v4174, %v4313
      %v4449 = vadd.f32 %v4175, %v4316
      %v4450 = vadd.f32 %v4176, %v4319
      %v4451 = vadd.f32 %v4177, %v4322
      %v4452 = vadd.f32 %v4178, %v4325
      %v4453 = vadd.f32 %v4179, %v4328
      %v4454 = vadd.f32 %v4180, %v4331
      %v4455 = vadd.f32 %v4181, %v4334
      %v4456 = vadd.f32 %v4182, %v4337
      %v4457 = vadd.f32 %v4183, %v4340
      %v4458 = vadd.f32 %v4184, %v4343
      %v4459 = vadd.f32 %v4185, %v4346
      %v4460 = vadd.f32 %v4186, %v4349
      %v4461 = vadd.f32 %v4187, %v4352
      %v4462 = vadd.f32 %v4188, %v4355
      %v4463 = vadd.f32 %v4189, %v4358
      %v4464 = vadd.f32 %v4190, %v4361
      %v4465 = vadd.f32 %v4191, %v4364
      %v4466 = vadd.f32 %v4192, %v4367
      %v4467 = vadd.f32 %v4193, %v4370
      %v4468 = vadd.f32 %v4194, %v4373
      %v4469 = vadd.f32 %v4195, %v4376
      %v4470 = vadd.f32 %v4196, %v4379
      %v4471 = vadd.f32 %v4197, %v4382
      %v4472 = vadd.f32 %v4198, %v4385
      %v4473 = vadd.f32 %v4199, %v4388
      %v4474 = vadd.f32 %v4200, %v4391
      %v4475 = vadd.f32 %v4201, %v4394
      %v4476 = vadd.f32 %v4202, %v4397
      %v4477 = vadd.f32 %v4203, %v4400
      %v4478 = vadd.f32 %v4204, %v4403
      %v4479 = vadd.f32 %v4205, %v4406
      %v4480 = vadd.f32 %v4206, %v4409
      %v4481 = vadd.f32 %v4207, %v4412
      %v4482 = vadd.f32 %v4208, %v4415
      %v4483 = vadd.f32 %v4209, %v4418
      %v4484 = vadd.f32 %v4210, %v4421
      %v4485 = vadd.f32 %v4211, %v4424
      %v4486 = vadd.f32 %v4212, %v4427
      %v4487 = vadd.f32 %v4213, %v4430
      %v4488 = vadd.f32 %v4214, %v4433
      %v4489 = vadd.f32 %v4215, %v4436
      %v4490 = vadd.f32 %v4216, %v4439
      %v4491 = vadd.f32 %v4217, %v4442
      %v4492 = vld [vmem:[#allocation2 + $0x21] sm:$0xff]
      %v4493 = vld [vmem:[#allocation2 + $0x29] sm:$0xff]
      %v4494 = vld [vmem:[#allocation2 + $0x31] sm:$0xff]
      %v4495 = vld [vmem:[#allocation2 + $0x39] sm:$0xff]
      %v4496 = vld [vmem:[#allocation2 + $0x41] sm:$0xff]
      %v4497 = vld [vmem:[#allocation2 + $0x49] sm:$0xff]
      %v4498 = vld [vmem:[#allocation2 + $0x51] sm:$0xff]
      %v4499 = vld [vmem:[#allocation2 + $0x59] sm:$0xff]
      %v4500 = vld [vmem:[#allocation2 + $0x61] sm:$0xff]
      %v4501 = vld [vmem:[#allocation2 + $0x69] sm:$0xff]
      %v4502 = vld [vmem:[#allocation2 + $0x71] sm:$0xff]
      %v4503 = vld [vmem:[#allocation2 + $0x79] sm:$0xff]
      %v4504 = vld [vmem:[#allocation2 + $0x81] sm:$0xff]
      %v4505 = vld [vmem:[#allocation2 + $0x89] sm:$0xff]
      %v4506 = vld [vmem:[#allocation2 + $0x91] sm:$0xff]
      %v4507 = vld [vmem:[#allocation2 + $0x99] sm:$0xff]
      %v4508 = vld [vmem:[#allocation2 + $0xa1] sm:$0xff]
      %v4509 = vld [vmem:[#allocation2 + $0xa9] sm:$0xff]
      %v4510 = vld [vmem:[#allocation2 + $0xb1] sm:$0xff]
      %v4511 = vld [vmem:[#allocation2 + $0xb9] sm:$0xff]
      %v4512 = vld [vmem:[#allocation2 + $0xc1] sm:$0xff]
      %v4513 = vld [vmem:[#allocation2 + $0xc9] sm:$0xff]
      %v4514 = vld [vmem:[#allocation2 + $0xd1] sm:$0xff]
      %v4515 = vld [vmem:[#allocation2 + $0xd9] sm:$0xff]
      %v4516 = vld [vmem:[#allocation2 + $0xe1] sm:$0xff]
      %v4517 = vld [vmem:[#allocation2 + $0xe9] sm:$0xff]
      %v4518 = vld [vmem:[#allocation2 + $0xf1] sm:$0xff]
      %v4519 = vld [vmem:[#allocation2 + $0xf9] sm:$0xff]
      %v4520 = vld [vmem:[#allocation2 + $0x101] sm:$0xff]
      %v4521 = vld [vmem:[#allocation2 + $0x109] sm:$0xff]
      %v4522 = vld [vmem:[#allocation2 + $0x111] sm:$0xff]
      %v4523 = vld [vmem:[#allocation2 + $0x119] sm:$0xff]
      %v4524 = vld [vmem:[#allocation2 + $0x121] sm:$0xff]
      %v4525 = vld [vmem:[#allocation2 + $0x129] sm:$0xff]
      %v4526 = vld [vmem:[#allocation2 + $0x131] sm:$0xff]
      %v4527 = vld [vmem:[#allocation2 + $0x139] sm:$0xff]
      %v4528 = vld [vmem:[#allocation2 + $0x141] sm:$0xff]
      %v4529 = vld [vmem:[#allocation2 + $0x149] sm:$0xff]
      %v4530 = vld [vmem:[#allocation2 + $0x151] sm:$0xff]
      %v4531 = vld [vmem:[#allocation2 + $0x159] sm:$0xff]
      %v4532 = vld [vmem:[#allocation2 + $0x161] sm:$0xff]
      %v4533 = vld [vmem:[#allocation2 + $0x169] sm:$0xff]
      %v4534 = vld [vmem:[#allocation2 + $0x171] sm:$0xff]
      %v4535 = vld [vmem:[#allocation2 + $0x179] sm:$0xff]
      %v4536 = vld [vmem:[#allocation2 + $0x181] sm:$0xff]
      %v4537 = vld [vmem:[#allocation2 + $0x189] sm:$0xff]
      %v4538 = vld [vmem:[#allocation2 + $0x191] sm:$0xff]
      %v4539 = vld [vmem:[#allocation2 + $0x199] sm:$0xff]
      %s4540 = scalar_lea.vmem %s5, 640
      %v4541 = vld [vmem:[%s4540] sm:$0xff]
      %v4542 = vld [vmem:[%s4540 + $0x8] sm:$0xff]
      %v4543 = vld [vmem:[%s4540 + $0x10] sm:$0xff]
      %v4544 = vld [vmem:[%s4540 + $0x18] sm:$0xff]
      %v4545 = vld [vmem:[%s4540 + $0x20] sm:$0xff]
      %v4546 = vld [vmem:[%s4540 + $0x28] sm:$0xff]
      %v4547 = vld [vmem:[%s4540 + $0x30] sm:$0xff]
      %v4548 = vld [vmem:[%s4540 + $0x38] sm:$0xff]
      %v4549 = vld [vmem:[%s4540 + $0x40] sm:$0xff]
      %v4550 = vld [vmem:[%s4540 + $0x48] sm:$0xff]
      %v4551 = vld [vmem:[%s4540 + $0x50] sm:$0xff]
      %v4552 = vld [vmem:[%s4540 + $0x58] sm:$0xff]
      %v4553 = vld [vmem:[%s4540 + $0x60] sm:$0xff]
      %v4554 = vld [vmem:[%s4540 + $0x68] sm:$0xff]
      %v4555 = vld [vmem:[%s4540 + $0x70] sm:$0xff]
      %v4556 = vld [vmem:[%s4540 + $0x78] sm:$0xff]
      %4557 = vmatpush.msra.mxu0 %v4556
      %4558 = vmatpush.msra.mxu0 %v4555
      %4559 = vmatpush.msra.mxu0 %v4554
      %4560 = vmatpush.msra.mxu0 %v4553
      %4561 = vmatpush.msra.mxu0 %v4552
      %4562 = vmatpush.msra.mxu0 %v4551
      %4563 = vmatpush.msra.mxu0 %v4550
      %4564 = vmatpush.msra.mxu0 %v4549
      %4565 = vmatpush.msra.mxu0 %v4548
      %4566 = vmatpush.msra.mxu0 %v4547
      %4567 = vmatpush.msra.mxu0 %v4546
      %4568 = vmatpush.msra.mxu0 %v4545
      %4569 = vmatpush.msra.mxu0 %v4544
      %4570 = vmatpush.msra.mxu0 %v4543
      %4571 = vmatpush.msra.mxu0 %v4542
      %4572 = vmatpush.msra.mxu0 %v4541
      %4573 = vmatmul.f32.gmra.mxu0 %v4492
      %v4574 = vpop.f32.mrf.mxu0
      %v4575 = vadd.f32 0.0, %v4574
      %4576 = vmatmul.f32.gmra.mxu0 %v4493
      %v4577 = vpop.f32.mrf.mxu0
      %v4578 = vadd.f32 0.0, %v4577
      %4579 = vmatmul.f32.gmra.mxu0 %v4494
      %v4580 = vpop.f32.mrf.mxu0
      %v4581 = vadd.f32 0.0, %v4580
      %4582 = vmatmul.f32.gmra.mxu0 %v4495
      %v4583 = vpop.f32.mrf.mxu0
      %v4584 = vadd.f32 0.0, %v4583
      %4585 = vmatmul.f32.gmra.mxu0 %v4496
      %v4586 = vpop.f32.mrf.mxu0
      %v4587 = vadd.f32 0.0, %v4586
      %4588 = vmatmul.f32.gmra.mxu0 %v4497
      %v4589 = vpop.f32.mrf.mxu0
      %v4590 = vadd.f32 0.0, %v4589
      %4591 = vmatmul.f32.gmra.mxu0 %v4498
      %v4592 = vpop.f32.mrf.mxu0
      %v4593 = vadd.f32 0.0, %v4592
      %4594 = vmatmul.f32.gmra.mxu0 %v4499
      %v4595 = vpop.f32.mrf.mxu0
      %v4596 = vadd.f32 0.0, %v4595
      %4597 = vmatmul.f32.gmra.mxu0 %v4500
      %v4598 = vpop.f32.mrf.mxu0
      %v4599 = vadd.f32 0.0, %v4598
      %4600 = vmatmul.f32.gmra.mxu0 %v4501
      %v4601 = vpop.f32.mrf.mxu0
      %v4602 = vadd.f32 0.0, %v4601
      %4603 = vmatmul.f32.gmra.mxu0 %v4502
      %v4604 = vpop.f32.mrf.mxu0
      %v4605 = vadd.f32 0.0, %v4604
      %4606 = vmatmul.f32.gmra.mxu0 %v4503
      %v4607 = vpop.f32.mrf.mxu0
      %v4608 = vadd.f32 0.0, %v4607
      %4609 = vmatmul.f32.gmra.mxu0 %v4504
      %v4610 = vpop.f32.mrf.mxu0
      %v4611 = vadd.f32 0.0, %v4610
      %4612 = vmatmul.f32.gmra.mxu0 %v4505
      %v4613 = vpop.f32.mrf.mxu0
      %v4614 = vadd.f32 0.0, %v4613
      %4615 = vmatmul.f32.gmra.mxu0 %v4506
      %v4616 = vpop.f32.mrf.mxu0
      %v4617 = vadd.f32 0.0, %v4616
      %4618 = vmatmul.f32.gmra.mxu0 %v4507
      %v4619 = vpop.f32.mrf.mxu0
      %v4620 = vadd.f32 0.0, %v4619
      %4621 = vmatmul.f32.gmra.mxu0 %v4508
      %v4622 = vpop.f32.mrf.mxu0
      %v4623 = vadd.f32 0.0, %v4622
      %4624 = vmatmul.f32.gmra.mxu0 %v4509
      %v4625 = vpop.f32.mrf.mxu0
      %v4626 = vadd.f32 0.0, %v4625
      %4627 = vmatmul.f32.gmra.mxu0 %v4510
      %v4628 = vpop.f32.mrf.mxu0
      %v4629 = vadd.f32 0.0, %v4628
      %4630 = vmatmul.f32.gmra.mxu0 %v4511
      %v4631 = vpop.f32.mrf.mxu0
      %v4632 = vadd.f32 0.0, %v4631
      %4633 = vmatmul.f32.gmra.mxu0 %v4512
      %v4634 = vpop.f32.mrf.mxu0
      %v4635 = vadd.f32 0.0, %v4634
      %4636 = vmatmul.f32.gmra.mxu0 %v4513
      %v4637 = vpop.f32.mrf.mxu0
      %v4638 = vadd.f32 0.0, %v4637
      %4639 = vmatmul.f32.gmra.mxu0 %v4514
      %v4640 = vpop.f32.mrf.mxu0
      %v4641 = vadd.f32 0.0, %v4640
      %4642 = vmatmul.f32.gmra.mxu0 %v4515
      %v4643 = vpop.f32.mrf.mxu0
      %v4644 = vadd.f32 0.0, %v4643
      %4645 = vmatmul.f32.gmra.mxu0 %v4516
      %v4646 = vpop.f32.mrf.mxu0
      %v4647 = vadd.f32 0.0, %v4646
      %4648 = vmatmul.f32.gmra.mxu0 %v4517
      %v4649 = vpop.f32.mrf.mxu0
      %v4650 = vadd.f32 0.0, %v4649
      %4651 = vmatmul.f32.gmra.mxu0 %v4518
      %v4652 = vpop.f32.mrf.mxu0
      %v4653 = vadd.f32 0.0, %v4652
      %4654 = vmatmul.f32.gmra.mxu0 %v4519
      %v4655 = vpop.f32.mrf.mxu0
      %v4656 = vadd.f32 0.0, %v4655
      %4657 = vmatmul.f32.gmra.mxu0 %v4520
      %v4658 = vpop.f32.mrf.mxu0
      %v4659 = vadd.f32 0.0, %v4658
      %4660 = vmatmul.f32.gmra.mxu0 %v4521
      %v4661 = vpop.f32.mrf.mxu0
      %v4662 = vadd.f32 0.0, %v4661
      %4663 = vmatmul.f32.gmra.mxu0 %v4522
      %v4664 = vpop.f32.mrf.mxu0
      %v4665 = vadd.f32 0.0, %v4664
      %4666 = vmatmul.f32.gmra.mxu0 %v4523
      %v4667 = vpop.f32.mrf.mxu0
      %v4668 = vadd.f32 0.0, %v4667
      %4669 = vmatmul.f32.gmra.mxu0 %v4524
      %v4670 = vpop.f32.mrf.mxu0
      %v4671 = vadd.f32 0.0, %v4670
      %4672 = vmatmul.f32.gmra.mxu0 %v4525
      %v4673 = vpop.f32.mrf.mxu0
      %v4674 = vadd.f32 0.0, %v4673
      %4675 = vmatmul.f32.gmra.mxu0 %v4526
      %v4676 = vpop.f32.mrf.mxu0
      %v4677 = vadd.f32 0.0, %v4676
      %4678 = vmatmul.f32.gmra.mxu0 %v4527
      %v4679 = vpop.f32.mrf.mxu0
      %v4680 = vadd.f32 0.0, %v4679
      %4681 = vmatmul.f32.gmra.mxu0 %v4528
      %v4682 = vpop.f32.mrf.mxu0
      %v4683 = vadd.f32 0.0, %v4682
      %4684 = vmatmul.f32.gmra.mxu0 %v4529
      %v4685 = vpop.f32.mrf.mxu0
      %v4686 = vadd.f32 0.0, %v4685
      %4687 = vmatmul.f32.gmra.mxu0 %v4530
      %v4688 = vpop.f32.mrf.mxu0
      %v4689 = vadd.f32 0.0, %v4688
      %4690 = vmatmul.f32.gmra.mxu0 %v4531
      %v4691 = vpop.f32.mrf.mxu0
      %v4692 = vadd.f32 0.0, %v4691
      %4693 = vmatmul.f32.gmra.mxu0 %v4532
      %v4694 = vpop.f32.mrf.mxu0
      %v4695 = vadd.f32 0.0, %v4694
      %4696 = vmatmul.f32.gmra.mxu0 %v4533
      %v4697 = vpop.f32.mrf.mxu0
      %v4698 = vadd.f32 0.0, %v4697
      %4699 = vmatmul.f32.gmra.mxu0 %v4534
      %v4700 = vpop.f32.mrf.mxu0
      %v4701 = vadd.f32 0.0, %v4700
      %4702 = vmatmul.f32.gmra.mxu0 %v4535
      %v4703 = vpop.f32.mrf.mxu0
      %v4704 = vadd.f32 0.0, %v4703
      %4705 = vmatmul.f32.gmra.mxu0 %v4536
      %v4706 = vpop.f32.mrf.mxu0
      %v4707 = vadd.f32 0.0, %v4706
      %4708 = vmatmul.f32.gmra.mxu0 %v4537
      %v4709 = vpop.f32.mrf.mxu0
      %v4710 = vadd.f32 0.0, %v4709
      %4711 = vmatmul.f32.gmra.mxu0 %v4538
      %v4712 = vpop.f32.mrf.mxu0
      %v4713 = vadd.f32 0.0, %v4712
      %4714 = vmatmul.f32.gmra.mxu0 %v4539
      %v4715 = vpop.f32.mrf.mxu0
      %v4716 = vadd.f32 0.0, %v4715
      %4717 = vdwg.mxu0
      %v4718 = vadd.f32 %v4444, %v4575
      %v4719 = vadd.f32 %v4445, %v4578
      %v4720 = vadd.f32 %v4446, %v4581
      %v4721 = vadd.f32 %v4447, %v4584
      %v4722 = vadd.f32 %v4448, %v4587
      %v4723 = vadd.f32 %v4449, %v4590
      %v4724 = vadd.f32 %v4450, %v4593
      %v4725 = vadd.f32 %v4451, %v4596
      %v4726 = vadd.f32 %v4452, %v4599
      %v4727 = vadd.f32 %v4453, %v4602
      %v4728 = vadd.f32 %v4454, %v4605
      %v4729 = vadd.f32 %v4455, %v4608
      %v4730 = vadd.f32 %v4456, %v4611
      %v4731 = vadd.f32 %v4457, %v4614
      %v4732 = vadd.f32 %v4458, %v4617
      %v4733 = vadd.f32 %v4459, %v4620
      %v4734 = vadd.f32 %v4460, %v4623
      %v4735 = vadd.f32 %v4461, %v4626
      %v4736 = vadd.f32 %v4462, %v4629
      %v4737 = vadd.f32 %v4463, %v4632
      %v4738 = vadd.f32 %v4464, %v4635
      %v4739 = vadd.f32 %v4465, %v4638
      %v4740 = vadd.f32 %v4466, %v4641
      %v4741 = vadd.f32 %v4467, %v4644
      %v4742 = vadd.f32 %v4468, %v4647
      %v4743 = vadd.f32 %v4469, %v4650
      %v4744 = vadd.f32 %v4470, %v4653
      %v4745 = vadd.f32 %v4471, %v4656
      %v4746 = vadd.f32 %v4472, %v4659
      %v4747 = vadd.f32 %v4473, %v4662
      %v4748 = vadd.f32 %v4474, %v4665
      %v4749 = vadd.f32 %v4475, %v4668
      %v4750 = vadd.f32 %v4476, %v4671
      %v4751 = vadd.f32 %v4477, %v4674
      %v4752 = vadd.f32 %v4478, %v4677
      %v4753 = vadd.f32 %v4479, %v4680
      %v4754 = vadd.f32 %v4480, %v4683
      %v4755 = vadd.f32 %v4481, %v4686
      %v4756 = vadd.f32 %v4482, %v4689
      %v4757 = vadd.f32 %v4483, %v4692
      %v4758 = vadd.f32 %v4484, %v4695
      %v4759 = vadd.f32 %v4485, %v4698
      %v4760 = vadd.f32 %v4486, %v4701
      %v4761 = vadd.f32 %v4487, %v4704
      %v4762 = vadd.f32 %v4488, %v4707
      %v4763 = vadd.f32 %v4489, %v4710
      %v4764 = vadd.f32 %v4490, %v4713
      %v4765 = vadd.f32 %v4491, %v4716
      %v4766 = vld [vmem:[#allocation2 + $0x37] sm:$0xff]
      %v4767 = vld [vmem:[#allocation2 + $0x3f] sm:$0xff]
      %v4768 = vld [vmem:[#allocation2 + $0x47] sm:$0xff]
      %v4769 = vld [vmem:[#allocation2 + $0x4f] sm:$0xff]
      %v4770 = vld [vmem:[#allocation2 + $0x57] sm:$0xff]
      %v4771 = vld [vmem:[#allocation2 + $0x5f] sm:$0xff]
      %v4772 = vld [vmem:[#allocation2 + $0x67] sm:$0xff]
      %v4773 = vld [vmem:[#allocation2 + $0x6f] sm:$0xff]
      %v4774 = vld [vmem:[#allocation2 + $0x77] sm:$0xff]
      %v4775 = vld [vmem:[#allocation2 + $0x7f] sm:$0xff]
      %v4776 = vld [vmem:[#allocation2 + $0x87] sm:$0xff]
      %v4777 = vld [vmem:[#allocation2 + $0x8f] sm:$0xff]
      %v4778 = vld [vmem:[#allocation2 + $0x97] sm:$0xff]
      %v4779 = vld [vmem:[#allocation2 + $0x9f] sm:$0xff]
      %v4780 = vld [vmem:[#allocation2 + $0xa7] sm:$0xff]
      %v4781 = vld [vmem:[#allocation2 + $0xaf] sm:$0xff]
      %v4782 = vld [vmem:[#allocation2 + $0xb7] sm:$0xff]
      %v4783 = vld [vmem:[#allocation2 + $0xbf] sm:$0xff]
      %v4784 = vld [vmem:[#allocation2 + $0xc7] sm:$0xff]
      %v4785 = vld [vmem:[#allocation2 + $0xcf] sm:$0xff]
      %v4786 = vld [vmem:[#allocation2 + $0xd7] sm:$0xff]
      %v4787 = vld [vmem:[#allocation2 + $0xdf] sm:$0xff]
      %v4788 = vld [vmem:[#allocation2 + $0xe7] sm:$0xff]
      %v4789 = vld [vmem:[#allocation2 + $0xef] sm:$0xff]
      %v4790 = vld [vmem:[#allocation2 + $0xf7] sm:$0xff]
      %v4791 = vld [vmem:[#allocation2 + $0xff] sm:$0xff]
      %v4792 = vld [vmem:[#allocation2 + $0x107] sm:$0xff]
      %v4793 = vld [vmem:[#allocation2 + $0x10f] sm:$0xff]
      %v4794 = vld [vmem:[#allocation2 + $0x117] sm:$0xff]
      %v4795 = vld [vmem:[#allocation2 + $0x11f] sm:$0xff]
      %v4796 = vld [vmem:[#allocation2 + $0x127] sm:$0xff]
      %v4797 = vld [vmem:[#allocation2 + $0x12f] sm:$0xff]
      %v4798 = vld [vmem:[#allocation2 + $0x137] sm:$0xff]
      %v4799 = vld [vmem:[#allocation2 + $0x13f] sm:$0xff]
      %v4800 = vld [vmem:[#allocation2 + $0x147] sm:$0xff]
      %v4801 = vld [vmem:[#allocation2 + $0x14f] sm:$0xff]
      %v4802 = vld [vmem:[#allocation2 + $0x157] sm:$0xff]
      %v4803 = vld [vmem:[#allocation2 + $0x15f] sm:$0xff]
      %v4804 = vld [vmem:[#allocation2 + $0x167] sm:$0xff]
      %v4805 = vld [vmem:[#allocation2 + $0x16f] sm:$0xff]
      %v4806 = vld [vmem:[#allocation2 + $0x177] sm:$0xff]
      %v4807 = vld [vmem:[#allocation2 + $0x17f] sm:$0xff]
      %v4808 = vld [vmem:[#allocation2 + $0x187] sm:$0xff]
      %v4809 = vld [vmem:[#allocation2 + $0x18f] sm:$0xff]
      %v4810 = vld [vmem:[#allocation2 + $0x197] sm:$0xff]
      %v4811 = vld [vmem:[#allocation2 + $0x19f] sm:$0xff]
      %v4812 = vld [vmem:[#allocation2 + $0x1a7] sm:$0xff]
      %v4813 = vld [vmem:[#allocation2 + $0x1af] sm:$0xff]
      %s4814 = scalar_lea.vmem %s5, 768
      %v4815 = vld [vmem:[%s4814] sm:$0xff]
      %v4816 = vld [vmem:[%s4814 + $0x8] sm:$0xff]
      %v4817 = vld [vmem:[%s4814 + $0x10] sm:$0xff]
      %v4818 = vld [vmem:[%s4814 + $0x18] sm:$0xff]
      %v4819 = vld [vmem:[%s4814 + $0x20] sm:$0xff]
      %v4820 = vld [vmem:[%s4814 + $0x28] sm:$0xff]
      %v4821 = vld [vmem:[%s4814 + $0x30] sm:$0xff]
      %v4822 = vld [vmem:[%s4814 + $0x38] sm:$0xff]
      %v4823 = vld [vmem:[%s4814 + $0x40] sm:$0xff]
      %v4824 = vld [vmem:[%s4814 + $0x48] sm:$0xff]
      %v4825 = vld [vmem:[%s4814 + $0x50] sm:$0xff]
      %v4826 = vld [vmem:[%s4814 + $0x58] sm:$0xff]
      %v4827 = vld [vmem:[%s4814 + $0x60] sm:$0xff]
      %v4828 = vld [vmem:[%s4814 + $0x68] sm:$0xff]
      %v4829 = vld [vmem:[%s4814 + $0x70] sm:$0xff]
      %v4830 = vld [vmem:[%s4814 + $0x78] sm:$0xff]
      %4831 = vmatpush.msra.mxu0 %v4830
      %4832 = vmatpush.msra.mxu0 %v4829
      %4833 = vmatpush.msra.mxu0 %v4828
      %4834 = vmatpush.msra.mxu0 %v4827
      %4835 = vmatpush.msra.mxu0 %v4826
      %4836 = vmatpush.msra.mxu0 %v4825
      %4837 = vmatpush.msra.mxu0 %v4824
      %4838 = vmatpush.msra.mxu0 %v4823
      %4839 = vmatpush.msra.mxu0 %v4822
      %4840 = vmatpush.msra.mxu0 %v4821
      %4841 = vmatpush.msra.mxu0 %v4820
      %4842 = vmatpush.msra.mxu0 %v4819
      %4843 = vmatpush.msra.mxu0 %v4818
      %4844 = vmatpush.msra.mxu0 %v4817
      %4845 = vmatpush.msra.mxu0 %v4816
      %4846 = vmatpush.msra.mxu0 %v4815
      %4847 = vmatmul.f32.gmra.mxu0 %v4766
      %v4848 = vpop.f32.mrf.mxu0
      %v4849 = vadd.f32 0.0, %v4848
      %4850 = vmatmul.f32.gmra.mxu0 %v4767
      %v4851 = vpop.f32.mrf.mxu0
      %v4852 = vadd.f32 0.0, %v4851
      %4853 = vmatmul.f32.gmra.mxu0 %v4768
      %v4854 = vpop.f32.mrf.mxu0
      %v4855 = vadd.f32 0.0, %v4854
      %4856 = vmatmul.f32.gmra.mxu0 %v4769
      %v4857 = vpop.f32.mrf.mxu0
      %v4858 = vadd.f32 0.0, %v4857
      %4859 = vmatmul.f32.gmra.mxu0 %v4770
      %v4860 = vpop.f32.mrf.mxu0
      %v4861 = vadd.f32 0.0, %v4860
      %4862 = vmatmul.f32.gmra.mxu0 %v4771
      %v4863 = vpop.f32.mrf.mxu0
      %v4864 = vadd.f32 0.0, %v4863
      %4865 = vmatmul.f32.gmra.mxu0 %v4772
      %v4866 = vpop.f32.mrf.mxu0
      %v4867 = vadd.f32 0.0, %v4866
      %4868 = vmatmul.f32.gmra.mxu0 %v4773
      %v4869 = vpop.f32.mrf.mxu0
      %v4870 = vadd.f32 0.0, %v4869
      %4871 = vmatmul.f32.gmra.mxu0 %v4774
      %v4872 = vpop.f32.mrf.mxu0
      %v4873 = vadd.f32 0.0, %v4872
      %4874 = vmatmul.f32.gmra.mxu0 %v4775
      %v4875 = vpop.f32.mrf.mxu0
      %v4876 = vadd.f32 0.0, %v4875
      %4877 = vmatmul.f32.gmra.mxu0 %v4776
      %v4878 = vpop.f32.mrf.mxu0
      %v4879 = vadd.f32 0.0, %v4878
      %4880 = vmatmul.f32.gmra.mxu0 %v4777
      %v4881 = vpop.f32.mrf.mxu0
      %v4882 = vadd.f32 0.0, %v4881
      %4883 = vmatmul.f32.gmra.mxu0 %v4778
      %v4884 = vpop.f32.mrf.mxu0
      %v4885 = vadd.f32 0.0, %v4884
      %4886 = vmatmul.f32.gmra.mxu0 %v4779
      %v4887 = vpop.f32.mrf.mxu0
      %v4888 = vadd.f32 0.0, %v4887
      %4889 = vmatmul.f32.gmra.mxu0 %v4780
      %v4890 = vpop.f32.mrf.mxu0
      %v4891 = vadd.f32 0.0, %v4890
      %4892 = vmatmul.f32.gmra.mxu0 %v4781
      %v4893 = vpop.f32.mrf.mxu0
      %v4894 = vadd.f32 0.0, %v4893
      %4895 = vmatmul.f32.gmra.mxu0 %v4782
      %v4896 = vpop.f32.mrf.mxu0
      %v4897 = vadd.f32 0.0, %v4896
      %4898 = vmatmul.f32.gmra.mxu0 %v4783
      %v4899 = vpop.f32.mrf.mxu0
      %v4900 = vadd.f32 0.0, %v4899
      %4901 = vmatmul.f32.gmra.mxu0 %v4784
      %v4902 = vpop.f32.mrf.mxu0
      %v4903 = vadd.f32 0.0, %v4902
      %4904 = vmatmul.f32.gmra.mxu0 %v4785
      %v4905 = vpop.f32.mrf.mxu0
      %v4906 = vadd.f32 0.0, %v4905
      %4907 = vmatmul.f32.gmra.mxu0 %v4786
      %v4908 = vpop.f32.mrf.mxu0
      %v4909 = vadd.f32 0.0, %v4908
      %4910 = vmatmul.f32.gmra.mxu0 %v4787
      %v4911 = vpop.f32.mrf.mxu0
      %v4912 = vadd.f32 0.0, %v4911
      %4913 = vmatmul.f32.gmra.mxu0 %v4788
      %v4914 = vpop.f32.mrf.mxu0
      %v4915 = vadd.f32 0.0, %v4914
      %4916 = vmatmul.f32.gmra.mxu0 %v4789
      %v4917 = vpop.f32.mrf.mxu0
      %v4918 = vadd.f32 0.0, %v4917
      %4919 = vmatmul.f32.gmra.mxu0 %v4790
      %v4920 = vpop.f32.mrf.mxu0
      %v4921 = vadd.f32 0.0, %v4920
      %4922 = vmatmul.f32.gmra.mxu0 %v4791
      %v4923 = vpop.f32.mrf.mxu0
      %v4924 = vadd.f32 0.0, %v4923
      %4925 = vmatmul.f32.gmra.mxu0 %v4792
      %v4926 = vpop.f32.mrf.mxu0
      %v4927 = vadd.f32 0.0, %v4926
      %4928 = vmatmul.f32.gmra.mxu0 %v4793
      %v4929 = vpop.f32.mrf.mxu0
      %v4930 = vadd.f32 0.0, %v4929
      %4931 = vmatmul.f32.gmra.mxu0 %v4794
      %v4932 = vpop.f32.mrf.mxu0
      %v4933 = vadd.f32 0.0, %v4932
      %4934 = vmatmul.f32.gmra.mxu0 %v4795
      %v4935 = vpop.f32.mrf.mxu0
      %v4936 = vadd.f32 0.0, %v4935
      %4937 = vmatmul.f32.gmra.mxu0 %v4796
      %v4938 = vpop.f32.mrf.mxu0
      %v4939 = vadd.f32 0.0, %v4938
      %4940 = vmatmul.f32.gmra.mxu0 %v4797
      %v4941 = vpop.f32.mrf.mxu0
      %v4942 = vadd.f32 0.0, %v4941
      %4943 = vmatmul.f32.gmra.mxu0 %v4798
      %v4944 = vpop.f32.mrf.mxu0
      %v4945 = vadd.f32 0.0, %v4944
      %4946 = vmatmul.f32.gmra.mxu0 %v4799
      %v4947 = vpop.f32.mrf.mxu0
      %v4948 = vadd.f32 0.0, %v4947
      %4949 = vmatmul.f32.gmra.mxu0 %v4800
      %v4950 = vpop.f32.mrf.mxu0
      %v4951 = vadd.f32 0.0, %v4950
      %4952 = vmatmul.f32.gmra.mxu0 %v4801
      %v4953 = vpop.f32.mrf.mxu0
      %v4954 = vadd.f32 0.0, %v4953
      %4955 = vmatmul.f32.gmra.mxu0 %v4802
      %v4956 = vpop.f32.mrf.mxu0
      %v4957 = vadd.f32 0.0, %v4956
      %4958 = vmatmul.f32.gmra.mxu0 %v4803
      %v4959 = vpop.f32.mrf.mxu0
      %v4960 = vadd.f32 0.0, %v4959
      %4961 = vmatmul.f32.gmra.mxu0 %v4804
      %v4962 = vpop.f32.mrf.mxu0
      %v4963 = vadd.f32 0.0, %v4962
      %4964 = vmatmul.f32.gmra.mxu0 %v4805
      %v4965 = vpop.f32.mrf.mxu0
      %v4966 = vadd.f32 0.0, %v4965
      %4967 = vmatmul.f32.gmra.mxu0 %v4806
      %v4968 = vpop.f32.mrf.mxu0
      %v4969 = vadd.f32 0.0, %v4968
      %4970 = vmatmul.f32.gmra.mxu0 %v4807
      %v4971 = vpop.f32.mrf.mxu0
      %v4972 = vadd.f32 0.0, %v4971
      %4973 = vmatmul.f32.gmra.mxu0 %v4808
      %v4974 = vpop.f32.mrf.mxu0
      %v4975 = vadd.f32 0.0, %v4974
      %4976 = vmatmul.f32.gmra.mxu0 %v4809
      %v4977 = vpop.f32.mrf.mxu0
      %v4978 = vadd.f32 0.0, %v4977
      %4979 = vmatmul.f32.gmra.mxu0 %v4810
      %v4980 = vpop.f32.mrf.mxu0
      %v4981 = vadd.f32 0.0, %v4980
      %4982 = vmatmul.f32.gmra.mxu0 %v4811
      %v4983 = vpop.f32.mrf.mxu0
      %v4984 = vadd.f32 0.0, %v4983
      %4985 = vmatmul.f32.gmra.mxu0 %v4812
      %v4986 = vpop.f32.mrf.mxu0
      %v4987 = vadd.f32 0.0, %v4986
      %4988 = vmatmul.f32.gmra.mxu0 %v4813
      %v4989 = vpop.f32.mrf.mxu0
      %v4990 = vadd.f32 0.0, %v4989
      %4991 = vdwg.mxu0
      %v4992 = vadd.f32 %v4718, %v4849
      %v4993 = vadd.f32 %v4719, %v4852
      %v4994 = vadd.f32 %v4720, %v4855
      %v4995 = vadd.f32 %v4721, %v4858
      %v4996 = vadd.f32 %v4722, %v4861
      %v4997 = vadd.f32 %v4723, %v4864
      %v4998 = vadd.f32 %v4724, %v4867
      %v4999 = vadd.f32 %v4725, %v4870
      %v5000 = vadd.f32 %v4726, %v4873
      %v5001 = vadd.f32 %v4727, %v4876
      %v5002 = vadd.f32 %v4728, %v4879
      %v5003 = vadd.f32 %v4729, %v4882
      %v5004 = vadd.f32 %v4730, %v4885
      %v5005 = vadd.f32 %v4731, %v4888
      %v5006 = vadd.f32 %v4732, %v4891
      %v5007 = vadd.f32 %v4733, %v4894
      %v5008 = vadd.f32 %v4734, %v4897
      %v5009 = vadd.f32 %v4735, %v4900
      %v5010 = vadd.f32 %v4736, %v4903
      %v5011 = vadd.f32 %v4737, %v4906
      %v5012 = vadd.f32 %v4738, %v4909
      %v5013 = vadd.f32 %v4739, %v4912
      %v5014 = vadd.f32 %v4740, %v4915
      %v5015 = vadd.f32 %v4741, %v4918
      %v5016 = vadd.f32 %v4742, %v4921
      %v5017 = vadd.f32 %v4743, %v4924
      %v5018 = vadd.f32 %v4744, %v4927
      %v5019 = vadd.f32 %v4745, %v4930
      %v5020 = vadd.f32 %v4746, %v4933
      %v5021 = vadd.f32 %v4747, %v4936
      %v5022 = vadd.f32 %v4748, %v4939
      %v5023 = vadd.f32 %v4749, %v4942
      %v5024 = vadd.f32 %v4750, %v4945
      %v5025 = vadd.f32 %v4751, %v4948
      %v5026 = vadd.f32 %v4752, %v4951
      %v5027 = vadd.f32 %v4753, %v4954
      %v5028 = vadd.f32 %v4754, %v4957
      %v5029 = vadd.f32 %v4755, %v4960
      %v5030 = vadd.f32 %v4756, %v4963
      %v5031 = vadd.f32 %v4757, %v4966
      %v5032 = vadd.f32 %v4758, %v4969
      %v5033 = vadd.f32 %v4759, %v4972
      %v5034 = vadd.f32 %v4760, %v4975
      %v5035 = vadd.f32 %v4761, %v4978
      %v5036 = vadd.f32 %v4762, %v4981
      %v5037 = vadd.f32 %v4763, %v4984
      %v5038 = vadd.f32 %v4764, %v4987
      %v5039 = vadd.f32 %v4765, %v4990
      %v5040 = vld [vmem:[#allocation2 + $0x38] sm:$0xff]
      %v5041 = vld [vmem:[#allocation2 + $0x40] sm:$0xff]
      %v5042 = vld [vmem:[#allocation2 + $0x48] sm:$0xff]
      %v5043 = vld [vmem:[#allocation2 + $0x50] sm:$0xff]
      %v5044 = vld [vmem:[#allocation2 + $0x58] sm:$0xff]
      %v5045 = vld [vmem:[#allocation2 + $0x60] sm:$0xff]
      %v5046 = vld [vmem:[#allocation2 + $0x68] sm:$0xff]
      %v5047 = vld [vmem:[#allocation2 + $0x70] sm:$0xff]
      %v5048 = vld [vmem:[#allocation2 + $0x78] sm:$0xff]
      %v5049 = vld [vmem:[#allocation2 + $0x80] sm:$0xff]
      %v5050 = vld [vmem:[#allocation2 + $0x88] sm:$0xff]
      %v5051 = vld [vmem:[#allocation2 + $0x90] sm:$0xff]
      %v5052 = vld [vmem:[#allocation2 + $0x98] sm:$0xff]
      %v5053 = vld [vmem:[#allocation2 + $0xa0] sm:$0xff]
      %v5054 = vld [vmem:[#allocation2 + $0xa8] sm:$0xff]
      %v5055 = vld [vmem:[#allocation2 + $0xb0] sm:$0xff]
      %v5056 = vld [vmem:[#allocation2 + $0xb8] sm:$0xff]
      %v5057 = vld [vmem:[#allocation2 + $0xc0] sm:$0xff]
      %v5058 = vld [vmem:[#allocation2 + $0xc8] sm:$0xff]
      %v5059 = vld [vmem:[#allocation2 + $0xd0] sm:$0xff]
      %v5060 = vld [vmem:[#allocation2 + $0xd8] sm:$0xff]
      %v5061 = vld [vmem:[#allocation2 + $0xe0] sm:$0xff]
      %v5062 = vld [vmem:[#allocation2 + $0xe8] sm:$0xff]
      %v5063 = vld [vmem:[#allocation2 + $0xf0] sm:$0xff]
      %v5064 = vld [vmem:[#allocation2 + $0xf8] sm:$0xff]
      %v5065 = vld [vmem:[#allocation2 + $0x100] sm:$0xff]
      %v5066 = vld [vmem:[#allocation2 + $0x108] sm:$0xff]
      %v5067 = vld [vmem:[#allocation2 + $0x110] sm:$0xff]
      %v5068 = vld [vmem:[#allocation2 + $0x118] sm:$0xff]
      %v5069 = vld [vmem:[#allocation2 + $0x120] sm:$0xff]
      %v5070 = vld [vmem:[#allocation2 + $0x128] sm:$0xff]
      %v5071 = vld [vmem:[#allocation2 + $0x130] sm:$0xff]
      %v5072 = vld [vmem:[#allocation2 + $0x138] sm:$0xff]
      %v5073 = vld [vmem:[#allocation2 + $0x140] sm:$0xff]
      %v5074 = vld [vmem:[#allocation2 + $0x148] sm:$0xff]
      %v5075 = vld [vmem:[#allocation2 + $0x150] sm:$0xff]
      %v5076 = vld [vmem:[#allocation2 + $0x158] sm:$0xff]
      %v5077 = vld [vmem:[#allocation2 + $0x160] sm:$0xff]
      %v5078 = vld [vmem:[#allocation2 + $0x168] sm:$0xff]
      %v5079 = vld [vmem:[#allocation2 + $0x170] sm:$0xff]
      %v5080 = vld [vmem:[#allocation2 + $0x178] sm:$0xff]
      %v5081 = vld [vmem:[#allocation2 + $0x180] sm:$0xff]
      %v5082 = vld [vmem:[#allocation2 + $0x188] sm:$0xff]
      %v5083 = vld [vmem:[#allocation2 + $0x190] sm:$0xff]
      %v5084 = vld [vmem:[#allocation2 + $0x198] sm:$0xff]
      %v5085 = vld [vmem:[#allocation2 + $0x1a0] sm:$0xff]
      %v5086 = vld [vmem:[#allocation2 + $0x1a8] sm:$0xff]
      %v5087 = vld [vmem:[#allocation2 + $0x1b0] sm:$0xff]
      %s5088 = scalar_lea.vmem %s5, 896
      %v5089 = vld [vmem:[%s5088] sm:$0xff]
      %v5090 = vld [vmem:[%s5088 + $0x8] sm:$0xff]
      %v5091 = vld [vmem:[%s5088 + $0x10] sm:$0xff]
      %v5092 = vld [vmem:[%s5088 + $0x18] sm:$0xff]
      %v5093 = vld [vmem:[%s5088 + $0x20] sm:$0xff]
      %v5094 = vld [vmem:[%s5088 + $0x28] sm:$0xff]
      %v5095 = vld [vmem:[%s5088 + $0x30] sm:$0xff]
      %v5096 = vld [vmem:[%s5088 + $0x38] sm:$0xff]
      %v5097 = vld [vmem:[%s5088 + $0x40] sm:$0xff]
      %v5098 = vld [vmem:[%s5088 + $0x48] sm:$0xff]
      %v5099 = vld [vmem:[%s5088 + $0x50] sm:$0xff]
      %v5100 = vld [vmem:[%s5088 + $0x58] sm:$0xff]
      %v5101 = vld [vmem:[%s5088 + $0x60] sm:$0xff]
      %v5102 = vld [vmem:[%s5088 + $0x68] sm:$0xff]
      %v5103 = vld [vmem:[%s5088 + $0x70] sm:$0xff]
      %v5104 = vld [vmem:[%s5088 + $0x78] sm:$0xff]
      %5105 = vmatpush.msra.mxu0 %v5104
      %5106 = vmatpush.msra.mxu0 %v5103
      %5107 = vmatpush.msra.mxu0 %v5102
      %5108 = vmatpush.msra.mxu0 %v5101
      %5109 = vmatpush.msra.mxu0 %v5100
      %5110 = vmatpush.msra.mxu0 %v5099
      %5111 = vmatpush.msra.mxu0 %v5098
      %5112 = vmatpush.msra.mxu0 %v5097
      %5113 = vmatpush.msra.mxu0 %v5096
      %5114 = vmatpush.msra.mxu0 %v5095
      %5115 = vmatpush.msra.mxu0 %v5094
      %5116 = vmatpush.msra.mxu0 %v5093
      %5117 = vmatpush.msra.mxu0 %v5092
      %5118 = vmatpush.msra.mxu0 %v5091
      %5119 = vmatpush.msra.mxu0 %v5090
      %5120 = vmatpush.msra.mxu0 %v5089
      %5121 = vmatmul.f32.gmra.mxu0 %v5040
      %v5122 = vpop.f32.mrf.mxu0
      %v5123 = vadd.f32 0.0, %v5122
      %5124 = vmatmul.f32.gmra.mxu0 %v5041
      %v5125 = vpop.f32.mrf.mxu0
      %v5126 = vadd.f32 0.0, %v5125
      %5127 = vmatmul.f32.gmra.mxu0 %v5042
      %v5128 = vpop.f32.mrf.mxu0
      %v5129 = vadd.f32 0.0, %v5128
      %5130 = vmatmul.f32.gmra.mxu0 %v5043
      %v5131 = vpop.f32.mrf.mxu0
      %v5132 = vadd.f32 0.0, %v5131
      %5133 = vmatmul.f32.gmra.mxu0 %v5044
      %v5134 = vpop.f32.mrf.mxu0
      %v5135 = vadd.f32 0.0, %v5134
      %5136 = vmatmul.f32.gmra.mxu0 %v5045
      %v5137 = vpop.f32.mrf.mxu0
      %v5138 = vadd.f32 0.0, %v5137
      %5139 = vmatmul.f32.gmra.mxu0 %v5046
      %v5140 = vpop.f32.mrf.mxu0
      %v5141 = vadd.f32 0.0, %v5140
      %5142 = vmatmul.f32.gmra.mxu0 %v5047
      %v5143 = vpop.f32.mrf.mxu0
      %v5144 = vadd.f32 0.0, %v5143
      %5145 = vmatmul.f32.gmra.mxu0 %v5048
      %v5146 = vpop.f32.mrf.mxu0
      %v5147 = vadd.f32 0.0, %v5146
      %5148 = vmatmul.f32.gmra.mxu0 %v5049
      %v5149 = vpop.f32.mrf.mxu0
      %v5150 = vadd.f32 0.0, %v5149
      %5151 = vmatmul.f32.gmra.mxu0 %v5050
      %v5152 = vpop.f32.mrf.mxu0
      %v5153 = vadd.f32 0.0, %v5152
      %5154 = vmatmul.f32.gmra.mxu0 %v5051
      %v5155 = vpop.f32.mrf.mxu0
      %v5156 = vadd.f32 0.0, %v5155
      %5157 = vmatmul.f32.gmra.mxu0 %v5052
      %v5158 = vpop.f32.mrf.mxu0
      %v5159 = vadd.f32 0.0, %v5158
      %5160 = vmatmul.f32.gmra.mxu0 %v5053
      %v5161 = vpop.f32.mrf.mxu0
      %v5162 = vadd.f32 0.0, %v5161
      %5163 = vmatmul.f32.gmra.mxu0 %v5054
      %v5164 = vpop.f32.mrf.mxu0
      %v5165 = vadd.f32 0.0, %v5164
      %5166 = vmatmul.f32.gmra.mxu0 %v5055
      %v5167 = vpop.f32.mrf.mxu0
      %v5168 = vadd.f32 0.0, %v5167
      %5169 = vmatmul.f32.gmra.mxu0 %v5056
      %v5170 = vpop.f32.mrf.mxu0
      %v5171 = vadd.f32 0.0, %v5170
      %5172 = vmatmul.f32.gmra.mxu0 %v5057
      %v5173 = vpop.f32.mrf.mxu0
      %v5174 = vadd.f32 0.0, %v5173
      %5175 = vmatmul.f32.gmra.mxu0 %v5058
      %v5176 = vpop.f32.mrf.mxu0
      %v5177 = vadd.f32 0.0, %v5176
      %5178 = vmatmul.f32.gmra.mxu0 %v5059
      %v5179 = vpop.f32.mrf.mxu0
      %v5180 = vadd.f32 0.0, %v5179
      %5181 = vmatmul.f32.gmra.mxu0 %v5060
      %v5182 = vpop.f32.mrf.mxu0
      %v5183 = vadd.f32 0.0, %v5182
      %5184 = vmatmul.f32.gmra.mxu0 %v5061
      %v5185 = vpop.f32.mrf.mxu0
      %v5186 = vadd.f32 0.0, %v5185
      %5187 = vmatmul.f32.gmra.mxu0 %v5062
      %v5188 = vpop.f32.mrf.mxu0
      %v5189 = vadd.f32 0.0, %v5188
      %5190 = vmatmul.f32.gmra.mxu0 %v5063
      %v5191 = vpop.f32.mrf.mxu0
      %v5192 = vadd.f32 0.0, %v5191
      %5193 = vmatmul.f32.gmra.mxu0 %v5064
      %v5194 = vpop.f32.mrf.mxu0
      %v5195 = vadd.f32 0.0, %v5194
      %5196 = vmatmul.f32.gmra.mxu0 %v5065
      %v5197 = vpop.f32.mrf.mxu0
      %v5198 = vadd.f32 0.0, %v5197
      %5199 = vmatmul.f32.gmra.mxu0 %v5066
      %v5200 = vpop.f32.mrf.mxu0
      %v5201 = vadd.f32 0.0, %v5200
      %5202 = vmatmul.f32.gmra.mxu0 %v5067
      %v5203 = vpop.f32.mrf.mxu0
      %v5204 = vadd.f32 0.0, %v5203
      %5205 = vmatmul.f32.gmra.mxu0 %v5068
      %v5206 = vpop.f32.mrf.mxu0
      %v5207 = vadd.f32 0.0, %v5206
      %5208 = vmatmul.f32.gmra.mxu0 %v5069
      %v5209 = vpop.f32.mrf.mxu0
      %v5210 = vadd.f32 0.0, %v5209
      %5211 = vmatmul.f32.gmra.mxu0 %v5070
      %v5212 = vpop.f32.mrf.mxu0
      %v5213 = vadd.f32 0.0, %v5212
      %5214 = vmatmul.f32.gmra.mxu0 %v5071
      %v5215 = vpop.f32.mrf.mxu0
      %v5216 = vadd.f32 0.0, %v5215
      %5217 = vmatmul.f32.gmra.mxu0 %v5072
      %v5218 = vpop.f32.mrf.mxu0
      %v5219 = vadd.f32 0.0, %v5218
      %5220 = vmatmul.f32.gmra.mxu0 %v5073
      %v5221 = vpop.f32.mrf.mxu0
      %v5222 = vadd.f32 0.0, %v5221
      %5223 = vmatmul.f32.gmra.mxu0 %v5074
      %v5224 = vpop.f32.mrf.mxu0
      %v5225 = vadd.f32 0.0, %v5224
      %5226 = vmatmul.f32.gmra.mxu0 %v5075
      %v5227 = vpop.f32.mrf.mxu0
      %v5228 = vadd.f32 0.0, %v5227
      %5229 = vmatmul.f32.gmra.mxu0 %v5076
      %v5230 = vpop.f32.mrf.mxu0
      %v5231 = vadd.f32 0.0, %v5230
      %5232 = vmatmul.f32.gmra.mxu0 %v5077
      %v5233 = vpop.f32.mrf.mxu0
      %v5234 = vadd.f32 0.0, %v5233
      %5235 = vmatmul.f32.gmra.mxu0 %v5078
      %v5236 = vpop.f32.mrf.mxu0
      %v5237 = vadd.f32 0.0, %v5236
      %5238 = vmatmul.f32.gmra.mxu0 %v5079
      %v5239 = vpop.f32.mrf.mxu0
      %v5240 = vadd.f32 0.0, %v5239
      %5241 = vmatmul.f32.gmra.mxu0 %v5080
      %v5242 = vpop.f32.mrf.mxu0
      %v5243 = vadd.f32 0.0, %v5242
      %5244 = vmatmul.f32.gmra.mxu0 %v5081
      %v5245 = vpop.f32.mrf.mxu0
      %v5246 = vadd.f32 0.0, %v5245
      %5247 = vmatmul.f32.gmra.mxu0 %v5082
      %v5248 = vpop.f32.mrf.mxu0
      %v5249 = vadd.f32 0.0, %v5248
      %5250 = vmatmul.f32.gmra.mxu0 %v5083
      %v5251 = vpop.f32.mrf.mxu0
      %v5252 = vadd.f32 0.0, %v5251
      %5253 = vmatmul.f32.gmra.mxu0 %v5084
      %v5254 = vpop.f32.mrf.mxu0
      %v5255 = vadd.f32 0.0, %v5254
      %5256 = vmatmul.f32.gmra.mxu0 %v5085
      %v5257 = vpop.f32.mrf.mxu0
      %v5258 = vadd.f32 0.0, %v5257
      %5259 = vmatmul.f32.gmra.mxu0 %v5086
      %v5260 = vpop.f32.mrf.mxu0
      %v5261 = vadd.f32 0.0, %v5260
      %5262 = vmatmul.f32.gmra.mxu0 %v5087
      %v5263 = vpop.f32.mrf.mxu0
      %v5264 = vadd.f32 0.0, %v5263
      %5265 = vdwg.mxu0
      %v5266 = vadd.f32 %v4992, %v5123
      %v5267 = vadd.f32 %v4993, %v5126
      %v5268 = vadd.f32 %v4994, %v5129
      %v5269 = vadd.f32 %v4995, %v5132
      %v5270 = vadd.f32 %v4996, %v5135
      %v5271 = vadd.f32 %v4997, %v5138
      %v5272 = vadd.f32 %v4998, %v5141
      %v5273 = vadd.f32 %v4999, %v5144
      %v5274 = vadd.f32 %v5000, %v5147
      %v5275 = vadd.f32 %v5001, %v5150
      %v5276 = vadd.f32 %v5002, %v5153
      %v5277 = vadd.f32 %v5003, %v5156
      %v5278 = vadd.f32 %v5004, %v5159
      %v5279 = vadd.f32 %v5005, %v5162
      %v5280 = vadd.f32 %v5006, %v5165
      %v5281 = vadd.f32 %v5007, %v5168
      %v5282 = vadd.f32 %v5008, %v5171
      %v5283 = vadd.f32 %v5009, %v5174
      %v5284 = vadd.f32 %v5010, %v5177
      %v5285 = vadd.f32 %v5011, %v5180
      %v5286 = vadd.f32 %v5012, %v5183
      %v5287 = vadd.f32 %v5013, %v5186
      %v5288 = vadd.f32 %v5014, %v5189
      %v5289 = vadd.f32 %v5015, %v5192
      %v5290 = vadd.f32 %v5016, %v5195
      %v5291 = vadd.f32 %v5017, %v5198
      %v5292 = vadd.f32 %v5018, %v5201
      %v5293 = vadd.f32 %v5019, %v5204
      %v5294 = vadd.f32 %v5020, %v5207
      %v5295 = vadd.f32 %v5021, %v5210
      %v5296 = vadd.f32 %v5022, %v5213
      %v5297 = vadd.f32 %v5023, %v5216
      %v5298 = vadd.f32 %v5024, %v5219
      %v5299 = vadd.f32 %v5025, %v5222
      %v5300 = vadd.f32 %v5026, %v5225
      %v5301 = vadd.f32 %v5027, %v5228
      %v5302 = vadd.f32 %v5028, %v5231
      %v5303 = vadd.f32 %v5029, %v5234
      %v5304 = vadd.f32 %v5030, %v5237
      %v5305 = vadd.f32 %v5031, %v5240
      %v5306 = vadd.f32 %v5032, %v5243
      %v5307 = vadd.f32 %v5033, %v5246
      %v5308 = vadd.f32 %v5034, %v5249
      %v5309 = vadd.f32 %v5035, %v5252
      %v5310 = vadd.f32 %v5036, %v5255
      %v5311 = vadd.f32 %v5037, %v5258
      %v5312 = vadd.f32 %v5038, %v5261
      %v5313 = vadd.f32 %v5039, %v5264
      %v5314 = vld [vmem:[#allocation2 + $0x39] sm:$0xff]
      %v5315 = vld [vmem:[#allocation2 + $0x41] sm:$0xff]
      %v5316 = vld [vmem:[#allocation2 + $0x49] sm:$0xff]
      %v5317 = vld [vmem:[#allocation2 + $0x51] sm:$0xff]
      %v5318 = vld [vmem:[#allocation2 + $0x59] sm:$0xff]
      %v5319 = vld [vmem:[#allocation2 + $0x61] sm:$0xff]
      %v5320 = vld [vmem:[#allocation2 + $0x69] sm:$0xff]
      %v5321 = vld [vmem:[#allocation2 + $0x71] sm:$0xff]
      %v5322 = vld [vmem:[#allocation2 + $0x79] sm:$0xff]
      %v5323 = vld [vmem:[#allocation2 + $0x81] sm:$0xff]
      %v5324 = vld [vmem:[#allocation2 + $0x89] sm:$0xff]
      %v5325 = vld [vmem:[#allocation2 + $0x91] sm:$0xff]
      %v5326 = vld [vmem:[#allocation2 + $0x99] sm:$0xff]
      %v5327 = vld [vmem:[#allocation2 + $0xa1] sm:$0xff]
      %v5328 = vld [vmem:[#allocation2 + $0xa9] sm:$0xff]
      %v5329 = vld [vmem:[#allocation2 + $0xb1] sm:$0xff]
      %v5330 = vld [vmem:[#allocation2 + $0xb9] sm:$0xff]
      %v5331 = vld [vmem:[#allocation2 + $0xc1] sm:$0xff]
      %v5332 = vld [vmem:[#allocation2 + $0xc9] sm:$0xff]
      %v5333 = vld [vmem:[#allocation2 + $0xd1] sm:$0xff]
      %v5334 = vld [vmem:[#allocation2 + $0xd9] sm:$0xff]
      %v5335 = vld [vmem:[#allocation2 + $0xe1] sm:$0xff]
      %v5336 = vld [vmem:[#allocation2 + $0xe9] sm:$0xff]
      %v5337 = vld [vmem:[#allocation2 + $0xf1] sm:$0xff]
      %v5338 = vld [vmem:[#allocation2 + $0xf9] sm:$0xff]
      %v5339 = vld [vmem:[#allocation2 + $0x101] sm:$0xff]
      %v5340 = vld [vmem:[#allocation2 + $0x109] sm:$0xff]
      %v5341 = vld [vmem:[#allocation2 + $0x111] sm:$0xff]
      %v5342 = vld [vmem:[#allocation2 + $0x119] sm:$0xff]
      %v5343 = vld [vmem:[#allocation2 + $0x121] sm:$0xff]
      %v5344 = vld [vmem:[#allocation2 + $0x129] sm:$0xff]
      %v5345 = vld [vmem:[#allocation2 + $0x131] sm:$0xff]
      %v5346 = vld [vmem:[#allocation2 + $0x139] sm:$0xff]
      %v5347 = vld [vmem:[#allocation2 + $0x141] sm:$0xff]
      %v5348 = vld [vmem:[#allocation2 + $0x149] sm:$0xff]
      %v5349 = vld [vmem:[#allocation2 + $0x151] sm:$0xff]
      %v5350 = vld [vmem:[#allocation2 + $0x159] sm:$0xff]
      %v5351 = vld [vmem:[#allocation2 + $0x161] sm:$0xff]
      %v5352 = vld [vmem:[#allocation2 + $0x169] sm:$0xff]
      %v5353 = vld [vmem:[#allocation2 + $0x171] sm:$0xff]
      %v5354 = vld [vmem:[#allocation2 + $0x179] sm:$0xff]
      %v5355 = vld [vmem:[#allocation2 + $0x181] sm:$0xff]
      %v5356 = vld [vmem:[#allocation2 + $0x189] sm:$0xff]
      %v5357 = vld [vmem:[#allocation2 + $0x191] sm:$0xff]
      %v5358 = vld [vmem:[#allocation2 + $0x199] sm:$0xff]
      %v5359 = vld [vmem:[#allocation2 + $0x1a1] sm:$0xff]
      %v5360 = vld [vmem:[#allocation2 + $0x1a9] sm:$0xff]
      %v5361 = vld [vmem:[#allocation2 + $0x1b1] sm:$0xff]
      %s5362 = scalar_lea.vmem %s5, 1024
      %v5363 = vld [vmem:[%s5362] sm:$0xff]
      %v5364 = vld [vmem:[%s5362 + $0x8] sm:$0xff]
      %v5365 = vld [vmem:[%s5362 + $0x10] sm:$0xff]
      %v5366 = vld [vmem:[%s5362 + $0x18] sm:$0xff]
      %v5367 = vld [vmem:[%s5362 + $0x20] sm:$0xff]
      %v5368 = vld [vmem:[%s5362 + $0x28] sm:$0xff]
      %v5369 = vld [vmem:[%s5362 + $0x30] sm:$0xff]
      %v5370 = vld [vmem:[%s5362 + $0x38] sm:$0xff]
      %v5371 = vld [vmem:[%s5362 + $0x40] sm:$0xff]
      %v5372 = vld [vmem:[%s5362 + $0x48] sm:$0xff]
      %v5373 = vld [vmem:[%s5362 + $0x50] sm:$0xff]
      %v5374 = vld [vmem:[%s5362 + $0x58] sm:$0xff]
      %v5375 = vld [vmem:[%s5362 + $0x60] sm:$0xff]
      %v5376 = vld [vmem:[%s5362 + $0x68] sm:$0xff]
      %v5377 = vld [vmem:[%s5362 + $0x70] sm:$0xff]
      %v5378 = vld [vmem:[%s5362 + $0x78] sm:$0xff]
      %5379 = vmatpush.msra.mxu0 %v5378
      %5380 = vmatpush.msra.mxu0 %v5377
      %5381 = vmatpush.msra.mxu0 %v5376
      %5382 = vmatpush.msra.mxu0 %v5375
      %5383 = vmatpush.msra.mxu0 %v5374
      %5384 = vmatpush.msra.mxu0 %v5373
      %5385 = vmatpush.msra.mxu0 %v5372
      %5386 = vmatpush.msra.mxu0 %v5371
      %5387 = vmatpush.msra.mxu0 %v5370
      %5388 = vmatpush.msra.mxu0 %v5369
      %5389 = vmatpush.msra.mxu0 %v5368
      %5390 = vmatpush.msra.mxu0 %v5367
      %5391 = vmatpush.msra.mxu0 %v5366
      %5392 = vmatpush.msra.mxu0 %v5365
      %5393 = vmatpush.msra.mxu0 %v5364
      %5394 = vmatpush.msra.mxu0 %v5363
      %5395 = vmatmul.f32.gmra.mxu0 %v5314
      %v5396 = vpop.f32.mrf.mxu0
      %v5397 = vadd.f32 0.0, %v5396
      %5398 = vmatmul.f32.gmra.mxu0 %v5315
      %v5399 = vpop.f32.mrf.mxu0
      %v5400 = vadd.f32 0.0, %v5399
      %5401 = vmatmul.f32.gmra.mxu0 %v5316
      %v5402 = vpop.f32.mrf.mxu0
      %v5403 = vadd.f32 0.0, %v5402
      %5404 = vmatmul.f32.gmra.mxu0 %v5317
      %v5405 = vpop.f32.mrf.mxu0
      %v5406 = vadd.f32 0.0, %v5405
      %5407 = vmatmul.f32.gmra.mxu0 %v5318
      %v5408 = vpop.f32.mrf.mxu0
      %v5409 = vadd.f32 0.0, %v5408
      %5410 = vmatmul.f32.gmra.mxu0 %v5319
      %v5411 = vpop.f32.mrf.mxu0
      %v5412 = vadd.f32 0.0, %v5411
      %5413 = vmatmul.f32.gmra.mxu0 %v5320
      %v5414 = vpop.f32.mrf.mxu0
      %v5415 = vadd.f32 0.0, %v5414
      %5416 = vmatmul.f32.gmra.mxu0 %v5321
      %v5417 = vpop.f32.mrf.mxu0
      %v5418 = vadd.f32 0.0, %v5417
      %5419 = vmatmul.f32.gmra.mxu0 %v5322
      %v5420 = vpop.f32.mrf.mxu0
      %v5421 = vadd.f32 0.0, %v5420
      %5422 = vmatmul.f32.gmra.mxu0 %v5323
      %v5423 = vpop.f32.mrf.mxu0
      %v5424 = vadd.f32 0.0, %v5423
      %5425 = vmatmul.f32.gmra.mxu0 %v5324
      %v5426 = vpop.f32.mrf.mxu0
      %v5427 = vadd.f32 0.0, %v5426
      %5428 = vmatmul.f32.gmra.mxu0 %v5325
      %v5429 = vpop.f32.mrf.mxu0
      %v5430 = vadd.f32 0.0, %v5429
      %5431 = vmatmul.f32.gmra.mxu0 %v5326
      %v5432 = vpop.f32.mrf.mxu0
      %v5433 = vadd.f32 0.0, %v5432
      %5434 = vmatmul.f32.gmra.mxu0 %v5327
      %v5435 = vpop.f32.mrf.mxu0
      %v5436 = vadd.f32 0.0, %v5435
      %5437 = vmatmul.f32.gmra.mxu0 %v5328
      %v5438 = vpop.f32.mrf.mxu0
      %v5439 = vadd.f32 0.0, %v5438
      %5440 = vmatmul.f32.gmra.mxu0 %v5329
      %v5441 = vpop.f32.mrf.mxu0
      %v5442 = vadd.f32 0.0, %v5441
      %5443 = vmatmul.f32.gmra.mxu0 %v5330
      %v5444 = vpop.f32.mrf.mxu0
      %v5445 = vadd.f32 0.0, %v5444
      %5446 = vmatmul.f32.gmra.mxu0 %v5331
      %v5447 = vpop.f32.mrf.mxu0
      %v5448 = vadd.f32 0.0, %v5447
      %5449 = vmatmul.f32.gmra.mxu0 %v5332
      %v5450 = vpop.f32.mrf.mxu0
      %v5451 = vadd.f32 0.0, %v5450
      %5452 = vmatmul.f32.gmra.mxu0 %v5333
      %v5453 = vpop.f32.mrf.mxu0
      %v5454 = vadd.f32 0.0, %v5453
      %5455 = vmatmul.f32.gmra.mxu0 %v5334
      %v5456 = vpop.f32.mrf.mxu0
      %v5457 = vadd.f32 0.0, %v5456
      %5458 = vmatmul.f32.gmra.mxu0 %v5335
      %v5459 = vpop.f32.mrf.mxu0
      %v5460 = vadd.f32 0.0, %v5459
      %5461 = vmatmul.f32.gmra.mxu0 %v5336
      %v5462 = vpop.f32.mrf.mxu0
      %v5463 = vadd.f32 0.0, %v5462
      %5464 = vmatmul.f32.gmra.mxu0 %v5337
      %v5465 = vpop.f32.mrf.mxu0
      %v5466 = vadd.f32 0.0, %v5465
      %5467 = vmatmul.f32.gmra.mxu0 %v5338
      %v5468 = vpop.f32.mrf.mxu0
      %v5469 = vadd.f32 0.0, %v5468
      %5470 = vmatmul.f32.gmra.mxu0 %v5339
      %v5471 = vpop.f32.mrf.mxu0
      %v5472 = vadd.f32 0.0, %v5471
      %5473 = vmatmul.f32.gmra.mxu0 %v5340
      %v5474 = vpop.f32.mrf.mxu0
      %v5475 = vadd.f32 0.0, %v5474
      %5476 = vmatmul.f32.gmra.mxu0 %v5341
      %v5477 = vpop.f32.mrf.mxu0
      %v5478 = vadd.f32 0.0, %v5477
      %5479 = vmatmul.f32.gmra.mxu0 %v5342
      %v5480 = vpop.f32.mrf.mxu0
      %v5481 = vadd.f32 0.0, %v5480
      %5482 = vmatmul.f32.gmra.mxu0 %v5343
      %v5483 = vpop.f32.mrf.mxu0
      %v5484 = vadd.f32 0.0, %v5483
      %5485 = vmatmul.f32.gmra.mxu0 %v5344
      %v5486 = vpop.f32.mrf.mxu0
      %v5487 = vadd.f32 0.0, %v5486
      %5488 = vmatmul.f32.gmra.mxu0 %v5345
      %v5489 = vpop.f32.mrf.mxu0
      %v5490 = vadd.f32 0.0, %v5489
      %5491 = vmatmul.f32.gmra.mxu0 %v5346
      %v5492 = vpop.f32.mrf.mxu0
      %v5493 = vadd.f32 0.0, %v5492
      %5494 = vmatmul.f32.gmra.mxu0 %v5347
      %v5495 = vpop.f32.mrf.mxu0
      %v5496 = vadd.f32 0.0, %v5495
      %5497 = vmatmul.f32.gmra.mxu0 %v5348
      %v5498 = vpop.f32.mrf.mxu0
      %v5499 = vadd.f32 0.0, %v5498
      %5500 = vmatmul.f32.gmra.mxu0 %v5349
      %v5501 = vpop.f32.mrf.mxu0
      %v5502 = vadd.f32 0.0, %v5501
      %5503 = vmatmul.f32.gmra.mxu0 %v5350
      %v5504 = vpop.f32.mrf.mxu0
      %v5505 = vadd.f32 0.0, %v5504
      %5506 = vmatmul.f32.gmra.mxu0 %v5351
      %v5507 = vpop.f32.mrf.mxu0
      %v5508 = vadd.f32 0.0, %v5507
      %5509 = vmatmul.f32.gmra.mxu0 %v5352
      %v5510 = vpop.f32.mrf.mxu0
      %v5511 = vadd.f32 0.0, %v5510
      %5512 = vmatmul.f32.gmra.mxu0 %v5353
      %v5513 = vpop.f32.mrf.mxu0
      %v5514 = vadd.f32 0.0, %v5513
      %5515 = vmatmul.f32.gmra.mxu0 %v5354
      %v5516 = vpop.f32.mrf.mxu0
      %v5517 = vadd.f32 0.0, %v5516
      %5518 = vmatmul.f32.gmra.mxu0 %v5355
      %v5519 = vpop.f32.mrf.mxu0
      %v5520 = vadd.f32 0.0, %v5519
      %5521 = vmatmul.f32.gmra.mxu0 %v5356
      %v5522 = vpop.f32.mrf.mxu0
      %v5523 = vadd.f32 0.0, %v5522
      %5524 = vmatmul.f32.gmra.mxu0 %v5357
      %v5525 = vpop.f32.mrf.mxu0
      %v5526 = vadd.f32 0.0, %v5525
      %5527 = vmatmul.f32.gmra.mxu0 %v5358
      %v5528 = vpop.f32.mrf.mxu0
      %v5529 = vadd.f32 0.0, %v5528
      %5530 = vmatmul.f32.gmra.mxu0 %v5359
      %v5531 = vpop.f32.mrf.mxu0
      %v5532 = vadd.f32 0.0, %v5531
      %5533 = vmatmul.f32.gmra.mxu0 %v5360
      %v5534 = vpop.f32.mrf.mxu0
      %v5535 = vadd.f32 0.0, %v5534
      %5536 = vmatmul.f32.gmra.mxu0 %v5361
      %v5537 = vpop.f32.mrf.mxu0
      %v5538 = vadd.f32 0.0, %v5537
      %5539 = vdwg.mxu0
      %v5540 = vadd.f32 %v5266, %v5397
      %v5541 = vadd.f32 %v5267, %v5400
      %v5542 = vadd.f32 %v5268, %v5403
      %v5543 = vadd.f32 %v5269, %v5406
      %v5544 = vadd.f32 %v5270, %v5409
      %v5545 = vadd.f32 %v5271, %v5412
      %v5546 = vadd.f32 %v5272, %v5415
      %v5547 = vadd.f32 %v5273, %v5418
      %v5548 = vadd.f32 %v5274, %v5421
      %v5549 = vadd.f32 %v5275, %v5424
      %v5550 = vadd.f32 %v5276, %v5427
      %v5551 = vadd.f32 %v5277, %v5430
      %v5552 = vadd.f32 %v5278, %v5433
      %v5553 = vadd.f32 %v5279, %v5436
      %v5554 = vadd.f32 %v5280, %v5439
      %v5555 = vadd.f32 %v5281, %v5442
      %v5556 = vadd.f32 %v5282, %v5445
      %v5557 = vadd.f32 %v5283, %v5448
      %v5558 = vadd.f32 %v5284, %v5451
      %v5559 = vadd.f32 %v5285, %v5454
      %v5560 = vadd.f32 %v5286, %v5457
      %v5561 = vadd.f32 %v5287, %v5460
      %v5562 = vadd.f32 %v5288, %v5463
      %v5563 = vadd.f32 %v5289, %v5466
      %v5564 = vadd.f32 %v5290, %v5469
      %v5565 = vadd.f32 %v5291, %v5472
      %v5566 = vadd.f32 %v5292, %v5475
      %v5567 = vadd.f32 %v5293, %v5478
      %v5568 = vadd.f32 %v5294, %v5481
      %v5569 = vadd.f32 %v5295, %v5484
      %v5570 = vadd.f32 %v5296, %v5487
      %v5571 = vadd.f32 %v5297, %v5490
      %v5572 = vadd.f32 %v5298, %v5493
      %v5573 = vadd.f32 %v5299, %v5496
      %v5574 = vadd.f32 %v5300, %v5499
      %v5575 = vadd.f32 %v5301, %v5502
      %v5576 = vadd.f32 %v5302, %v5505
      %v5577 = vadd.f32 %v5303, %v5508
      %v5578 = vadd.f32 %v5304, %v5511
      %v5579 = vadd.f32 %v5305, %v5514
      %v5580 = vadd.f32 %v5306, %v5517
      %v5581 = vadd.f32 %v5307, %v5520
      %v5582 = vadd.f32 %v5308, %v5523
      %v5583 = vadd.f32 %v5309, %v5526
      %v5584 = vadd.f32 %v5310, %v5529
      %v5585 = vadd.f32 %v5311, %v5532
      %v5586 = vadd.f32 %v5312, %v5535
      %v5587 = vadd.f32 %v5313, %v5538
      %v5588 = vld [vmem:[%s6] sm:$0x1]
      %v5590 = vperm.slane %v5588, 0
      %v5592 = vmul.f32 %v5540, %v5590
      %v5593 = vmul.f32 %v5541, %v5590
      %v5594 = vmul.f32 %v5542, %v5590
      %v5595 = vmul.f32 %v5543, %v5590
      %v5596 = vmul.f32 %v5544, %v5590
      %v5597 = vmul.f32 %v5545, %v5590
      %v5598 = vmul.f32 %v5546, %v5590
      %v5599 = vmul.f32 %v5547, %v5590
      %v5600 = vmul.f32 %v5548, %v5590
      %v5601 = vmul.f32 %v5549, %v5590
      %v5602 = vmul.f32 %v5550, %v5590
      %v5603 = vmul.f32 %v5551, %v5590
      %v5604 = vmul.f32 %v5552, %v5590
      %v5605 = vmul.f32 %v5553, %v5590
      %v5606 = vmul.f32 %v5554, %v5590
      %v5607 = vmul.f32 %v5555, %v5590
      %v5608 = vmul.f32 %v5556, %v5590
      %v5609 = vmul.f32 %v5557, %v5590
      %v5610 = vmul.f32 %v5558, %v5590
      %v5611 = vmul.f32 %v5559, %v5590
      %v5612 = vmul.f32 %v5560, %v5590
      %v5613 = vmul.f32 %v5561, %v5590
      %v5614 = vmul.f32 %v5562, %v5590
      %v5615 = vmul.f32 %v5563, %v5590
      %v5616 = vmul.f32 %v5564, %v5590
      %v5617 = vmul.f32 %v5565, %v5590
      %v5618 = vmul.f32 %v5566, %v5590
      %v5619 = vmul.f32 %v5567, %v5590
      %v5620 = vmul.f32 %v5568, %v5590
      %v5621 = vmul.f32 %v5569, %v5590
      %v5622 = vmul.f32 %v5570, %v5590
      %v5623 = vmul.f32 %v5571, %v5590
      %v5624 = vmul.f32 %v5572, %v5590
      %v5625 = vmul.f32 %v5573, %v5590
      %v5626 = vmul.f32 %v5574, %v5590
      %v5627 = vmul.f32 %v5575, %v5590
      %v5628 = vmul.f32 %v5576, %v5590
      %v5629 = vmul.f32 %v5577, %v5590
      %v5630 = vmul.f32 %v5578, %v5590
      %v5631 = vmul.f32 %v5579, %v5590
      %v5632 = vmul.f32 %v5580, %v5590
      %v5633 = vmul.f32 %v5581, %v5590
      %v5634 = vmul.f32 %v5582, %v5590
      %v5635 = vmul.f32 %v5583, %v5590
      %v5636 = vmul.f32 %v5584, %v5590
      %v5637 = vmul.f32 %v5585, %v5590
      %v5638 = vmul.f32 %v5586, %v5590
      %v5639 = vmul.f32 %v5587, %v5590
      %v5640 = vld [vmem:[%s7] sm:$0x1]
      %v5642 = vperm.slane %v5640, 0
      %v5644 = vadd.f32 %v5592, %v5642
      %v5645 = vadd.f32 %v5593, %v5642
      %v5646 = vadd.f32 %v5594, %v5642
      %v5647 = vadd.f32 %v5595, %v5642
      %v5648 = vadd.f32 %v5596, %v5642
      %v5649 = vadd.f32 %v5597, %v5642
      %v5650 = vadd.f32 %v5598, %v5642
      %v5651 = vadd.f32 %v5599, %v5642
      %v5652 = vadd.f32 %v5600, %v5642
      %v5653 = vadd.f32 %v5601, %v5642
      %v5654 = vadd.f32 %v5602, %v5642
      %v5655 = vadd.f32 %v5603, %v5642
      %v5656 = vadd.f32 %v5604, %v5642
      %v5657 = vadd.f32 %v5605, %v5642
      %v5658 = vadd.f32 %v5606, %v5642
      %v5659 = vadd.f32 %v5607, %v5642
      %v5660 = vadd.f32 %v5608, %v5642
      %v5661 = vadd.f32 %v5609, %v5642
      %v5662 = vadd.f32 %v5610, %v5642
      %v5663 = vadd.f32 %v5611, %v5642
      %v5664 = vadd.f32 %v5612, %v5642
      %v5665 = vadd.f32 %v5613, %v5642
      %v5666 = vadd.f32 %v5614, %v5642
      %v5667 = vadd.f32 %v5615, %v5642
      %v5668 = vadd.f32 %v5616, %v5642
      %v5669 = vadd.f32 %v5617, %v5642
      %v5670 = vadd.f32 %v5618, %v5642
      %v5671 = vadd.f32 %v5619, %v5642
      %v5672 = vadd.f32 %v5620, %v5642
      %v5673 = vadd.f32 %v5621, %v5642
      %v5674 = vadd.f32 %v5622, %v5642
      %v5675 = vadd.f32 %v5623, %v5642
      %v5676 = vadd.f32 %v5624, %v5642
      %v5677 = vadd.f32 %v5625, %v5642
      %v5678 = vadd.f32 %v5626, %v5642
      %v5679 = vadd.f32 %v5627, %v5642
      %v5680 = vadd.f32 %v5628, %v5642
      %v5681 = vadd.f32 %v5629, %v5642
      %v5682 = vadd.f32 %v5630, %v5642
      %v5683 = vadd.f32 %v5631, %v5642
      %v5684 = vadd.f32 %v5632, %v5642
      %v5685 = vadd.f32 %v5633, %v5642
      %v5686 = vadd.f32 %v5634, %v5642
      %v5687 = vadd.f32 %v5635, %v5642
      %v5688 = vadd.f32 %v5636, %v5642
      %v5689 = vadd.f32 %v5637, %v5642
      %v5690 = vadd.f32 %v5638, %v5642
      %v5691 = vadd.f32 %v5639, %v5642
      %v5692 = vld [vmem:[%s300 + $0x19] sm:$0xff]
      %v5693 = vld [vmem:[%s300 + $0x21] sm:$0xff]
      %v5694 = vld [vmem:[%s300 + $0x29] sm:$0xff]
      %v5695 = vld [vmem:[%s300 + $0x31] sm:$0xff]
      %v5696 = vld [vmem:[%s300 + $0x39] sm:$0xff]
      %v5697 = vld [vmem:[%s300 + $0x41] sm:$0xff]
      %v5698 = vld [vmem:[%s300 + $0x49] sm:$0xff]
      %v5699 = vld [vmem:[%s300 + $0x51] sm:$0xff]
      %v5700 = vld [vmem:[%s300 + $0x59] sm:$0xff]
      %v5701 = vld [vmem:[%s300 + $0x61] sm:$0xff]
      %v5702 = vld [vmem:[%s300 + $0x69] sm:$0xff]
      %v5703 = vld [vmem:[%s300 + $0x71] sm:$0xff]
      %v5704 = vld [vmem:[%s300 + $0x79] sm:$0xff]
      %v5705 = vld [vmem:[%s300 + $0x81] sm:$0xff]
      %v5706 = vld [vmem:[%s300 + $0x89] sm:$0xff]
      %v5707 = vld [vmem:[%s300 + $0x91] sm:$0xff]
      %v5708 = vld [vmem:[%s300 + $0x99] sm:$0xff]
      %v5709 = vld [vmem:[%s300 + $0xa1] sm:$0xff]
      %v5710 = vld [vmem:[%s300 + $0xa9] sm:$0xff]
      %v5711 = vld [vmem:[%s300 + $0xb1] sm:$0xff]
      %v5712 = vld [vmem:[%s300 + $0xb9] sm:$0xff]
      %v5713 = vld [vmem:[%s300 + $0xc1] sm:$0xff]
      %v5714 = vld [vmem:[%s300 + $0xc9] sm:$0xff]
      %v5715 = vld [vmem:[%s300 + $0xd1] sm:$0xff]
      %v5716 = vld [vmem:[%s300 + $0xd9] sm:$0xff]
      %v5717 = vld [vmem:[%s300 + $0xe1] sm:$0xff]
      %v5718 = vld [vmem:[%s300 + $0xe9] sm:$0xff]
      %v5719 = vld [vmem:[%s300 + $0xf1] sm:$0xff]
      %v5720 = vld [vmem:[%s300 + $0xf9] sm:$0xff]
      %v5721 = vld [vmem:[%s300 + $0x101] sm:$0xff]
      %v5722 = vld [vmem:[%s300 + $0x109] sm:$0xff]
      %v5723 = vld [vmem:[%s300 + $0x111] sm:$0xff]
      %v5724 = vld [vmem:[%s300 + $0x119] sm:$0xff]
      %v5725 = vld [vmem:[%s300 + $0x121] sm:$0xff]
      %v5726 = vld [vmem:[%s300 + $0x129] sm:$0xff]
      %v5727 = vld [vmem:[%s300 + $0x131] sm:$0xff]
      %v5728 = vld [vmem:[%s300 + $0x139] sm:$0xff]
      %v5729 = vld [vmem:[%s300 + $0x141] sm:$0xff]
      %v5730 = vld [vmem:[%s300 + $0x149] sm:$0xff]
      %v5731 = vld [vmem:[%s300 + $0x151] sm:$0xff]
      %v5732 = vld [vmem:[%s300 + $0x159] sm:$0xff]
      %v5733 = vld [vmem:[%s300 + $0x161] sm:$0xff]
      %v5734 = vld [vmem:[%s300 + $0x169] sm:$0xff]
      %v5735 = vld [vmem:[%s300 + $0x171] sm:$0xff]
      %v5736 = vld [vmem:[%s300 + $0x179] sm:$0xff]
      %v5737 = vld [vmem:[%s300 + $0x181] sm:$0xff]
      %v5738 = vld [vmem:[%s300 + $0x189] sm:$0xff]
      %v5739 = vld [vmem:[%s300 + $0x191] sm:$0xff]
      %v5740 = vadd.f32 %v5644, %v5692
      %v5741 = vadd.f32 %v5645, %v5693
      %v5742 = vadd.f32 %v5646, %v5694
      %v5743 = vadd.f32 %v5647, %v5695
      %v5744 = vadd.f32 %v5648, %v5696
      %v5745 = vadd.f32 %v5649, %v5697
      %v5746 = vadd.f32 %v5650, %v5698
      %v5747 = vadd.f32 %v5651, %v5699
      %v5748 = vadd.f32 %v5652, %v5700
      %v5749 = vadd.f32 %v5653, %v5701
      %v5750 = vadd.f32 %v5654, %v5702
      %v5751 = vadd.f32 %v5655, %v5703
      %v5752 = vadd.f32 %v5656, %v5704
      %v5753 = vadd.f32 %v5657, %v5705
      %v5754 = vadd.f32 %v5658, %v5706
      %v5755 = vadd.f32 %v5659, %v5707
      %v5756 = vadd.f32 %v5660, %v5708
      %v5757 = vadd.f32 %v5661, %v5709
      %v5758 = vadd.f32 %v5662, %v5710
      %v5759 = vadd.f32 %v5663, %v5711
      %v5760 = vadd.f32 %v5664, %v5712
      %v5761 = vadd.f32 %v5665, %v5713
      %v5762 = vadd.f32 %v5666, %v5714
      %v5763 = vadd.f32 %v5667, %v5715
      %v5764 = vadd.f32 %v5668, %v5716
      %v5765 = vadd.f32 %v5669, %v5717
      %v5766 = vadd.f32 %v5670, %v5718
      %v5767 = vadd.f32 %v5671, %v5719
      %v5768 = vadd.f32 %v5672, %v5720
      %v5769 = vadd.f32 %v5673, %v5721
      %v5770 = vadd.f32 %v5674, %v5722
      %v5771 = vadd.f32 %v5675, %v5723
      %v5772 = vadd.f32 %v5676, %v5724
      %v5773 = vadd.f32 %v5677, %v5725
      %v5774 = vadd.f32 %v5678, %v5726
      %v5775 = vadd.f32 %v5679, %v5727
      %v5776 = vadd.f32 %v5680, %v5728
      %v5777 = vadd.f32 %v5681, %v5729
      %v5778 = vadd.f32 %v5682, %v5730
      %v5779 = vadd.f32 %v5683, %v5731
      %v5780 = vadd.f32 %v5684, %v5732
      %v5781 = vadd.f32 %v5685, %v5733
      %v5782 = vadd.f32 %v5686, %v5734
      %v5783 = vadd.f32 %v5687, %v5735
      %v5784 = vadd.f32 %v5688, %v5736
      %v5785 = vadd.f32 %v5689, %v5737
      %v5786 = vadd.f32 %v5690, %v5738
      %v5787 = vadd.f32 %v5691, %v5739
      %v5788 = vmax.f32 %v5740, 0.0
      %v5789 = vmax.f32 %v5741, 0.0
      %v5790 = vmax.f32 %v5742, 0.0
      %v5791 = vmax.f32 %v5743, 0.0
      %v5792 = vmax.f32 %v5744, 0.0
      %v5793 = vmax.f32 %v5745, 0.0
      %v5794 = vmax.f32 %v5746, 0.0
      %v5795 = vmax.f32 %v5747, 0.0
      %v5796 = vmax.f32 %v5748, 0.0
      %v5797 = vmax.f32 %v5749, 0.0
      %v5798 = vmax.f32 %v5750, 0.0
      %v5799 = vmax.f32 %v5751, 0.0
      %v5800 = vmax.f32 %v5752, 0.0
      %v5801 = vmax.f32 %v5753, 0.0
      %v5802 = vmax.f32 %v5754, 0.0
      %v5803 = vmax.f32 %v5755, 0.0
      %v5804 = vmax.f32 %v5756, 0.0
      %v5805 = vmax.f32 %v5757, 0.0
      %v5806 = vmax.f32 %v5758, 0.0
      %v5807 = vmax.f32 %v5759, 0.0
      %v5808 = vmax.f32 %v5760, 0.0
      %v5809 = vmax.f32 %v5761, 0.0
      %v5810 = vmax.f32 %v5762, 0.0
      %v5811 = vmax.f32 %v5763, 0.0
      %v5812 = vmax.f32 %v5764, 0.0
      %v5813 = vmax.f32 %v5765, 0.0
      %v5814 = vmax.f32 %v5766, 0.0
      %v5815 = vmax.f32 %v5767, 0.0
      %v5816 = vmax.f32 %v5768, 0.0
      %v5817 = vmax.f32 %v5769, 0.0
      %v5818 = vmax.f32 %v5770, 0.0
      %v5819 = vmax.f32 %v5771, 0.0
      %v5820 = vmax.f32 %v5772, 0.0
      %v5821 = vmax.f32 %v5773, 0.0
      %v5822 = vmax.f32 %v5774, 0.0
      %v5823 = vmax.f32 %v5775, 0.0
      %v5824 = vmax.f32 %v5776, 0.0
      %v5825 = vmax.f32 %v5777, 0.0
      %v5826 = vmax.f32 %v5778, 0.0
      %v5827 = vmax.f32 %v5779, 0.0
      %v5828 = vmax.f32 %v5780, 0.0
      %v5829 = vmax.f32 %v5781, 0.0
      %v5830 = vmax.f32 %v5782, 0.0
      %v5831 = vmax.f32 %v5783, 0.0
      %v5832 = vmax.f32 %v5784, 0.0
      %v5833 = vmax.f32 %v5785, 0.0
      %v5834 = vmax.f32 %v5786, 0.0
      %v5835 = vmax.f32 %v5787, 0.0
      %5836 = vst [vmem:[%s305] sm:$0xff] %v5788
      %5837 = vst [vmem:[%s305 + $0x8] sm:$0xff] %v5789
      %5838 = vst [vmem:[%s305 + $0x10] sm:$0xff] %v5790
      %5839 = vst [vmem:[%s305 + $0x18] sm:$0xff] %v5791
      %5840 = vst [vmem:[%s305 + $0x20] sm:$0xff] %v5792
      %5841 = vst [vmem:[%s305 + $0x28] sm:$0xff] %v5793
      %5842 = vst [vmem:[%s305 + $0x30] sm:$0xff] %v5794
      %5843 = vst [vmem:[%s305 + $0x38] sm:$0xff] %v5795
      %5844 = vst [vmem:[%s305 + $0x40] sm:$0xff] %v5796
      %5845 = vst [vmem:[%s305 + $0x48] sm:$0xff] %v5797
      %5846 = vst [vmem:[%s305 + $0x50] sm:$0xff] %v5798
      %5847 = vst [vmem:[%s305 + $0x58] sm:$0xff] %v5799
      %5848 = vst [vmem:[%s305 + $0x60] sm:$0xff] %v5800
      %5849 = vst [vmem:[%s305 + $0x68] sm:$0xff] %v5801
      %5850 = vst [vmem:[%s305 + $0x70] sm:$0xff] %v5802
      %5851 = vst [vmem:[%s305 + $0x78] sm:$0xff] %v5803
      %5852 = vst [vmem:[%s305 + $0x80] sm:$0xff] %v5804
      %5853 = vst [vmem:[%s305 + $0x88] sm:$0xff] %v5805
      %5854 = vst [vmem:[%s305 + $0x90] sm:$0xff] %v5806
      %5855 = vst [vmem:[%s305 + $0x98] sm:$0xff] %v5807
      %5856 = vst [vmem:[%s305 + $0xa0] sm:$0xff] %v5808
      %5857 = vst [vmem:[%s305 + $0xa8] sm:$0xff] %v5809
      %5858 = vst [vmem:[%s305 + $0xb0] sm:$0xff] %v5810
      %5859 = vst [vmem:[%s305 + $0xb8] sm:$0xff] %v5811
      %5860 = vst [vmem:[%s305 + $0xc0] sm:$0xff] %v5812
      %5861 = vst [vmem:[%s305 + $0xc8] sm:$0xff] %v5813
      %5862 = vst [vmem:[%s305 + $0xd0] sm:$0xff] %v5814
      %5863 = vst [vmem:[%s305 + $0xd8] sm:$0xff] %v5815
      %5864 = vst [vmem:[%s305 + $0xe0] sm:$0xff] %v5816
      %5865 = vst [vmem:[%s305 + $0xe8] sm:$0xff] %v5817
      %5866 = vst [vmem:[%s305 + $0xf0] sm:$0xff] %v5818
      %5867 = vst [vmem:[%s305 + $0xf8] sm:$0xff] %v5819
      %5868 = vst [vmem:[%s305 + $0x100] sm:$0xff] %v5820
      %5869 = vst [vmem:[%s305 + $0x108] sm:$0xff] %v5821
      %5870 = vst [vmem:[%s305 + $0x110] sm:$0xff] %v5822
      %5871 = vst [vmem:[%s305 + $0x118] sm:$0xff] %v5823
      %5872 = vst [vmem:[%s305 + $0x120] sm:$0xff] %v5824
      %5873 = vst [vmem:[%s305 + $0x128] sm:$0xff] %v5825
      %5874 = vst [vmem:[%s305 + $0x130] sm:$0xff] %v5826
      %5875 = vst [vmem:[%s305 + $0x138] sm:$0xff] %v5827
      %5876 = vst [vmem:[%s305 + $0x140] sm:$0xff] %v5828
      %5877 = vst [vmem:[%s305 + $0x148] sm:$0xff] %v5829
      %5878 = vst [vmem:[%s305 + $0x150] sm:$0xff] %v5830
      %5879 = vst [vmem:[%s305 + $0x158] sm:$0xff] %v5831
      %5880 = vst [vmem:[%s305 + $0x160] sm:$0xff] %v5832
      %5881 = vst [vmem:[%s305 + $0x168] sm:$0xff] %v5833
      %5882 = vst [vmem:[%s305 + $0x170] sm:$0xff] %v5834
      %5883 = vst [vmem:[%s305 + $0x178] sm:$0xff] %v5835
      %p5884 = scmp.lt.s32.totalorder %s19, 1
      %s5885 = scalar_select %p5884, %s19, 1
      %s5886 = smul.addr %s5885, 48
      %s5887 = smul.addr %s5886, 8
      %s5888 = scalar_lea.vmem %s8, %s5887
      // Predicated region
      $region53: #{basic_block_forward.1} parent=51 // pred_check
        %p5889 = pneg %p210
      $region54: #{basic_block_forward.1} parent=51 // pred_check_branch
        %5891 = sbr.rel (%p5889) target = $region56
      $region55: #{basic_block_forward.1} parent=51 // pred_region
        _
      $region56: #{basic_block_forward.1} parent=51 // pred_fallthru
        _
    $region52: #{basic_block_forward.1} parent=5 // pred_fallthru
      _
    %p5892 = scmp.le.s32.totalorder 2, %s14
    // Predicated region
    $region57: #{basic_block_forward.1} parent=5 // pred_check
      %p5893 = pneg %p5892
    $region58: #{basic_block_forward.1} parent=5 // pred_check_branch
      %5895 = sbr.rel (%p5893) target = $region60
    $region59: #{basic_block_forward.1} parent=5 // pred_region
      %s5896 = ssub.s32 %s14, 2
      // Predicated region
      $region61: #{basic_block_forward.1} parent=59 // pred_check
        %p5897 = pneg %p216
      $region62: #{basic_block_forward.1} parent=59 // pred_check_branch
        %5899 = sbr.rel (%p5897) target = $region64
      $region63: #{basic_block_forward.1} parent=59 // pred_region
        %p5900 = scmp.lt.s32.totalorder %s20, 1
        %s5901 = scalar_select %p5900, %s20, 1
        %s5902 = smul.addr %s5901, 48
        %s5903 = smul.addr %s5902, 8
        %s5904 = scalar_lea.vmem %s8, %s5903
      $region64: #{basic_block_forward.1} parent=59 // pred_fallthru
        _
    $region60: #{basic_block_forward.1} parent=5 // pred_fallthru
      _
  $region6: #{basic_block_forward.1} parent=0 // loop_footer
    %s18 = sadd.s32 1, %s14
  $region7: #{basic_block_forward.1} parent=0 // loop_footer_branch
    %13 = sbr.rel target = $region3
  $region8: #{basic_block_forward.1} parent=0 // loop_exit
    _

</llo_original>
